<compile_context>
chip_gen: v6e
topology: v6e:2x2x1
jax: 0.10.0
libtpu: 0.0.40
codegen_flags: <defaults>
</compile_context>

<pallas_src>
import functools
import math

import jax
import jax.numpy as jnp
from jax.experimental import pallas as pl
from jax.experimental.pallas import tpu as pltpu


# 48 MiB scoped VMEM: > 32 MiB default, < 64 MiB physical on v7x.
_VMEM_LIMIT = 48 * 1024 * 1024


def _round_up(x, m):
    return (x + m - 1) // m * m


def _default_mxu_tile():
    """256x256 output tiles for the 256-wide MXU (v6e/v7x); 128 on v5e."""
    try:
        kind = jax.devices()[0].device_kind.lower()
    except Exception:
        return 256
    if "v5 lite" in kind or "v5e" in kind or "v5litepod" in kind:
        return 128
    return 256


_MXU_TILE = _default_mxu_tile()


def _pick_tile(dim, max_tile, align):
    """Pick (tile, padded_dim): tile <= max_tile, tile % align == 0,
    padded_dim % tile == 0, padded_dim >= dim, with minimal padding."""
    d = _round_up(dim, align)
    if d <= max_tile:
        return d, d
    nsteps = -(-d // max_tile)
    t = _round_up(-(-d // nsteps), align)
    return t, t * nsteps


# ----------------------------------------------------------------------------
# Pallas matmul kernel (MXU hot path for every conv / conv-transpose)
# ----------------------------------------------------------------------------
def _make_matmul_kernel(activation):
    def kernel(a_ref, b_ref, o_ref, acc_ref):
        @pl.when(pl.program_id(2) == 0)
        def _():
            acc_ref[...] = jnp.zeros_like(acc_ref)

        acc_ref[...] += jnp.dot(a_ref[...], b_ref[...],
                                preferred_element_type=jnp.float32)

        @pl.when(pl.program_id(2) == pl.num_programs(2) - 1)
        def _():
            r = acc_ref[...]
            if activation == "tanh":
                r = jnp.tanh(r)
            o_ref[...] = r.astype(o_ref.dtype)

    return kernel


def pallas_matmul(a, b, activation=None):
    """a: (M, K), b: (K, N) -> (M, N) f32.  Operands run in bf16 on the MXU,
    accumulation in f32; optional fused tanh epilogue."""
    M, K = a.shape
    K2, N = b.shape
    assert K == K2

    # Adaptive tiles: M aligned to 16 (bf16 sublane pack), N/K to 128 lanes.
    tm, Mp = _pick_tile(M, _MXU_TILE, 16)
    tn, Np = _pick_tile(N, _MXU_TILE, 128)
    tk, Kp = _pick_tile(K, 1024, 128)

    a = a.astype(jnp.bfloat16)
    b = b.astype(jnp.bfloat16)
    if (Mp, Kp) != (M, K):
        a = jnp.pad(a, ((0, Mp - M), (0, Kp - K)))
    if (Kp, Np) != (K, N):
        b = jnp.pad(b, ((0, Kp - K), (0, Np - N)))

    out = pl.pallas_call(
        _make_matmul_kernel(activation),
        out_shape=jax.ShapeDtypeStruct((Mp, Np), jnp.float32),
        grid_spec=pltpu.PrefetchScalarGridSpec(
            num_scalar_prefetch=0,
            grid=(Mp // tm, Np // tn, Kp // tk),
            in_specs=[pl.BlockSpec((tm, tk), lambda i, j, k: (i, k)),
                      pl.BlockSpec((tk, tn), lambda i, j, k: (k, j))],
            out_specs=pl.BlockSpec((tm, tn), lambda i, j, k: (i, j)),
            scratch_shapes=[pltpu.VMEM((tm, tn), jnp.float32)]),
        compiler_params=pltpu.CompilerParams(
            dimension_semantics=("parallel", "parallel", "arbitrary"),
            vmem_limit_bytes=_VMEM_LIMIT),
    )(a, b)
    if (Mp, Np) != (M, N):
        out = out[:M, :N]
    return out


# ----------------------------------------------------------------------------
# Pallas instance-norm (+affine, +ReLU, +residual add) kernel
# ----------------------------------------------------------------------------
def _make_in_kernel(relu, has_res, eps):
    def kernel(*refs):
        if has_res:
            x_ref, g_ref, b_ref, r_ref, o_ref = refs
        else:
            x_ref, g_ref, b_ref, o_ref = refs
        x = x_ref[...].astype(jnp.float32)          # (1, H*W, C)
        mean = jnp.mean(x, axis=1, keepdims=True)   # per channel over space
        var = jnp.mean(jnp.square(x - mean), axis=1, keepdims=True)  # biased
        y = (x - mean) * jax.lax.rsqrt(var + eps)
        y = y * g_ref[...] + b_ref[...]             # (1,1,C) lane-dense affine
        if relu:
            y = jnp.maximum(y, 0.0)
        if has_res:
            y = y + r_ref[...].astype(jnp.float32)
        o_ref[...] = y.astype(o_ref.dtype)

    return kernel


def pallas_instance_norm(x, gamma, beta, relu=False, residual=None, eps=1e-5):
    """x: (N, H, W, C) f32.  Per-(n, c) normalization over H*W, affine,
    optional fused ReLU / residual add.  One (H*W, C) block per sample so the
    channel axis stays lane-dense."""
    N, H, W, C = x.shape
    L = H * W
    # TODO(synk): tile the spatial axis (two-pass / Welford) for very large
    # H*W*C so a single-sample block also fits v7x's 64 MiB VMEM.
    x3 = x.reshape(N, L, C).astype(jnp.float32)
    g3 = gamma.reshape(1, 1, C).astype(jnp.float32)
    b3 = beta.reshape(1, 1, C).astype(jnp.float32)

    inputs = [x3, g3, b3]
    in_specs = [pl.BlockSpec((1, L, C), lambda n: (n, 0, 0)),
                pl.BlockSpec((1, 1, C), lambda n: (0, 0, 0)),
                pl.BlockSpec((1, 1, C), lambda n: (0, 0, 0))]
    has_res = residual is not None
    if has_res:
        inputs.append(residual.reshape(N, L, C).astype(jnp.float32))
        in_specs.append(pl.BlockSpec((1, L, C), lambda n: (n, 0, 0)))

    out = pl.pallas_call(
        _make_in_kernel(relu, has_res, eps),
        out_shape=jax.ShapeDtypeStruct((N, L, C), jnp.float32),
        grid_spec=pltpu.PrefetchScalarGridSpec(
            num_scalar_prefetch=0,
            grid=(N,),
            in_specs=in_specs,
            out_specs=pl.BlockSpec((1, L, C), lambda n: (n, 0, 0))),
        compiler_params=pltpu.CompilerParams(
            dimension_semantics=("parallel",),
            vmem_limit_bytes=_VMEM_LIMIT),
    )(*inputs)
    return out.reshape(N, H, W, C)


# ----------------------------------------------------------------------------
# Convolutions: im2col (glue) + Pallas matmul (hot path), NHWC layout
# ----------------------------------------------------------------------------
# TODO(synk): move im2col into the matmul kernel (memory_space=pl.ANY input +
# manual make_async_copy of input strips) to avoid the 9x/49x patch
# replication in HBM for the 3x3 / 7x7 convolutions.
def conv2d(x, w_mat, kh, kw, stride, pad, activation=None):
    """x: (N, H, W, Cin); w_mat: (kh*kw*Cin, Cout) bf16, rows ordered
    (ky, kx, cin) — matches PyTorch Conv2d(bias=False) semantics."""
    N, H, W, Cin = x.shape
    if isinstance(pad, int):
        pad = ((pad, pad), (pad, pad))
    (pt, pb), (pl_, pr) = pad
    Hout = (H + pt + pb - kh) // stride + 1
    Wout = (W + pl_ + pr - kw) // stride + 1

    xb = x.astype(jnp.bfloat16)                   # halve im2col HBM traffic
    xp = jnp.pad(xb, ((0, 0), (pt, pb), (pl_, pr), (0, 0)))

    patches = []
    for ky in range(kh):
        for kx in range(kw):
            patches.append(
                xp[:, ky:ky + stride * Hout:stride,
                      kx:kx + stride * Wout:stride, :])
    # (N, Hout, Wout, kh*kw, Cin) -> (N*Hout*Wout, kh*kw*Cin)
    p = jnp.stack(patches, axis=3)
    a = p.reshape(N * Hout * Wout, kh * kw * Cin)

    out = pallas_matmul(a, w_mat, activation=activation)   # (M, Cout) f32
    return out.reshape(N, Hout, Wout, -1)


def conv_transpose_4x4_s2_p1(x, wsub):
    """PyTorch ConvTranspose2d(k=4, s=2, p=1, bias=False) via sub-pixel
    decomposition: 4 stride-1 2x2 sub-convs on the undilated input, then
    interleave.  wsub: (4, 4*Cin, Cout) bf16, index = r*2 + s (output parity).
    """
    N, H, W, Cin = x.shape
    Cout = wsub.shape[-1]
    outs = []
    for r in range(2):
        for s in range(2):
            pad = ((1 - r, r), (1 - s, s))
            y = conv2d(x, wsub[r * 2 + s], kh=2, kw=2, stride=1, pad=pad)
            outs.append(y)                                  # (N, H, W, Cout)
    y = jnp.stack(outs, axis=0).reshape(2, 2, N, H, W, Cout)
    y = y.transpose(2, 3, 0, 4, 1, 5).reshape(N, 2 * H, 2 * W, Cout)
    return y


# ----------------------------------------------------------------------------
# Generator parameters (weights pre-laid-out for the matmul path) + forward
# ----------------------------------------------------------------------------
def _conv_w_to_mat(w):
    """(Cout, Cin, kh, kw) -> (kh*kw*Cin, Cout) bf16, rows ordered (ky,kx,cin)."""
    Cout, Cin, kh, kw = w.shape
    return w.transpose(2, 3, 1, 0).reshape(kh * kw * Cin, Cout).astype(jnp.bfloat16)


def _convT_w_to_submats(wt):
    """(Cin, Cout, 4, 4) ConvTranspose weight -> (4, 4*Cin, Cout) bf16 sub-kernel
    matmul matrices for the sub-pixel decomposition (index = r*2 + s)."""
    Cin, Cout, _, _ = wt.shape
    wc = jnp.flip(wt, axis=(2, 3)).transpose(1, 0, 2, 3)    # (Cout, Cin, 4, 4)
    mats = []
    for r in range(2):
        for s in range(2):
            sub = wc[:, :, r::2, s::2]                      # (Cout, Cin, 2, 2)
            mats.append(sub.transpose(2, 3, 1, 0)
                           .reshape(4 * Cin, Cout).astype(jnp.bfloat16))
    return jnp.stack(mats, axis=0)


def init_params(key, conv_dim=64, c_dim=5, repeat_num=6):
    params = {}
    n_keys = 64
    keys = list(jax.random.split(key, n_keys))
    ki = iter(range(n_keys))

    def conv_w(cout, cin, k):
        fan_in = cin * k * k
        return jax.random.normal(keys[next(ki)], (cout, cin, k, k),
                                 jnp.float32) * (1.0 / math.sqrt(fan_in))

    def convT_w(cin, cout, k):
        fan_in = cin * k * k
        return jax.random.normal(keys[next(ki)], (cin, cout, k, k),
                                 jnp.float32) * (1.0 / math.sqrt(fan_in))

    def in_ab(c):
        return jnp.ones((c,), jnp.float32), jnp.zeros((c,), jnp.float32)

    params["conv_in_w"] = _conv_w_to_mat(conv_w(conv_dim, 3 + c_dim, 7))
    params["in_in_g"], params["in_in_b"] = in_ab(conv_dim)

    curr = conv_dim
    for i in range(2):
        params[f"down{i}_w"] = _conv_w_to_mat(conv_w(curr * 2, curr, 4))
        params[f"down{i}_g"], params[f"down{i}_b"] = in_ab(curr * 2)
        curr *= 2

    for i in range(repeat_num):
        params[f"res{i}_w1"] = _conv_w_to_mat(conv_w(curr, curr, 3))
        params[f"res{i}_g1"], params[f"res{i}_b1"] = in_ab(curr)
        params[f"res{i}_w2"] = _conv_w_to_mat(conv_w(curr, curr, 3))
        params[f"res{i}_g2"], params[f"res{i}_b2"] = in_ab(curr)

    for i in range(2):
        params[f"up{i}_wsub"] = _convT_w_to_submats(convT_w(curr, curr // 2, 4))
        params[f"up{i}_g"], params[f"up{i}_b"] = in_ab(curr // 2)
        curr //= 2

    params["conv_out_w"] = _conv_w_to_mat(conv_w(3, curr, 7))
    return params


def generator_forward(params, x, c, repeat_num):
    N, _, H, W = x.shape
    # NCHW -> NHWC once at the boundary; everything internal stays NHWC.
    xh = jnp.transpose(x, (0, 2, 3, 1))
    cm = jnp.broadcast_to(c[:, None, None, :],
                          (N, H, W, c.shape[1])).astype(xh.dtype)
    h = jnp.concatenate([xh, cm], axis=-1)

    # stem: conv7x7 s1 p3 -> IN -> ReLU
    h = conv2d(h, params["conv_in_w"], kh=7, kw=7, stride=1, pad=3)
    h = pallas_instance_norm(h, params["in_in_g"], params["in_in_b"], relu=True)

    # 2x downsample: conv4x4 s2 p1 -> IN -> ReLU
    for i in range(2):
        h = conv2d(h, params[f"down{i}_w"], kh=4, kw=4, stride=2, pad=1)
        h = pallas_instance_norm(h, params[f"down{i}_g"], params[f"down{i}_b"],
                                 relu=True)

    # residual blocks: x + IN(conv3(ReLU(IN(conv3(x)))))
    for i in range(repeat_num):
        res = h
        t = conv2d(h, params[f"res{i}_w1"], kh=3, kw=3, stride=1, pad=1)
        t = pallas_instance_norm(t, params[f"res{i}_g1"], params[f"res{i}_b1"],
                                 relu=True)
        t = conv2d(t, params[f"res{i}_w2"], kh=3, kw=3, stride=1, pad=1)
        h = pallas_instance_norm(t, params[f"res{i}_g2"], params[f"res{i}_b2"],
                                 relu=False, residual=res)

    # 2x upsample: convT4x4 s2 p1 (sub-pixel) -> IN -> ReLU
    for i in range(2):
        h = conv_transpose_4x4_s2_p1(h, params[f"up{i}_wsub"])
        h = pallas_instance_norm(h, params[f"up{i}_g"], params[f"up{i}_b"],
                                 relu=True)

    # head: conv7x7 s1 p3 -> tanh (fused in the matmul epilogue)
    h = conv2d(h, params["conv_out_w"], kh=7, kw=7, stride=1, pad=3,
               activation="tanh")
    return jnp.transpose(h, (0, 3, 1, 2))   # back to NCHW


# ----------------------------------------------------------------------------
if __name__ == "__main__":
    # Small, forward-consistent shapes: batch=2, 3-channel 16x16 image, c_dim=5.
    conv_dim, c_dim, repeat_num = 16, 5, 2
    key = jax.random.PRNGKey(0)
    kp, kx, kc = jax.random.split(key, 3)

    params = init_params(kp, conv_dim=conv_dim, c_dim=c_dim,
                         repeat_num=repeat_num)
    x = jax.random.normal(kx, (2, 3, 16, 16), jnp.float32)
    c = jax.random.uniform(kc, (2, c_dim), jnp.float32)

    fwd = jax.jit(functools.partial(generator_forward, repeat_num=repeat_num))
    out = fwd(params, x, c)
    out = jax.block_until_ready(out)

    assert out.shape == (2, 3, 16, 16), out.shape
    assert bool(jnp.all(jnp.isfinite(out)))
    assert bool(jnp.all(jnp.abs(out) <= 1.0))  # tanh range
    print("KERNEL_OK")
</pallas_src>

<mosaic_0001>
module attributes {stable_mosaic.version = 11 : i64} {
  func.func @kernel(%arg0: i32, %arg1: i32, %arg2: i32, %arg3: memref<256x512xbf16, #tpu.memory_space<vmem>>, %arg4: memref<512x128xbf16, #tpu.memory_space<vmem>>, %arg5: memref<256x128xf32, #tpu.memory_space<vmem>>, %arg6: memref<256x128xf32, #tpu.memory_space<vmem>>) attributes {dimension_semantics = [#tpu.dimension_semantics<parallel>, #tpu.dimension_semantics<parallel>, #tpu.dimension_semantics<arbitrary>], iteration_bounds = array<i64: 2, 1, 1>, scalar_prefetch = 0 : i64, scratch_operands = 1 : i64, tpu.core_type = #tpu.core_type<tc>, window_params = [{transform_indices = @transform_0, window_bounds = array<i64: 256, 512>}, {transform_indices = @transform_1, window_bounds = array<i64: 512, 128>}, {transform_indices = @transform_2, window_bounds = array<i64: 256, 128>}]} {
    %c0_i32 = arith.constant 0 : i32
    %0 = arith.cmpi eq, %arg2, %c0_i32 : i32
    %1 = arith.extui %0 : i1 to i32
    %c0_i32_0 = arith.constant 0 : i32
    %2 = arith.cmpi ne, %1, %c0_i32_0 : i32
    scf.if %2 {
      %cst_10 = arith.constant 0.000000e+00 : f32
      %12 = vector.broadcast %cst_10 : f32 to vector<256x128xf32>
      %c0_11 = arith.constant 0 : index
      %c0_12 = arith.constant 0 : index
      %13 = vector.load %arg6[%c0_11, %c0_12] : memref<256x128xf32, #tpu.memory_space<vmem>>, vector<256x128xf32>
      tpu.vector_store %arg6[%c0_11, %c0_12], %12 {strides = array<i32>} : memref<256x128xf32, #tpu.memory_space<vmem>>, vector<256x128xf32>,
    } else {
    }
    %c0 = arith.constant 0 : index
    %c0_1 = arith.constant 0 : index
    %3 = vector.load %arg6[%c0, %c0_1] : memref<256x128xf32, #tpu.memory_space<vmem>>, vector<256x128xf32>
    %c0_2 = arith.constant 0 : index
    %c0_3 = arith.constant 0 : index
    %4 = vector.load %arg3[%c0_2, %c0_3] : memref<256x512xbf16, #tpu.memory_space<vmem>>, vector<256x512xbf16>
    %c0_4 = arith.constant 0 : index
    %c0_5 = arith.constant 0 : index
    %5 = vector.load %arg4[%c0_4, %c0_5] : memref<512x128xbf16, #tpu.memory_space<vmem>>, vector<512x128xbf16>
    %cst = arith.constant dense<0.000000e+00> : vector<256x128xf32>
    %6 = tpu.matmul %4, %5, %cst {dimension_numbers = #tpu.dot_dimension_numbers<[1], [0], [0], [1], [0, 0, 1, 1], [], []>} : vector<256x512xbf16>, vector<512x128xbf16>, vector<256x128xf32> -> vector<256x128xf32>
    %7 = arith.addf %3, %6 : vector<256x128xf32>
    %c0_6 = arith.constant 0 : index
    %c0_7 = arith.constant 0 : index
    %8 = vector.load %arg6[%c0_6, %c0_7] : memref<256x128xf32, #tpu.memory_space<vmem>>, vector<256x128xf32>
    tpu.vector_store %arg6[%c0_6, %c0_7], %7 {strides = array<i32>} : memref<256x128xf32, #tpu.memory_space<vmem>>, vector<256x128xf32>,
    %c0_i32_8 = arith.constant 0 : i32
    %9 = arith.cmpi eq, %arg2, %c0_i32_8 : i32
    %10 = arith.extui %9 : i1 to i32
    %c0_i32_9 = arith.constant 0 : i32
    %11 = arith.cmpi ne, %10, %c0_i32_9 : i32
    scf.if %11 {
      %c0_10 = arith.constant 0 : index
      %c0_11 = arith.constant 0 : index
      %12 = vector.load %arg6[%c0_10, %c0_11] : memref<256x128xf32, #tpu.memory_space<vmem>>, vector<256x128xf32>
      %c0_12 = arith.constant 0 : index
      %c0_13 = arith.constant 0 : index
      %13 = vector.load %arg5[%c0_12, %c0_13] : memref<256x128xf32, #tpu.memory_space<vmem>>, vector<256x128xf32>
      tpu.vector_store %arg5[%c0_12, %c0_13], %12 {strides = array<i32>} : memref<256x128xf32, #tpu.memory_space<vmem>>, vector<256x128xf32>,
    } else {
    }
    return
  }
  func.func @transform_0(%arg0: i32, %arg1: i32, %arg2: i32) -> (i32, i32) {
    %c0_i32 = arith.constant 0 : i32
    return %arg0, %arg2 : i32, i32
  }
  func.func @transform_1(%arg0: i32, %arg1: i32, %arg2: i32) -> (i32, i32) {
    %c0_i32 = arith.constant 0 : i32
    return %arg2, %arg1 : i32, i32
  }
  func.func @transform_2(%arg0: i32, %arg1: i32, %arg2: i32) -> (i32, i32) {
    %c0_i32 = arith.constant 0 : i32
    return %arg0, %arg1 : i32, i32
  }
}

module attributes {stable_mosaic.version = 11 : i64} {
  func.func @kernel(%arg0: i32, %arg1: memref<1x256x16xf32, #tpu.memory_space<vmem>>, %arg2: memref<1x1x16xf32, #tpu.memory_space<vmem>>, %arg3: memref<1x1x16xf32, #tpu.memory_space<vmem>>, %arg4: memref<1x256x16xf32, #tpu.memory_space<vmem>>) attributes {dimension_semantics = [#tpu.dimension_semantics<parallel>], iteration_bounds = array<i64: 2>, scalar_prefetch = 0 : i64, scratch_operands = 0 : i64, tpu.core_type = #tpu.core_type<tc>, window_params = [{transform_indices = @transform_0, window_bounds = array<i64: 1, 256, 16>}, {pipeline_mode = #tpu.pipeline_mode<synchronous>, transform_indices = @transform_1, window_bounds = array<i64: 1, 1, 16>}, {pipeline_mode = #tpu.pipeline_mode<synchronous>, transform_indices = @transform_2, window_bounds = array<i64: 1, 1, 16>}, {transform_indices = @transform_3, window_bounds = array<i64: 1, 256, 16>}]} {
    %c0 = arith.constant 0 : index
    %c0_0 = arith.constant 0 : index
    %c0_1 = arith.constant 0 : index
    %0 = vector.load %arg1[%c0, %c0_0, %c0_1] : memref<1x256x16xf32, #tpu.memory_space<vmem>>, vector<1x256x16xf32>
    %cst = arith.constant dense<0.000000e+00> : vector<1x16xf32>
    %1 = vector.multi_reduction <add>, %0, %cst [1] : vector<1x256x16xf32> to vector<1x16xf32>
    %2 = vector.shape_cast %1 : vector<1x16xf32> to vector<1x1x16xf32>
    %cst_2 = arith.constant 2.560000e+02 : f32
    %3 = vector.broadcast %cst_2 : f32 to vector<1x1x16xf32>
    %4 = arith.divf %2, %3 : vector<1x1x16xf32>
    %5 = vector.broadcast %4 : vector<1x1x16xf32> to vector<1x256x16xf32>
    %6 = arith.subf %0, %5 : vector<1x256x16xf32>
    %7 = arith.mulf %6, %6 : vector<1x256x16xf32>
    %cst_3 = arith.constant dense<0.000000e+00> : vector<1x16xf32>
    %8 = vector.multi_reduction <add>, %7, %cst_3 [1] : vector<1x256x16xf32> to vector<1x16xf32>
    %9 = vector.shape_cast %8 : vector<1x16xf32> to vector<1x1x16xf32>
    %cst_4 = arith.constant 2.560000e+02 : f32
    %10 = vector.broadcast %cst_4 : f32 to vector<1x1x16xf32>
    %11 = arith.divf %9, %10 : vector<1x1x16xf32>
    %12 = vector.broadcast %4 : vector<1x1x16xf32> to vector<1x256x16xf32>
    %13 = arith.subf %0, %12 : vector<1x256x16xf32>
    %cst_5 = arith.constant 9.99999974E-6 : f32
    %14 = vector.broadcast %cst_5 : f32 to vector<1x1x16xf32>
    %15 = arith.addf %11, %14 : vector<1x1x16xf32>
    %16 = math.rsqrt %15 : vector<1x1x16xf32>
    %17 = vector.broadcast %16 : vector<1x1x16xf32> to vector<1x256x16xf32>
    %18 = arith.mulf %13, %17 : vector<1x256x16xf32>
    %c0_6 = arith.constant 0 : index
    %c0_7 = arith.constant 0 : index
    %c0_8 = arith.constant 0 : index
    %19 = vector.load %arg2[%c0_6, %c0_7, %c0_8] : memref<1x1x16xf32, #tpu.memory_space<vmem>>, vector<1x1x16xf32>
    %20 = vector.broadcast %19 : vector<1x1x16xf32> to vector<1x256x16xf32>
    %21 = arith.mulf %18, %20 : vector<1x256x16xf32>
    %c0_9 = arith.constant 0 : index
    %c0_10 = arith.constant 0 : index
    %c0_11 = arith.constant 0 : index
    %22 = vector.load %arg3[%c0_9, %c0_10, %c0_11] : memref<1x1x16xf32, #tpu.memory_space<vmem>>, vector<1x1x16xf32>
    %23 = vector.broadcast %22 : vector<1x1x16xf32> to vector<1x256x16xf32>
    %24 = arith.addf %21, %23 : vector<1x256x16xf32>
    %cst_12 = arith.constant 0.000000e+00 : f32
    %25 = vector.broadcast %cst_12 : f32 to vector<1x256x16xf32>
    %26 = arith.maximumf %24, %25 : vector<1x256x16xf32>
    %c0_13 = arith.constant 0 : index
    %c0_14 = arith.constant 0 : index
    %c0_15 = arith.constant 0 : index
    %27 = vector.load %arg4[%c0_13, %c0_14, %c0_15] : memref<1x256x16xf32, #tpu.memory_space<vmem>>, vector<1x256x16xf32>
    tpu.vector_store %arg4[%c0_13, %c0_14, %c0_15], %26 {strides = array<i32>} : memref<1x256x16xf32, #tpu.memory_space<vmem>>, vector<1x256x16xf32>,
    return
  }
  func.func @transform_0(%arg0: i32) -> (i32, i32, i32) {
    %c0_i32 = arith.constant 0 : i32
    %c0_i32_0 = arith.constant 0 : i32
    %c0_i32_1 = arith.constant 0 : i32
    return %arg0, %c0_i32, %c0_i32_0 : i32, i32, i32
  }
  func.func @transform_1(%arg0: i32) -> (i32, i32, i32) {
    %c0_i32 = arith.constant 0 : i32
    %c0_i32_0 = arith.constant 0 : i32
    %c0_i32_1 = arith.constant 0 : i32
    %c0_i32_2 = arith.constant 0 : i32
    return %c0_i32, %c0_i32_0, %c0_i32_1 : i32, i32, i32
  }
  func.func @transform_2(%arg0: i32) -> (i32, i32, i32) {
    %c0_i32 = arith.constant 0 : i32
    %c0_i32_0 = arith.constant 0 : i32
    %c0_i32_1 = arith.constant 0 : i32
    %c0_i32_2 = arith.constant 0 : i32
    return %c0_i32, %c0_i32_0, %c0_i32_1 : i32, i32, i32
  }
  func.func @transform_3(%arg0: i32) -> (i32, i32, i32) {
    %c0_i32 = arith.constant 0 : i32
    %c0_i32_0 = arith.constant 0 : i32
    %c0_i32_1 = arith.constant 0 : i32
    return %arg0, %c0_i32, %c0_i32_0 : i32, i32, i32
  }
}

module attributes {stable_mosaic.version = 11 : i64} {
  func.func @kernel(%arg0: i32, %arg1: i32, %arg2: i32, %arg3: memref<128x256xbf16, #tpu.memory_space<vmem>>, %arg4: memref<256x128xbf16, #tpu.memory_space<vmem>>, %arg5: memref<128x128xf32, #tpu.memory_space<vmem>>, %arg6: memref<128x128xf32, #tpu.memory_space<vmem>>) attributes {dimension_semantics = [#tpu.dimension_semantics<parallel>, #tpu.dimension_semantics<parallel>, #tpu.dimension_semantics<arbitrary>], iteration_bounds = array<i64: 1, 1, 1>, scalar_prefetch = 0 : i64, scratch_operands = 1 : i64, tpu.core_type = #tpu.core_type<tc>, window_params = [{transform_indices = @transform_0, window_bounds = array<i64: 128, 256>}, {transform_indices = @transform_1, window_bounds = array<i64: 256, 128>}, {transform_indices = @transform_2, window_bounds = array<i64: 128, 128>}]} {
    %c0_i32 = arith.constant 0 : i32
    %0 = arith.cmpi eq, %arg2, %c0_i32 : i32
    %1 = arith.extui %0 : i1 to i32
    %c0_i32_0 = arith.constant 0 : i32
    %2 = arith.cmpi ne, %1, %c0_i32_0 : i32
    scf.if %2 {
      %cst_10 = arith.constant 0.000000e+00 : f32
      %12 = vector.broadcast %cst_10 : f32 to vector<128x128xf32>
      %c0_11 = arith.constant 0 : index
      %c0_12 = arith.constant 0 : index
      %13 = vector.load %arg6[%c0_11, %c0_12] : memref<128x128xf32, #tpu.memory_space<vmem>>, vector<128x128xf32>
      tpu.vector_store %arg6[%c0_11, %c0_12], %12 {strides = array<i32>} : memref<128x128xf32, #tpu.memory_space<vmem>>, vector<128x128xf32>,
    } else {
    }
    %c0 = arith.constant 0 : index
    %c0_1 = arith.constant 0 : index
    %3 = vector.load %arg6[%c0, %c0_1] : memref<128x128xf32, #tpu.memory_space<vmem>>, vector<128x128xf32>
    %c0_2 = arith.constant 0 : index
    %c0_3 = arith.constant 0 : index
    %4 = vector.load %arg3[%c0_2, %c0_3] : memref<128x256xbf16, #tpu.memory_space<vmem>>, vector<128x256xbf16>
    %c0_4 = arith.constant 0 : index
    %c0_5 = arith.constant 0 : index
    %5 = vector.load %arg4[%c0_4, %c0_5] : memref<256x128xbf16, #tpu.memory_space<vmem>>, vector<256x128xbf16>
    %cst = arith.constant dense<0.000000e+00> : vector<128x128xf32>
    %6 = tpu.matmul %4, %5, %cst {dimension_numbers = #tpu.dot_dimension_numbers<[1], [0], [0], [1], [0, 0, 1, 1], [], []>} : vector<128x256xbf16>, vector<256x128xbf16>, vector<128x128xf32> -> vector<128x128xf32>
    %7 = arith.addf %3, %6 : vector<128x128xf32>
    %c0_6 = arith.constant 0 : index
    %c0_7 = arith.constant 0 : index
    %8 = vector.load %arg6[%c0_6, %c0_7] : memref<128x128xf32, #tpu.memory_space<vmem>>, vector<128x128xf32>
    tpu.vector_store %arg6[%c0_6, %c0_7], %7 {strides = array<i32>} : memref<128x128xf32, #tpu.memory_space<vmem>>, vector<128x128xf32>,
    %c0_i32_8 = arith.constant 0 : i32
    %9 = arith.cmpi eq, %arg2, %c0_i32_8 : i32
    %10 = arith.extui %9 : i1 to i32
    %c0_i32_9 = arith.constant 0 : i32
    %11 = arith.cmpi ne, %10, %c0_i32_9 : i32
    scf.if %11 {
      %c0_10 = arith.constant 0 : index
      %c0_11 = arith.constant 0 : index
      %12 = vector.load %arg6[%c0_10, %c0_11] : memref<128x128xf32, #tpu.memory_space<vmem>>, vector<128x128xf32>
      %c0_12 = arith.constant 0 : index
      %c0_13 = arith.constant 0 : index
      %13 = vector.load %arg5[%c0_12, %c0_13] : memref<128x128xf32, #tpu.memory_space<vmem>>, vector<128x128xf32>
      tpu.vector_store %arg5[%c0_12, %c0_13], %12 {strides = array<i32>} : memref<128x128xf32, #tpu.memory_space<vmem>>, vector<128x128xf32>,
    } else {
    }
    return
  }
  func.func @transform_0(%arg0: i32, %arg1: i32, %arg2: i32) -> (i32, i32) {
    %c0_i32 = arith.constant 0 : i32
    return %arg0, %arg2 : i32, i32
  }
  func.func @transform_1(%arg0: i32, %arg1: i32, %arg2: i32) -> (i32, i32) {
    %c0_i32 = arith.constant 0 : i32
    return %arg2, %arg1 : i32, i32
  }
  func.func @transform_2(%arg0: i32, %arg1: i32, %arg2: i32) -> (i32, i32) {
    %c0_i32 = arith.constant 0 : i32
    return %arg0, %arg1 : i32, i32
  }
}

module attributes {stable_mosaic.version = 11 : i64} {
  func.func @kernel(%arg0: i32, %arg1: memref<1x64x32xf32, #tpu.memory_space<vmem>>, %arg2: memref<1x1x32xf32, #tpu.memory_space<vmem>>, %arg3: memref<1x1x32xf32, #tpu.memory_space<vmem>>, %arg4: memref<1x64x32xf32, #tpu.memory_space<vmem>>) attributes {dimension_semantics = [#tpu.dimension_semantics<parallel>], iteration_bounds = array<i64: 2>, scalar_prefetch = 0 : i64, scratch_operands = 0 : i64, tpu.core_type = #tpu.core_type<tc>, window_params = [{transform_indices = @transform_0, window_bounds = array<i64: 1, 64, 32>}, {pipeline_mode = #tpu.pipeline_mode<synchronous>, transform_indices = @transform_1, window_bounds = array<i64: 1, 1, 32>}, {pipeline_mode = #tpu.pipeline_mode<synchronous>, transform_indices = @transform_2, window_bounds = array<i64: 1, 1, 32>}, {transform_indices = @transform_3, window_bounds = array<i64: 1, 64, 32>}]} {
    %c0 = arith.constant 0 : index
    %c0_0 = arith.constant 0 : index
    %c0_1 = arith.constant 0 : index
    %0 = vector.load %arg1[%c0, %c0_0, %c0_1] : memref<1x64x32xf32, #tpu.memory_space<vmem>>, vector<1x64x32xf32>
    %cst = arith.constant dense<0.000000e+00> : vector<1x32xf32>
    %1 = vector.multi_reduction <add>, %0, %cst [1] : vector<1x64x32xf32> to vector<1x32xf32>
    %2 = vector.shape_cast %1 : vector<1x32xf32> to vector<1x1x32xf32>
    %cst_2 = arith.constant 6.400000e+01 : f32
    %3 = vector.broadcast %cst_2 : f32 to vector<1x1x32xf32>
    %4 = arith.divf %2, %3 : vector<1x1x32xf32>
    %5 = vector.broadcast %4 : vector<1x1x32xf32> to vector<1x64x32xf32>
    %6 = arith.subf %0, %5 : vector<1x64x32xf32>
    %7 = arith.mulf %6, %6 : vector<1x64x32xf32>
    %cst_3 = arith.constant dense<0.000000e+00> : vector<1x32xf32>
    %8 = vector.multi_reduction <add>, %7, %cst_3 [1] : vector<1x64x32xf32> to vector<1x32xf32>
    %9 = vector.shape_cast %8 : vector<1x32xf32> to vector<1x1x32xf32>
    %cst_4 = arith.constant 6.400000e+01 : f32
    %10 = vector.broadcast %cst_4 : f32 to vector<1x1x32xf32>
    %11 = arith.divf %9, %10 : vector<1x1x32xf32>
    %12 = vector.broadcast %4 : vector<1x1x32xf32> to vector<1x64x32xf32>
    %13 = arith.subf %0, %12 : vector<1x64x32xf32>
    %cst_5 = arith.constant 9.99999974E-6 : f32
    %14 = vector.broadcast %cst_5 : f32 to vector<1x1x32xf32>
    %15 = arith.addf %11, %14 : vector<1x1x32xf32>
    %16 = math.rsqrt %15 : vector<1x1x32xf32>
    %17 = vector.broadcast %16 : vector<1x1x32xf32> to vector<1x64x32xf32>
    %18 = arith.mulf %13, %17 : vector<1x64x32xf32>
    %c0_6 = arith.constant 0 : index
    %c0_7 = arith.constant 0 : index
    %c0_8 = arith.constant 0 : index
    %19 = vector.load %arg2[%c0_6, %c0_7, %c0_8] : memref<1x1x32xf32, #tpu.memory_space<vmem>>, vector<1x1x32xf32>
    %20 = vector.broadcast %19 : vector<1x1x32xf32> to vector<1x64x32xf32>
    %21 = arith.mulf %18, %20 : vector<1x64x32xf32>
    %c0_9 = arith.constant 0 : index
    %c0_10 = arith.constant 0 : index
    %c0_11 = arith.constant 0 : index
    %22 = vector.load %arg3[%c0_9, %c0_10, %c0_11] : memref<1x1x32xf32, #tpu.memory_space<vmem>>, vector<1x1x32xf32>
    %23 = vector.broadcast %22 : vector<1x1x32xf32> to vector<1x64x32xf32>
    %24 = arith.addf %21, %23 : vector<1x64x32xf32>
    %cst_12 = arith.constant 0.000000e+00 : f32
    %25 = vector.broadcast %cst_12 : f32 to vector<1x64x32xf32>
    %26 = arith.maximumf %24, %25 : vector<1x64x32xf32>
    %c0_13 = arith.constant 0 : index
    %c0_14 = arith.constant 0 : index
    %c0_15 = arith.constant 0 : index
    %27 = vector.load %arg4[%c0_13, %c0_14, %c0_15] : memref<1x64x32xf32, #tpu.memory_space<vmem>>, vector<1x64x32xf32>
    tpu.vector_store %arg4[%c0_13, %c0_14, %c0_15], %26 {strides = array<i32>} : memref<1x64x32xf32, #tpu.memory_space<vmem>>, vector<1x64x32xf32>,
    return
  }
  func.func @transform_0(%arg0: i32) -> (i32, i32, i32) {
    %c0_i32 = arith.constant 0 : i32
    %c0_i32_0 = arith.constant 0 : i32
    %c0_i32_1 = arith.constant 0 : i32
    return %arg0, %c0_i32, %c0_i32_0 : i32, i32, i32
  }
  func.func @transform_1(%arg0: i32) -> (i32, i32, i32) {
    %c0_i32 = arith.constant 0 : i32
    %c0_i32_0 = arith.constant 0 : i32
    %c0_i32_1 = arith.constant 0 : i32
    %c0_i32_2 = arith.constant 0 : i32
    return %c0_i32, %c0_i32_0, %c0_i32_1 : i32, i32, i32
  }
  func.func @transform_2(%arg0: i32) -> (i32, i32, i32) {
    %c0_i32 = arith.constant 0 : i32
    %c0_i32_0 = arith.constant 0 : i32
    %c0_i32_1 = arith.constant 0 : i32
    %c0_i32_2 = arith.constant 0 : i32
    return %c0_i32, %c0_i32_0, %c0_i32_1 : i32, i32, i32
  }
  func.func @transform_3(%arg0: i32) -> (i32, i32, i32) {
    %c0_i32 = arith.constant 0 : i32
    %c0_i32_0 = arith.constant 0 : i32
    %c0_i32_1 = arith.constant 0 : i32
    return %arg0, %c0_i32, %c0_i32_0 : i32, i32, i32
  }
}

module attributes {stable_mosaic.version = 11 : i64} {
  func.func @kernel(%arg0: i32, %arg1: i32, %arg2: i32, %arg3: memref<32x512xbf16, #tpu.memory_space<vmem>>, %arg4: memref<512x128xbf16, #tpu.memory_space<vmem>>, %arg5: memref<32x128xf32, #tpu.memory_space<vmem>>, %arg6: memref<32x128xf32, #tpu.memory_space<vmem>>) attributes {dimension_semantics = [#tpu.dimension_semantics<parallel>, #tpu.dimension_semantics<parallel>, #tpu.dimension_semantics<arbitrary>], iteration_bounds = array<i64: 1, 1, 1>, scalar_prefetch = 0 : i64, scratch_operands = 1 : i64, tpu.core_type = #tpu.core_type<tc>, window_params = [{transform_indices = @transform_0, window_bounds = array<i64: 32, 512>}, {transform_indices = @transform_1, window_bounds = array<i64: 512, 128>}, {transform_indices = @transform_2, window_bounds = array<i64: 32, 128>}]} {
    %c0_i32 = arith.constant 0 : i32
    %0 = arith.cmpi eq, %arg2, %c0_i32 : i32
    %1 = arith.extui %0 : i1 to i32
    %c0_i32_0 = arith.constant 0 : i32
    %2 = arith.cmpi ne, %1, %c0_i32_0 : i32
    scf.if %2 {
      %cst_10 = arith.constant 0.000000e+00 : f32
      %12 = vector.broadcast %cst_10 : f32 to vector<32x128xf32>
      %c0_11 = arith.constant 0 : index
      %c0_12 = arith.constant 0 : index
      %13 = vector.load %arg6[%c0_11, %c0_12] : memref<32x128xf32, #tpu.memory_space<vmem>>, vector<32x128xf32>
      tpu.vector_store %arg6[%c0_11, %c0_12], %12 {strides = array<i32>} : memref<32x128xf32, #tpu.memory_space<vmem>>, vector<32x128xf32>,
    } else {
    }
    %c0 = arith.constant 0 : index
    %c0_1 = arith.constant 0 : index
    %3 = vector.load %arg6[%c0, %c0_1] : memref<32x128xf32, #tpu.memory_space<vmem>>, vector<32x128xf32>
    %c0_2 = arith.constant 0 : index
    %c0_3 = arith.constant 0 : index
    %4 = vector.load %arg3[%c0_2, %c0_3] : memref<32x512xbf16, #tpu.memory_space<vmem>>, vector<32x512xbf16>
    %c0_4 = arith.constant 0 : index
    %c0_5 = arith.constant 0 : index
    %5 = vector.load %arg4[%c0_4, %c0_5] : memref<512x128xbf16, #tpu.memory_space<vmem>>, vector<512x128xbf16>
    %cst = arith.constant dense<0.000000e+00> : vector<32x128xf32>
    %6 = tpu.matmul %4, %5, %cst {dimension_numbers = #tpu.dot_dimension_numbers<[1], [0], [0], [1], [0, 0, 1, 1], [], []>} : vector<32x512xbf16>, vector<512x128xbf16>, vector<32x128xf32> -> vector<32x128xf32>
    %7 = arith.addf %3, %6 : vector<32x128xf32>
    %c0_6 = arith.constant 0 : index
    %c0_7 = arith.constant 0 : index
    %8 = vector.load %arg6[%c0_6, %c0_7] : memref<32x128xf32, #tpu.memory_space<vmem>>, vector<32x128xf32>
    tpu.vector_store %arg6[%c0_6, %c0_7], %7 {strides = array<i32>} : memref<32x128xf32, #tpu.memory_space<vmem>>, vector<32x128xf32>,
    %c0_i32_8 = arith.constant 0 : i32
    %9 = arith.cmpi eq, %arg2, %c0_i32_8 : i32
    %10 = arith.extui %9 : i1 to i32
    %c0_i32_9 = arith.constant 0 : i32
    %11 = arith.cmpi ne, %10, %c0_i32_9 : i32
    scf.if %11 {
      %c0_10 = arith.constant 0 : index
      %c0_11 = arith.constant 0 : index
      %12 = vector.load %arg6[%c0_10, %c0_11] : memref<32x128xf32, #tpu.memory_space<vmem>>, vector<32x128xf32>
      %c0_12 = arith.constant 0 : index
      %c0_13 = arith.constant 0 : index
      %13 = vector.load %arg5[%c0_12, %c0_13] : memref<32x128xf32, #tpu.memory_space<vmem>>, vector<32x128xf32>
      tpu.vector_store %arg5[%c0_12, %c0_13], %12 {strides = array<i32>} : memref<32x128xf32, #tpu.memory_space<vmem>>, vector<32x128xf32>,
    } else {
    }
    return
  }
  func.func @transform_0(%arg0: i32, %arg1: i32, %arg2: i32) -> (i32, i32) {
    %c0_i32 = arith.constant 0 : i32
    return %arg0, %arg2 : i32, i32
  }
  func.func @transform_1(%arg0: i32, %arg1: i32, %arg2: i32) -> (i32, i32) {
    %c0_i32 = arith.constant 0 : i32
    return %arg2, %arg1 : i32, i32
  }
  func.func @transform_2(%arg0: i32, %arg1: i32, %arg2: i32) -> (i32, i32) {
    %c0_i32 = arith.constant 0 : i32
    return %arg0, %arg1 : i32, i32
  }
}

module attributes {stable_mosaic.version = 11 : i64} {
  func.func @kernel(%arg0: i32, %arg1: memref<1x16x64xf32, #tpu.memory_space<vmem>>, %arg2: memref<1x1x64xf32, #tpu.memory_space<vmem>>, %arg3: memref<1x1x64xf32, #tpu.memory_space<vmem>>, %arg4: memref<1x16x64xf32, #tpu.memory_space<vmem>>) attributes {dimension_semantics = [#tpu.dimension_semantics<parallel>], iteration_bounds = array<i64: 2>, scalar_prefetch = 0 : i64, scratch_operands = 0 : i64, tpu.core_type = #tpu.core_type<tc>, window_params = [{transform_indices = @transform_0, window_bounds = array<i64: 1, 16, 64>}, {pipeline_mode = #tpu.pipeline_mode<synchronous>, transform_indices = @transform_1, window_bounds = array<i64: 1, 1, 64>}, {pipeline_mode = #tpu.pipeline_mode<synchronous>, transform_indices = @transform_2, window_bounds = array<i64: 1, 1, 64>}, {transform_indices = @transform_3, window_bounds = array<i64: 1, 16, 64>}]} {
    %c0 = arith.constant 0 : index
    %c0_0 = arith.constant 0 : index
    %c0_1 = arith.constant 0 : index
    %0 = vector.load %arg1[%c0, %c0_0, %c0_1] : memref<1x16x64xf32, #tpu.memory_space<vmem>>, vector<1x16x64xf32>
    %cst = arith.constant dense<0.000000e+00> : vector<1x64xf32>
    %1 = vector.multi_reduction <add>, %0, %cst [1] : vector<1x16x64xf32> to vector<1x64xf32>
    %2 = vector.shape_cast %1 : vector<1x64xf32> to vector<1x1x64xf32>
    %cst_2 = arith.constant 1.600000e+01 : f32
    %3 = vector.broadcast %cst_2 : f32 to vector<1x1x64xf32>
    %4 = arith.divf %2, %3 : vector<1x1x64xf32>
    %5 = vector.broadcast %4 : vector<1x1x64xf32> to vector<1x16x64xf32>
    %6 = arith.subf %0, %5 : vector<1x16x64xf32>
    %7 = arith.mulf %6, %6 : vector<1x16x64xf32>
    %cst_3 = arith.constant dense<0.000000e+00> : vector<1x64xf32>
    %8 = vector.multi_reduction <add>, %7, %cst_3 [1] : vector<1x16x64xf32> to vector<1x64xf32>
    %9 = vector.shape_cast %8 : vector<1x64xf32> to vector<1x1x64xf32>
    %cst_4 = arith.constant 1.600000e+01 : f32
    %10 = vector.broadcast %cst_4 : f32 to vector<1x1x64xf32>
    %11 = arith.divf %9, %10 : vector<1x1x64xf32>
    %12 = vector.broadcast %4 : vector<1x1x64xf32> to vector<1x16x64xf32>
    %13 = arith.subf %0, %12 : vector<1x16x64xf32>
    %cst_5 = arith.constant 9.99999974E-6 : f32
    %14 = vector.broadcast %cst_5 : f32 to vector<1x1x64xf32>
    %15 = arith.addf %11, %14 : vector<1x1x64xf32>
    %16 = math.rsqrt %15 : vector<1x1x64xf32>
    %17 = vector.broadcast %16 : vector<1x1x64xf32> to vector<1x16x64xf32>
    %18 = arith.mulf %13, %17 : vector<1x16x64xf32>
    %c0_6 = arith.constant 0 : index
    %c0_7 = arith.constant 0 : index
    %c0_8 = arith.constant 0 : index
    %19 = vector.load %arg2[%c0_6, %c0_7, %c0_8] : memref<1x1x64xf32, #tpu.memory_space<vmem>>, vector<1x1x64xf32>
    %20 = vector.broadcast %19 : vector<1x1x64xf32> to vector<1x16x64xf32>
    %21 = arith.mulf %18, %20 : vector<1x16x64xf32>
    %c0_9 = arith.constant 0 : index
    %c0_10 = arith.constant 0 : index
    %c0_11 = arith.constant 0 : index
    %22 = vector.load %arg3[%c0_9, %c0_10, %c0_11] : memref<1x1x64xf32, #tpu.memory_space<vmem>>, vector<1x1x64xf32>
    %23 = vector.broadcast %22 : vector<1x1x64xf32> to vector<1x16x64xf32>
    %24 = arith.addf %21, %23 : vector<1x16x64xf32>
    %cst_12 = arith.constant 0.000000e+00 : f32
    %25 = vector.broadcast %cst_12 : f32 to vector<1x16x64xf32>
    %26 = arith.maximumf %24, %25 : vector<1x16x64xf32>
    %c0_13 = arith.constant 0 : index
    %c0_14 = arith.constant 0 : index
    %c0_15 = arith.constant 0 : index
    %27 = vector.load %arg4[%c0_13, %c0_14, %c0_15] : memref<1x16x64xf32, #tpu.memory_space<vmem>>, vector<1x16x64xf32>
    tpu.vector_store %arg4[%c0_13, %c0_14, %c0_15], %26 {strides = array<i32>} : memref<1x16x64xf32, #tpu.memory_space<vmem>>, vector<1x16x64xf32>,
    return
  }
  func.func @transform_0(%arg0: i32) -> (i32, i32, i32) {
    %c0_i32 = arith.constant 0 : i32
    %c0_i32_0 = arith.constant 0 : i32
    %c0_i32_1 = arith.constant 0 : i32
    return %arg0, %c0_i32, %c0_i32_0 : i32, i32, i32
  }
  func.func @transform_1(%arg0: i32) -> (i32, i32, i32) {
    %c0_i32 = arith.constant 0 : i32
    %c0_i32_0 = arith.constant 0 : i32
    %c0_i32_1 = arith.constant 0 : i32
    %c0_i32_2 = arith.constant 0 : i32
    return %c0_i32, %c0_i32_0, %c0_i32_1 : i32, i32, i32
  }
  func.func @transform_2(%arg0: i32) -> (i32, i32, i32) {
    %c0_i32 = arith.constant 0 : i32
    %c0_i32_0 = arith.constant 0 : i32
    %c0_i32_1 = arith.constant 0 : i32
    %c0_i32_2 = arith.constant 0 : i32
    return %c0_i32, %c0_i32_0, %c0_i32_1 : i32, i32, i32
  }
  func.func @transform_3(%arg0: i32) -> (i32, i32, i32) {
    %c0_i32 = arith.constant 0 : i32
    %c0_i32_0 = arith.constant 0 : i32
    %c0_i32_1 = arith.constant 0 : i32
    return %arg0, %c0_i32, %c0_i32_0 : i32, i32, i32
  }
}

module attributes {stable_mosaic.version = 11 : i64} {
  func.func @kernel(%arg0: i32, %arg1: i32, %arg2: i32, %arg3: memref<32x640xbf16, #tpu.memory_space<vmem>>, %arg4: memref<640x128xbf16, #tpu.memory_space<vmem>>, %arg5: memref<32x128xf32, #tpu.memory_space<vmem>>, %arg6: memref<32x128xf32, #tpu.memory_space<vmem>>) attributes {dimension_semantics = [#tpu.dimension_semantics<parallel>, #tpu.dimension_semantics<parallel>, #tpu.dimension_semantics<arbitrary>], iteration_bounds = array<i64: 1, 1, 1>, scalar_prefetch = 0 : i64, scratch_operands = 1 : i64, tpu.core_type = #tpu.core_type<tc>, window_params = [{transform_indices = @transform_0, window_bounds = array<i64: 32, 640>}, {transform_indices = @transform_1, window_bounds = array<i64: 640, 128>}, {transform_indices = @transform_2, window_bounds = array<i64: 32, 128>}]} {
    %c0_i32 = arith.constant 0 : i32
    %0 = arith.cmpi eq, %arg2, %c0_i32 : i32
    %1 = arith.extui %0 : i1 to i32
    %c0_i32_0 = arith.constant 0 : i32
    %2 = arith.cmpi ne, %1, %c0_i32_0 : i32
    scf.if %2 {
      %cst_10 = arith.constant 0.000000e+00 : f32
      %12 = vector.broadcast %cst_10 : f32 to vector<32x128xf32>
      %c0_11 = arith.constant 0 : index
      %c0_12 = arith.constant 0 : index
      %13 = vector.load %arg6[%c0_11, %c0_12] : memref<32x128xf32, #tpu.memory_space<vmem>>, vector<32x128xf32>
      tpu.vector_store %arg6[%c0_11, %c0_12], %12 {strides = array<i32>} : memref<32x128xf32, #tpu.memory_space<vmem>>, vector<32x128xf32>,
    } else {
    }
    %c0 = arith.constant 0 : index
    %c0_1 = arith.constant 0 : index
    %3 = vector.load %arg6[%c0, %c0_1] : memref<32x128xf32, #tpu.memory_space<vmem>>, vector<32x128xf32>
    %c0_2 = arith.constant 0 : index
    %c0_3 = arith.constant 0 : index
    %4 = vector.load %arg3[%c0_2, %c0_3] : memref<32x640xbf16, #tpu.memory_space<vmem>>, vector<32x640xbf16>
    %c0_4 = arith.constant 0 : index
    %c0_5 = arith.constant 0 : index
    %5 = vector.load %arg4[%c0_4, %c0_5] : memref<640x128xbf16, #tpu.memory_space<vmem>>, vector<640x128xbf16>
    %cst = arith.constant dense<0.000000e+00> : vector<32x128xf32>
    %6 = tpu.matmul %4, %5, %cst {dimension_numbers = #tpu.dot_dimension_numbers<[1], [0], [0], [1], [0, 0, 1, 1], [], []>} : vector<32x640xbf16>, vector<640x128xbf16>, vector<32x128xf32> -> vector<32x128xf32>
    %7 = arith.addf %3, %6 : vector<32x128xf32>
    %c0_6 = arith.constant 0 : index
    %c0_7 = arith.constant 0 : index
    %8 = vector.load %arg6[%c0_6, %c0_7] : memref<32x128xf32, #tpu.memory_space<vmem>>, vector<32x128xf32>
    tpu.vector_store %arg6[%c0_6, %c0_7], %7 {strides = array<i32>} : memref<32x128xf32, #tpu.memory_space<vmem>>, vector<32x128xf32>,
    %c0_i32_8 = arith.constant 0 : i32
    %9 = arith.cmpi eq, %arg2, %c0_i32_8 : i32
    %10 = arith.extui %9 : i1 to i32
    %c0_i32_9 = arith.constant 0 : i32
    %11 = arith.cmpi ne, %10, %c0_i32_9 : i32
    scf.if %11 {
      %c0_10 = arith.constant 0 : index
      %c0_11 = arith.constant 0 : index
      %12 = vector.load %arg6[%c0_10, %c0_11] : memref<32x128xf32, #tpu.memory_space<vmem>>, vector<32x128xf32>
      %c0_12 = arith.constant 0 : index
      %c0_13 = arith.constant 0 : index
      %13 = vector.load %arg5[%c0_12, %c0_13] : memref<32x128xf32, #tpu.memory_space<vmem>>, vector<32x128xf32>
      tpu.vector_store %arg5[%c0_12, %c0_13], %12 {strides = array<i32>} : memref<32x128xf32, #tpu.memory_space<vmem>>, vector<32x128xf32>,
    } else {
    }
    return
  }
  func.func @transform_0(%arg0: i32, %arg1: i32, %arg2: i32) -> (i32, i32) {
    %c0_i32 = arith.constant 0 : i32
    return %arg0, %arg2 : i32, i32
  }
  func.func @transform_1(%arg0: i32, %arg1: i32, %arg2: i32) -> (i32, i32) {
    %c0_i32 = arith.constant 0 : i32
    return %arg2, %arg1 : i32, i32
  }
  func.func @transform_2(%arg0: i32, %arg1: i32, %arg2: i32) -> (i32, i32) {
    %c0_i32 = arith.constant 0 : i32
    return %arg0, %arg1 : i32, i32
  }
}

module attributes {stable_mosaic.version = 11 : i64} {
  func.func @kernel(%arg0: i32, %arg1: memref<1x16x64xf32, #tpu.memory_space<vmem>>, %arg2: memref<1x1x64xf32, #tpu.memory_space<vmem>>, %arg3: memref<1x1x64xf32, #tpu.memory_space<vmem>>, %arg4: memref<1x16x64xf32, #tpu.memory_space<vmem>>, %arg5: memref<1x16x64xf32, #tpu.memory_space<vmem>>) attributes {dimension_semantics = [#tpu.dimension_semantics<parallel>], iteration_bounds = array<i64: 2>, scalar_prefetch = 0 : i64, scratch_operands = 0 : i64, tpu.core_type = #tpu.core_type<tc>, window_params = [{transform_indices = @transform_0, window_bounds = array<i64: 1, 16, 64>}, {pipeline_mode = #tpu.pipeline_mode<synchronous>, transform_indices = @transform_1, window_bounds = array<i64: 1, 1, 64>}, {pipeline_mode = #tpu.pipeline_mode<synchronous>, transform_indices = @transform_2, window_bounds = array<i64: 1, 1, 64>}, {transform_indices = @transform_3, window_bounds = array<i64: 1, 16, 64>}, {transform_indices = @transform_4, window_bounds = array<i64: 1, 16, 64>}]} {
    %c0 = arith.constant 0 : index
    %c0_0 = arith.constant 0 : index
    %c0_1 = arith.constant 0 : index
    %0 = vector.load %arg1[%c0, %c0_0, %c0_1] : memref<1x16x64xf32, #tpu.memory_space<vmem>>, vector<1x16x64xf32>
    %cst = arith.constant dense<0.000000e+00> : vector<1x64xf32>
    %1 = vector.multi_reduction <add>, %0, %cst [1] : vector<1x16x64xf32> to vector<1x64xf32>
    %2 = vector.shape_cast %1 : vector<1x64xf32> to vector<1x1x64xf32>
    %cst_2 = arith.constant 1.600000e+01 : f32
    %3 = vector.broadcast %cst_2 : f32 to vector<1x1x64xf32>
    %4 = arith.divf %2, %3 : vector<1x1x64xf32>
    %5 = vector.broadcast %4 : vector<1x1x64xf32> to vector<1x16x64xf32>
    %6 = arith.subf %0, %5 : vector<1x16x64xf32>
    %7 = arith.mulf %6, %6 : vector<1x16x64xf32>
    %cst_3 = arith.constant dense<0.000000e+00> : vector<1x64xf32>
    %8 = vector.multi_reduction <add>, %7, %cst_3 [1] : vector<1x16x64xf32> to vector<1x64xf32>
    %9 = vector.shape_cast %8 : vector<1x64xf32> to vector<1x1x64xf32>
    %cst_4 = arith.constant 1.600000e+01 : f32
    %10 = vector.broadcast %cst_4 : f32 to vector<1x1x64xf32>
    %11 = arith.divf %9, %10 : vector<1x1x64xf32>
    %12 = vector.broadcast %4 : vector<1x1x64xf32> to vector<1x16x64xf32>
    %13 = arith.subf %0, %12 : vector<1x16x64xf32>
    %cst_5 = arith.constant 9.99999974E-6 : f32
    %14 = vector.broadcast %cst_5 : f32 to vector<1x1x64xf32>
    %15 = arith.addf %11, %14 : vector<1x1x64xf32>
    %16 = math.rsqrt %15 : vector<1x1x64xf32>
    %17 = vector.broadcast %16 : vector<1x1x64xf32> to vector<1x16x64xf32>
    %18 = arith.mulf %13, %17 : vector<1x16x64xf32>
    %c0_6 = arith.constant 0 : index
    %c0_7 = arith.constant 0 : index
    %c0_8 = arith.constant 0 : index
    %19 = vector.load %arg2[%c0_6, %c0_7, %c0_8] : memref<1x1x64xf32, #tpu.memory_space<vmem>>, vector<1x1x64xf32>
    %20 = vector.broadcast %19 : vector<1x1x64xf32> to vector<1x16x64xf32>
    %21 = arith.mulf %18, %20 : vector<1x16x64xf32>
    %c0_9 = arith.constant 0 : index
    %c0_10 = arith.constant 0 : index
    %c0_11 = arith.constant 0 : index
    %22 = vector.load %arg3[%c0_9, %c0_10, %c0_11] : memref<1x1x64xf32, #tpu.memory_space<vmem>>, vector<1x1x64xf32>
    %23 = vector.broadcast %22 : vector<1x1x64xf32> to vector<1x16x64xf32>
    %24 = arith.addf %21, %23 : vector<1x16x64xf32>
    %c0_12 = arith.constant 0 : index
    %c0_13 = arith.constant 0 : index
    %c0_14 = arith.constant 0 : index
    %25 = vector.load %arg4[%c0_12, %c0_13, %c0_14] : memref<1x16x64xf32, #tpu.memory_space<vmem>>, vector<1x16x64xf32>
    %26 = arith.addf %24, %25 : vector<1x16x64xf32>
    %c0_15 = arith.constant 0 : index
    %c0_16 = arith.constant 0 : index
    %c0_17 = arith.constant 0 : index
    %27 = vector.load %arg5[%c0_15, %c0_16, %c0_17] : memref<1x16x64xf32, #tpu.memory_space<vmem>>, vector<1x16x64xf32>
    tpu.vector_store %arg5[%c0_15, %c0_16, %c0_17], %26 {strides = array<i32>} : memref<1x16x64xf32, #tpu.memory_space<vmem>>, vector<1x16x64xf32>,
    return
  }
  func.func @transform_0(%arg0: i32) -> (i32, i32, i32) {
    %c0_i32 = arith.constant 0 : i32
    %c0_i32_0 = arith.constant 0 : i32
    %c0_i32_1 = arith.constant 0 : i32
    return %arg0, %c0_i32, %c0_i32_0 : i32, i32, i32
  }
  func.func @transform_1(%arg0: i32) -> (i32, i32, i32) {
    %c0_i32 = arith.constant 0 : i32
    %c0_i32_0 = arith.constant 0 : i32
    %c0_i32_1 = arith.constant 0 : i32
    %c0_i32_2 = arith.constant 0 : i32
    return %c0_i32, %c0_i32_0, %c0_i32_1 : i32, i32, i32
  }
  func.func @transform_2(%arg0: i32) -> (i32, i32, i32) {
    %c0_i32 = arith.constant 0 : i32
    %c0_i32_0 = arith.constant 0 : i32
    %c0_i32_1 = arith.constant 0 : i32
    %c0_i32_2 = arith.constant 0 : i32
    return %c0_i32, %c0_i32_0, %c0_i32_1 : i32, i32, i32
  }
  func.func @transform_3(%arg0: i32) -> (i32, i32, i32) {
    %c0_i32 = arith.constant 0 : i32
    %c0_i32_0 = arith.constant 0 : i32
    %c0_i32_1 = arith.constant 0 : i32
    return %arg0, %c0_i32, %c0_i32_0 : i32, i32, i32
  }
  func.func @transform_4(%arg0: i32) -> (i32, i32, i32) {
    %c0_i32 = arith.constant 0 : i32
    %c0_i32_0 = arith.constant 0 : i32
    %c0_i32_1 = arith.constant 0 : i32
    return %arg0, %c0_i32, %c0_i32_0 : i32, i32, i32
  }
}

module attributes {stable_mosaic.version = 11 : i64} {
  func.func @kernel(%arg0: i32, %arg1: i32, %arg2: i32, %arg3: memref<32x256xbf16, #tpu.memory_space<vmem>>, %arg4: memref<256x128xbf16, #tpu.memory_space<vmem>>, %arg5: memref<32x128xf32, #tpu.memory_space<vmem>>, %arg6: memref<32x128xf32, #tpu.memory_space<vmem>>) attributes {dimension_semantics = [#tpu.dimension_semantics<parallel>, #tpu.dimension_semantics<parallel>, #tpu.dimension_semantics<arbitrary>], iteration_bounds = array<i64: 1, 1, 1>, scalar_prefetch = 0 : i64, scratch_operands = 1 : i64, tpu.core_type = #tpu.core_type<tc>, window_params = [{transform_indices = @transform_0, window_bounds = array<i64: 32, 256>}, {transform_indices = @transform_1, window_bounds = array<i64: 256, 128>}, {transform_indices = @transform_2, window_bounds = array<i64: 32, 128>}]} {
    %c0_i32 = arith.constant 0 : i32
    %0 = arith.cmpi eq, %arg2, %c0_i32 : i32
    %1 = arith.extui %0 : i1 to i32
    %c0_i32_0 = arith.constant 0 : i32
    %2 = arith.cmpi ne, %1, %c0_i32_0 : i32
    scf.if %2 {
      %cst_10 = arith.constant 0.000000e+00 : f32
      %12 = vector.broadcast %cst_10 : f32 to vector<32x128xf32>
      %c0_11 = arith.constant 0 : index
      %c0_12 = arith.constant 0 : index
      %13 = vector.load %arg6[%c0_11, %c0_12] : memref<32x128xf32, #tpu.memory_space<vmem>>, vector<32x128xf32>
      tpu.vector_store %arg6[%c0_11, %c0_12], %12 {strides = array<i32>} : memref<32x128xf32, #tpu.memory_space<vmem>>, vector<32x128xf32>,
    } else {
    }
    %c0 = arith.constant 0 : index
    %c0_1 = arith.constant 0 : index
    %3 = vector.load %arg6[%c0, %c0_1] : memref<32x128xf32, #tpu.memory_space<vmem>>, vector<32x128xf32>
    %c0_2 = arith.constant 0 : index
    %c0_3 = arith.constant 0 : index
    %4 = vector.load %arg3[%c0_2, %c0_3] : memref<32x256xbf16, #tpu.memory_space<vmem>>, vector<32x256xbf16>
    %c0_4 = arith.constant 0 : index
    %c0_5 = arith.constant 0 : index
    %5 = vector.load %arg4[%c0_4, %c0_5] : memref<256x128xbf16, #tpu.memory_space<vmem>>, vector<256x128xbf16>
    %cst = arith.constant dense<0.000000e+00> : vector<32x128xf32>
    %6 = tpu.matmul %4, %5, %cst {dimension_numbers = #tpu.dot_dimension_numbers<[1], [0], [0], [1], [0, 0, 1, 1], [], []>} : vector<32x256xbf16>, vector<256x128xbf16>, vector<32x128xf32> -> vector<32x128xf32>
    %7 = arith.addf %3, %6 : vector<32x128xf32>
    %c0_6 = arith.constant 0 : index
    %c0_7 = arith.constant 0 : index
    %8 = vector.load %arg6[%c0_6, %c0_7] : memref<32x128xf32, #tpu.memory_space<vmem>>, vector<32x128xf32>
    tpu.vector_store %arg6[%c0_6, %c0_7], %7 {strides = array<i32>} : memref<32x128xf32, #tpu.memory_space<vmem>>, vector<32x128xf32>,
    %c0_i32_8 = arith.constant 0 : i32
    %9 = arith.cmpi eq, %arg2, %c0_i32_8 : i32
    %10 = arith.extui %9 : i1 to i32
    %c0_i32_9 = arith.constant 0 : i32
    %11 = arith.cmpi ne, %10, %c0_i32_9 : i32
    scf.if %11 {
      %c0_10 = arith.constant 0 : index
      %c0_11 = arith.constant 0 : index
      %12 = vector.load %arg6[%c0_10, %c0_11] : memref<32x128xf32, #tpu.memory_space<vmem>>, vector<32x128xf32>
      %c0_12 = arith.constant 0 : index
      %c0_13 = arith.constant 0 : index
      %13 = vector.load %arg5[%c0_12, %c0_13] : memref<32x128xf32, #tpu.memory_space<vmem>>, vector<32x128xf32>
      tpu.vector_store %arg5[%c0_12, %c0_13], %12 {strides = array<i32>} : memref<32x128xf32, #tpu.memory_space<vmem>>, vector<32x128xf32>,
    } else {
    }
    return
  }
  func.func @transform_0(%arg0: i32, %arg1: i32, %arg2: i32) -> (i32, i32) {
    %c0_i32 = arith.constant 0 : i32
    return %arg0, %arg2 : i32, i32
  }
  func.func @transform_1(%arg0: i32, %arg1: i32, %arg2: i32) -> (i32, i32) {
    %c0_i32 = arith.constant 0 : i32
    return %arg2, %arg1 : i32, i32
  }
  func.func @transform_2(%arg0: i32, %arg1: i32, %arg2: i32) -> (i32, i32) {
    %c0_i32 = arith.constant 0 : i32
    return %arg0, %arg1 : i32, i32
  }
}

module attributes {stable_mosaic.version = 11 : i64} {
  func.func @kernel(%arg0: i32, %arg1: i32, %arg2: i32, %arg3: memref<128x128xbf16, #tpu.memory_space<vmem>>, %arg4: memref<128x128xbf16, #tpu.memory_space<vmem>>, %arg5: memref<128x128xf32, #tpu.memory_space<vmem>>, %arg6: memref<128x128xf32, #tpu.memory_space<vmem>>) attributes {dimension_semantics = [#tpu.dimension_semantics<parallel>, #tpu.dimension_semantics<parallel>, #tpu.dimension_semantics<arbitrary>], iteration_bounds = array<i64: 1, 1, 1>, scalar_prefetch = 0 : i64, scratch_operands = 1 : i64, tpu.core_type = #tpu.core_type<tc>, window_params = [{transform_indices = @transform_0, window_bounds = array<i64: 128, 128>}, {transform_indices = @transform_1, window_bounds = array<i64: 128, 128>}, {transform_indices = @transform_2, window_bounds = array<i64: 128, 128>}]} {
    %c0_i32 = arith.constant 0 : i32
    %0 = arith.cmpi eq, %arg2, %c0_i32 : i32
    %1 = arith.extui %0 : i1 to i32
    %c0_i32_0 = arith.constant 0 : i32
    %2 = arith.cmpi ne, %1, %c0_i32_0 : i32
    scf.if %2 {
      %cst_10 = arith.constant 0.000000e+00 : f32
      %12 = vector.broadcast %cst_10 : f32 to vector<128x128xf32>
      %c0_11 = arith.constant 0 : index
      %c0_12 = arith.constant 0 : index
      %13 = vector.load %arg6[%c0_11, %c0_12] : memref<128x128xf32, #tpu.memory_space<vmem>>, vector<128x128xf32>
      tpu.vector_store %arg6[%c0_11, %c0_12], %12 {strides = array<i32>} : memref<128x128xf32, #tpu.memory_space<vmem>>, vector<128x128xf32>,
    } else {
    }
    %c0 = arith.constant 0 : index
    %c0_1 = arith.constant 0 : index
    %3 = vector.load %arg6[%c0, %c0_1] : memref<128x128xf32, #tpu.memory_space<vmem>>, vector<128x128xf32>
    %c0_2 = arith.constant 0 : index
    %c0_3 = arith.constant 0 : index
    %4 = vector.load %arg3[%c0_2, %c0_3] : memref<128x128xbf16, #tpu.memory_space<vmem>>, vector<128x128xbf16>
    %c0_4 = arith.constant 0 : index
    %c0_5 = arith.constant 0 : index
    %5 = vector.load %arg4[%c0_4, %c0_5] : memref<128x128xbf16, #tpu.memory_space<vmem>>, vector<128x128xbf16>
    %cst = arith.constant dense<0.000000e+00> : vector<128x128xf32>
    %6 = tpu.matmul %4, %5, %cst {dimension_numbers = #tpu.dot_dimension_numbers<[1], [0], [0], [1], [0, 0, 1, 1], [], []>} : vector<128x128xbf16>, vector<128x128xbf16>, vector<128x128xf32> -> vector<128x128xf32>
    %7 = arith.addf %3, %6 : vector<128x128xf32>
    %c0_6 = arith.constant 0 : index
    %c0_7 = arith.constant 0 : index
    %8 = vector.load %arg6[%c0_6, %c0_7] : memref<128x128xf32, #tpu.memory_space<vmem>>, vector<128x128xf32>
    tpu.vector_store %arg6[%c0_6, %c0_7], %7 {strides = array<i32>} : memref<128x128xf32, #tpu.memory_space<vmem>>, vector<128x128xf32>,
    %c0_i32_8 = arith.constant 0 : i32
    %9 = arith.cmpi eq, %arg2, %c0_i32_8 : i32
    %10 = arith.extui %9 : i1 to i32
    %c0_i32_9 = arith.constant 0 : i32
    %11 = arith.cmpi ne, %10, %c0_i32_9 : i32
    scf.if %11 {
      %c0_10 = arith.constant 0 : index
      %c0_11 = arith.constant 0 : index
      %12 = vector.load %arg6[%c0_10, %c0_11] : memref<128x128xf32, #tpu.memory_space<vmem>>, vector<128x128xf32>
      %c0_12 = arith.constant 0 : index
      %c0_13 = arith.constant 0 : index
      %13 = vector.load %arg5[%c0_12, %c0_13] : memref<128x128xf32, #tpu.memory_space<vmem>>, vector<128x128xf32>
      tpu.vector_store %arg5[%c0_12, %c0_13], %12 {strides = array<i32>} : memref<128x128xf32, #tpu.memory_space<vmem>>, vector<128x128xf32>,
    } else {
    }
    return
  }
  func.func @transform_0(%arg0: i32, %arg1: i32, %arg2: i32) -> (i32, i32) {
    %c0_i32 = arith.constant 0 : i32
    return %arg0, %arg2 : i32, i32
  }
  func.func @transform_1(%arg0: i32, %arg1: i32, %arg2: i32) -> (i32, i32) {
    %c0_i32 = arith.constant 0 : i32
    return %arg2, %arg1 : i32, i32
  }
  func.func @transform_2(%arg0: i32, %arg1: i32, %arg2: i32) -> (i32, i32) {
    %c0_i32 = arith.constant 0 : i32
    return %arg0, %arg1 : i32, i32
  }
}

module attributes {stable_mosaic.version = 11 : i64} {
  func.func @kernel(%arg0: i32, %arg1: i32, %arg2: i32, %arg3: memref<256x896xbf16, #tpu.memory_space<vmem>>, %arg4: memref<896x128xbf16, #tpu.memory_space<vmem>>, %arg5: memref<256x128xf32, #tpu.memory_space<vmem>>, %arg6: memref<256x128xf32, #tpu.memory_space<vmem>>) attributes {dimension_semantics = [#tpu.dimension_semantics<parallel>, #tpu.dimension_semantics<parallel>, #tpu.dimension_semantics<arbitrary>], iteration_bounds = array<i64: 2, 1, 1>, scalar_prefetch = 0 : i64, scratch_operands = 1 : i64, tpu.core_type = #tpu.core_type<tc>, window_params = [{transform_indices = @transform_0, window_bounds = array<i64: 256, 896>}, {transform_indices = @transform_1, window_bounds = array<i64: 896, 128>}, {transform_indices = @transform_2, window_bounds = array<i64: 256, 128>}]} {
    %c0_i32 = arith.constant 0 : i32
    %0 = arith.cmpi eq, %arg2, %c0_i32 : i32
    %1 = arith.extui %0 : i1 to i32
    %c0_i32_0 = arith.constant 0 : i32
    %2 = arith.cmpi ne, %1, %c0_i32_0 : i32
    scf.if %2 {
      %cst_10 = arith.constant 0.000000e+00 : f32
      %12 = vector.broadcast %cst_10 : f32 to vector<256x128xf32>
      %c0_11 = arith.constant 0 : index
      %c0_12 = arith.constant 0 : index
      %13 = vector.load %arg6[%c0_11, %c0_12] : memref<256x128xf32, #tpu.memory_space<vmem>>, vector<256x128xf32>
      tpu.vector_store %arg6[%c0_11, %c0_12], %12 {strides = array<i32>} : memref<256x128xf32, #tpu.memory_space<vmem>>, vector<256x128xf32>,
    } else {
    }
    %c0 = arith.constant 0 : index
    %c0_1 = arith.constant 0 : index
    %3 = vector.load %arg6[%c0, %c0_1] : memref<256x128xf32, #tpu.memory_space<vmem>>, vector<256x128xf32>
    %c0_2 = arith.constant 0 : index
    %c0_3 = arith.constant 0 : index
    %4 = vector.load %arg3[%c0_2, %c0_3] : memref<256x896xbf16, #tpu.memory_space<vmem>>, vector<256x896xbf16>
    %c0_4 = arith.constant 0 : index
    %c0_5 = arith.constant 0 : index
    %5 = vector.load %arg4[%c0_4, %c0_5] : memref<896x128xbf16, #tpu.memory_space<vmem>>, vector<896x128xbf16>
    %cst = arith.constant dense<0.000000e+00> : vector<256x128xf32>
    %6 = tpu.matmul %4, %5, %cst {dimension_numbers = #tpu.dot_dimension_numbers<[1], [0], [0], [1], [0, 0, 1, 1], [], []>} : vector<256x896xbf16>, vector<896x128xbf16>, vector<256x128xf32> -> vector<256x128xf32>
    %7 = arith.addf %3, %6 : vector<256x128xf32>
    %c0_6 = arith.constant 0 : index
    %c0_7 = arith.constant 0 : index
    %8 = vector.load %arg6[%c0_6, %c0_7] : memref<256x128xf32, #tpu.memory_space<vmem>>, vector<256x128xf32>
    tpu.vector_store %arg6[%c0_6, %c0_7], %7 {strides = array<i32>} : memref<256x128xf32, #tpu.memory_space<vmem>>, vector<256x128xf32>,
    %c0_i32_8 = arith.constant 0 : i32
    %9 = arith.cmpi eq, %arg2, %c0_i32_8 : i32
    %10 = arith.extui %9 : i1 to i32
    %c0_i32_9 = arith.constant 0 : i32
    %11 = arith.cmpi ne, %10, %c0_i32_9 : i32
    scf.if %11 {
      %c0_10 = arith.constant 0 : index
      %c0_11 = arith.constant 0 : index
      %12 = vector.load %arg6[%c0_10, %c0_11] : memref<256x128xf32, #tpu.memory_space<vmem>>, vector<256x128xf32>
      %13 = math.tanh %12 : vector<256x128xf32>
      %c0_12 = arith.constant 0 : index
      %c0_13 = arith.constant 0 : index
      %14 = vector.load %arg5[%c0_12, %c0_13] : memref<256x128xf32, #tpu.memory_space<vmem>>, vector<256x128xf32>
      tpu.vector_store %arg5[%c0_12, %c0_13], %13 {strides = array<i32>} : memref<256x128xf32, #tpu.memory_space<vmem>>, vector<256x128xf32>,
    } else {
    }
    return
  }
  func.func @transform_0(%arg0: i32, %arg1: i32, %arg2: i32) -> (i32, i32) {
    %c0_i32 = arith.constant 0 : i32
    return %arg0, %arg2 : i32, i32
  }
  func.func @transform_1(%arg0: i32, %arg1: i32, %arg2: i32) -> (i32, i32) {
    %c0_i32 = arith.constant 0 : i32
    return %arg2, %arg1 : i32, i32
  }
  func.func @transform_2(%arg0: i32, %arg1: i32, %arg2: i32) -> (i32, i32) {
    %c0_i32 = arith.constant 0 : i32
    return %arg0, %arg1 : i32, i32
  }
}

</mosaic_0001>

<llo_original>
// kernel: generator_forward.26
$region0: #{generator_forward.26}
  #allocation0 [shape = 'u32[]', space=smem, size = 0x4, offset = 0x4, fixed_abs, tag = 'smem constant byte address 0x4 - core index']
  #allocation1 [shape = 'u32[144,128]{1,0:T(1,128)}', space=vmem, size = 0x12000, scoped, tag = 'internal scratch']
  %s0 = inlined_call_operand.vmem [shape: f32[2,256,16], index: 0, kind: input, shape index: {}]
  %s1 = inlined_call_operand.vmem [shape: f32[1,1,16], index: 1, kind: input, shape index: {}]
  %s2 = inlined_call_operand.vmem [shape: f32[1,1,16], index: 2, kind: input, shape index: {}]
  %s3 = inlined_call_operand.vmem [shape: f32[2,256,16], index: 3, kind: output, shape index: {}]
  %s4 = sld [smem:[#allocation0]]
  $region45: #{generator_forward.26} parent=0
    _
  %s6 = ssub.s32 1, %s4
  %s7 = scalar_select 0, %s6, %s4
  loop: start=0, step=1, limit=4
  $region2: #{generator_forward.26} parent=0 // loop_pre_header
    _
  $region3: #{generator_forward.26} parent=0 // loop_header
    %s9 = sphi 0, %s13
    %p10 = scmp.ge.s32.totalorder %s9, 4
    %s19 = sphi 0, %s21
    %s22 = sphi 0, %s19
    %s23 = sphi 0, %s22
    %s39 = sphi 0, %s23
    %s43 = sphi 0, %s43
    %s45 = sphi 0, %s43
    %s46 = sphi 0, %s45
    %s60 = sphi 0, %s46
    %s64 = sphi 0, %s64
    %s66 = sphi 0, %s64
    %s67 = sphi 0, %s66
    %s81 = sphi 0, %s67
    %s87 = sphi 0, %s89
    %s90 = sphi 0, %s87
    %s91 = sphi 0, %s90
    %s107 = sphi 0, %s91
  $region4: #{generator_forward.26} parent=0 // loop_header_branch
    %12 = sbr.rel (%p10) target = $region8
  $region5: #{generator_forward.26} parent=0 // loop_body
    %s14 = ssub.s32 %s9, 1
    %s15 = ssub.s32 %s9, 2
    %s16 = sadd.s32 %s9, 1
    %s17 = ssub.s32 %s9, %s16
    %p18 = scmp.eq.s32.totalorder %s17, 0
    %s20 = sadd.s32 %s19, 1
    %s21 = scalar_select %p18, %s19, %s20
    %p24 = pneg %p18
    %p25 = scmp.eq.s32.totalorder %s9, 1
    %p26 = por %p24, %p25
    %p27 = scmp.ne.s32.totalorder %s19, %s22
    %p28 = scmp.eq.s32.totalorder %s9, 0
    %p29 = por %p27, %p28
    %p30 = scmp.ne.s32.totalorder %s19, %s22
    %p31 = scmp.eq.s32.totalorder %s14, 1
    %p32 = por %p30, %p31
    %p33 = scmp.ne.s32.totalorder %s22, %s23
    %p34 = scmp.eq.s32.totalorder %s14, 0
    %p35 = por %p33, %p34
    %p36 = scmp.ne.s32.totalorder %s22, %s23
    %p37 = scmp.eq.s32.totalorder %s15, 1
    %p38 = por %p36, %p37
    %p40 = scmp.ne.s32.totalorder %s23, %s39
    %p41 = scmp.eq.s32.totalorder %s15, 0
    %p42 = por %p40, %p41
    %s44 = sadd.s32 %s43, 1
    %p47 = scmp.eq.s32.totalorder %s9, 1
    %p48 = scmp.ne.s32.totalorder %s43, %s45
    %p49 = scmp.eq.s32.totalorder %s9, 0
    %p50 = por %p48, %p49
    %p51 = scmp.ne.s32.totalorder %s43, %s45
    %p52 = scmp.eq.s32.totalorder %s14, 1
    %p53 = por %p51, %p52
    %p54 = scmp.ne.s32.totalorder %s45, %s46
    %p55 = scmp.eq.s32.totalorder %s14, 0
    %p56 = por %p54, %p55
    %p57 = scmp.ne.s32.totalorder %s45, %s46
    %p58 = scmp.eq.s32.totalorder %s15, 1
    %p59 = por %p57, %p58
    %p61 = scmp.ne.s32.totalorder %s46, %s60
    %p62 = scmp.eq.s32.totalorder %s15, 0
    %p63 = por %p61, %p62
    %s65 = sadd.s32 %s64, 1
    %p68 = scmp.eq.s32.totalorder %s9, 1
    %p69 = scmp.ne.s32.totalorder %s64, %s66
    %p70 = scmp.eq.s32.totalorder %s9, 0
    %p71 = por %p69, %p70
    %p72 = scmp.ne.s32.totalorder %s64, %s66
    %p73 = scmp.eq.s32.totalorder %s14, 1
    %p74 = por %p72, %p73
    %p75 = scmp.ne.s32.totalorder %s66, %s67
    %p76 = scmp.eq.s32.totalorder %s14, 0
    %p77 = por %p75, %p76
    %p78 = scmp.ne.s32.totalorder %s66, %s67
    %p79 = scmp.eq.s32.totalorder %s15, 1
    %p80 = por %p78, %p79
    %p82 = scmp.ne.s32.totalorder %s67, %s81
    %p83 = scmp.eq.s32.totalorder %s15, 0
    %p84 = por %p82, %p83
    %s85 = ssub.s32 %s9, %s16
    %p86 = scmp.eq.s32.totalorder %s85, 0
    %s88 = sadd.s32 %s87, 1
    %s89 = scalar_select %p86, %s87, %s88
    %p92 = pneg %p86
    %p93 = scmp.eq.s32.totalorder %s9, 1
    %p94 = por %p92, %p93
    %p95 = scmp.ne.s32.totalorder %s87, %s90
    %p96 = scmp.eq.s32.totalorder %s9, 0
    %p97 = por %p95, %p96
    %p98 = scmp.ne.s32.totalorder %s87, %s90
    %p99 = scmp.eq.s32.totalorder %s14, 1
    %p100 = por %p98, %p99
    %p101 = scmp.ne.s32.totalorder %s90, %s91
    %p102 = scmp.eq.s32.totalorder %s14, 0
    %p103 = por %p101, %p102
    %p104 = scmp.ne.s32.totalorder %s90, %s91
    %p105 = scmp.eq.s32.totalorder %s15, 1
    %p106 = por %p104, %p105
    %p108 = scmp.ne.s32.totalorder %s91, %s107
    %p109 = scmp.eq.s32.totalorder %s15, 0
    %p110 = por %p108, %p109
    %p111 = scmp.le.s32.totalorder 1, %s9
    %p112 = scmp.lt.s32.totalorder %s9, 3
    %p113 = pnand %p111, %p112
    %p114 = pneg %p113
    // Predicated region
    $region9: #{generator_forward.26} parent=5 // pred_check
      _
    $region10: #{generator_forward.26} parent=5 // pred_check_branch
      %116 = sbr.rel (%p113) target = $region12
    $region11: #{generator_forward.26} parent=5 // pred_region
      %s117 = ssub.s32 %s9, 1
      // Predicated region
      $region13: #{generator_forward.26} parent=11 // pred_check
        %p118 = pneg %p56
      $region14: #{generator_forward.26} parent=11 // pred_check_branch
        %120 = sbr.rel (%p118) target = $region16
      $region15: #{generator_forward.26} parent=11 // pred_region
        _
      $region16: #{generator_forward.26} parent=11 // pred_fallthru
        _
      // Predicated region
      $region17: #{generator_forward.26} parent=11 // pred_check
        %p121 = pneg %p77
      $region18: #{generator_forward.26} parent=11 // pred_check_branch
        %123 = sbr.rel (%p121) target = $region20
      $region19: #{generator_forward.26} parent=11 // pred_region
        _
      $region20: #{generator_forward.26} parent=11 // pred_fallthru
        _
    $region12: #{generator_forward.26} parent=5 // pred_fallthru
      _
    %p124 = scmp.lt.s32.totalorder %s9, 2
    // Predicated region
    $region21: #{generator_forward.26} parent=5 // pred_check
      %p125 = pneg %p124
    $region22: #{generator_forward.26} parent=5 // pred_check_branch
      %127 = sbr.rel (%p125) target = $region24
    $region23: #{generator_forward.26} parent=5 // pred_region
      // Predicated region
      $region25: #{generator_forward.26} parent=23 // pred_check
        %p128 = pneg %p29
      $region26: #{generator_forward.26} parent=23 // pred_check_branch
        %130 = sbr.rel (%p128) target = $region28
      $region27: #{generator_forward.26} parent=23 // pred_region
        %p131 = scmp.lt.s32.totalorder %s9, 1
        %s132 = scalar_select %p131, %s9, 1
        %s133 = smul.addr %s132, 32
        %s134 = smul.addr %s133, 8
        %s135 = scalar_lea.vmem %s0, %s134
      $region28: #{generator_forward.26} parent=23 // pred_fallthru
        _
    $region24: #{generator_forward.26} parent=5 // pred_fallthru
      _
    %p136 = scmp.le.s32.totalorder 1, %s9
    %p137 = scmp.lt.s32.totalorder %s9, 3
    %p138 = pnand %p136, %p137
    %p139 = pneg %p138
    // Predicated region
    $region29: #{generator_forward.26} parent=5 // pred_check
      _
    $region30: #{generator_forward.26} parent=5 // pred_check_branch
      %141 = sbr.rel (%p138) target = $region32
    $region31: #{generator_forward.26} parent=5 // pred_region
      %s142 = ssub.s32 %s9, 1
      %p143 = scmp.lt.s32.totalorder %s14, 1
      %s144 = scalar_select %p143, %s14, 1
      %s145 = smul.addr %s144, 32
      %s146 = smul.addr %s145, 8
      %s147 = scalar_lea.vmem %s0, %s146
      %p148 = pneg %p35
      %p149 = pneg %p32
      %p150 = pneg %p56
      %p151 = pneg %p53
      %p152 = pneg %p77
      %p153 = pneg %p74
      %p154 = pneg %p103
      %p155 = pneg %p100
      %p156 = scmp.lt.s32.totalorder %s14, 1
      %s157 = scalar_select %p156, %s14, 1
      %s158 = smul.addr %s157, 32
      %s159 = smul.addr %s158, 8
      %s160 = scalar_lea.vmem %s3, %s159
      %p161 = scmp.lt.s32.totalorder %s14, 1
      %s162 = scalar_select %p161, %s14, 1
      %s163 = smul.addr %s162, 32
      %s164 = smul.addr %s163, 8
      %s165 = scalar_lea.vmem %s0, %s164
      %p166 = scmp.lt.s32.totalorder %s14, 1
      %s167 = scalar_select %p166, %s14, 1
      %s168 = smul.addr %s167, 32
      %s169 = smul.addr %s168, 8
      %s170 = scalar_lea.vmem %s3, %s169
      %v171 = vld [vmem:[%s165] sm:$0xff]
      %v172 = vld [vmem:[%s165 + $0x8] sm:$0xff]
      %v173 = vld [vmem:[%s165 + $0x10] sm:$0xff]
      %v174 = vld [vmem:[%s165 + $0x18] sm:$0xff]
      %v175 = vld [vmem:[%s165 + $0x20] sm:$0xff]
      %v176 = vld [vmem:[%s165 + $0x28] sm:$0xff]
      %v177 = vld [vmem:[%s165 + $0x30] sm:$0xff]
      %v178 = vld [vmem:[%s165 + $0x38] sm:$0xff]
      %v179 = vld [vmem:[%s165 + $0x40] sm:$0xff]
      %v180 = vld [vmem:[%s165 + $0x48] sm:$0xff]
      %v181 = vld [vmem:[%s165 + $0x50] sm:$0xff]
      %v182 = vld [vmem:[%s165 + $0x58] sm:$0xff]
      %v183 = vld [vmem:[%s165 + $0x60] sm:$0xff]
      %v184 = vld [vmem:[%s165 + $0x68] sm:$0xff]
      %v185 = vld [vmem:[%s165 + $0x70] sm:$0xff]
      %v186 = vld [vmem:[%s165 + $0x78] sm:$0xff]
      %v187 = vld [vmem:[%s165 + $0x80] sm:$0xff]
      %v188 = vld [vmem:[%s165 + $0x88] sm:$0xff]
      %v189 = vld [vmem:[%s165 + $0x90] sm:$0xff]
      %v190 = vld [vmem:[%s165 + $0x98] sm:$0xff]
      %v191 = vld [vmem:[%s165 + $0xa0] sm:$0xff]
      %v192 = vld [vmem:[%s165 + $0xa8] sm:$0xff]
      %v193 = vld [vmem:[%s165 + $0xb0] sm:$0xff]
      %v194 = vld [vmem:[%s165 + $0xb8] sm:$0xff]
      %v195 = vld [vmem:[%s165 + $0xc0] sm:$0xff]
      %v196 = vld [vmem:[%s165 + $0xc8] sm:$0xff]
      %v197 = vld [vmem:[%s165 + $0xd0] sm:$0xff]
      %v198 = vld [vmem:[%s165 + $0xd8] sm:$0xff]
      %v199 = vld [vmem:[%s165 + $0xe0] sm:$0xff]
      %v200 = vld [vmem:[%s165 + $0xe8] sm:$0xff]
      %v201 = vld [vmem:[%s165 + $0xf0] sm:$0xff]
      %v202 = vld [vmem:[%s165 + $0xf8] sm:$0xff]
      %vm203 = vcmask 130048
      %v204 = vsel %vm203, %v171, 0.0
      %v205 = vsel %vm203, %v172, 0.0
      %v206 = vadd.f32 %v204, %v205
      %v207 = vsel %vm203, %v173, 0.0
      %v208 = vadd.f32 %v206, %v207
      %v209 = vsel %vm203, %v174, 0.0
      %v210 = vadd.f32 %v208, %v209
      %v211 = vsel %vm203, %v175, 0.0
      %v212 = vadd.f32 %v210, %v211
      %v213 = vsel %vm203, %v176, 0.0
      %v214 = vadd.f32 %v212, %v213
      %v215 = vsel %vm203, %v177, 0.0
      %v216 = vadd.f32 %v214, %v215
      %v217 = vsel %vm203, %v178, 0.0
      %v218 = vadd.f32 %v216, %v217
      %v219 = vsel %vm203, %v179, 0.0
      %v220 = vadd.f32 %v218, %v219
      %v221 = vsel %vm203, %v180, 0.0
      %v222 = vadd.f32 %v220, %v221
      %v223 = vsel %vm203, %v181, 0.0
      %v224 = vadd.f32 %v222, %v223
      %v225 = vsel %vm203, %v182, 0.0
      %v226 = vadd.f32 %v224, %v225
      %v227 = vsel %vm203, %v183, 0.0
      %v228 = vadd.f32 %v226, %v227
      %v229 = vsel %vm203, %v184, 0.0
      %v230 = vadd.f32 %v228, %v229
      %v231 = vsel %vm203, %v185, 0.0
      %v232 = vadd.f32 %v230, %v231
      %v233 = vsel %vm203, %v186, 0.0
      %v234 = vadd.f32 %v232, %v233
      %v235 = vsel %vm203, %v187, 0.0
      %v236 = vadd.f32 %v234, %v235
      %v237 = vsel %vm203, %v188, 0.0
      %v238 = vadd.f32 %v236, %v237
      %v239 = vsel %vm203, %v189, 0.0
      %v240 = vadd.f32 %v238, %v239
      %v241 = vsel %vm203, %v190, 0.0
      %v242 = vadd.f32 %v240, %v241
      %v243 = vsel %vm203, %v191, 0.0
      %v244 = vadd.f32 %v242, %v243
      %v245 = vsel %vm203, %v192, 0.0
      %v246 = vadd.f32 %v244, %v245
      %v247 = vsel %vm203, %v193, 0.0
      %v248 = vadd.f32 %v246, %v247
      %v249 = vsel %vm203, %v194, 0.0
      %v250 = vadd.f32 %v248, %v249
      %v251 = vsel %vm203, %v195, 0.0
      %v252 = vadd.f32 %v250, %v251
      %v253 = vsel %vm203, %v196, 0.0
      %v254 = vadd.f32 %v252, %v253
      %v255 = vsel %vm203, %v197, 0.0
      %v256 = vadd.f32 %v254, %v255
      %v257 = vsel %vm203, %v198, 0.0
      %v258 = vadd.f32 %v256, %v257
      %v259 = vsel %vm203, %v199, 0.0
      %v260 = vadd.f32 %v258, %v259
      %v261 = vsel %vm203, %v200, 0.0
      %v262 = vadd.f32 %v260, %v261
      %v263 = vsel %vm203, %v201, 0.0
      %v264 = vadd.f32 %v262, %v263
      %v265 = vsel %vm203, %v202, 0.0
      %v266 = vadd.f32 %v264, %v265
      %v267 = vrot.slane %v266, 4
      %v268 = vadd.f32 %v266, %v267
      %v269 = vrot.slane %v268, 2
      %v270 = vadd.f32 %v268, %v269
      %v271 = vrot.slane %v270, 1
      %v272 = vadd.f32 %v270, %v271
      %v273 = vrcp.pop 256.0
      %v274 = vmul.f32 %v272, %v273
      %v275 = vsub.f32 %v171, %v274
      %v276 = vsub.f32 %v172, %v274
      %v277 = vsub.f32 %v173, %v274
      %v278 = vsub.f32 %v174, %v274
      %v279 = vsub.f32 %v175, %v274
      %v280 = vsub.f32 %v176, %v274
      %v281 = vsub.f32 %v177, %v274
      %v282 = vsub.f32 %v178, %v274
      %v283 = vsub.f32 %v179, %v274
      %v284 = vsub.f32 %v180, %v274
      %v285 = vsub.f32 %v181, %v274
      %v286 = vsub.f32 %v182, %v274
      %v287 = vsub.f32 %v183, %v274
      %v288 = vsub.f32 %v184, %v274
      %v289 = vsub.f32 %v185, %v274
      %v290 = vsub.f32 %v186, %v274
      %v291 = vsub.f32 %v187, %v274
      %v292 = vsub.f32 %v188, %v274
      %v293 = vsub.f32 %v189, %v274
      %v294 = vsub.f32 %v190, %v274
      %v295 = vsub.f32 %v191, %v274
      %v296 = vsub.f32 %v192, %v274
      %v297 = vsub.f32 %v193, %v274
      %v298 = vsub.f32 %v194, %v274
      %v299 = vsub.f32 %v195, %v274
      %v300 = vsub.f32 %v196, %v274
      %v301 = vsub.f32 %v197, %v274
      %v302 = vsub.f32 %v198, %v274
      %v303 = vsub.f32 %v199, %v274
      %v304 = vsub.f32 %v200, %v274
      %v305 = vsub.f32 %v201, %v274
      %v306 = vsub.f32 %v202, %v274
      %v307 = vmul.f32 %v275, %v275
      %v308 = vmul.f32 %v276, %v276
      %v309 = vmul.f32 %v277, %v277
      %v310 = vmul.f32 %v278, %v278
      %v311 = vmul.f32 %v279, %v279
      %v312 = vmul.f32 %v280, %v280
      %v313 = vmul.f32 %v281, %v281
      %v314 = vmul.f32 %v282, %v282
      %v315 = vmul.f32 %v283, %v283
      %v316 = vmul.f32 %v284, %v284
      %v317 = vmul.f32 %v285, %v285
      %v318 = vmul.f32 %v286, %v286
      %v319 = vmul.f32 %v287, %v287
      %v320 = vmul.f32 %v288, %v288
      %v321 = vmul.f32 %v289, %v289
      %v322 = vmul.f32 %v290, %v290
      %v323 = vmul.f32 %v291, %v291
      %v324 = vmul.f32 %v292, %v292
      %v325 = vmul.f32 %v293, %v293
      %v326 = vmul.f32 %v294, %v294
      %v327 = vmul.f32 %v295, %v295
      %v328 = vmul.f32 %v296, %v296
      %v329 = vmul.f32 %v297, %v297
      %v330 = vmul.f32 %v298, %v298
      %v331 = vmul.f32 %v299, %v299
      %v332 = vmul.f32 %v300, %v300
      %v333 = vmul.f32 %v301, %v301
      %v334 = vmul.f32 %v302, %v302
      %v335 = vmul.f32 %v303, %v303
      %v336 = vmul.f32 %v304, %v304
      %v337 = vmul.f32 %v305, %v305
      %v338 = vmul.f32 %v306, %v306
      %v339 = vsel %vm203, %v307, 0.0
      %v340 = vsel %vm203, %v308, 0.0
      %v341 = vadd.f32 %v339, %v340
      %v342 = vsel %vm203, %v309, 0.0
      %v343 = vadd.f32 %v341, %v342
      %v344 = vsel %vm203, %v310, 0.0
      %v345 = vadd.f32 %v343, %v344
      %v346 = vsel %vm203, %v311, 0.0
      %v347 = vadd.f32 %v345, %v346
      %v348 = vsel %vm203, %v312, 0.0
      %v349 = vadd.f32 %v347, %v348
      %v350 = vsel %vm203, %v313, 0.0
      %v351 = vadd.f32 %v349, %v350
      %v352 = vsel %vm203, %v314, 0.0
      %v353 = vadd.f32 %v351, %v352
      %v354 = vsel %vm203, %v315, 0.0
      %v355 = vadd.f32 %v353, %v354
      %v356 = vsel %vm203, %v316, 0.0
      %v357 = vadd.f32 %v355, %v356
      %v358 = vsel %vm203, %v317, 0.0
      %v359 = vadd.f32 %v357, %v358
      %v360 = vsel %vm203, %v318, 0.0
      %v361 = vadd.f32 %v359, %v360
      %v362 = vsel %vm203, %v319, 0.0
      %v363 = vadd.f32 %v361, %v362
      %v364 = vsel %vm203, %v320, 0.0
      %v365 = vadd.f32 %v363, %v364
      %v366 = vsel %vm203, %v321, 0.0
      %v367 = vadd.f32 %v365, %v366
      %v368 = vsel %vm203, %v322, 0.0
      %v369 = vadd.f32 %v367, %v368
      %v370 = vsel %vm203, %v323, 0.0
      %v371 = vadd.f32 %v369, %v370
      %v372 = vsel %vm203, %v324, 0.0
      %v373 = vadd.f32 %v371, %v372
      %v374 = vsel %vm203, %v325, 0.0
      %v375 = vadd.f32 %v373, %v374
      %v376 = vsel %vm203, %v326, 0.0
      %v377 = vadd.f32 %v375, %v376
      %v378 = vsel %vm203, %v327, 0.0
      %v379 = vadd.f32 %v377, %v378
      %v380 = vsel %vm203, %v328, 0.0
      %v381 = vadd.f32 %v379, %v380
      %v382 = vsel %vm203, %v329, 0.0
      %v383 = vadd.f32 %v381, %v382
      %v384 = vsel %vm203, %v330, 0.0
      %v385 = vadd.f32 %v383, %v384
      %v386 = vsel %vm203, %v331, 0.0
      %v387 = vadd.f32 %v385, %v386
      %v388 = vsel %vm203, %v332, 0.0
      %v389 = vadd.f32 %v387, %v388
      %v390 = vsel %vm203, %v333, 0.0
      %v391 = vadd.f32 %v389, %v390
      %v392 = vsel %vm203, %v334, 0.0
      %v393 = vadd.f32 %v391, %v392
      %v394 = vsel %vm203, %v335, 0.0
      %v395 = vadd.f32 %v393, %v394
      %v396 = vsel %vm203, %v336, 0.0
      %v397 = vadd.f32 %v395, %v396
      %v398 = vsel %vm203, %v337, 0.0
      %v399 = vadd.f32 %v397, %v398
      %v400 = vsel %vm203, %v338, 0.0
      %v401 = vadd.f32 %v399, %v400
      %v402 = vrot.slane %v401, 4
      %v403 = vadd.f32 %v401, %v402
      %v404 = vrot.slane %v403, 2
      %v405 = vadd.f32 %v403, %v404
      %v406 = vrot.slane %v405, 1
      %v407 = vadd.f32 %v405, %v406
      %v408 = vmul.f32 %v407, %v273
      %v409 = vadd.f32 %v408, 1e-05
      %v410 = vrsqrt.pop %v409
      %v411 = vmul.f32 %v275, %v410
      %v412 = vmul.f32 %v276, %v410
      %v413 = vmul.f32 %v277, %v410
      %v414 = vmul.f32 %v278, %v410
      %v415 = vmul.f32 %v279, %v410
      %v416 = vmul.f32 %v280, %v410
      %v417 = vmul.f32 %v281, %v410
      %v418 = vmul.f32 %v282, %v410
      %v419 = vmul.f32 %v283, %v410
      %v420 = vmul.f32 %v284, %v410
      %v421 = vmul.f32 %v285, %v410
      %v422 = vmul.f32 %v286, %v410
      %v423 = vmul.f32 %v287, %v410
      %v424 = vmul.f32 %v288, %v410
      %v425 = vmul.f32 %v289, %v410
      %v426 = vmul.f32 %v290, %v410
      %v427 = vmul.f32 %v291, %v410
      %v428 = vmul.f32 %v292, %v410
      %v429 = vmul.f32 %v293, %v410
      %v430 = vmul.f32 %v294, %v410
      %v431 = vmul.f32 %v295, %v410
      %v432 = vmul.f32 %v296, %v410
      %v433 = vmul.f32 %v297, %v410
      %v434 = vmul.f32 %v298, %v410
      %v435 = vmul.f32 %v299, %v410
      %v436 = vmul.f32 %v300, %v410
      %v437 = vmul.f32 %v301, %v410
      %v438 = vmul.f32 %v302, %v410
      %v439 = vmul.f32 %v303, %v410
      %v440 = vmul.f32 %v304, %v410
      %v441 = vmul.f32 %v305, %v410
      %v442 = vmul.f32 %v306, %v410
      %v443 = vld [vmem:[%s1] sm:$0x1]
      %v445 = vlaneseq
      %v446 = vshrl.u32 %v445, 7
      %v447 = vsub.s32 0, %v446
      %v448 = vrot.slane %v443, %v447
      %v450 = vmul.f32 %v411, %v448
      %v451 = vmul.f32 %v412, %v448
      %v452 = vmul.f32 %v413, %v448
      %v453 = vmul.f32 %v414, %v448
      %v454 = vmul.f32 %v415, %v448
      %v455 = vmul.f32 %v416, %v448
      %v456 = vmul.f32 %v417, %v448
      %v457 = vmul.f32 %v418, %v448
      %v458 = vmul.f32 %v419, %v448
      %v459 = vmul.f32 %v420, %v448
      %v460 = vmul.f32 %v421, %v448
      %v461 = vmul.f32 %v422, %v448
      %v462 = vmul.f32 %v423, %v448
      %v463 = vmul.f32 %v424, %v448
      %v464 = vmul.f32 %v425, %v448
      %v465 = vmul.f32 %v426, %v448
      %v466 = vmul.f32 %v427, %v448
      %v467 = vmul.f32 %v428, %v448
      %v468 = vmul.f32 %v429, %v448
      %v469 = vmul.f32 %v430, %v448
      %v470 = vmul.f32 %v431, %v448
      %v471 = vmul.f32 %v432, %v448
      %v472 = vmul.f32 %v433, %v448
      %v473 = vmul.f32 %v434, %v448
      %v474 = vmul.f32 %v435, %v448
      %v475 = vmul.f32 %v436, %v448
      %v476 = vmul.f32 %v437, %v448
      %v477 = vmul.f32 %v438, %v448
      %v478 = vmul.f32 %v439, %v448
      %v479 = vmul.f32 %v440, %v448
      %v480 = vmul.f32 %v441, %v448
      %v481 = vmul.f32 %v442, %v448
      %v482 = vld [vmem:[%s2] sm:$0x1]
      %v484 = vlaneseq
      %v485 = vshrl.u32 %v484, 7
      %v486 = vsub.s32 0, %v485
      %v487 = vrot.slane %v482, %v486
      %v489 = vadd.f32 %v450, %v487
      %v490 = vadd.f32 %v451, %v487
      %v491 = vadd.f32 %v452, %v487
      %v492 = vadd.f32 %v453, %v487
      %v493 = vadd.f32 %v454, %v487
      %v494 = vadd.f32 %v455, %v487
      %v495 = vadd.f32 %v456, %v487
      %v496 = vadd.f32 %v457, %v487
      %v497 = vadd.f32 %v458, %v487
      %v498 = vadd.f32 %v459, %v487
      %v499 = vadd.f32 %v460, %v487
      %v500 = vadd.f32 %v461, %v487
      %v501 = vadd.f32 %v462, %v487
      %v502 = vadd.f32 %v463, %v487
      %v503 = vadd.f32 %v464, %v487
      %v504 = vadd.f32 %v465, %v487
      %v505 = vadd.f32 %v466, %v487
      %v506 = vadd.f32 %v467, %v487
      %v507 = vadd.f32 %v468, %v487
      %v508 = vadd.f32 %v469, %v487
      %v509 = vadd.f32 %v470, %v487
      %v510 = vadd.f32 %v471, %v487
      %v511 = vadd.f32 %v472, %v487
      %v512 = vadd.f32 %v473, %v487
      %v513 = vadd.f32 %v474, %v487
      %v514 = vadd.f32 %v475, %v487
      %v515 = vadd.f32 %v476, %v487
      %v516 = vadd.f32 %v477, %v487
      %v517 = vadd.f32 %v478, %v487
      %v518 = vadd.f32 %v479, %v487
      %v519 = vadd.f32 %v480, %v487
      %v520 = vadd.f32 %v481, %v487
      %v521 = vmax.f32 %v489, 0.0
      %v522 = vmax.f32 %v490, 0.0
      %v523 = vmax.f32 %v491, 0.0
      %v524 = vmax.f32 %v492, 0.0
      %v525 = vmax.f32 %v493, 0.0
      %v526 = vmax.f32 %v494, 0.0
      %v527 = vmax.f32 %v495, 0.0
      %v528 = vmax.f32 %v496, 0.0
      %v529 = vmax.f32 %v497, 0.0
      %v530 = vmax.f32 %v498, 0.0
      %v531 = vmax.f32 %v499, 0.0
      %v532 = vmax.f32 %v500, 0.0
      %v533 = vmax.f32 %v501, 0.0
      %v534 = vmax.f32 %v502, 0.0
      %v535 = vmax.f32 %v503, 0.0
      %v536 = vmax.f32 %v504, 0.0
      %v537 = vmax.f32 %v505, 0.0
      %v538 = vmax.f32 %v506, 0.0
      %v539 = vmax.f32 %v507, 0.0
      %v540 = vmax.f32 %v508, 0.0
      %v541 = vmax.f32 %v509, 0.0
      %v542 = vmax.f32 %v510, 0.0
      %v543 = vmax.f32 %v511, 0.0
      %v544 = vmax.f32 %v512, 0.0
      %v545 = vmax.f32 %v513, 0.0
      %v546 = vmax.f32 %v514, 0.0
      %v547 = vmax.f32 %v515, 0.0
      %v548 = vmax.f32 %v516, 0.0
      %v549 = vmax.f32 %v517, 0.0
      %v550 = vmax.f32 %v518, 0.0
      %v551 = vmax.f32 %v519, 0.0
      %v552 = vmax.f32 %v520, 0.0
      %553 = vst.msk [vmem:[%s170] sm:$0xff] %vm203, %v521
      %554 = vst.msk [vmem:[%s170 + $0x8] sm:$0xff] %vm203, %v522
      %555 = vst.msk [vmem:[%s170 + $0x10] sm:$0xff] %vm203, %v523
      %556 = vst.msk [vmem:[%s170 + $0x18] sm:$0xff] %vm203, %v524
      %557 = vst.msk [vmem:[%s170 + $0x20] sm:$0xff] %vm203, %v525
      %558 = vst.msk [vmem:[%s170 + $0x28] sm:$0xff] %vm203, %v526
      %559 = vst.msk [vmem:[%s170 + $0x30] sm:$0xff] %vm203, %v527
      %560 = vst.msk [vmem:[%s170 + $0x38] sm:$0xff] %vm203, %v528
      %561 = vst.msk [vmem:[%s170 + $0x40] sm:$0xff] %vm203, %v529
      %562 = vst.msk [vmem:[%s170 + $0x48] sm:$0xff] %vm203, %v530
      %563 = vst.msk [vmem:[%s170 + $0x50] sm:$0xff] %vm203, %v531
      %564 = vst.msk [vmem:[%s170 + $0x58] sm:$0xff] %vm203, %v532
      %565 = vst.msk [vmem:[%s170 + $0x60] sm:$0xff] %vm203, %v533
      %566 = vst.msk [vmem:[%s170 + $0x68] sm:$0xff] %vm203, %v534
      %567 = vst.msk [vmem:[%s170 + $0x70] sm:$0xff] %vm203, %v535
      %568 = vst.msk [vmem:[%s170 + $0x78] sm:$0xff] %vm203, %v536
      %569 = vst.msk [vmem:[%s170 + $0x80] sm:$0xff] %vm203, %v537
      %570 = vst.msk [vmem:[%s170 + $0x88] sm:$0xff] %vm203, %v538
      %571 = vst.msk [vmem:[%s170 + $0x90] sm:$0xff] %vm203, %v539
      %572 = vst.msk [vmem:[%s170 + $0x98] sm:$0xff] %vm203, %v540
      %573 = vst.msk [vmem:[%s170 + $0xa0] sm:$0xff] %vm203, %v541
      %574 = vst.msk [vmem:[%s170 + $0xa8] sm:$0xff] %vm203, %v542
      %575 = vst.msk [vmem:[%s170 + $0xb0] sm:$0xff] %vm203, %v543
      %576 = vst.msk [vmem:[%s170 + $0xb8] sm:$0xff] %vm203, %v544
      %577 = vst.msk [vmem:[%s170 + $0xc0] sm:$0xff] %vm203, %v545
      %578 = vst.msk [vmem:[%s170 + $0xc8] sm:$0xff] %vm203, %v546
      %579 = vst.msk [vmem:[%s170 + $0xd0] sm:$0xff] %vm203, %v547
      %580 = vst.msk [vmem:[%s170 + $0xd8] sm:$0xff] %vm203, %v548
      %581 = vst.msk [vmem:[%s170 + $0xe0] sm:$0xff] %vm203, %v549
      %582 = vst.msk [vmem:[%s170 + $0xe8] sm:$0xff] %vm203, %v550
      %583 = vst.msk [vmem:[%s170 + $0xf0] sm:$0xff] %vm203, %v551
      %584 = vst.msk [vmem:[%s170 + $0xf8] sm:$0xff] %vm203, %v552
      %p585 = scmp.lt.s32.totalorder %s14, 1
      %s586 = scalar_select %p585, %s14, 1
      %s587 = smul.addr %s586, 32
      %s588 = smul.addr %s587, 8
      %s589 = scalar_lea.vmem %s3, %s588
      // Predicated region
      $region33: #{generator_forward.26} parent=31 // pred_check
        %p590 = pneg %p100
      $region34: #{generator_forward.26} parent=31 // pred_check_branch
        %592 = sbr.rel (%p590) target = $region36
      $region35: #{generator_forward.26} parent=31 // pred_region
        _
      $region36: #{generator_forward.26} parent=31 // pred_fallthru
        _
    $region32: #{generator_forward.26} parent=5 // pred_fallthru
      _
    %p593 = scmp.le.s32.totalorder 2, %s9
    // Predicated region
    $region37: #{generator_forward.26} parent=5 // pred_check
      %p594 = pneg %p593
    $region38: #{generator_forward.26} parent=5 // pred_check_branch
      %596 = sbr.rel (%p594) target = $region40
    $region39: #{generator_forward.26} parent=5 // pred_region
      %s597 = ssub.s32 %s9, 2
      // Predicated region
      $region41: #{generator_forward.26} parent=39 // pred_check
        %p598 = pneg %p106
      $region42: #{generator_forward.26} parent=39 // pred_check_branch
        %600 = sbr.rel (%p598) target = $region44
      $region43: #{generator_forward.26} parent=39 // pred_region
        %p601 = scmp.lt.s32.totalorder %s15, 1
        %s602 = scalar_select %p601, %s15, 1
        %s603 = smul.addr %s602, 32
        %s604 = smul.addr %s603, 8
        %s605 = scalar_lea.vmem %s3, %s604
      $region44: #{generator_forward.26} parent=39 // pred_fallthru
        _
    $region40: #{generator_forward.26} parent=5 // pred_fallthru
      _
  $region6: #{generator_forward.26} parent=0 // loop_footer
    %s13 = sadd.s32 1, %s9
  $region7: #{generator_forward.26} parent=0 // loop_footer_branch
    %8 = sbr.rel target = $region3
  $region8: #{generator_forward.26} parent=0 // loop_exit
    _

// kernel: generator_forward.25
$region0: #{generator_forward.25}
  #allocation0 [shape = 'u32[]', space=smem, size = 0x4, offset = 0x4, fixed_abs, tag = 'smem constant byte address 0x4 - core index']
  #allocation1 [shape = 'u32[144,128]{1,0:T(1,128)}', space=vmem, size = 0x12000, scoped, tag = 'internal scratch']
  #allocation2 [shape = 'f32[256,128]{1,0:T(8,128)}', space=vmem, size = 0x20000, scoped, tag = 'scratch operand']
  %s0 = inlined_call_operand.vmem [shape: bf16[512,512], index: 0, kind: input, shape index: {}]
  %s1 = inlined_call_operand.vmem [shape: bf16[512,128], index: 1, kind: input, shape index: {}]
  %s2 = inlined_call_operand.vmem [shape: f32[512,128], index: 2, kind: output, shape index: {}]
  %s3 = sld [smem:[#allocation0]]
  $region49: #{generator_forward.25} parent=0
    _
  %s5 = ssub.s32 1, %s3
  %s6 = scalar_select 0, %s5, %s3
  loop: start=0, step=1, limit=4
  $region2: #{generator_forward.25} parent=0 // loop_pre_header
    _
  $region3: #{generator_forward.25} parent=0 // loop_header
    %s8 = sphi 0, %s12
    %p9 = scmp.ge.s32.totalorder %s8, 4
    %s15 = sphi 0, %s34
    %s16 = sphi 0, %s30
    %s17 = sphi 0, %s26
    %s18 = sphi 0, %s15
    %s19 = sphi 0, %s16
    %s20 = sphi 0, %s17
    %s21 = sphi 0, %s18
    %s22 = sphi 0, %s19
    %s23 = sphi 0, %s20
    %s39 = sphi 0, %s41
    %s42 = sphi 0, %s39
    %s43 = sphi 0, %s42
    %s59 = sphi 0, %s43
    %s67 = sphi 0, %s69
    %s70 = sphi 0, %s67
    %s71 = sphi 0, %s70
    %s87 = sphi 0, %s71
    %s95 = sphi 0, %s97
    %s98 = sphi 0, %s95
    %s99 = sphi 0, %s98
    %s115 = sphi 0, %s99
  $region4: #{generator_forward.25} parent=0 // loop_header_branch
    %11 = sbr.rel (%p9) target = $region8
  $region5: #{generator_forward.25} parent=0 // loop_body
    %s13 = ssub.s32 %s8, 1
    %s14 = ssub.s32 %s8, 2
    %s24 = sadd.s32 1, %s17
    %p25 = scmp.ge.s32.totalorder %s24, 1
    %s26 = scalar_select %p25, 0, %s24
    %s27 = sadd.s32 1, %s16
    %s28 = scalar_select %p25, %s27, %s16
    %p29 = scmp.ge.s32.totalorder %s28, 1
    %s30 = scalar_select %p29, 0, %s28
    %s31 = sadd.s32 1, %s15
    %s32 = scalar_select %p29, %s31, %s15
    %p33 = scmp.ge.s32.totalorder %s32, 2
    %s34 = scalar_select %p33, 0, %s32
    %s35 = ssub.s32 %s15, %s34
    %s36 = ssub.s32 %s17, %s26
    %s37 = sor.u32 %s35, %s36
    %p38 = scmp.eq.s32.totalorder %s37, 0
    %s40 = sadd.s32 %s39, 1
    %s41 = scalar_select %p38, %s39, %s40
    %p44 = pneg %p38
    %p45 = scmp.eq.s32.totalorder %s8, 1
    %p46 = por %p44, %p45
    %p47 = scmp.ne.s32.totalorder %s39, %s42
    %p48 = scmp.eq.s32.totalorder %s8, 0
    %p49 = por %p47, %p48
    %p50 = scmp.ne.s32.totalorder %s39, %s42
    %p51 = scmp.eq.s32.totalorder %s13, 1
    %p52 = por %p50, %p51
    %p53 = scmp.ne.s32.totalorder %s42, %s43
    %p54 = scmp.eq.s32.totalorder %s13, 0
    %p55 = por %p53, %p54
    %p56 = scmp.ne.s32.totalorder %s42, %s43
    %p57 = scmp.eq.s32.totalorder %s14, 1
    %p58 = por %p56, %p57
    %p60 = scmp.ne.s32.totalorder %s43, %s59
    %p61 = scmp.eq.s32.totalorder %s14, 0
    %p62 = por %p60, %p61
    %s63 = ssub.s32 %s17, %s26
    %s64 = ssub.s32 %s16, %s30
    %s65 = sor.u32 %s63, %s64
    %p66 = scmp.eq.s32.totalorder %s65, 0
    %s68 = sadd.s32 %s67, 1
    %s69 = scalar_select %p66, %s67, %s68
    %p72 = pneg %p66
    %p73 = scmp.eq.s32.totalorder %s8, 1
    %p74 = por %p72, %p73
    %p75 = scmp.ne.s32.totalorder %s67, %s70
    %p76 = scmp.eq.s32.totalorder %s8, 0
    %p77 = por %p75, %p76
    %p78 = scmp.ne.s32.totalorder %s67, %s70
    %p79 = scmp.eq.s32.totalorder %s13, 1
    %p80 = por %p78, %p79
    %p81 = scmp.ne.s32.totalorder %s70, %s71
    %p82 = scmp.eq.s32.totalorder %s13, 0
    %p83 = por %p81, %p82
    %p84 = scmp.ne.s32.totalorder %s70, %s71
    %p85 = scmp.eq.s32.totalorder %s14, 1
    %p86 = por %p84, %p85
    %p88 = scmp.ne.s32.totalorder %s71, %s87
    %p89 = scmp.eq.s32.totalorder %s14, 0
    %p90 = por %p88, %p89
    %s91 = ssub.s32 %s15, %s34
    %s92 = ssub.s32 %s16, %s30
    %s93 = sor.u32 %s91, %s92
    %p94 = scmp.eq.s32.totalorder %s93, 0
    %s96 = sadd.s32 %s95, 1
    %s97 = scalar_select %p94, %s95, %s96
    %p100 = pneg %p94
    %p101 = scmp.eq.s32.totalorder %s8, 1
    %p102 = por %p100, %p101
    %p103 = scmp.ne.s32.totalorder %s95, %s98
    %p104 = scmp.eq.s32.totalorder %s8, 0
    %p105 = por %p103, %p104
    %p106 = scmp.ne.s32.totalorder %s95, %s98
    %p107 = scmp.eq.s32.totalorder %s13, 1
    %p108 = por %p106, %p107
    %p109 = scmp.ne.s32.totalorder %s98, %s99
    %p110 = scmp.eq.s32.totalorder %s13, 0
    %p111 = por %p109, %p110
    %p112 = scmp.ne.s32.totalorder %s98, %s99
    %p113 = scmp.eq.s32.totalorder %s14, 1
    %p114 = por %p112, %p113
    %p116 = scmp.ne.s32.totalorder %s99, %s115
    %p117 = scmp.eq.s32.totalorder %s14, 0
    %p118 = por %p116, %p117
    %p119 = scmp.le.s32.totalorder 1, %s8
    %p120 = scmp.lt.s32.totalorder %s8, 3
    %p121 = pnand %p119, %p120
    %p122 = pneg %p121
    // Predicated region
    $region9: #{generator_forward.25} parent=5 // pred_check
      _
    $region10: #{generator_forward.25} parent=5 // pred_check_branch
      %124 = sbr.rel (%p121) target = $region12
    $region11: #{generator_forward.25} parent=5 // pred_region
      %s125 = ssub.s32 %s8, 1
      // Predicated region
      $region13: #{generator_forward.25} parent=11 // pred_check
        %p126 = pneg %p83
      $region14: #{generator_forward.25} parent=11 // pred_check_branch
        %128 = sbr.rel (%p126) target = $region16
      $region15: #{generator_forward.25} parent=11 // pred_region
        %s129 = smul.u32 64, %s20
        %p130 = scmp.lt.s32.totalorder %s129, 63
        %s131 = scalar_select %p130, %s129, 63
        %p132 = scmp.lt.s32.totalorder %s19, 0
        %s133 = scalar_select %p132, %s19, 0
        %s134 = sadd.s32 %s133, %s131
        %s135 = smul.addr %s134, 4
        %s136 = scalar_lea.vmem %s1, %s135
        %s137 = smul.u32 64, %s20
      $region16: #{generator_forward.25} parent=11 // pred_fallthru
        _
    $region12: #{generator_forward.25} parent=5 // pred_fallthru
      _
    %p138 = scmp.lt.s32.totalorder %s8, 2
    // Predicated region
    $region17: #{generator_forward.25} parent=5 // pred_check
      %p139 = pneg %p138
    $region18: #{generator_forward.25} parent=5 // pred_check_branch
      %141 = sbr.rel (%p139) target = $region20
    $region19: #{generator_forward.25} parent=5 // pred_region
      // Predicated region
      $region21: #{generator_forward.25} parent=19 // pred_check
        %p142 = pneg %p49
      $region22: #{generator_forward.25} parent=19 // pred_check_branch
        %144 = sbr.rel (%p142) target = $region24
      $region23: #{generator_forward.25} parent=19 // pred_region
        %s145 = smul.u32 32, %s15
        %s146 = smul.u32 4, %s17
        %p147 = scmp.lt.s32.totalorder %s145, 63
        %s148 = scalar_select %p147, %s145, 63
        %p149 = scmp.lt.s32.totalorder %s146, 3
        %s150 = scalar_select %p149, %s146, 3
        %s151 = smul.addr %s148, 4
        %s152 = sadd.s32 %s150, %s151
        %s153 = smul.addr %s152, 4
        %s154 = scalar_lea.vmem %s0, %s153
        %s155 = smul.u32 32, %s15
        %s156 = smul.u32 4, %s17
      $region24: #{generator_forward.25} parent=19 // pred_fallthru
        _
    $region20: #{generator_forward.25} parent=5 // pred_fallthru
      _
    %p157 = scmp.le.s32.totalorder 1, %s8
    %p158 = scmp.lt.s32.totalorder %s8, 3
    %p159 = pnand %p157, %p158
    %p160 = pneg %p159
    // Predicated region
    $region25: #{generator_forward.25} parent=5 // pred_check
      _
    $region26: #{generator_forward.25} parent=5 // pred_check_branch
      %162 = sbr.rel (%p159) target = $region28
    $region27: #{generator_forward.25} parent=5 // pred_region
      %s163 = ssub.s32 %s8, 1
      %s164 = smul.u32 32, %s18
      %s165 = smul.u32 4, %s20
      %p166 = scmp.lt.s32.totalorder %s164, 63
      %s167 = scalar_select %p166, %s164, 63
      %p168 = scmp.lt.s32.totalorder %s165, 3
      %s169 = scalar_select %p168, %s165, 3
      %s170 = smul.addr %s167, 4
      %s171 = sadd.s32 %s169, %s170
      %s172 = smul.addr %s171, 4
      %s173 = scalar_lea.vmem %s0, %s172
      %p174 = pneg %p55
      %p175 = pneg %p52
      %s176 = smul.u32 64, %s20
      %p177 = scmp.lt.s32.totalorder %s176, 63
      %s178 = scalar_select %p177, %s176, 63
      %p179 = scmp.lt.s32.totalorder %s19, 0
      %s180 = scalar_select %p179, %s19, 0
      %s181 = sadd.s32 %s180, %s178
      %s182 = smul.addr %s181, 4
      %s183 = scalar_lea.vmem %s1, %s182
      %p184 = pneg %p83
      %p185 = pneg %p80
      %p186 = pneg %p111
      %p187 = pneg %p108
      %s188 = smul.u32 32, %s18
      %p189 = scmp.lt.s32.totalorder %s188, 63
      %s190 = scalar_select %p189, %s188, 63
      %p191 = scmp.lt.s32.totalorder %s19, 0
      %s192 = scalar_select %p191, %s19, 0
      %s193 = sadd.s32 %s192, %s190
      %s194 = smul.addr %s193, 8
      %s195 = scalar_lea.vmem %s2, %s194
      %s196 = smul.u32 32, %s18
      %s197 = smul.u32 4, %s20
      %p198 = scmp.lt.s32.totalorder %s196, 63
      %s199 = scalar_select %p198, %s196, 63
      %p200 = scmp.lt.s32.totalorder %s197, 3
      %s201 = scalar_select %p200, %s197, 3
      %s202 = smul.addr %s199, 4
      %s203 = sadd.s32 %s201, %s202
      %s204 = smul.addr %s203, 4
      %s205 = scalar_lea.vmem %s0, %s204
      %s206 = smul.u32 32, %s18
      %s207 = smul.u32 4, %s20
      %s208 = smul.u32 64, %s20
      %p209 = scmp.lt.s32.totalorder %s208, 63
      %s210 = scalar_select %p209, %s208, 63
      %p211 = scmp.lt.s32.totalorder %s19, 0
      %s212 = scalar_select %p211, %s19, 0
      %s213 = sadd.s32 %s212, %s210
      %s214 = smul.addr %s213, 4
      %s215 = scalar_lea.vmem %s1, %s214
      %s216 = smul.u32 64, %s20
      %s217 = smul.u32 32, %s18
      %p218 = scmp.lt.s32.totalorder %s217, 63
      %s219 = scalar_select %p218, %s217, 63
      %p220 = scmp.lt.s32.totalorder %s19, 0
      %s221 = scalar_select %p220, %s19, 0
      %s222 = sadd.s32 %s221, %s219
      %s223 = smul.addr %s222, 8
      %s224 = scalar_lea.vmem %s2, %s223
      %s225 = smul.u32 32, %s18
      %p227 = scmp.eq.s32.totalorder %s20, 0
      // Predicated region
      $region29: #{generator_forward.25} parent=27 // pred_check
        %p228 = pneg %p227
      $region30: #{generator_forward.25} parent=27 // pred_check_branch
        %230 = sbr.rel (%p228) target = $region32
      $region31: #{generator_forward.25} parent=27 // pred_region
        %231 = vst [vmem:[#allocation2] sm:$0xff] 0.0
        %232 = vst [vmem:[#allocation2 + $0x8] sm:$0xff] 0.0
        %233 = vst [vmem:[#allocation2 + $0x10] sm:$0xff] 0.0
        %234 = vst [vmem:[#allocation2 + $0x18] sm:$0xff] 0.0
        %235 = vst [vmem:[#allocation2 + $0x20] sm:$0xff] 0.0
        %236 = vst [vmem:[#allocation2 + $0x28] sm:$0xff] 0.0
        %237 = vst [vmem:[#allocation2 + $0x30] sm:$0xff] 0.0
        %238 = vst [vmem:[#allocation2 + $0x38] sm:$0xff] 0.0
        %239 = vst [vmem:[#allocation2 + $0x40] sm:$0xff] 0.0
        %240 = vst [vmem:[#allocation2 + $0x48] sm:$0xff] 0.0
        %241 = vst [vmem:[#allocation2 + $0x50] sm:$0xff] 0.0
        %242 = vst [vmem:[#allocation2 + $0x58] sm:$0xff] 0.0
        %243 = vst [vmem:[#allocation2 + $0x60] sm:$0xff] 0.0
        %244 = vst [vmem:[#allocation2 + $0x68] sm:$0xff] 0.0
        %245 = vst [vmem:[#allocation2 + $0x70] sm:$0xff] 0.0
        %246 = vst [vmem:[#allocation2 + $0x78] sm:$0xff] 0.0
        %247 = vst [vmem:[#allocation2 + $0x80] sm:$0xff] 0.0
        %248 = vst [vmem:[#allocation2 + $0x88] sm:$0xff] 0.0
        %249 = vst [vmem:[#allocation2 + $0x90] sm:$0xff] 0.0
        %250 = vst [vmem:[#allocation2 + $0x98] sm:$0xff] 0.0
        %251 = vst [vmem:[#allocation2 + $0xa0] sm:$0xff] 0.0
        %252 = vst [vmem:[#allocation2 + $0xa8] sm:$0xff] 0.0
        %253 = vst [vmem:[#allocation2 + $0xb0] sm:$0xff] 0.0
        %254 = vst [vmem:[#allocation2 + $0xb8] sm:$0xff] 0.0
        %255 = vst [vmem:[#allocation2 + $0xc0] sm:$0xff] 0.0
        %256 = vst [vmem:[#allocation2 + $0xc8] sm:$0xff] 0.0
        %257 = vst [vmem:[#allocation2 + $0xd0] sm:$0xff] 0.0
        %258 = vst [vmem:[#allocation2 + $0xd8] sm:$0xff] 0.0
        %259 = vst [vmem:[#allocation2 + $0xe0] sm:$0xff] 0.0
        %260 = vst [vmem:[#allocation2 + $0xe8] sm:$0xff] 0.0
        %261 = vst [vmem:[#allocation2 + $0xf0] sm:$0xff] 0.0
        %262 = vst [vmem:[#allocation2 + $0xf8] sm:$0xff] 0.0
      $region32: #{generator_forward.25} parent=27 // pred_fallthru
        _
      %v263 = vld [vmem:[#allocation2] sm:$0xff]
      %v264 = vld [vmem:[#allocation2 + $0x8] sm:$0xff]
      %v265 = vld [vmem:[#allocation2 + $0x10] sm:$0xff]
      %v266 = vld [vmem:[#allocation2 + $0x18] sm:$0xff]
      %v267 = vld [vmem:[#allocation2 + $0x20] sm:$0xff]
      %v268 = vld [vmem:[#allocation2 + $0x28] sm:$0xff]
      %v269 = vld [vmem:[#allocation2 + $0x30] sm:$0xff]
      %v270 = vld [vmem:[#allocation2 + $0x38] sm:$0xff]
      %v271 = vld [vmem:[#allocation2 + $0x40] sm:$0xff]
      %v272 = vld [vmem:[#allocation2 + $0x48] sm:$0xff]
      %v273 = vld [vmem:[#allocation2 + $0x50] sm:$0xff]
      %v274 = vld [vmem:[#allocation2 + $0x58] sm:$0xff]
      %v275 = vld [vmem:[#allocation2 + $0x60] sm:$0xff]
      %v276 = vld [vmem:[#allocation2 + $0x68] sm:$0xff]
      %v277 = vld [vmem:[#allocation2 + $0x70] sm:$0xff]
      %v278 = vld [vmem:[#allocation2 + $0x78] sm:$0xff]
      %v279 = vld [vmem:[#allocation2 + $0x80] sm:$0xff]
      %v280 = vld [vmem:[#allocation2 + $0x88] sm:$0xff]
      %v281 = vld [vmem:[#allocation2 + $0x90] sm:$0xff]
      %v282 = vld [vmem:[#allocation2 + $0x98] sm:$0xff]
      %v283 = vld [vmem:[#allocation2 + $0xa0] sm:$0xff]
      %v284 = vld [vmem:[#allocation2 + $0xa8] sm:$0xff]
      %v285 = vld [vmem:[#allocation2 + $0xb0] sm:$0xff]
      %v286 = vld [vmem:[#allocation2 + $0xb8] sm:$0xff]
      %v287 = vld [vmem:[#allocation2 + $0xc0] sm:$0xff]
      %v288 = vld [vmem:[#allocation2 + $0xc8] sm:$0xff]
      %v289 = vld [vmem:[#allocation2 + $0xd0] sm:$0xff]
      %v290 = vld [vmem:[#allocation2 + $0xd8] sm:$0xff]
      %v291 = vld [vmem:[#allocation2 + $0xe0] sm:$0xff]
      %v292 = vld [vmem:[#allocation2 + $0xe8] sm:$0xff]
      %v293 = vld [vmem:[#allocation2 + $0xf0] sm:$0xff]
      %v294 = vld [vmem:[#allocation2 + $0xf8] sm:$0xff]
      %v295 = vld [vmem:[%s205] sm:$0xff]
      %v296 = vld [vmem:[%s205 + $0x8] sm:$0xff]
      %v297 = vld [vmem:[%s205 + $0x10] sm:$0xff]
      %v298 = vld [vmem:[%s205 + $0x18] sm:$0xff]
      %v299 = vld [vmem:[%s205 + $0x20] sm:$0xff]
      %v300 = vld [vmem:[%s205 + $0x28] sm:$0xff]
      %v301 = vld [vmem:[%s205 + $0x30] sm:$0xff]
      %v302 = vld [vmem:[%s205 + $0x38] sm:$0xff]
      %v303 = vld [vmem:[%s205 + $0x40] sm:$0xff]
      %v304 = vld [vmem:[%s205 + $0x48] sm:$0xff]
      %v305 = vld [vmem:[%s205 + $0x50] sm:$0xff]
      %v306 = vld [vmem:[%s205 + $0x58] sm:$0xff]
      %v307 = vld [vmem:[%s205 + $0x60] sm:$0xff]
      %v308 = vld [vmem:[%s205 + $0x68] sm:$0xff]
      %v309 = vld [vmem:[%s205 + $0x70] sm:$0xff]
      %v310 = vld [vmem:[%s205 + $0x78] sm:$0xff]
      %v311 = vld [vmem:[%s205 + $0x80] sm:$0xff]
      %v312 = vld [vmem:[%s205 + $0x88] sm:$0xff]
      %v313 = vld [vmem:[%s205 + $0x90] sm:$0xff]
      %v314 = vld [vmem:[%s205 + $0x98] sm:$0xff]
      %v315 = vld [vmem:[%s205 + $0xa0] sm:$0xff]
      %v316 = vld [vmem:[%s205 + $0xa8] sm:$0xff]
      %v317 = vld [vmem:[%s205 + $0xb0] sm:$0xff]
      %v318 = vld [vmem:[%s205 + $0xb8] sm:$0xff]
      %v319 = vld [vmem:[%s205 + $0xc0] sm:$0xff]
      %v320 = vld [vmem:[%s205 + $0xc8] sm:$0xff]
      %v321 = vld [vmem:[%s205 + $0xd0] sm:$0xff]
      %v322 = vld [vmem:[%s205 + $0xd8] sm:$0xff]
      %v323 = vld [vmem:[%s205 + $0xe0] sm:$0xff]
      %v324 = vld [vmem:[%s205 + $0xe8] sm:$0xff]
      %v325 = vld [vmem:[%s205 + $0xf0] sm:$0xff]
      %v326 = vld [vmem:[%s205 + $0xf8] sm:$0xff]
      %v327 = vld [vmem:[%s205 + $0x100] sm:$0xff]
      %v328 = vld [vmem:[%s205 + $0x108] sm:$0xff]
      %v329 = vld [vmem:[%s205 + $0x110] sm:$0xff]
      %v330 = vld [vmem:[%s205 + $0x118] sm:$0xff]
      %v331 = vld [vmem:[%s205 + $0x120] sm:$0xff]
      %v332 = vld [vmem:[%s205 + $0x128] sm:$0xff]
      %v333 = vld [vmem:[%s205 + $0x130] sm:$0xff]
      %v334 = vld [vmem:[%s205 + $0x138] sm:$0xff]
      %v335 = vld [vmem:[%s205 + $0x140] sm:$0xff]
      %v336 = vld [vmem:[%s205 + $0x148] sm:$0xff]
      %v337 = vld [vmem:[%s205 + $0x150] sm:$0xff]
      %v338 = vld [vmem:[%s205 + $0x158] sm:$0xff]
      %v339 = vld [vmem:[%s205 + $0x160] sm:$0xff]
      %v340 = vld [vmem:[%s205 + $0x168] sm:$0xff]
      %v341 = vld [vmem:[%s205 + $0x170] sm:$0xff]
      %v342 = vld [vmem:[%s205 + $0x178] sm:$0xff]
      %v343 = vld [vmem:[%s205 + $0x180] sm:$0xff]
      %v344 = vld [vmem:[%s205 + $0x188] sm:$0xff]
      %v345 = vld [vmem:[%s205 + $0x190] sm:$0xff]
      %v346 = vld [vmem:[%s205 + $0x198] sm:$0xff]
      %v347 = vld [vmem:[%s205 + $0x1a0] sm:$0xff]
      %v348 = vld [vmem:[%s205 + $0x1a8] sm:$0xff]
      %v349 = vld [vmem:[%s205 + $0x1b0] sm:$0xff]
      %v350 = vld [vmem:[%s205 + $0x1b8] sm:$0xff]
      %v351 = vld [vmem:[%s205 + $0x1c0] sm:$0xff]
      %v352 = vld [vmem:[%s205 + $0x1c8] sm:$0xff]
      %v353 = vld [vmem:[%s205 + $0x1d0] sm:$0xff]
      %v354 = vld [vmem:[%s205 + $0x1d8] sm:$0xff]
      %v355 = vld [vmem:[%s205 + $0x1e0] sm:$0xff]
      %v356 = vld [vmem:[%s205 + $0x1e8] sm:$0xff]
      %v357 = vld [vmem:[%s205 + $0x1f0] sm:$0xff]
      %v358 = vld [vmem:[%s205 + $0x1f8] sm:$0xff]
      %v359 = vld [vmem:[%s215] sm:$0xf]
      %v360 = vld [vmem:[%s215 + $0x4] sm:$0xf]
      %v361 = vld [vmem:[%s215 + $0x8] sm:$0xf]
      %v362 = vld [vmem:[%s215 + $0xc] sm:$0xf]
      %v363 = vld [vmem:[%s215 + $0x10] sm:$0xf]
      %v364 = vld [vmem:[%s215 + $0x14] sm:$0xf]
      %v365 = vld [vmem:[%s215 + $0x18] sm:$0xf]
      %v366 = vld [vmem:[%s215 + $0x1c] sm:$0xf]
      %v367 = vld [vmem:[%s215 + $0x20] sm:$0xf]
      %v368 = vld [vmem:[%s215 + $0x24] sm:$0xf]
      %v369 = vld [vmem:[%s215 + $0x28] sm:$0xf]
      %v370 = vld [vmem:[%s215 + $0x2c] sm:$0xf]
      %v371 = vld [vmem:[%s215 + $0x30] sm:$0xf]
      %v372 = vld [vmem:[%s215 + $0x34] sm:$0xf]
      %v373 = vld [vmem:[%s215 + $0x38] sm:$0xf]
      %v374 = vld [vmem:[%s215 + $0x3c] sm:$0xf]
      %v375 = vld [vmem:[%s215 + $0x40] sm:$0xf]
      %v376 = vld [vmem:[%s215 + $0x44] sm:$0xf]
      %v377 = vld [vmem:[%s215 + $0x48] sm:$0xf]
      %v378 = vld [vmem:[%s215 + $0x4c] sm:$0xf]
      %v379 = vld [vmem:[%s215 + $0x50] sm:$0xf]
      %v380 = vld [vmem:[%s215 + $0x54] sm:$0xf]
      %v381 = vld [vmem:[%s215 + $0x58] sm:$0xf]
      %v382 = vld [vmem:[%s215 + $0x5c] sm:$0xf]
      %v383 = vld [vmem:[%s215 + $0x60] sm:$0xf]
      %v384 = vld [vmem:[%s215 + $0x64] sm:$0xf]
      %v385 = vld [vmem:[%s215 + $0x68] sm:$0xf]
      %v386 = vld [vmem:[%s215 + $0x6c] sm:$0xf]
      %v387 = vld [vmem:[%s215 + $0x70] sm:$0xf]
      %v388 = vld [vmem:[%s215 + $0x74] sm:$0xf]
      %v389 = vld [vmem:[%s215 + $0x78] sm:$0xf]
      %v390 = vld [vmem:[%s215 + $0x7c] sm:$0xf]
      %v391 = vld [vmem:[%s215 + $0x80] sm:$0xf]
      %v392 = vld [vmem:[%s215 + $0x84] sm:$0xf]
      %v393 = vld [vmem:[%s215 + $0x88] sm:$0xf]
      %v394 = vld [vmem:[%s215 + $0x8c] sm:$0xf]
      %v395 = vld [vmem:[%s215 + $0x90] sm:$0xf]
      %v396 = vld [vmem:[%s215 + $0x94] sm:$0xf]
      %v397 = vld [vmem:[%s215 + $0x98] sm:$0xf]
      %v398 = vld [vmem:[%s215 + $0x9c] sm:$0xf]
      %v399 = vld [vmem:[%s215 + $0xa0] sm:$0xf]
      %v400 = vld [vmem:[%s215 + $0xa4] sm:$0xf]
      %v401 = vld [vmem:[%s215 + $0xa8] sm:$0xf]
      %v402 = vld [vmem:[%s215 + $0xac] sm:$0xf]
      %v403 = vld [vmem:[%s215 + $0xb0] sm:$0xf]
      %v404 = vld [vmem:[%s215 + $0xb4] sm:$0xf]
      %v405 = vld [vmem:[%s215 + $0xb8] sm:$0xf]
      %v406 = vld [vmem:[%s215 + $0xbc] sm:$0xf]
      %v407 = vld [vmem:[%s215 + $0xc0] sm:$0xf]
      %v408 = vld [vmem:[%s215 + $0xc4] sm:$0xf]
      %v409 = vld [vmem:[%s215 + $0xc8] sm:$0xf]
      %v410 = vld [vmem:[%s215 + $0xcc] sm:$0xf]
      %v411 = vld [vmem:[%s215 + $0xd0] sm:$0xf]
      %v412 = vld [vmem:[%s215 + $0xd4] sm:$0xf]
      %v413 = vld [vmem:[%s215 + $0xd8] sm:$0xf]
      %v414 = vld [vmem:[%s215 + $0xdc] sm:$0xf]
      %v415 = vld [vmem:[%s215 + $0xe0] sm:$0xf]
      %v416 = vld [vmem:[%s215 + $0xe4] sm:$0xf]
      %v417 = vld [vmem:[%s215 + $0xe8] sm:$0xf]
      %v418 = vld [vmem:[%s215 + $0xec] sm:$0xf]
      %v419 = vld [vmem:[%s215 + $0xf0] sm:$0xf]
      %v420 = vld [vmem:[%s215 + $0xf4] sm:$0xf]
      %v421 = vld [vmem:[%s215 + $0xf8] sm:$0xf]
      %v422 = vld [vmem:[%s215 + $0xfc] sm:$0xf]
      %v487 = vunpack.c.l.b16 %v295
      %v488 = vunpack.c.h.b16 %v295
      %v489 = vunpack.c.l.b16 %v296
      %v490 = vunpack.c.h.b16 %v296
      %v491 = vunpack.c.l.b16 %v297
      %v492 = vunpack.c.h.b16 %v297
      %v493 = vunpack.c.l.b16 %v298
      %v494 = vunpack.c.h.b16 %v298
      %v495 = vunpack.c.l.b16 %v299
      %v496 = vunpack.c.h.b16 %v299
      %v497 = vunpack.c.l.b16 %v300
      %v498 = vunpack.c.h.b16 %v300
      %v499 = vunpack.c.l.b16 %v301
      %v500 = vunpack.c.h.b16 %v301
      %v501 = vunpack.c.l.b16 %v302
      %v502 = vunpack.c.h.b16 %v302
      %v503 = vunpack.c.l.b16 %v303
      %v504 = vunpack.c.h.b16 %v303
      %v505 = vunpack.c.l.b16 %v304
      %v506 = vunpack.c.h.b16 %v304
      %v507 = vunpack.c.l.b16 %v305
      %v508 = vunpack.c.h.b16 %v305
      %v509 = vunpack.c.l.b16 %v306
      %v510 = vunpack.c.h.b16 %v306
      %v511 = vunpack.c.l.b16 %v307
      %v512 = vunpack.c.h.b16 %v307
      %v513 = vunpack.c.l.b16 %v308
      %v514 = vunpack.c.h.b16 %v308
      %v515 = vunpack.c.l.b16 %v309
      %v516 = vunpack.c.h.b16 %v309
      %v517 = vunpack.c.l.b16 %v310
      %v518 = vunpack.c.h.b16 %v310
      %v519 = vunpack.c.l.b16 %v311
      %v520 = vunpack.c.h.b16 %v311
      %v521 = vunpack.c.l.b16 %v312
      %v522 = vunpack.c.h.b16 %v312
      %v523 = vunpack.c.l.b16 %v313
      %v524 = vunpack.c.h.b16 %v313
      %v525 = vunpack.c.l.b16 %v314
      %v526 = vunpack.c.h.b16 %v314
      %v527 = vunpack.c.l.b16 %v315
      %v528 = vunpack.c.h.b16 %v315
      %v529 = vunpack.c.l.b16 %v316
      %v530 = vunpack.c.h.b16 %v316
      %v531 = vunpack.c.l.b16 %v317
      %v532 = vunpack.c.h.b16 %v317
      %v533 = vunpack.c.l.b16 %v318
      %v534 = vunpack.c.h.b16 %v318
      %v535 = vunpack.c.l.b16 %v319
      %v536 = vunpack.c.h.b16 %v319
      %v537 = vunpack.c.l.b16 %v320
      %v538 = vunpack.c.h.b16 %v320
      %v539 = vunpack.c.l.b16 %v321
      %v540 = vunpack.c.h.b16 %v321
      %v541 = vunpack.c.l.b16 %v322
      %v542 = vunpack.c.h.b16 %v322
      %v543 = vunpack.c.l.b16 %v323
      %v544 = vunpack.c.h.b16 %v323
      %v545 = vunpack.c.l.b16 %v324
      %v546 = vunpack.c.h.b16 %v324
      %v547 = vunpack.c.l.b16 %v325
      %v548 = vunpack.c.h.b16 %v325
      %v549 = vunpack.c.l.b16 %v326
      %v550 = vunpack.c.h.b16 %v326
      %v551 = vunpack.c.l.b16 %v327
      %v552 = vunpack.c.h.b16 %v327
      %v553 = vunpack.c.l.b16 %v328
      %v554 = vunpack.c.h.b16 %v328
      %v555 = vunpack.c.l.b16 %v329
      %v556 = vunpack.c.h.b16 %v329
      %v557 = vunpack.c.l.b16 %v330
      %v558 = vunpack.c.h.b16 %v330
      %v559 = vunpack.c.l.b16 %v331
      %v560 = vunpack.c.h.b16 %v331
      %v561 = vunpack.c.l.b16 %v332
      %v562 = vunpack.c.h.b16 %v332
      %v563 = vunpack.c.l.b16 %v333
      %v564 = vunpack.c.h.b16 %v333
      %v565 = vunpack.c.l.b16 %v334
      %v566 = vunpack.c.h.b16 %v334
      %v567 = vunpack.c.l.b16 %v335
      %v568 = vunpack.c.h.b16 %v335
      %v569 = vunpack.c.l.b16 %v336
      %v570 = vunpack.c.h.b16 %v336
      %v571 = vunpack.c.l.b16 %v337
      %v572 = vunpack.c.h.b16 %v337
      %v573 = vunpack.c.l.b16 %v338
      %v574 = vunpack.c.h.b16 %v338
      %v575 = vunpack.c.l.b16 %v339
      %v576 = vunpack.c.h.b16 %v339
      %v577 = vunpack.c.l.b16 %v340
      %v578 = vunpack.c.h.b16 %v340
      %v579 = vunpack.c.l.b16 %v341
      %v580 = vunpack.c.h.b16 %v341
      %v581 = vunpack.c.l.b16 %v342
      %v582 = vunpack.c.h.b16 %v342
      %v583 = vunpack.c.l.b16 %v343
      %v584 = vunpack.c.h.b16 %v343
      %v585 = vunpack.c.l.b16 %v344
      %v586 = vunpack.c.h.b16 %v344
      %v587 = vunpack.c.l.b16 %v345
      %v588 = vunpack.c.h.b16 %v345
      %v589 = vunpack.c.l.b16 %v346
      %v590 = vunpack.c.h.b16 %v346
      %v591 = vunpack.c.l.b16 %v347
      %v592 = vunpack.c.h.b16 %v347
      %v593 = vunpack.c.l.b16 %v348
      %v594 = vunpack.c.h.b16 %v348
      %v595 = vunpack.c.l.b16 %v349
      %v596 = vunpack.c.h.b16 %v349
      %v597 = vunpack.c.l.b16 %v350
      %v598 = vunpack.c.h.b16 %v350
      %v599 = vunpack.c.l.b16 %v351
      %v600 = vunpack.c.h.b16 %v351
      %v601 = vunpack.c.l.b16 %v352
      %v602 = vunpack.c.h.b16 %v352
      %v603 = vunpack.c.l.b16 %v353
      %v604 = vunpack.c.h.b16 %v353
      %v605 = vunpack.c.l.b16 %v354
      %v606 = vunpack.c.h.b16 %v354
      %v607 = vunpack.c.l.b16 %v355
      %v608 = vunpack.c.h.b16 %v355
      %v609 = vunpack.c.l.b16 %v356
      %v610 = vunpack.c.h.b16 %v356
      %v611 = vunpack.c.l.b16 %v357
      %v612 = vunpack.c.h.b16 %v357
      %v613 = vunpack.c.l.b16 %v358
      %v614 = vunpack.c.h.b16 %v358
      %v615 = vpack.c.b16 %v491, %v487
      %v616 = vpack.c.b16 %v492, %v488
      %v617 = vpack.c.b16 %v493, %v489
      %v618 = vpack.c.b16 %v494, %v490
      %v619 = vpack.c.b16 %v499, %v495
      %v620 = vpack.c.b16 %v500, %v496
      %v621 = vpack.c.b16 %v501, %v497
      %v622 = vpack.c.b16 %v502, %v498
      %v623 = vpack.c.b16 %v507, %v503
      %v624 = vpack.c.b16 %v508, %v504
      %v625 = vpack.c.b16 %v509, %v505
      %v626 = vpack.c.b16 %v510, %v506
      %v627 = vpack.c.b16 %v515, %v511
      %v628 = vpack.c.b16 %v516, %v512
      %v629 = vpack.c.b16 %v517, %v513
      %v630 = vpack.c.b16 %v518, %v514
      %v631 = vpack.c.b16 %v523, %v519
      %v632 = vpack.c.b16 %v524, %v520
      %v633 = vpack.c.b16 %v525, %v521
      %v634 = vpack.c.b16 %v526, %v522
      %v635 = vpack.c.b16 %v531, %v527
      %v636 = vpack.c.b16 %v532, %v528
      %v637 = vpack.c.b16 %v533, %v529
      %v638 = vpack.c.b16 %v534, %v530
      %v639 = vpack.c.b16 %v539, %v535
      %v640 = vpack.c.b16 %v540, %v536
      %v641 = vpack.c.b16 %v541, %v537
      %v642 = vpack.c.b16 %v542, %v538
      %v643 = vpack.c.b16 %v547, %v543
      %v644 = vpack.c.b16 %v548, %v544
      %v645 = vpack.c.b16 %v549, %v545
      %v646 = vpack.c.b16 %v550, %v546
      %v647 = vpack.c.b16 %v555, %v551
      %v648 = vpack.c.b16 %v556, %v552
      %v649 = vpack.c.b16 %v557, %v553
      %v650 = vpack.c.b16 %v558, %v554
      %v651 = vpack.c.b16 %v563, %v559
      %v652 = vpack.c.b16 %v564, %v560
      %v653 = vpack.c.b16 %v565, %v561
      %v654 = vpack.c.b16 %v566, %v562
      %v655 = vpack.c.b16 %v571, %v567
      %v656 = vpack.c.b16 %v572, %v568
      %v657 = vpack.c.b16 %v573, %v569
      %v658 = vpack.c.b16 %v574, %v570
      %v659 = vpack.c.b16 %v579, %v575
      %v660 = vpack.c.b16 %v580, %v576
      %v661 = vpack.c.b16 %v581, %v577
      %v662 = vpack.c.b16 %v582, %v578
      %v663 = vpack.c.b16 %v587, %v583
      %v664 = vpack.c.b16 %v588, %v584
      %v665 = vpack.c.b16 %v589, %v585
      %v666 = vpack.c.b16 %v590, %v586
      %v667 = vpack.c.b16 %v595, %v591
      %v668 = vpack.c.b16 %v596, %v592
      %v669 = vpack.c.b16 %v597, %v593
      %v670 = vpack.c.b16 %v598, %v594
      %v671 = vpack.c.b16 %v603, %v599
      %v672 = vpack.c.b16 %v604, %v600
      %v673 = vpack.c.b16 %v605, %v601
      %v674 = vpack.c.b16 %v606, %v602
      %v675 = vpack.c.b16 %v611, %v607
      %v676 = vpack.c.b16 %v612, %v608
      %v677 = vpack.c.b16 %v613, %v609
      %v678 = vpack.c.b16 %v614, %v610
      %v807 = vunpack.c.l.b16 %v359
      %v808 = vunpack.c.l.b16 %v360
      %v809 = vunpack.c.l.b16 %v361
      %v810 = vunpack.c.l.b16 %v362
      %v811 = vunpack.c.l.b16 %v363
      %v812 = vunpack.c.l.b16 %v364
      %v813 = vunpack.c.l.b16 %v365
      %v814 = vunpack.c.l.b16 %v366
      %v815 = vunpack.c.l.b16 %v367
      %v816 = vunpack.c.l.b16 %v368
      %v817 = vunpack.c.l.b16 %v369
      %v818 = vunpack.c.l.b16 %v370
      %v819 = vunpack.c.l.b16 %v371
      %v820 = vunpack.c.l.b16 %v372
      %v821 = vunpack.c.l.b16 %v373
      %v822 = vunpack.c.l.b16 %v374
      %v823 = vunpack.c.l.b16 %v375
      %v824 = vunpack.c.l.b16 %v376
      %v825 = vunpack.c.l.b16 %v377
      %v826 = vunpack.c.l.b16 %v378
      %v827 = vunpack.c.l.b16 %v379
      %v828 = vunpack.c.l.b16 %v380
      %v829 = vunpack.c.l.b16 %v381
      %v830 = vunpack.c.l.b16 %v382
      %v831 = vunpack.c.l.b16 %v383
      %v832 = vunpack.c.l.b16 %v384
      %v833 = vunpack.c.l.b16 %v385
      %v834 = vunpack.c.l.b16 %v386
      %v835 = vunpack.c.l.b16 %v387
      %v836 = vunpack.c.l.b16 %v388
      %v837 = vunpack.c.l.b16 %v389
      %v838 = vunpack.c.l.b16 %v390
      %v839 = vunpack.c.l.b16 %v391
      %v840 = vunpack.c.l.b16 %v392
      %v841 = vunpack.c.l.b16 %v393
      %v842 = vunpack.c.l.b16 %v394
      %v843 = vunpack.c.l.b16 %v395
      %v844 = vunpack.c.l.b16 %v396
      %v845 = vunpack.c.l.b16 %v397
      %v846 = vunpack.c.l.b16 %v398
      %v847 = vunpack.c.l.b16 %v399
      %v848 = vunpack.c.l.b16 %v400
      %v849 = vunpack.c.l.b16 %v401
      %v850 = vunpack.c.l.b16 %v402
      %v851 = vunpack.c.l.b16 %v403
      %v852 = vunpack.c.l.b16 %v404
      %v853 = vunpack.c.l.b16 %v405
      %v854 = vunpack.c.l.b16 %v406
      %v855 = vunpack.c.l.b16 %v407
      %v856 = vunpack.c.l.b16 %v408
      %v857 = vunpack.c.l.b16 %v409
      %v858 = vunpack.c.l.b16 %v410
      %v859 = vunpack.c.l.b16 %v411
      %v860 = vunpack.c.l.b16 %v412
      %v861 = vunpack.c.l.b16 %v413
      %v862 = vunpack.c.l.b16 %v414
      %v863 = vunpack.c.l.b16 %v415
      %v864 = vunpack.c.l.b16 %v416
      %v865 = vunpack.c.l.b16 %v417
      %v866 = vunpack.c.l.b16 %v418
      %v867 = vunpack.c.l.b16 %v419
      %v868 = vunpack.c.l.b16 %v420
      %v869 = vunpack.c.l.b16 %v421
      %v870 = vunpack.c.l.b16 %v422
      %v871 = vpack.c.b16 %v808, %v807
      %v872 = vpack.c.b16 %v810, %v809
      %v873 = vpack.c.b16 %v812, %v811
      %v874 = vpack.c.b16 %v814, %v813
      %v875 = vpack.c.b16 %v816, %v815
      %v876 = vpack.c.b16 %v818, %v817
      %v877 = vpack.c.b16 %v820, %v819
      %v878 = vpack.c.b16 %v822, %v821
      %v879 = vpack.c.b16 %v824, %v823
      %v880 = vpack.c.b16 %v826, %v825
      %v881 = vpack.c.b16 %v828, %v827
      %v882 = vpack.c.b16 %v830, %v829
      %v883 = vpack.c.b16 %v832, %v831
      %v884 = vpack.c.b16 %v834, %v833
      %v885 = vpack.c.b16 %v836, %v835
      %v886 = vpack.c.b16 %v838, %v837
      %v887 = vpack.c.b16 %v840, %v839
      %v888 = vpack.c.b16 %v842, %v841
      %v889 = vpack.c.b16 %v844, %v843
      %v890 = vpack.c.b16 %v846, %v845
      %v891 = vpack.c.b16 %v848, %v847
      %v892 = vpack.c.b16 %v850, %v849
      %v893 = vpack.c.b16 %v852, %v851
      %v894 = vpack.c.b16 %v854, %v853
      %v895 = vpack.c.b16 %v856, %v855
      %v896 = vpack.c.b16 %v858, %v857
      %v897 = vpack.c.b16 %v860, %v859
      %v898 = vpack.c.b16 %v862, %v861
      %v899 = vpack.c.b16 %v864, %v863
      %v900 = vpack.c.b16 %v866, %v865
      %v901 = vpack.c.b16 %v868, %v867
      %v902 = vpack.c.b16 %v870, %v869
      %935 = vmatprep.subr.bf16.mxu0 0
      %936 = vmatpush1.bf16.msra.mxu0 %v878
      %937 = vmatprep.subr.bf16.mxu0 0
      %938 = vmatpush1.bf16.msra.mxu0 %v877
      %939 = vmatprep.subr.bf16.mxu0 0
      %940 = vmatpush1.bf16.msra.mxu0 %v876
      %941 = vmatprep.subr.bf16.mxu0 0
      %942 = vmatpush1.bf16.msra.mxu0 %v875
      %943 = vmatprep.subr.bf16.mxu0 0
      %944 = vmatpush1.bf16.msra.mxu0 %v874
      %945 = vmatprep.subr.bf16.mxu0 0
      %946 = vmatpush1.bf16.msra.mxu0 %v873
      %947 = vmatprep.subr.bf16.mxu0 0
      %948 = vmatpush1.bf16.msra.mxu0 %v872
      %949 = vmatprep.subr.bf16.mxu0 0
      %950 = vmatpush1.bf16.msra.mxu0 %v871
      %951 = vmatprep.subr.bf16.mxu0 0
      %952 = vmatpush2.bf16.msra.mxu0 %v886
      %953 = vmatprep.subr.bf16.mxu0 0
      %954 = vmatpush2.bf16.msra.mxu0 %v885
      %955 = vmatprep.subr.bf16.mxu0 0
      %956 = vmatpush2.bf16.msra.mxu0 %v884
      %957 = vmatprep.subr.bf16.mxu0 0
      %958 = vmatpush2.bf16.msra.mxu0 %v883
      %959 = vmatprep.subr.bf16.mxu0 0
      %960 = vmatpush2.bf16.msra.mxu0 %v882
      %961 = vmatprep.subr.bf16.mxu0 0
      %962 = vmatpush2.bf16.msra.mxu0 %v881
      %963 = vmatprep.subr.bf16.mxu0 0
      %964 = vmatpush2.bf16.msra.mxu0 %v880
      %965 = vmatprep.subr.bf16.mxu0 0
      %966 = vmatpush2.bf16.msra.mxu0 %v879
      %967 = vmatprep.mubr.bf16.mxu0 %v616
      %968 = vmatmul.mubr.bf16.gmra.mxu0 %v615
      %v969 = vpop.f32.mrf.mxu0
      %v970 = vadd.f32 0.0, %v969
      %v971 = vpop.f32.mrf.mxu0
      %v972 = vpop.f32.mrf.mxu0
      %v973 = vadd.f32 0.0, %v972
      %v974 = vpop.f32.mrf.mxu0
      %975 = vmatprep.mubr.bf16.mxu0 %v620
      %976 = vmatmul.mubr.bf16.gmra.mxu0 %v619
      %v977 = vpop.f32.mrf.mxu0
      %v978 = vadd.f32 0.0, %v977
      %v979 = vpop.f32.mrf.mxu0
      %v980 = vpop.f32.mrf.mxu0
      %v981 = vadd.f32 0.0, %v980
      %v982 = vpop.f32.mrf.mxu0
      %983 = vmatprep.mubr.bf16.mxu0 %v624
      %984 = vmatmul.mubr.bf16.gmra.mxu0 %v623
      %v985 = vpop.f32.mrf.mxu0
      %v986 = vadd.f32 0.0, %v985
      %v987 = vpop.f32.mrf.mxu0
      %v988 = vpop.f32.mrf.mxu0
      %v989 = vadd.f32 0.0, %v988
      %v990 = vpop.f32.mrf.mxu0
      %991 = vmatprep.mubr.bf16.mxu0 %v628
      %992 = vmatmul.mubr.bf16.gmra.mxu0 %v627
      %v993 = vpop.f32.mrf.mxu0
      %v994 = vadd.f32 0.0, %v993
      %v995 = vpop.f32.mrf.mxu0
      %v996 = vpop.f32.mrf.mxu0
      %v997 = vadd.f32 0.0, %v996
      %v998 = vpop.f32.mrf.mxu0
      %999 = vmatprep.mubr.bf16.mxu0 %v632
      %1000 = vmatmul.mubr.bf16.gmra.mxu0 %v631
      %v1001 = vpop.f32.mrf.mxu0
      %v1002 = vadd.f32 0.0, %v1001
      %v1003 = vpop.f32.mrf.mxu0
      %v1004 = vpop.f32.mrf.mxu0
      %v1005 = vadd.f32 0.0, %v1004
      %v1006 = vpop.f32.mrf.mxu0
      %1007 = vmatprep.mubr.bf16.mxu0 %v636
      %1008 = vmatmul.mubr.bf16.gmra.mxu0 %v635
      %v1009 = vpop.f32.mrf.mxu0
      %v1010 = vadd.f32 0.0, %v1009
      %v1011 = vpop.f32.mrf.mxu0
      %v1012 = vpop.f32.mrf.mxu0
      %v1013 = vadd.f32 0.0, %v1012
      %v1014 = vpop.f32.mrf.mxu0
      %1015 = vmatprep.mubr.bf16.mxu0 %v640
      %1016 = vmatmul.mubr.bf16.gmra.mxu0 %v639
      %v1017 = vpop.f32.mrf.mxu0
      %v1018 = vadd.f32 0.0, %v1017
      %v1019 = vpop.f32.mrf.mxu0
      %v1020 = vpop.f32.mrf.mxu0
      %v1021 = vadd.f32 0.0, %v1020
      %v1022 = vpop.f32.mrf.mxu0
      %1023 = vmatprep.mubr.bf16.mxu0 %v644
      %1024 = vmatmul.mubr.bf16.gmra.mxu0 %v643
      %v1025 = vpop.f32.mrf.mxu0
      %v1026 = vadd.f32 0.0, %v1025
      %v1027 = vpop.f32.mrf.mxu0
      %v1028 = vpop.f32.mrf.mxu0
      %v1029 = vadd.f32 0.0, %v1028
      %v1030 = vpop.f32.mrf.mxu0
      %1031 = vmatprep.mubr.bf16.mxu0 %v648
      %1032 = vmatmul.mubr.bf16.gmra.mxu0 %v647
      %v1033 = vpop.f32.mrf.mxu0
      %v1034 = vadd.f32 0.0, %v1033
      %v1035 = vpop.f32.mrf.mxu0
      %v1036 = vpop.f32.mrf.mxu0
      %v1037 = vadd.f32 0.0, %v1036
      %v1038 = vpop.f32.mrf.mxu0
      %1039 = vmatprep.mubr.bf16.mxu0 %v652
      %1040 = vmatmul.mubr.bf16.gmra.mxu0 %v651
      %v1041 = vpop.f32.mrf.mxu0
      %v1042 = vadd.f32 0.0, %v1041
      %v1043 = vpop.f32.mrf.mxu0
      %v1044 = vpop.f32.mrf.mxu0
      %v1045 = vadd.f32 0.0, %v1044
      %v1046 = vpop.f32.mrf.mxu0
      %1047 = vmatprep.mubr.bf16.mxu0 %v656
      %1048 = vmatmul.mubr.bf16.gmra.mxu0 %v655
      %v1049 = vpop.f32.mrf.mxu0
      %v1050 = vadd.f32 0.0, %v1049
      %v1051 = vpop.f32.mrf.mxu0
      %v1052 = vpop.f32.mrf.mxu0
      %v1053 = vadd.f32 0.0, %v1052
      %v1054 = vpop.f32.mrf.mxu0
      %1055 = vmatprep.mubr.bf16.mxu0 %v660
      %1056 = vmatmul.mubr.bf16.gmra.mxu0 %v659
      %v1057 = vpop.f32.mrf.mxu0
      %v1058 = vadd.f32 0.0, %v1057
      %v1059 = vpop.f32.mrf.mxu0
      %v1060 = vpop.f32.mrf.mxu0
      %v1061 = vadd.f32 0.0, %v1060
      %v1062 = vpop.f32.mrf.mxu0
      %1063 = vmatprep.mubr.bf16.mxu0 %v664
      %1064 = vmatmul.mubr.bf16.gmra.mxu0 %v663
      %v1065 = vpop.f32.mrf.mxu0
      %v1066 = vadd.f32 0.0, %v1065
      %v1067 = vpop.f32.mrf.mxu0
      %v1068 = vpop.f32.mrf.mxu0
      %v1069 = vadd.f32 0.0, %v1068
      %v1070 = vpop.f32.mrf.mxu0
      %1071 = vmatprep.mubr.bf16.mxu0 %v668
      %1072 = vmatmul.mubr.bf16.gmra.mxu0 %v667
      %v1073 = vpop.f32.mrf.mxu0
      %v1074 = vadd.f32 0.0, %v1073
      %v1075 = vpop.f32.mrf.mxu0
      %v1076 = vpop.f32.mrf.mxu0
      %v1077 = vadd.f32 0.0, %v1076
      %v1078 = vpop.f32.mrf.mxu0
      %1079 = vmatprep.mubr.bf16.mxu0 %v672
      %1080 = vmatmul.mubr.bf16.gmra.mxu0 %v671
      %v1081 = vpop.f32.mrf.mxu0
      %v1082 = vadd.f32 0.0, %v1081
      %v1083 = vpop.f32.mrf.mxu0
      %v1084 = vpop.f32.mrf.mxu0
      %v1085 = vadd.f32 0.0, %v1084
      %v1086 = vpop.f32.mrf.mxu0
      %1087 = vmatprep.mubr.bf16.mxu0 %v676
      %1088 = vmatmul.mubr.bf16.gmra.mxu0 %v675
      %v1089 = vpop.f32.mrf.mxu0
      %v1090 = vadd.f32 0.0, %v1089
      %v1091 = vpop.f32.mrf.mxu0
      %v1092 = vpop.f32.mrf.mxu0
      %v1093 = vadd.f32 0.0, %v1092
      %v1094 = vpop.f32.mrf.mxu0
      %1095 = vdwg.mxu0
      %1096 = vmatprep.subr.bf16.mxu0 0
      %1097 = vmatpush1.bf16.msra.mxu0 %v894
      %1098 = vmatprep.subr.bf16.mxu0 0
      %1099 = vmatpush1.bf16.msra.mxu0 %v893
      %1100 = vmatprep.subr.bf16.mxu0 0
      %1101 = vmatpush1.bf16.msra.mxu0 %v892
      %1102 = vmatprep.subr.bf16.mxu0 0
      %1103 = vmatpush1.bf16.msra.mxu0 %v891
      %1104 = vmatprep.subr.bf16.mxu0 0
      %1105 = vmatpush1.bf16.msra.mxu0 %v890
      %1106 = vmatprep.subr.bf16.mxu0 0
      %1107 = vmatpush1.bf16.msra.mxu0 %v889
      %1108 = vmatprep.subr.bf16.mxu0 0
      %1109 = vmatpush1.bf16.msra.mxu0 %v888
      %1110 = vmatprep.subr.bf16.mxu0 0
      %1111 = vmatpush1.bf16.msra.mxu0 %v887
      %1112 = vmatprep.subr.bf16.mxu0 0
      %1113 = vmatpush2.bf16.msra.mxu0 %v902
      %1114 = vmatprep.subr.bf16.mxu0 0
      %1115 = vmatpush2.bf16.msra.mxu0 %v901
      %1116 = vmatprep.subr.bf16.mxu0 0
      %1117 = vmatpush2.bf16.msra.mxu0 %v900
      %1118 = vmatprep.subr.bf16.mxu0 0
      %1119 = vmatpush2.bf16.msra.mxu0 %v899
      %1120 = vmatprep.subr.bf16.mxu0 0
      %1121 = vmatpush2.bf16.msra.mxu0 %v898
      %1122 = vmatprep.subr.bf16.mxu0 0
      %1123 = vmatpush2.bf16.msra.mxu0 %v897
      %1124 = vmatprep.subr.bf16.mxu0 0
      %1125 = vmatpush2.bf16.msra.mxu0 %v896
      %1126 = vmatprep.subr.bf16.mxu0 0
      %1127 = vmatpush2.bf16.msra.mxu0 %v895
      %1128 = vmatprep.mubr.bf16.mxu0 %v618
      %1129 = vmatmul.mubr.bf16.gmra.mxu0 %v617
      %v1130 = vpop.f32.mrf.mxu0
      %v1131 = vadd.f32 %v970, %v1130
      %v1132 = vpop.f32.mrf.mxu0
      %v1133 = vpop.f32.mrf.mxu0
      %v1134 = vadd.f32 %v973, %v1133
      %v1135 = vpop.f32.mrf.mxu0
      %1136 = vmatprep.mubr.bf16.mxu0 %v622
      %1137 = vmatmul.mubr.bf16.gmra.mxu0 %v621
      %v1138 = vpop.f32.mrf.mxu0
      %v1139 = vadd.f32 %v978, %v1138
      %v1140 = vpop.f32.mrf.mxu0
      %v1141 = vpop.f32.mrf.mxu0
      %v1142 = vadd.f32 %v981, %v1141
      %v1143 = vpop.f32.mrf.mxu0
      %1144 = vmatprep.mubr.bf16.mxu0 %v626
      %1145 = vmatmul.mubr.bf16.gmra.mxu0 %v625
      %v1146 = vpop.f32.mrf.mxu0
      %v1147 = vadd.f32 %v986, %v1146
      %v1148 = vpop.f32.mrf.mxu0
      %v1149 = vpop.f32.mrf.mxu0
      %v1150 = vadd.f32 %v989, %v1149
      %v1151 = vpop.f32.mrf.mxu0
      %1152 = vmatprep.mubr.bf16.mxu0 %v630
      %1153 = vmatmul.mubr.bf16.gmra.mxu0 %v629
      %v1154 = vpop.f32.mrf.mxu0
      %v1155 = vadd.f32 %v994, %v1154
      %v1156 = vpop.f32.mrf.mxu0
      %v1157 = vpop.f32.mrf.mxu0
      %v1158 = vadd.f32 %v997, %v1157
      %v1159 = vpop.f32.mrf.mxu0
      %1160 = vmatprep.mubr.bf16.mxu0 %v634
      %1161 = vmatmul.mubr.bf16.gmra.mxu0 %v633
      %v1162 = vpop.f32.mrf.mxu0
      %v1163 = vadd.f32 %v1002, %v1162
      %v1164 = vpop.f32.mrf.mxu0
      %v1165 = vpop.f32.mrf.mxu0
      %v1166 = vadd.f32 %v1005, %v1165
      %v1167 = vpop.f32.mrf.mxu0
      %1168 = vmatprep.mubr.bf16.mxu0 %v638
      %1169 = vmatmul.mubr.bf16.gmra.mxu0 %v637
      %v1170 = vpop.f32.mrf.mxu0
      %v1171 = vadd.f32 %v1010, %v1170
      %v1172 = vpop.f32.mrf.mxu0
      %v1173 = vpop.f32.mrf.mxu0
      %v1174 = vadd.f32 %v1013, %v1173
      %v1175 = vpop.f32.mrf.mxu0
      %1176 = vmatprep.mubr.bf16.mxu0 %v642
      %1177 = vmatmul.mubr.bf16.gmra.mxu0 %v641
      %v1178 = vpop.f32.mrf.mxu0
      %v1179 = vadd.f32 %v1018, %v1178
      %v1180 = vpop.f32.mrf.mxu0
      %v1181 = vpop.f32.mrf.mxu0
      %v1182 = vadd.f32 %v1021, %v1181
      %v1183 = vpop.f32.mrf.mxu0
      %1184 = vmatprep.mubr.bf16.mxu0 %v646
      %1185 = vmatmul.mubr.bf16.gmra.mxu0 %v645
      %v1186 = vpop.f32.mrf.mxu0
      %v1187 = vadd.f32 %v1026, %v1186
      %v1188 = vpop.f32.mrf.mxu0
      %v1189 = vpop.f32.mrf.mxu0
      %v1190 = vadd.f32 %v1029, %v1189
      %v1191 = vpop.f32.mrf.mxu0
      %1192 = vmatprep.mubr.bf16.mxu0 %v650
      %1193 = vmatmul.mubr.bf16.gmra.mxu0 %v649
      %v1194 = vpop.f32.mrf.mxu0
      %v1195 = vadd.f32 %v1034, %v1194
      %v1196 = vpop.f32.mrf.mxu0
      %v1197 = vpop.f32.mrf.mxu0
      %v1198 = vadd.f32 %v1037, %v1197
      %v1199 = vpop.f32.mrf.mxu0
      %1200 = vmatprep.mubr.bf16.mxu0 %v654
      %1201 = vmatmul.mubr.bf16.gmra.mxu0 %v653
      %v1202 = vpop.f32.mrf.mxu0
      %v1203 = vadd.f32 %v1042, %v1202
      %v1204 = vpop.f32.mrf.mxu0
      %v1205 = vpop.f32.mrf.mxu0
      %v1206 = vadd.f32 %v1045, %v1205
      %v1207 = vpop.f32.mrf.mxu0
      %1208 = vmatprep.mubr.bf16.mxu0 %v658
      %1209 = vmatmul.mubr.bf16.gmra.mxu0 %v657
      %v1210 = vpop.f32.mrf.mxu0
      %v1211 = vadd.f32 %v1050, %v1210
      %v1212 = vpop.f32.mrf.mxu0
      %v1213 = vpop.f32.mrf.mxu0
      %v1214 = vadd.f32 %v1053, %v1213
      %v1215 = vpop.f32.mrf.mxu0
      %1216 = vmatprep.mubr.bf16.mxu0 %v662
      %1217 = vmatmul.mubr.bf16.gmra.mxu0 %v661
      %v1218 = vpop.f32.mrf.mxu0
      %v1219 = vadd.f32 %v1058, %v1218
      %v1220 = vpop.f32.mrf.mxu0
      %v1221 = vpop.f32.mrf.mxu0
      %v1222 = vadd.f32 %v1061, %v1221
      %v1223 = vpop.f32.mrf.mxu0
      %1224 = vmatprep.mubr.bf16.mxu0 %v666
      %1225 = vmatmul.mubr.bf16.gmra.mxu0 %v665
      %v1226 = vpop.f32.mrf.mxu0
      %v1227 = vadd.f32 %v1066, %v1226
      %v1228 = vpop.f32.mrf.mxu0
      %v1229 = vpop.f32.mrf.mxu0
      %v1230 = vadd.f32 %v1069, %v1229
      %v1231 = vpop.f32.mrf.mxu0
      %1232 = vmatprep.mubr.bf16.mxu0 %v670
      %1233 = vmatmul.mubr.bf16.gmra.mxu0 %v669
      %v1234 = vpop.f32.mrf.mxu0
      %v1235 = vadd.f32 %v1074, %v1234
      %v1236 = vpop.f32.mrf.mxu0
      %v1237 = vpop.f32.mrf.mxu0
      %v1238 = vadd.f32 %v1077, %v1237
      %v1239 = vpop.f32.mrf.mxu0
      %1240 = vmatprep.mubr.bf16.mxu0 %v674
      %1241 = vmatmul.mubr.bf16.gmra.mxu0 %v673
      %v1242 = vpop.f32.mrf.mxu0
      %v1243 = vadd.f32 %v1082, %v1242
      %v1244 = vpop.f32.mrf.mxu0
      %v1245 = vpop.f32.mrf.mxu0
      %v1246 = vadd.f32 %v1085, %v1245
      %v1247 = vpop.f32.mrf.mxu0
      %1248 = vmatprep.mubr.bf16.mxu0 %v678
      %1249 = vmatmul.mubr.bf16.gmra.mxu0 %v677
      %v1250 = vpop.f32.mrf.mxu0
      %v1251 = vadd.f32 %v1090, %v1250
      %v1252 = vpop.f32.mrf.mxu0
      %v1253 = vpop.f32.mrf.mxu0
      %v1254 = vadd.f32 %v1093, %v1253
      %v1255 = vpop.f32.mrf.mxu0
      %1256 = vdwg.mxu0
      %v1257 = vadd.f32 %v263, %v1131
      %v1258 = vadd.f32 %v264, %v1134
      %v1259 = vadd.f32 %v265, %v1139
      %v1260 = vadd.f32 %v266, %v1142
      %v1261 = vadd.f32 %v267, %v1147
      %v1262 = vadd.f32 %v268, %v1150
      %v1263 = vadd.f32 %v269, %v1155
      %v1264 = vadd.f32 %v270, %v1158
      %v1265 = vadd.f32 %v271, %v1163
      %v1266 = vadd.f32 %v272, %v1166
      %v1267 = vadd.f32 %v273, %v1171
      %v1268 = vadd.f32 %v274, %v1174
      %v1269 = vadd.f32 %v275, %v1179
      %v1270 = vadd.f32 %v276, %v1182
      %v1271 = vadd.f32 %v277, %v1187
      %v1272 = vadd.f32 %v278, %v1190
      %v1273 = vadd.f32 %v279, %v1195
      %v1274 = vadd.f32 %v280, %v1198
      %v1275 = vadd.f32 %v281, %v1203
      %v1276 = vadd.f32 %v282, %v1206
      %v1277 = vadd.f32 %v283, %v1211
      %v1278 = vadd.f32 %v284, %v1214
      %v1279 = vadd.f32 %v285, %v1219
      %v1280 = vadd.f32 %v286, %v1222
      %v1281 = vadd.f32 %v287, %v1227
      %v1282 = vadd.f32 %v288, %v1230
      %v1283 = vadd.f32 %v289, %v1235
      %v1284 = vadd.f32 %v290, %v1238
      %v1285 = vadd.f32 %v291, %v1243
      %v1286 = vadd.f32 %v292, %v1246
      %v1287 = vadd.f32 %v293, %v1251
      %v1288 = vadd.f32 %v294, %v1254
      %1289 = vst [vmem:[#allocation2] sm:$0xff] %v1257
      %1290 = vst [vmem:[#allocation2 + $0x8] sm:$0xff] %v1258
      %1291 = vst [vmem:[#allocation2 + $0x10] sm:$0xff] %v1259
      %1292 = vst [vmem:[#allocation2 + $0x18] sm:$0xff] %v1260
      %1293 = vst [vmem:[#allocation2 + $0x20] sm:$0xff] %v1261
      %1294 = vst [vmem:[#allocation2 + $0x28] sm:$0xff] %v1262
      %1295 = vst [vmem:[#allocation2 + $0x30] sm:$0xff] %v1263
      %1296 = vst [vmem:[#allocation2 + $0x38] sm:$0xff] %v1264
      %1297 = vst [vmem:[#allocation2 + $0x40] sm:$0xff] %v1265
      %1298 = vst [vmem:[#allocation2 + $0x48] sm:$0xff] %v1266
      %1299 = vst [vmem:[#allocation2 + $0x50] sm:$0xff] %v1267
      %1300 = vst [vmem:[#allocation2 + $0x58] sm:$0xff] %v1268
      %1301 = vst [vmem:[#allocation2 + $0x60] sm:$0xff] %v1269
      %1302 = vst [vmem:[#allocation2 + $0x68] sm:$0xff] %v1270
      %1303 = vst [vmem:[#allocation2 + $0x70] sm:$0xff] %v1271
      %1304 = vst [vmem:[#allocation2 + $0x78] sm:$0xff] %v1272
      %1305 = vst [vmem:[#allocation2 + $0x80] sm:$0xff] %v1273
      %1306 = vst [vmem:[#allocation2 + $0x88] sm:$0xff] %v1274
      %1307 = vst [vmem:[#allocation2 + $0x90] sm:$0xff] %v1275
      %1308 = vst [vmem:[#allocation2 + $0x98] sm:$0xff] %v1276
      %1309 = vst [vmem:[#allocation2 + $0xa0] sm:$0xff] %v1277
      %1310 = vst [vmem:[#allocation2 + $0xa8] sm:$0xff] %v1278
      %1311 = vst [vmem:[#allocation2 + $0xb0] sm:$0xff] %v1279
      %1312 = vst [vmem:[#allocation2 + $0xb8] sm:$0xff] %v1280
      %1313 = vst [vmem:[#allocation2 + $0xc0] sm:$0xff] %v1281
      %1314 = vst [vmem:[#allocation2 + $0xc8] sm:$0xff] %v1282
      %1315 = vst [vmem:[#allocation2 + $0xd0] sm:$0xff] %v1283
      %1316 = vst [vmem:[#allocation2 + $0xd8] sm:$0xff] %v1284
      %1317 = vst [vmem:[#allocation2 + $0xe0] sm:$0xff] %v1285
      %1318 = vst [vmem:[#allocation2 + $0xe8] sm:$0xff] %v1286
      %1319 = vst [vmem:[#allocation2 + $0xf0] sm:$0xff] %v1287
      %1320 = vst [vmem:[#allocation2 + $0xf8] sm:$0xff] %v1288
      // Predicated region
      $region33: #{generator_forward.25} parent=27 // pred_check
        %p1321 = pneg %p227
      $region34: #{generator_forward.25} parent=27 // pred_check_branch
        %1323 = sbr.rel (%p1321) target = $region36
      $region35: #{generator_forward.25} parent=27 // pred_region
        %v1324 = vld [vmem:[#allocation2] sm:$0xff]
        %v1325 = vld [vmem:[#allocation2 + $0x8] sm:$0xff]
        %v1326 = vld [vmem:[#allocation2 + $0x10] sm:$0xff]
        %v1327 = vld [vmem:[#allocation2 + $0x18] sm:$0xff]
        %v1328 = vld [vmem:[#allocation2 + $0x20] sm:$0xff]
        %v1329 = vld [vmem:[#allocation2 + $0x28] sm:$0xff]
        %v1330 = vld [vmem:[#allocation2 + $0x30] sm:$0xff]
        %v1331 = vld [vmem:[#allocation2 + $0x38] sm:$0xff]
        %v1332 = vld [vmem:[#allocation2 + $0x40] sm:$0xff]
        %v1333 = vld [vmem:[#allocation2 + $0x48] sm:$0xff]
        %v1334 = vld [vmem:[#allocation2 + $0x50] sm:$0xff]
        %v1335 = vld [vmem:[#allocation2 + $0x58] sm:$0xff]
        %v1336 = vld [vmem:[#allocation2 + $0x60] sm:$0xff]
        %v1337 = vld [vmem:[#allocation2 + $0x68] sm:$0xff]
        %v1338 = vld [vmem:[#allocation2 + $0x70] sm:$0xff]
        %v1339 = vld [vmem:[#allocation2 + $0x78] sm:$0xff]
        %v1340 = vld [vmem:[#allocation2 + $0x80] sm:$0xff]
        %v1341 = vld [vmem:[#allocation2 + $0x88] sm:$0xff]
        %v1342 = vld [vmem:[#allocation2 + $0x90] sm:$0xff]
        %v1343 = vld [vmem:[#allocation2 + $0x98] sm:$0xff]
        %v1344 = vld [vmem:[#allocation2 + $0xa0] sm:$0xff]
        %v1345 = vld [vmem:[#allocation2 + $0xa8] sm:$0xff]
        %v1346 = vld [vmem:[#allocation2 + $0xb0] sm:$0xff]
        %v1347 = vld [vmem:[#allocation2 + $0xb8] sm:$0xff]
        %v1348 = vld [vmem:[#allocation2 + $0xc0] sm:$0xff]
        %v1349 = vld [vmem:[#allocation2 + $0xc8] sm:$0xff]
        %v1350 = vld [vmem:[#allocation2 + $0xd0] sm:$0xff]
        %v1351 = vld [vmem:[#allocation2 + $0xd8] sm:$0xff]
        %v1352 = vld [vmem:[#allocation2 + $0xe0] sm:$0xff]
        %v1353 = vld [vmem:[#allocation2 + $0xe8] sm:$0xff]
        %v1354 = vld [vmem:[#allocation2 + $0xf0] sm:$0xff]
        %v1355 = vld [vmem:[#allocation2 + $0xf8] sm:$0xff]
        %1356 = vst [vmem:[%s224] sm:$0xff] %v1324
        %1357 = vst [vmem:[%s224 + $0x8] sm:$0xff] %v1325
        %1358 = vst [vmem:[%s224 + $0x10] sm:$0xff] %v1326
        %1359 = vst [vmem:[%s224 + $0x18] sm:$0xff] %v1327
        %1360 = vst [vmem:[%s224 + $0x20] sm:$0xff] %v1328
        %1361 = vst [vmem:[%s224 + $0x28] sm:$0xff] %v1329
        %1362 = vst [vmem:[%s224 + $0x30] sm:$0xff] %v1330
        %1363 = vst [vmem:[%s224 + $0x38] sm:$0xff] %v1331
        %1364 = vst [vmem:[%s224 + $0x40] sm:$0xff] %v1332
        %1365 = vst [vmem:[%s224 + $0x48] sm:$0xff] %v1333
        %1366 = vst [vmem:[%s224 + $0x50] sm:$0xff] %v1334
        %1367 = vst [vmem:[%s224 + $0x58] sm:$0xff] %v1335
        %1368 = vst [vmem:[%s224 + $0x60] sm:$0xff] %v1336
        %1369 = vst [vmem:[%s224 + $0x68] sm:$0xff] %v1337
        %1370 = vst [vmem:[%s224 + $0x70] sm:$0xff] %v1338
        %1371 = vst [vmem:[%s224 + $0x78] sm:$0xff] %v1339
        %1372 = vst [vmem:[%s224 + $0x80] sm:$0xff] %v1340
        %1373 = vst [vmem:[%s224 + $0x88] sm:$0xff] %v1341
        %1374 = vst [vmem:[%s224 + $0x90] sm:$0xff] %v1342
        %1375 = vst [vmem:[%s224 + $0x98] sm:$0xff] %v1343
        %1376 = vst [vmem:[%s224 + $0xa0] sm:$0xff] %v1344
        %1377 = vst [vmem:[%s224 + $0xa8] sm:$0xff] %v1345
        %1378 = vst [vmem:[%s224 + $0xb0] sm:$0xff] %v1346
        %1379 = vst [vmem:[%s224 + $0xb8] sm:$0xff] %v1347
        %1380 = vst [vmem:[%s224 + $0xc0] sm:$0xff] %v1348
        %1381 = vst [vmem:[%s224 + $0xc8] sm:$0xff] %v1349
        %1382 = vst [vmem:[%s224 + $0xd0] sm:$0xff] %v1350
        %1383 = vst [vmem:[%s224 + $0xd8] sm:$0xff] %v1351
        %1384 = vst [vmem:[%s224 + $0xe0] sm:$0xff] %v1352
        %1385 = vst [vmem:[%s224 + $0xe8] sm:$0xff] %v1353
        %1386 = vst [vmem:[%s224 + $0xf0] sm:$0xff] %v1354
        %1387 = vst [vmem:[%s224 + $0xf8] sm:$0xff] %v1355
      $region36: #{generator_forward.25} parent=27 // pred_fallthru
        _
      %s1388 = smul.u32 32, %s18
      %p1389 = scmp.lt.s32.totalorder %s1388, 63
      %s1390 = scalar_select %p1389, %s1388, 63
      %p1391 = scmp.lt.s32.totalorder %s19, 0
      %s1392 = scalar_select %p1391, %s19, 0
      %s1393 = sadd.s32 %s1392, %s1390
      %s1394 = smul.addr %s1393, 8
      %s1395 = scalar_lea.vmem %s2, %s1394
      // Predicated region
      $region37: #{generator_forward.25} parent=27 // pred_check
        %p1396 = pneg %p108
      $region38: #{generator_forward.25} parent=27 // pred_check_branch
        %1398 = sbr.rel (%p1396) target = $region40
      $region39: #{generator_forward.25} parent=27 // pred_region
        %s1399 = smul.u32 32, %s18
      $region40: #{generator_forward.25} parent=27 // pred_fallthru
        _
    $region28: #{generator_forward.25} parent=5 // pred_fallthru
      _
    %p1400 = scmp.le.s32.totalorder 2, %s8
    // Predicated region
    $region41: #{generator_forward.25} parent=5 // pred_check
      %p1401 = pneg %p1400
    $region42: #{generator_forward.25} parent=5 // pred_check_branch
      %1403 = sbr.rel (%p1401) target = $region44
    $region43: #{generator_forward.25} parent=5 // pred_region
      %s1404 = ssub.s32 %s8, 2
      // Predicated region
      $region45: #{generator_forward.25} parent=43 // pred_check
        %p1405 = pneg %p114
      $region46: #{generator_forward.25} parent=43 // pred_check_branch
        %1407 = sbr.rel (%p1405) target = $region48
      $region47: #{generator_forward.25} parent=43 // pred_region
        %s1408 = smul.u32 32, %s21
        %p1409 = scmp.lt.s32.totalorder %s1408, 63
        %s1410 = scalar_select %p1409, %s1408, 63
        %p1411 = scmp.lt.s32.totalorder %s22, 0
        %s1412 = scalar_select %p1411, %s22, 0
        %s1413 = sadd.s32 %s1412, %s1410
        %s1414 = smul.addr %s1413, 8
        %s1415 = scalar_lea.vmem %s2, %s1414
      $region48: #{generator_forward.25} parent=43 // pred_fallthru
        _
    $region44: #{generator_forward.25} parent=5 // pred_fallthru
      _
  $region6: #{generator_forward.25} parent=0 // loop_footer
    %s12 = sadd.s32 1, %s8
  $region7: #{generator_forward.25} parent=0 // loop_footer_branch
    %7 = sbr.rel target = $region3
  $region8: #{generator_forward.25} parent=0 // loop_exit
    _

// kernel: generator_forward.27
$region0: #{generator_forward.27}
  #allocation0 [shape = 'u32[]', space=smem, size = 0x4, offset = 0x4, fixed_abs, tag = 'smem constant byte address 0x4 - core index']
  #allocation1 [shape = 'u32[144,128]{1,0:T(1,128)}', space=vmem, size = 0x12000, scoped, tag = 'internal scratch']
  #allocation2 [shape = 'f32[128,128]{1,0:T(8,128)}', space=vmem, size = 0x10000, scoped, tag = 'scratch operand']
  %s0 = inlined_call_operand.vmem [shape: bf16[128,256], index: 0, kind: input, shape index: {}]
  %s1 = inlined_call_operand.vmem [shape: bf16[256,128], index: 1, kind: input, shape index: {}]
  %s2 = inlined_call_operand.vmem [shape: f32[128,128], index: 2, kind: output, shape index: {}]
  %s3 = sld [smem:[#allocation0]]
  $region26: #{generator_forward.27} parent=0
    _
  %s5 = ssub.s32 1, %s3
  %s6 = scalar_select 0, %s5, %s3
  // Predicated region
  $region2: #{generator_forward.27} parent=0 // pred_check
    _
  $region3: #{generator_forward.27} parent=0 // pred_check_branch
    %8 = sbr.rel (0) target = $region5
  $region4: #{generator_forward.27} parent=0 // pred_region
    _
  $region5: #{generator_forward.27} parent=0 // pred_fallthru
    _
  // Predicated region
  $region6: #{generator_forward.27} parent=0 // pred_check
    _
  $region7: #{generator_forward.27} parent=0 // pred_check_branch
    %10 = sbr.rel (0) target = $region9
  $region8: #{generator_forward.27} parent=0 // pred_region
    _
  $region9: #{generator_forward.27} parent=0 // pred_fallthru
    _
  %p12 = scmp.eq.s32.totalorder 0, 0
  // Predicated region
  $region10: #{generator_forward.27} parent=0 // pred_check
    %p13 = pneg %p12
  $region11: #{generator_forward.27} parent=0 // pred_check_branch
    %15 = sbr.rel (%p13) target = $region13
  $region12: #{generator_forward.27} parent=0 // pred_region
    %16 = vst [vmem:[#allocation2] sm:$0xff] 0.0
    %17 = vst [vmem:[#allocation2 + $0x8] sm:$0xff] 0.0
    %18 = vst [vmem:[#allocation2 + $0x10] sm:$0xff] 0.0
    %19 = vst [vmem:[#allocation2 + $0x18] sm:$0xff] 0.0
    %20 = vst [vmem:[#allocation2 + $0x20] sm:$0xff] 0.0
    %21 = vst [vmem:[#allocation2 + $0x28] sm:$0xff] 0.0
    %22 = vst [vmem:[#allocation2 + $0x30] sm:$0xff] 0.0
    %23 = vst [vmem:[#allocation2 + $0x38] sm:$0xff] 0.0
    %24 = vst [vmem:[#allocation2 + $0x40] sm:$0xff] 0.0
    %25 = vst [vmem:[#allocation2 + $0x48] sm:$0xff] 0.0
    %26 = vst [vmem:[#allocation2 + $0x50] sm:$0xff] 0.0
    %27 = vst [vmem:[#allocation2 + $0x58] sm:$0xff] 0.0
    %28 = vst [vmem:[#allocation2 + $0x60] sm:$0xff] 0.0
    %29 = vst [vmem:[#allocation2 + $0x68] sm:$0xff] 0.0
    %30 = vst [vmem:[#allocation2 + $0x70] sm:$0xff] 0.0
    %31 = vst [vmem:[#allocation2 + $0x78] sm:$0xff] 0.0
  $region13: #{generator_forward.27} parent=0 // pred_fallthru
    _
  %v32 = vld [vmem:[#allocation2] sm:$0xff]
  %v33 = vld [vmem:[#allocation2 + $0x8] sm:$0xff]
  %v34 = vld [vmem:[#allocation2 + $0x10] sm:$0xff]
  %v35 = vld [vmem:[#allocation2 + $0x18] sm:$0xff]
  %v36 = vld [vmem:[#allocation2 + $0x20] sm:$0xff]
  %v37 = vld [vmem:[#allocation2 + $0x28] sm:$0xff]
  %v38 = vld [vmem:[#allocation2 + $0x30] sm:$0xff]
  %v39 = vld [vmem:[#allocation2 + $0x38] sm:$0xff]
  %v40 = vld [vmem:[#allocation2 + $0x40] sm:$0xff]
  %v41 = vld [vmem:[#allocation2 + $0x48] sm:$0xff]
  %v42 = vld [vmem:[#allocation2 + $0x50] sm:$0xff]
  %v43 = vld [vmem:[#allocation2 + $0x58] sm:$0xff]
  %v44 = vld [vmem:[#allocation2 + $0x60] sm:$0xff]
  %v45 = vld [vmem:[#allocation2 + $0x68] sm:$0xff]
  %v46 = vld [vmem:[#allocation2 + $0x70] sm:$0xff]
  %v47 = vld [vmem:[#allocation2 + $0x78] sm:$0xff]
  %v48 = vld [vmem:[%s0] sm:$0xff]
  %v49 = vld [vmem:[%s0 + $0x8] sm:$0xff]
  %v50 = vld [vmem:[%s0 + $0x10] sm:$0xff]
  %v51 = vld [vmem:[%s0 + $0x18] sm:$0xff]
  %v52 = vld [vmem:[%s0 + $0x20] sm:$0xff]
  %v53 = vld [vmem:[%s0 + $0x28] sm:$0xff]
  %v54 = vld [vmem:[%s0 + $0x30] sm:$0xff]
  %v55 = vld [vmem:[%s0 + $0x38] sm:$0xff]
  %v56 = vld [vmem:[%s0 + $0x40] sm:$0xff]
  %v57 = vld [vmem:[%s0 + $0x48] sm:$0xff]
  %v58 = vld [vmem:[%s0 + $0x50] sm:$0xff]
  %v59 = vld [vmem:[%s0 + $0x58] sm:$0xff]
  %v60 = vld [vmem:[%s0 + $0x60] sm:$0xff]
  %v61 = vld [vmem:[%s0 + $0x68] sm:$0xff]
  %v62 = vld [vmem:[%s0 + $0x70] sm:$0xff]
  %v63 = vld [vmem:[%s0 + $0x78] sm:$0xff]
  %v64 = vld [vmem:[%s1] sm:$0xf]
  %v65 = vld [vmem:[%s1 + $0x4] sm:$0xf]
  %v66 = vld [vmem:[%s1 + $0x8] sm:$0xf]
  %v67 = vld [vmem:[%s1 + $0xc] sm:$0xf]
  %v68 = vld [vmem:[%s1 + $0x10] sm:$0xf]
  %v69 = vld [vmem:[%s1 + $0x14] sm:$0xf]
  %v70 = vld [vmem:[%s1 + $0x18] sm:$0xf]
  %v71 = vld [vmem:[%s1 + $0x1c] sm:$0xf]
  %v72 = vld [vmem:[%s1 + $0x20] sm:$0xf]
  %v73 = vld [vmem:[%s1 + $0x24] sm:$0xf]
  %v74 = vld [vmem:[%s1 + $0x28] sm:$0xf]
  %v75 = vld [vmem:[%s1 + $0x2c] sm:$0xf]
  %v76 = vld [vmem:[%s1 + $0x30] sm:$0xf]
  %v77 = vld [vmem:[%s1 + $0x34] sm:$0xf]
  %v78 = vld [vmem:[%s1 + $0x38] sm:$0xf]
  %v79 = vld [vmem:[%s1 + $0x3c] sm:$0xf]
  %v80 = vld [vmem:[%s1 + $0x40] sm:$0xf]
  %v81 = vld [vmem:[%s1 + $0x44] sm:$0xf]
  %v82 = vld [vmem:[%s1 + $0x48] sm:$0xf]
  %v83 = vld [vmem:[%s1 + $0x4c] sm:$0xf]
  %v84 = vld [vmem:[%s1 + $0x50] sm:$0xf]
  %v85 = vld [vmem:[%s1 + $0x54] sm:$0xf]
  %v86 = vld [vmem:[%s1 + $0x58] sm:$0xf]
  %v87 = vld [vmem:[%s1 + $0x5c] sm:$0xf]
  %v88 = vld [vmem:[%s1 + $0x60] sm:$0xf]
  %v89 = vld [vmem:[%s1 + $0x64] sm:$0xf]
  %v90 = vld [vmem:[%s1 + $0x68] sm:$0xf]
  %v91 = vld [vmem:[%s1 + $0x6c] sm:$0xf]
  %v92 = vld [vmem:[%s1 + $0x70] sm:$0xf]
  %v93 = vld [vmem:[%s1 + $0x74] sm:$0xf]
  %v94 = vld [vmem:[%s1 + $0x78] sm:$0xf]
  %v95 = vld [vmem:[%s1 + $0x7c] sm:$0xf]
  %v112 = vunpack.c.l.b16 %v48
  %v113 = vunpack.c.h.b16 %v48
  %v114 = vunpack.c.l.b16 %v49
  %v115 = vunpack.c.h.b16 %v49
  %v116 = vunpack.c.l.b16 %v50
  %v117 = vunpack.c.h.b16 %v50
  %v118 = vunpack.c.l.b16 %v51
  %v119 = vunpack.c.h.b16 %v51
  %v120 = vunpack.c.l.b16 %v52
  %v121 = vunpack.c.h.b16 %v52
  %v122 = vunpack.c.l.b16 %v53
  %v123 = vunpack.c.h.b16 %v53
  %v124 = vunpack.c.l.b16 %v54
  %v125 = vunpack.c.h.b16 %v54
  %v126 = vunpack.c.l.b16 %v55
  %v127 = vunpack.c.h.b16 %v55
  %v128 = vunpack.c.l.b16 %v56
  %v129 = vunpack.c.h.b16 %v56
  %v130 = vunpack.c.l.b16 %v57
  %v131 = vunpack.c.h.b16 %v57
  %v132 = vunpack.c.l.b16 %v58
  %v133 = vunpack.c.h.b16 %v58
  %v134 = vunpack.c.l.b16 %v59
  %v135 = vunpack.c.h.b16 %v59
  %v136 = vunpack.c.l.b16 %v60
  %v137 = vunpack.c.h.b16 %v60
  %v138 = vunpack.c.l.b16 %v61
  %v139 = vunpack.c.h.b16 %v61
  %v140 = vunpack.c.l.b16 %v62
  %v141 = vunpack.c.h.b16 %v62
  %v142 = vunpack.c.l.b16 %v63
  %v143 = vunpack.c.h.b16 %v63
  %v144 = vpack.c.b16 %v114, %v112
  %v145 = vpack.c.b16 %v115, %v113
  %v146 = vpack.c.b16 %v118, %v116
  %v147 = vpack.c.b16 %v119, %v117
  %v148 = vpack.c.b16 %v122, %v120
  %v149 = vpack.c.b16 %v123, %v121
  %v150 = vpack.c.b16 %v126, %v124
  %v151 = vpack.c.b16 %v127, %v125
  %v152 = vpack.c.b16 %v130, %v128
  %v153 = vpack.c.b16 %v131, %v129
  %v154 = vpack.c.b16 %v134, %v132
  %v155 = vpack.c.b16 %v135, %v133
  %v156 = vpack.c.b16 %v138, %v136
  %v157 = vpack.c.b16 %v139, %v137
  %v158 = vpack.c.b16 %v142, %v140
  %v159 = vpack.c.b16 %v143, %v141
  %v208 = vunpack.c.l.b16 %v64
  %v209 = vunpack.c.l.b16 %v65
  %v210 = vunpack.c.l.b16 %v66
  %v211 = vunpack.c.l.b16 %v67
  %v212 = vunpack.c.l.b16 %v68
  %v213 = vunpack.c.l.b16 %v69
  %v214 = vunpack.c.l.b16 %v70
  %v215 = vunpack.c.l.b16 %v71
  %v216 = vunpack.c.l.b16 %v72
  %v217 = vunpack.c.l.b16 %v73
  %v218 = vunpack.c.l.b16 %v74
  %v219 = vunpack.c.l.b16 %v75
  %v220 = vunpack.c.l.b16 %v76
  %v221 = vunpack.c.l.b16 %v77
  %v222 = vunpack.c.l.b16 %v78
  %v223 = vunpack.c.l.b16 %v79
  %v224 = vunpack.c.l.b16 %v80
  %v225 = vunpack.c.l.b16 %v81
  %v226 = vunpack.c.l.b16 %v82
  %v227 = vunpack.c.l.b16 %v83
  %v228 = vunpack.c.l.b16 %v84
  %v229 = vunpack.c.l.b16 %v85
  %v230 = vunpack.c.l.b16 %v86
  %v231 = vunpack.c.l.b16 %v87
  %v232 = vunpack.c.l.b16 %v88
  %v233 = vunpack.c.l.b16 %v89
  %v234 = vunpack.c.l.b16 %v90
  %v235 = vunpack.c.l.b16 %v91
  %v236 = vunpack.c.l.b16 %v92
  %v237 = vunpack.c.l.b16 %v93
  %v238 = vunpack.c.l.b16 %v94
  %v239 = vunpack.c.l.b16 %v95
  %v240 = vpack.c.b16 %v209, %v208
  %v241 = vpack.c.b16 %v211, %v210
  %v242 = vpack.c.b16 %v213, %v212
  %v243 = vpack.c.b16 %v215, %v214
  %v244 = vpack.c.b16 %v217, %v216
  %v245 = vpack.c.b16 %v219, %v218
  %v246 = vpack.c.b16 %v221, %v220
  %v247 = vpack.c.b16 %v223, %v222
  %v248 = vpack.c.b16 %v225, %v224
  %v249 = vpack.c.b16 %v227, %v226
  %v250 = vpack.c.b16 %v229, %v228
  %v251 = vpack.c.b16 %v231, %v230
  %v252 = vpack.c.b16 %v233, %v232
  %v253 = vpack.c.b16 %v235, %v234
  %v254 = vpack.c.b16 %v237, %v236
  %v255 = vpack.c.b16 %v239, %v238
  %272 = vmatprep.subr.bf16.mxu0 0
  %273 = vmatpush1.bf16.msra.mxu0 %v247
  %274 = vmatprep.subr.bf16.mxu0 0
  %275 = vmatpush1.bf16.msra.mxu0 %v246
  %276 = vmatprep.subr.bf16.mxu0 0
  %277 = vmatpush1.bf16.msra.mxu0 %v245
  %278 = vmatprep.subr.bf16.mxu0 0
  %279 = vmatpush1.bf16.msra.mxu0 %v244
  %280 = vmatprep.subr.bf16.mxu0 0
  %281 = vmatpush1.bf16.msra.mxu0 %v243
  %282 = vmatprep.subr.bf16.mxu0 0
  %283 = vmatpush1.bf16.msra.mxu0 %v242
  %284 = vmatprep.subr.bf16.mxu0 0
  %285 = vmatpush1.bf16.msra.mxu0 %v241
  %286 = vmatprep.subr.bf16.mxu0 0
  %287 = vmatpush1.bf16.msra.mxu0 %v240
  %288 = vmatprep.subr.bf16.mxu0 0
  %289 = vmatpush2.bf16.msra.mxu0 %v255
  %290 = vmatprep.subr.bf16.mxu0 0
  %291 = vmatpush2.bf16.msra.mxu0 %v254
  %292 = vmatprep.subr.bf16.mxu0 0
  %293 = vmatpush2.bf16.msra.mxu0 %v253
  %294 = vmatprep.subr.bf16.mxu0 0
  %295 = vmatpush2.bf16.msra.mxu0 %v252
  %296 = vmatprep.subr.bf16.mxu0 0
  %297 = vmatpush2.bf16.msra.mxu0 %v251
  %298 = vmatprep.subr.bf16.mxu0 0
  %299 = vmatpush2.bf16.msra.mxu0 %v250
  %300 = vmatprep.subr.bf16.mxu0 0
  %301 = vmatpush2.bf16.msra.mxu0 %v249
  %302 = vmatprep.subr.bf16.mxu0 0
  %303 = vmatpush2.bf16.msra.mxu0 %v248
  %304 = vmatprep.mubr.bf16.mxu0 %v145
  %305 = vmatmul.mubr.bf16.gmra.mxu0 %v144
  %v306 = vpop.f32.mrf.mxu0
  %v307 = vadd.f32 0.0, %v306
  %v308 = vpop.f32.mrf.mxu0
  %v309 = vpop.f32.mrf.mxu0
  %v310 = vadd.f32 0.0, %v309
  %v311 = vpop.f32.mrf.mxu0
  %312 = vmatprep.mubr.bf16.mxu0 %v147
  %313 = vmatmul.mubr.bf16.gmra.mxu0 %v146
  %v314 = vpop.f32.mrf.mxu0
  %v315 = vadd.f32 0.0, %v314
  %v316 = vpop.f32.mrf.mxu0
  %v317 = vpop.f32.mrf.mxu0
  %v318 = vadd.f32 0.0, %v317
  %v319 = vpop.f32.mrf.mxu0
  %320 = vmatprep.mubr.bf16.mxu0 %v149
  %321 = vmatmul.mubr.bf16.gmra.mxu0 %v148
  %v322 = vpop.f32.mrf.mxu0
  %v323 = vadd.f32 0.0, %v322
  %v324 = vpop.f32.mrf.mxu0
  %v325 = vpop.f32.mrf.mxu0
  %v326 = vadd.f32 0.0, %v325
  %v327 = vpop.f32.mrf.mxu0
  %328 = vmatprep.mubr.bf16.mxu0 %v151
  %329 = vmatmul.mubr.bf16.gmra.mxu0 %v150
  %v330 = vpop.f32.mrf.mxu0
  %v331 = vadd.f32 0.0, %v330
  %v332 = vpop.f32.mrf.mxu0
  %v333 = vpop.f32.mrf.mxu0
  %v334 = vadd.f32 0.0, %v333
  %v335 = vpop.f32.mrf.mxu0
  %336 = vmatprep.mubr.bf16.mxu0 %v153
  %337 = vmatmul.mubr.bf16.gmra.mxu0 %v152
  %v338 = vpop.f32.mrf.mxu0
  %v339 = vadd.f32 0.0, %v338
  %v340 = vpop.f32.mrf.mxu0
  %v341 = vpop.f32.mrf.mxu0
  %v342 = vadd.f32 0.0, %v341
  %v343 = vpop.f32.mrf.mxu0
  %344 = vmatprep.mubr.bf16.mxu0 %v155
  %345 = vmatmul.mubr.bf16.gmra.mxu0 %v154
  %v346 = vpop.f32.mrf.mxu0
  %v347 = vadd.f32 0.0, %v346
  %v348 = vpop.f32.mrf.mxu0
  %v349 = vpop.f32.mrf.mxu0
  %v350 = vadd.f32 0.0, %v349
  %v351 = vpop.f32.mrf.mxu0
  %352 = vmatprep.mubr.bf16.mxu0 %v157
  %353 = vmatmul.mubr.bf16.gmra.mxu0 %v156
  %v354 = vpop.f32.mrf.mxu0
  %v355 = vadd.f32 0.0, %v354
  %v356 = vpop.f32.mrf.mxu0
  %v357 = vpop.f32.mrf.mxu0
  %v358 = vadd.f32 0.0, %v357
  %v359 = vpop.f32.mrf.mxu0
  %360 = vmatprep.mubr.bf16.mxu0 %v159
  %361 = vmatmul.mubr.bf16.gmra.mxu0 %v158
  %v362 = vpop.f32.mrf.mxu0
  %v363 = vadd.f32 0.0, %v362
  %v364 = vpop.f32.mrf.mxu0
  %v365 = vpop.f32.mrf.mxu0
  %v366 = vadd.f32 0.0, %v365
  %v367 = vpop.f32.mrf.mxu0
  %368 = vdwg.mxu0
  %v369 = vadd.f32 %v32, %v307
  %v370 = vadd.f32 %v33, %v310
  %v371 = vadd.f32 %v34, %v315
  %v372 = vadd.f32 %v35, %v318
  %v373 = vadd.f32 %v36, %v323
  %v374 = vadd.f32 %v37, %v326
  %v375 = vadd.f32 %v38, %v331
  %v376 = vadd.f32 %v39, %v334
  %v377 = vadd.f32 %v40, %v339
  %v378 = vadd.f32 %v41, %v342
  %v379 = vadd.f32 %v42, %v347
  %v380 = vadd.f32 %v43, %v350
  %v381 = vadd.f32 %v44, %v355
  %v382 = vadd.f32 %v45, %v358
  %v383 = vadd.f32 %v46, %v363
  %v384 = vadd.f32 %v47, %v366
  %385 = vst [vmem:[#allocation2] sm:$0xff] %v369
  %386 = vst [vmem:[#allocation2 + $0x8] sm:$0xff] %v370
  %387 = vst [vmem:[#allocation2 + $0x10] sm:$0xff] %v371
  %388 = vst [vmem:[#allocation2 + $0x18] sm:$0xff] %v372
  %389 = vst [vmem:[#allocation2 + $0x20] sm:$0xff] %v373
  %390 = vst [vmem:[#allocation2 + $0x28] sm:$0xff] %v374
  %391 = vst [vmem:[#allocation2 + $0x30] sm:$0xff] %v375
  %392 = vst [vmem:[#allocation2 + $0x38] sm:$0xff] %v376
  %393 = vst [vmem:[#allocation2 + $0x40] sm:$0xff] %v377
  %394 = vst [vmem:[#allocation2 + $0x48] sm:$0xff] %v378
  %395 = vst [vmem:[#allocation2 + $0x50] sm:$0xff] %v379
  %396 = vst [vmem:[#allocation2 + $0x58] sm:$0xff] %v380
  %397 = vst [vmem:[#allocation2 + $0x60] sm:$0xff] %v381
  %398 = vst [vmem:[#allocation2 + $0x68] sm:$0xff] %v382
  %399 = vst [vmem:[#allocation2 + $0x70] sm:$0xff] %v383
  %400 = vst [vmem:[#allocation2 + $0x78] sm:$0xff] %v384
  // Predicated region
  $region14: #{generator_forward.27} parent=0 // pred_check
    %p401 = pneg %p12
  $region15: #{generator_forward.27} parent=0 // pred_check_branch
    %403 = sbr.rel (%p401) target = $region17
  $region16: #{generator_forward.27} parent=0 // pred_region
    %v404 = vld [vmem:[#allocation2] sm:$0xff]
    %v405 = vld [vmem:[#allocation2 + $0x8] sm:$0xff]
    %v406 = vld [vmem:[#allocation2 + $0x10] sm:$0xff]
    %v407 = vld [vmem:[#allocation2 + $0x18] sm:$0xff]
    %v408 = vld [vmem:[#allocation2 + $0x20] sm:$0xff]
    %v409 = vld [vmem:[#allocation2 + $0x28] sm:$0xff]
    %v410 = vld [vmem:[#allocation2 + $0x30] sm:$0xff]
    %v411 = vld [vmem:[#allocation2 + $0x38] sm:$0xff]
    %v412 = vld [vmem:[#allocation2 + $0x40] sm:$0xff]
    %v413 = vld [vmem:[#allocation2 + $0x48] sm:$0xff]
    %v414 = vld [vmem:[#allocation2 + $0x50] sm:$0xff]
    %v415 = vld [vmem:[#allocation2 + $0x58] sm:$0xff]
    %v416 = vld [vmem:[#allocation2 + $0x60] sm:$0xff]
    %v417 = vld [vmem:[#allocation2 + $0x68] sm:$0xff]
    %v418 = vld [vmem:[#allocation2 + $0x70] sm:$0xff]
    %v419 = vld [vmem:[#allocation2 + $0x78] sm:$0xff]
    %420 = vst [vmem:[%s2] sm:$0xff] %v404
    %421 = vst [vmem:[%s2 + $0x8] sm:$0xff] %v405
    %422 = vst [vmem:[%s2 + $0x10] sm:$0xff] %v406
    %423 = vst [vmem:[%s2 + $0x18] sm:$0xff] %v407
    %424 = vst [vmem:[%s2 + $0x20] sm:$0xff] %v408
    %425 = vst [vmem:[%s2 + $0x28] sm:$0xff] %v409
    %426 = vst [vmem:[%s2 + $0x30] sm:$0xff] %v410
    %427 = vst [vmem:[%s2 + $0x38] sm:$0xff] %v411
    %428 = vst [vmem:[%s2 + $0x40] sm:$0xff] %v412
    %429 = vst [vmem:[%s2 + $0x48] sm:$0xff] %v413
    %430 = vst [vmem:[%s2 + $0x50] sm:$0xff] %v414
    %431 = vst [vmem:[%s2 + $0x58] sm:$0xff] %v415
    %432 = vst [vmem:[%s2 + $0x60] sm:$0xff] %v416
    %433 = vst [vmem:[%s2 + $0x68] sm:$0xff] %v417
    %434 = vst [vmem:[%s2 + $0x70] sm:$0xff] %v418
    %435 = vst [vmem:[%s2 + $0x78] sm:$0xff] %v419
  $region17: #{generator_forward.27} parent=0 // pred_fallthru
    _
  // Predicated region
  $region18: #{generator_forward.27} parent=0 // pred_check
    _
  $region19: #{generator_forward.27} parent=0 // pred_check_branch
    %437 = sbr.rel (0) target = $region21
  $region20: #{generator_forward.27} parent=0 // pred_region
    _
  $region21: #{generator_forward.27} parent=0 // pred_fallthru
    _
  // Predicated region
  $region22: #{generator_forward.27} parent=0 // pred_check
    _
  $region23: #{generator_forward.27} parent=0 // pred_check_branch
    %439 = sbr.rel (0) target = $region25
  $region24: #{generator_forward.27} parent=0 // pred_region
    _
  $region25: #{generator_forward.27} parent=0 // pred_fallthru
    _

// kernel: generator_forward.28
$region0: #{generator_forward.28}
  #allocation0 [shape = 'u32[]', space=smem, size = 0x4, offset = 0x4, fixed_abs, tag = 'smem constant byte address 0x4 - core index']
  #allocation1 [shape = 'u32[144,128]{1,0:T(1,128)}', space=vmem, size = 0x12000, scoped, tag = 'internal scratch']
  %s0 = inlined_call_operand.vmem [shape: f32[2,64,32], index: 0, kind: input, shape index: {}]
  %s1 = inlined_call_operand.vmem [shape: f32[1,1,32], index: 1, kind: input, shape index: {}]
  %s2 = inlined_call_operand.vmem [shape: f32[1,1,32], index: 2, kind: input, shape index: {}]
  %s3 = inlined_call_operand.vmem [shape: f32[2,64,32], index: 3, kind: output, shape index: {}]
  %s4 = sld [smem:[#allocation0]]
  $region45: #{generator_forward.28} parent=0
    _
  %s6 = ssub.s32 1, %s4
  %s7 = scalar_select 0, %s6, %s4
  loop: start=0, step=1, limit=4
  $region2: #{generator_forward.28} parent=0 // loop_pre_header
    _
  $region3: #{generator_forward.28} parent=0 // loop_header
    %s9 = sphi 0, %s13
    %p10 = scmp.ge.s32.totalorder %s9, 4
    %s19 = sphi 0, %s21
    %s22 = sphi 0, %s19
    %s23 = sphi 0, %s22
    %s39 = sphi 0, %s23
    %s43 = sphi 0, %s43
    %s45 = sphi 0, %s43
    %s46 = sphi 0, %s45
    %s60 = sphi 0, %s46
    %s64 = sphi 0, %s64
    %s66 = sphi 0, %s64
    %s67 = sphi 0, %s66
    %s81 = sphi 0, %s67
    %s87 = sphi 0, %s89
    %s90 = sphi 0, %s87
    %s91 = sphi 0, %s90
    %s107 = sphi 0, %s91
  $region4: #{generator_forward.28} parent=0 // loop_header_branch
    %12 = sbr.rel (%p10) target = $region8
  $region5: #{generator_forward.28} parent=0 // loop_body
    %s14 = ssub.s32 %s9, 1
    %s15 = ssub.s32 %s9, 2
    %s16 = sadd.s32 %s9, 1
    %s17 = ssub.s32 %s9, %s16
    %p18 = scmp.eq.s32.totalorder %s17, 0
    %s20 = sadd.s32 %s19, 1
    %s21 = scalar_select %p18, %s19, %s20
    %p24 = pneg %p18
    %p25 = scmp.eq.s32.totalorder %s9, 1
    %p26 = por %p24, %p25
    %p27 = scmp.ne.s32.totalorder %s19, %s22
    %p28 = scmp.eq.s32.totalorder %s9, 0
    %p29 = por %p27, %p28
    %p30 = scmp.ne.s32.totalorder %s19, %s22
    %p31 = scmp.eq.s32.totalorder %s14, 1
    %p32 = por %p30, %p31
    %p33 = scmp.ne.s32.totalorder %s22, %s23
    %p34 = scmp.eq.s32.totalorder %s14, 0
    %p35 = por %p33, %p34
    %p36 = scmp.ne.s32.totalorder %s22, %s23
    %p37 = scmp.eq.s32.totalorder %s15, 1
    %p38 = por %p36, %p37
    %p40 = scmp.ne.s32.totalorder %s23, %s39
    %p41 = scmp.eq.s32.totalorder %s15, 0
    %p42 = por %p40, %p41
    %s44 = sadd.s32 %s43, 1
    %p47 = scmp.eq.s32.totalorder %s9, 1
    %p48 = scmp.ne.s32.totalorder %s43, %s45
    %p49 = scmp.eq.s32.totalorder %s9, 0
    %p50 = por %p48, %p49
    %p51 = scmp.ne.s32.totalorder %s43, %s45
    %p52 = scmp.eq.s32.totalorder %s14, 1
    %p53 = por %p51, %p52
    %p54 = scmp.ne.s32.totalorder %s45, %s46
    %p55 = scmp.eq.s32.totalorder %s14, 0
    %p56 = por %p54, %p55
    %p57 = scmp.ne.s32.totalorder %s45, %s46
    %p58 = scmp.eq.s32.totalorder %s15, 1
    %p59 = por %p57, %p58
    %p61 = scmp.ne.s32.totalorder %s46, %s60
    %p62 = scmp.eq.s32.totalorder %s15, 0
    %p63 = por %p61, %p62
    %s65 = sadd.s32 %s64, 1
    %p68 = scmp.eq.s32.totalorder %s9, 1
    %p69 = scmp.ne.s32.totalorder %s64, %s66
    %p70 = scmp.eq.s32.totalorder %s9, 0
    %p71 = por %p69, %p70
    %p72 = scmp.ne.s32.totalorder %s64, %s66
    %p73 = scmp.eq.s32.totalorder %s14, 1
    %p74 = por %p72, %p73
    %p75 = scmp.ne.s32.totalorder %s66, %s67
    %p76 = scmp.eq.s32.totalorder %s14, 0
    %p77 = por %p75, %p76
    %p78 = scmp.ne.s32.totalorder %s66, %s67
    %p79 = scmp.eq.s32.totalorder %s15, 1
    %p80 = por %p78, %p79
    %p82 = scmp.ne.s32.totalorder %s67, %s81
    %p83 = scmp.eq.s32.totalorder %s15, 0
    %p84 = por %p82, %p83
    %s85 = ssub.s32 %s9, %s16
    %p86 = scmp.eq.s32.totalorder %s85, 0
    %s88 = sadd.s32 %s87, 1
    %s89 = scalar_select %p86, %s87, %s88
    %p92 = pneg %p86
    %p93 = scmp.eq.s32.totalorder %s9, 1
    %p94 = por %p92, %p93
    %p95 = scmp.ne.s32.totalorder %s87, %s90
    %p96 = scmp.eq.s32.totalorder %s9, 0
    %p97 = por %p95, %p96
    %p98 = scmp.ne.s32.totalorder %s87, %s90
    %p99 = scmp.eq.s32.totalorder %s14, 1
    %p100 = por %p98, %p99
    %p101 = scmp.ne.s32.totalorder %s90, %s91
    %p102 = scmp.eq.s32.totalorder %s14, 0
    %p103 = por %p101, %p102
    %p104 = scmp.ne.s32.totalorder %s90, %s91
    %p105 = scmp.eq.s32.totalorder %s15, 1
    %p106 = por %p104, %p105
    %p108 = scmp.ne.s32.totalorder %s91, %s107
    %p109 = scmp.eq.s32.totalorder %s15, 0
    %p110 = por %p108, %p109
    %p111 = scmp.le.s32.totalorder 1, %s9
    %p112 = scmp.lt.s32.totalorder %s9, 3
    %p113 = pnand %p111, %p112
    %p114 = pneg %p113
    // Predicated region
    $region9: #{generator_forward.28} parent=5 // pred_check
      _
    $region10: #{generator_forward.28} parent=5 // pred_check_branch
      %116 = sbr.rel (%p113) target = $region12
    $region11: #{generator_forward.28} parent=5 // pred_region
      %s117 = ssub.s32 %s9, 1
      // Predicated region
      $region13: #{generator_forward.28} parent=11 // pred_check
        %p118 = pneg %p56
      $region14: #{generator_forward.28} parent=11 // pred_check_branch
        %120 = sbr.rel (%p118) target = $region16
      $region15: #{generator_forward.28} parent=11 // pred_region
        _
      $region16: #{generator_forward.28} parent=11 // pred_fallthru
        _
      // Predicated region
      $region17: #{generator_forward.28} parent=11 // pred_check
        %p121 = pneg %p77
      $region18: #{generator_forward.28} parent=11 // pred_check_branch
        %123 = sbr.rel (%p121) target = $region20
      $region19: #{generator_forward.28} parent=11 // pred_region
        _
      $region20: #{generator_forward.28} parent=11 // pred_fallthru
        _
    $region12: #{generator_forward.28} parent=5 // pred_fallthru
      _
    %p124 = scmp.lt.s32.totalorder %s9, 2
    // Predicated region
    $region21: #{generator_forward.28} parent=5 // pred_check
      %p125 = pneg %p124
    $region22: #{generator_forward.28} parent=5 // pred_check_branch
      %127 = sbr.rel (%p125) target = $region24
    $region23: #{generator_forward.28} parent=5 // pred_region
      // Predicated region
      $region25: #{generator_forward.28} parent=23 // pred_check
        %p128 = pneg %p29
      $region26: #{generator_forward.28} parent=23 // pred_check_branch
        %130 = sbr.rel (%p128) target = $region28
      $region27: #{generator_forward.28} parent=23 // pred_region
        %p131 = scmp.lt.s32.totalorder %s9, 1
        %s132 = scalar_select %p131, %s9, 1
        %s133 = smul.addr %s132, 8
        %s134 = smul.addr %s133, 8
        %s135 = scalar_lea.vmem %s0, %s134
      $region28: #{generator_forward.28} parent=23 // pred_fallthru
        _
    $region24: #{generator_forward.28} parent=5 // pred_fallthru
      _
    %p136 = scmp.le.s32.totalorder 1, %s9
    %p137 = scmp.lt.s32.totalorder %s9, 3
    %p138 = pnand %p136, %p137
    %p139 = pneg %p138
    // Predicated region
    $region29: #{generator_forward.28} parent=5 // pred_check
      _
    $region30: #{generator_forward.28} parent=5 // pred_check_branch
      %141 = sbr.rel (%p138) target = $region32
    $region31: #{generator_forward.28} parent=5 // pred_region
      %s142 = ssub.s32 %s9, 1
      %p143 = scmp.lt.s32.totalorder %s14, 1
      %s144 = scalar_select %p143, %s14, 1
      %s145 = smul.addr %s144, 8
      %s146 = smul.addr %s145, 8
      %s147 = scalar_lea.vmem %s0, %s146
      %p148 = pneg %p35
      %p149 = pneg %p32
      %p150 = pneg %p56
      %p151 = pneg %p53
      %p152 = pneg %p77
      %p153 = pneg %p74
      %p154 = pneg %p103
      %p155 = pneg %p100
      %p156 = scmp.lt.s32.totalorder %s14, 1
      %s157 = scalar_select %p156, %s14, 1
      %s158 = smul.addr %s157, 8
      %s159 = smul.addr %s158, 8
      %s160 = scalar_lea.vmem %s3, %s159
      %p161 = scmp.lt.s32.totalorder %s14, 1
      %s162 = scalar_select %p161, %s14, 1
      %s163 = smul.addr %s162, 8
      %s164 = smul.addr %s163, 8
      %s165 = scalar_lea.vmem %s0, %s164
      %p166 = scmp.lt.s32.totalorder %s14, 1
      %s167 = scalar_select %p166, %s14, 1
      %s168 = smul.addr %s167, 8
      %s169 = smul.addr %s168, 8
      %s170 = scalar_lea.vmem %s3, %s169
      %v171 = vld [vmem:[%s165] sm:$0xff]
      %v172 = vld [vmem:[%s165 + $0x8] sm:$0xff]
      %v173 = vld [vmem:[%s165 + $0x10] sm:$0xff]
      %v174 = vld [vmem:[%s165 + $0x18] sm:$0xff]
      %v175 = vld [vmem:[%s165 + $0x20] sm:$0xff]
      %v176 = vld [vmem:[%s165 + $0x28] sm:$0xff]
      %v177 = vld [vmem:[%s165 + $0x30] sm:$0xff]
      %v178 = vld [vmem:[%s165 + $0x38] sm:$0xff]
      %vm179 = vcmask 261120
      %v180 = vsel %vm179, %v171, 0.0
      %v181 = vsel %vm179, %v172, 0.0
      %v182 = vadd.f32 %v180, %v181
      %v183 = vsel %vm179, %v173, 0.0
      %v184 = vadd.f32 %v182, %v183
      %v185 = vsel %vm179, %v174, 0.0
      %v186 = vadd.f32 %v184, %v185
      %v187 = vsel %vm179, %v175, 0.0
      %v188 = vadd.f32 %v186, %v187
      %v189 = vsel %vm179, %v176, 0.0
      %v190 = vadd.f32 %v188, %v189
      %v191 = vsel %vm179, %v177, 0.0
      %v192 = vadd.f32 %v190, %v191
      %v193 = vsel %vm179, %v178, 0.0
      %v194 = vadd.f32 %v192, %v193
      %v195 = vrot.slane %v194, 4
      %v196 = vadd.f32 %v194, %v195
      %v197 = vrot.slane %v196, 2
      %v198 = vadd.f32 %v196, %v197
      %v199 = vrot.slane %v198, 1
      %v200 = vadd.f32 %v198, %v199
      %v201 = vrcp.pop 64.0
      %v202 = vmul.f32 %v200, %v201
      %v203 = vsub.f32 %v171, %v202
      %v204 = vsub.f32 %v172, %v202
      %v205 = vsub.f32 %v173, %v202
      %v206 = vsub.f32 %v174, %v202
      %v207 = vsub.f32 %v175, %v202
      %v208 = vsub.f32 %v176, %v202
      %v209 = vsub.f32 %v177, %v202
      %v210 = vsub.f32 %v178, %v202
      %v211 = vmul.f32 %v203, %v203
      %v212 = vmul.f32 %v204, %v204
      %v213 = vmul.f32 %v205, %v205
      %v214 = vmul.f32 %v206, %v206
      %v215 = vmul.f32 %v207, %v207
      %v216 = vmul.f32 %v208, %v208
      %v217 = vmul.f32 %v209, %v209
      %v218 = vmul.f32 %v210, %v210
      %v219 = vsel %vm179, %v211, 0.0
      %v220 = vsel %vm179, %v212, 0.0
      %v221 = vadd.f32 %v219, %v220
      %v222 = vsel %vm179, %v213, 0.0
      %v223 = vadd.f32 %v221, %v222
      %v224 = vsel %vm179, %v214, 0.0
      %v225 = vadd.f32 %v223, %v224
      %v226 = vsel %vm179, %v215, 0.0
      %v227 = vadd.f32 %v225, %v226
      %v228 = vsel %vm179, %v216, 0.0
      %v229 = vadd.f32 %v227, %v228
      %v230 = vsel %vm179, %v217, 0.0
      %v231 = vadd.f32 %v229, %v230
      %v232 = vsel %vm179, %v218, 0.0
      %v233 = vadd.f32 %v231, %v232
      %v234 = vrot.slane %v233, 4
      %v235 = vadd.f32 %v233, %v234
      %v236 = vrot.slane %v235, 2
      %v237 = vadd.f32 %v235, %v236
      %v238 = vrot.slane %v237, 1
      %v239 = vadd.f32 %v237, %v238
      %v240 = vmul.f32 %v239, %v201
      %v241 = vadd.f32 %v240, 1e-05
      %v242 = vrsqrt.pop %v241
      %v243 = vmul.f32 %v203, %v242
      %v244 = vmul.f32 %v204, %v242
      %v245 = vmul.f32 %v205, %v242
      %v246 = vmul.f32 %v206, %v242
      %v247 = vmul.f32 %v207, %v242
      %v248 = vmul.f32 %v208, %v242
      %v249 = vmul.f32 %v209, %v242
      %v250 = vmul.f32 %v210, %v242
      %v251 = vld [vmem:[%s1] sm:$0x1]
      %v253 = vlaneseq
      %v254 = vshrl.u32 %v253, 7
      %v255 = vsub.s32 0, %v254
      %v256 = vrot.slane %v251, %v255
      %v258 = vmul.f32 %v243, %v256
      %v259 = vmul.f32 %v244, %v256
      %v260 = vmul.f32 %v245, %v256
      %v261 = vmul.f32 %v246, %v256
      %v262 = vmul.f32 %v247, %v256
      %v263 = vmul.f32 %v248, %v256
      %v264 = vmul.f32 %v249, %v256
      %v265 = vmul.f32 %v250, %v256
      %v266 = vld [vmem:[%s2] sm:$0x1]
      %v268 = vlaneseq
      %v269 = vshrl.u32 %v268, 7
      %v270 = vsub.s32 0, %v269
      %v271 = vrot.slane %v266, %v270
      %v273 = vadd.f32 %v258, %v271
      %v274 = vadd.f32 %v259, %v271
      %v275 = vadd.f32 %v260, %v271
      %v276 = vadd.f32 %v261, %v271
      %v277 = vadd.f32 %v262, %v271
      %v278 = vadd.f32 %v263, %v271
      %v279 = vadd.f32 %v264, %v271
      %v280 = vadd.f32 %v265, %v271
      %v281 = vmax.f32 %v273, 0.0
      %v282 = vmax.f32 %v274, 0.0
      %v283 = vmax.f32 %v275, 0.0
      %v284 = vmax.f32 %v276, 0.0
      %v285 = vmax.f32 %v277, 0.0
      %v286 = vmax.f32 %v278, 0.0
      %v287 = vmax.f32 %v279, 0.0
      %v288 = vmax.f32 %v280, 0.0
      %289 = vst.msk [vmem:[%s170] sm:$0xff] %vm179, %v281
      %290 = vst.msk [vmem:[%s170 + $0x8] sm:$0xff] %vm179, %v282
      %291 = vst.msk [vmem:[%s170 + $0x10] sm:$0xff] %vm179, %v283
      %292 = vst.msk [vmem:[%s170 + $0x18] sm:$0xff] %vm179, %v284
      %293 = vst.msk [vmem:[%s170 + $0x20] sm:$0xff] %vm179, %v285
      %294 = vst.msk [vmem:[%s170 + $0x28] sm:$0xff] %vm179, %v286
      %295 = vst.msk [vmem:[%s170 + $0x30] sm:$0xff] %vm179, %v287
      %296 = vst.msk [vmem:[%s170 + $0x38] sm:$0xff] %vm179, %v288
      %p297 = scmp.lt.s32.totalorder %s14, 1
      %s298 = scalar_select %p297, %s14, 1
      %s299 = smul.addr %s298, 8
      %s300 = smul.addr %s299, 8
      %s301 = scalar_lea.vmem %s3, %s300
      // Predicated region
      $region33: #{generator_forward.28} parent=31 // pred_check
        %p302 = pneg %p100
      $region34: #{generator_forward.28} parent=31 // pred_check_branch
        %304 = sbr.rel (%p302) target = $region36
      $region35: #{generator_forward.28} parent=31 // pred_region
        _
      $region36: #{generator_forward.28} parent=31 // pred_fallthru
        _
    $region32: #{generator_forward.28} parent=5 // pred_fallthru
      _
    %p305 = scmp.le.s32.totalorder 2, %s9
    // Predicated region
    $region37: #{generator_forward.28} parent=5 // pred_check
      %p306 = pneg %p305
    $region38: #{generator_forward.28} parent=5 // pred_check_branch
      %308 = sbr.rel (%p306) target = $region40
    $region39: #{generator_forward.28} parent=5 // pred_region
      %s309 = ssub.s32 %s9, 2
      // Predicated region
      $region41: #{generator_forward.28} parent=39 // pred_check
        %p310 = pneg %p106
      $region42: #{generator_forward.28} parent=39 // pred_check_branch
        %312 = sbr.rel (%p310) target = $region44
      $region43: #{generator_forward.28} parent=39 // pred_region
        %p313 = scmp.lt.s32.totalorder %s15, 1
        %s314 = scalar_select %p313, %s15, 1
        %s315 = smul.addr %s314, 8
        %s316 = smul.addr %s315, 8
        %s317 = scalar_lea.vmem %s3, %s316
      $region44: #{generator_forward.28} parent=39 // pred_fallthru
        _
    $region40: #{generator_forward.28} parent=5 // pred_fallthru
      _
  $region6: #{generator_forward.28} parent=0 // loop_footer
    %s13 = sadd.s32 1, %s9
  $region7: #{generator_forward.28} parent=0 // loop_footer_branch
    %8 = sbr.rel target = $region3
  $region8: #{generator_forward.28} parent=0 // loop_exit
    _

// kernel: generator_forward.30
$region0: #{generator_forward.30}
  #allocation0 [shape = 'u32[]', space=smem, size = 0x4, offset = 0x4, fixed_abs, tag = 'smem constant byte address 0x4 - core index']
  #allocation1 [shape = 'u32[144,128]{1,0:T(1,128)}', space=vmem, size = 0x12000, scoped, tag = 'internal scratch']
  %s0 = inlined_call_operand.vmem [shape: f32[2,16,64], index: 0, kind: input, shape index: {}]
  %s1 = inlined_call_operand.vmem [shape: f32[1,1,64], index: 1, kind: input, shape index: {}]
  %s2 = inlined_call_operand.vmem [shape: f32[1,1,64], index: 2, kind: input, shape index: {}]
  %s3 = inlined_call_operand.vmem [shape: f32[2,16,64], index: 3, kind: output, shape index: {}]
  %s4 = sld [smem:[#allocation0]]
  $region45: #{generator_forward.30} parent=0
    _
  %s6 = ssub.s32 1, %s4
  %s7 = scalar_select 0, %s6, %s4
  loop: start=0, step=1, limit=4
  $region2: #{generator_forward.30} parent=0 // loop_pre_header
    _
  $region3: #{generator_forward.30} parent=0 // loop_header
    %s9 = sphi 0, %s13
    %p10 = scmp.ge.s32.totalorder %s9, 4
    %s19 = sphi 0, %s21
    %s22 = sphi 0, %s19
    %s23 = sphi 0, %s22
    %s39 = sphi 0, %s23
    %s43 = sphi 0, %s43
    %s45 = sphi 0, %s43
    %s46 = sphi 0, %s45
    %s60 = sphi 0, %s46
    %s64 = sphi 0, %s64
    %s66 = sphi 0, %s64
    %s67 = sphi 0, %s66
    %s81 = sphi 0, %s67
    %s87 = sphi 0, %s89
    %s90 = sphi 0, %s87
    %s91 = sphi 0, %s90
    %s107 = sphi 0, %s91
  $region4: #{generator_forward.30} parent=0 // loop_header_branch
    %12 = sbr.rel (%p10) target = $region8
  $region5: #{generator_forward.30} parent=0 // loop_body
    %s14 = ssub.s32 %s9, 1
    %s15 = ssub.s32 %s9, 2
    %s16 = sadd.s32 %s9, 1
    %s17 = ssub.s32 %s9, %s16
    %p18 = scmp.eq.s32.totalorder %s17, 0
    %s20 = sadd.s32 %s19, 1
    %s21 = scalar_select %p18, %s19, %s20
    %p24 = pneg %p18
    %p25 = scmp.eq.s32.totalorder %s9, 1
    %p26 = por %p24, %p25
    %p27 = scmp.ne.s32.totalorder %s19, %s22
    %p28 = scmp.eq.s32.totalorder %s9, 0
    %p29 = por %p27, %p28
    %p30 = scmp.ne.s32.totalorder %s19, %s22
    %p31 = scmp.eq.s32.totalorder %s14, 1
    %p32 = por %p30, %p31
    %p33 = scmp.ne.s32.totalorder %s22, %s23
    %p34 = scmp.eq.s32.totalorder %s14, 0
    %p35 = por %p33, %p34
    %p36 = scmp.ne.s32.totalorder %s22, %s23
    %p37 = scmp.eq.s32.totalorder %s15, 1
    %p38 = por %p36, %p37
    %p40 = scmp.ne.s32.totalorder %s23, %s39
    %p41 = scmp.eq.s32.totalorder %s15, 0
    %p42 = por %p40, %p41
    %s44 = sadd.s32 %s43, 1
    %p47 = scmp.eq.s32.totalorder %s9, 1
    %p48 = scmp.ne.s32.totalorder %s43, %s45
    %p49 = scmp.eq.s32.totalorder %s9, 0
    %p50 = por %p48, %p49
    %p51 = scmp.ne.s32.totalorder %s43, %s45
    %p52 = scmp.eq.s32.totalorder %s14, 1
    %p53 = por %p51, %p52
    %p54 = scmp.ne.s32.totalorder %s45, %s46
    %p55 = scmp.eq.s32.totalorder %s14, 0
    %p56 = por %p54, %p55
    %p57 = scmp.ne.s32.totalorder %s45, %s46
    %p58 = scmp.eq.s32.totalorder %s15, 1
    %p59 = por %p57, %p58
    %p61 = scmp.ne.s32.totalorder %s46, %s60
    %p62 = scmp.eq.s32.totalorder %s15, 0
    %p63 = por %p61, %p62
    %s65 = sadd.s32 %s64, 1
    %p68 = scmp.eq.s32.totalorder %s9, 1
    %p69 = scmp.ne.s32.totalorder %s64, %s66
    %p70 = scmp.eq.s32.totalorder %s9, 0
    %p71 = por %p69, %p70
    %p72 = scmp.ne.s32.totalorder %s64, %s66
    %p73 = scmp.eq.s32.totalorder %s14, 1
    %p74 = por %p72, %p73
    %p75 = scmp.ne.s32.totalorder %s66, %s67
    %p76 = scmp.eq.s32.totalorder %s14, 0
    %p77 = por %p75, %p76
    %p78 = scmp.ne.s32.totalorder %s66, %s67
    %p79 = scmp.eq.s32.totalorder %s15, 1
    %p80 = por %p78, %p79
    %p82 = scmp.ne.s32.totalorder %s67, %s81
    %p83 = scmp.eq.s32.totalorder %s15, 0
    %p84 = por %p82, %p83
    %s85 = ssub.s32 %s9, %s16
    %p86 = scmp.eq.s32.totalorder %s85, 0
    %s88 = sadd.s32 %s87, 1
    %s89 = scalar_select %p86, %s87, %s88
    %p92 = pneg %p86
    %p93 = scmp.eq.s32.totalorder %s9, 1
    %p94 = por %p92, %p93
    %p95 = scmp.ne.s32.totalorder %s87, %s90
    %p96 = scmp.eq.s32.totalorder %s9, 0
    %p97 = por %p95, %p96
    %p98 = scmp.ne.s32.totalorder %s87, %s90
    %p99 = scmp.eq.s32.totalorder %s14, 1
    %p100 = por %p98, %p99
    %p101 = scmp.ne.s32.totalorder %s90, %s91
    %p102 = scmp.eq.s32.totalorder %s14, 0
    %p103 = por %p101, %p102
    %p104 = scmp.ne.s32.totalorder %s90, %s91
    %p105 = scmp.eq.s32.totalorder %s15, 1
    %p106 = por %p104, %p105
    %p108 = scmp.ne.s32.totalorder %s91, %s107
    %p109 = scmp.eq.s32.totalorder %s15, 0
    %p110 = por %p108, %p109
    %p111 = scmp.le.s32.totalorder 1, %s9
    %p112 = scmp.lt.s32.totalorder %s9, 3
    %p113 = pnand %p111, %p112
    %p114 = pneg %p113
    // Predicated region
    $region9: #{generator_forward.30} parent=5 // pred_check
      _
    $region10: #{generator_forward.30} parent=5 // pred_check_branch
      %116 = sbr.rel (%p113) target = $region12
    $region11: #{generator_forward.30} parent=5 // pred_region
      %s117 = ssub.s32 %s9, 1
      // Predicated region
      $region13: #{generator_forward.30} parent=11 // pred_check
        %p118 = pneg %p56
      $region14: #{generator_forward.30} parent=11 // pred_check_branch
        %120 = sbr.rel (%p118) target = $region16
      $region15: #{generator_forward.30} parent=11 // pred_region
        _
      $region16: #{generator_forward.30} parent=11 // pred_fallthru
        _
      // Predicated region
      $region17: #{generator_forward.30} parent=11 // pred_check
        %p121 = pneg %p77
      $region18: #{generator_forward.30} parent=11 // pred_check_branch
        %123 = sbr.rel (%p121) target = $region20
      $region19: #{generator_forward.30} parent=11 // pred_region
        _
      $region20: #{generator_forward.30} parent=11 // pred_fallthru
        _
    $region12: #{generator_forward.30} parent=5 // pred_fallthru
      _
    %p124 = scmp.lt.s32.totalorder %s9, 2
    // Predicated region
    $region21: #{generator_forward.30} parent=5 // pred_check
      %p125 = pneg %p124
    $region22: #{generator_forward.30} parent=5 // pred_check_branch
      %127 = sbr.rel (%p125) target = $region24
    $region23: #{generator_forward.30} parent=5 // pred_region
      // Predicated region
      $region25: #{generator_forward.30} parent=23 // pred_check
        %p128 = pneg %p29
      $region26: #{generator_forward.30} parent=23 // pred_check_branch
        %130 = sbr.rel (%p128) target = $region28
      $region27: #{generator_forward.30} parent=23 // pred_region
        %p131 = scmp.lt.s32.totalorder %s9, 1
        %s132 = scalar_select %p131, %s9, 1
        %s133 = smul.addr %s132, 2
        %s134 = smul.addr %s133, 8
        %s135 = scalar_lea.vmem %s0, %s134
      $region28: #{generator_forward.30} parent=23 // pred_fallthru
        _
    $region24: #{generator_forward.30} parent=5 // pred_fallthru
      _
    %p136 = scmp.le.s32.totalorder 1, %s9
    %p137 = scmp.lt.s32.totalorder %s9, 3
    %p138 = pnand %p136, %p137
    %p139 = pneg %p138
    // Predicated region
    $region29: #{generator_forward.30} parent=5 // pred_check
      _
    $region30: #{generator_forward.30} parent=5 // pred_check_branch
      %141 = sbr.rel (%p138) target = $region32
    $region31: #{generator_forward.30} parent=5 // pred_region
      %s142 = ssub.s32 %s9, 1
      %p143 = scmp.lt.s32.totalorder %s14, 1
      %s144 = scalar_select %p143, %s14, 1
      %s145 = smul.addr %s144, 2
      %s146 = smul.addr %s145, 8
      %s147 = scalar_lea.vmem %s0, %s146
      %p148 = pneg %p35
      %p149 = pneg %p32
      %p150 = pneg %p56
      %p151 = pneg %p53
      %p152 = pneg %p77
      %p153 = pneg %p74
      %p154 = pneg %p103
      %p155 = pneg %p100
      %p156 = scmp.lt.s32.totalorder %s14, 1
      %s157 = scalar_select %p156, %s14, 1
      %s158 = smul.addr %s157, 2
      %s159 = smul.addr %s158, 8
      %s160 = scalar_lea.vmem %s3, %s159
      %p161 = scmp.lt.s32.totalorder %s14, 1
      %s162 = scalar_select %p161, %s14, 1
      %s163 = smul.addr %s162, 2
      %s164 = smul.addr %s163, 8
      %s165 = scalar_lea.vmem %s0, %s164
      %p166 = scmp.lt.s32.totalorder %s14, 1
      %s167 = scalar_select %p166, %s14, 1
      %s168 = smul.addr %s167, 2
      %s169 = smul.addr %s168, 8
      %s170 = scalar_lea.vmem %s3, %s169
      %v171 = vld [vmem:[%s165] sm:$0xff]
      %v172 = vld [vmem:[%s165 + $0x8] sm:$0xff]
      %vm173 = vcmask 523264
      %v174 = vsel %vm173, %v171, 0.0
      %v175 = vsel %vm173, %v172, 0.0
      %v176 = vadd.f32 %v174, %v175
      %v177 = vrot.slane %v176, 4
      %v178 = vadd.f32 %v176, %v177
      %v179 = vrot.slane %v178, 2
      %v180 = vadd.f32 %v178, %v179
      %v181 = vrot.slane %v180, 1
      %v182 = vadd.f32 %v180, %v181
      %v183 = vrcp.pop 16.0
      %v184 = vmul.f32 %v182, %v183
      %v185 = vsub.f32 %v171, %v184
      %v186 = vsub.f32 %v172, %v184
      %v187 = vmul.f32 %v185, %v185
      %v188 = vmul.f32 %v186, %v186
      %v189 = vsel %vm173, %v187, 0.0
      %v190 = vsel %vm173, %v188, 0.0
      %v191 = vadd.f32 %v189, %v190
      %v192 = vrot.slane %v191, 4
      %v193 = vadd.f32 %v191, %v192
      %v194 = vrot.slane %v193, 2
      %v195 = vadd.f32 %v193, %v194
      %v196 = vrot.slane %v195, 1
      %v197 = vadd.f32 %v195, %v196
      %v198 = vmul.f32 %v197, %v183
      %v199 = vadd.f32 %v198, 1e-05
      %v200 = vrsqrt.pop %v199
      %v201 = vmul.f32 %v185, %v200
      %v202 = vmul.f32 %v186, %v200
      %v203 = vld [vmem:[%s1] sm:$0x1]
      %v205 = vlaneseq
      %v206 = vshrl.u32 %v205, 7
      %v207 = vsub.s32 0, %v206
      %v208 = vrot.slane %v203, %v207
      %v210 = vmul.f32 %v201, %v208
      %v211 = vmul.f32 %v202, %v208
      %v212 = vld [vmem:[%s2] sm:$0x1]
      %v214 = vlaneseq
      %v215 = vshrl.u32 %v214, 7
      %v216 = vsub.s32 0, %v215
      %v217 = vrot.slane %v212, %v216
      %v219 = vadd.f32 %v210, %v217
      %v220 = vadd.f32 %v211, %v217
      %v221 = vmax.f32 %v219, 0.0
      %v222 = vmax.f32 %v220, 0.0
      %223 = vst.msk [vmem:[%s170] sm:$0xff] %vm173, %v221
      %224 = vst.msk [vmem:[%s170 + $0x8] sm:$0xff] %vm173, %v222
      %p225 = scmp.lt.s32.totalorder %s14, 1
      %s226 = scalar_select %p225, %s14, 1
      %s227 = smul.addr %s226, 2
      %s228 = smul.addr %s227, 8
      %s229 = scalar_lea.vmem %s3, %s228
      // Predicated region
      $region33: #{generator_forward.30} parent=31 // pred_check
        %p230 = pneg %p100
      $region34: #{generator_forward.30} parent=31 // pred_check_branch
        %232 = sbr.rel (%p230) target = $region36
      $region35: #{generator_forward.30} parent=31 // pred_region
        _
      $region36: #{generator_forward.30} parent=31 // pred_fallthru
        _
    $region32: #{generator_forward.30} parent=5 // pred_fallthru
      _
    %p233 = scmp.le.s32.totalorder 2, %s9
    // Predicated region
    $region37: #{generator_forward.30} parent=5 // pred_check
      %p234 = pneg %p233
    $region38: #{generator_forward.30} parent=5 // pred_check_branch
      %236 = sbr.rel (%p234) target = $region40
    $region39: #{generator_forward.30} parent=5 // pred_region
      %s237 = ssub.s32 %s9, 2
      // Predicated region
      $region41: #{generator_forward.30} parent=39 // pred_check
        %p238 = pneg %p106
      $region42: #{generator_forward.30} parent=39 // pred_check_branch
        %240 = sbr.rel (%p238) target = $region44
      $region43: #{generator_forward.30} parent=39 // pred_region
        %p241 = scmp.lt.s32.totalorder %s15, 1
        %s242 = scalar_select %p241, %s15, 1
        %s243 = smul.addr %s242, 2
        %s244 = smul.addr %s243, 8
        %s245 = scalar_lea.vmem %s3, %s244
      $region44: #{generator_forward.30} parent=39 // pred_fallthru
        _
    $region40: #{generator_forward.30} parent=5 // pred_fallthru
      _
  $region6: #{generator_forward.30} parent=0 // loop_footer
    %s13 = sadd.s32 1, %s9
  $region7: #{generator_forward.30} parent=0 // loop_footer_branch
    %8 = sbr.rel target = $region3
  $region8: #{generator_forward.30} parent=0 // loop_exit
    _

// kernel: generator_forward.29
$region0: #{generator_forward.29}
  #allocation0 [shape = 'u32[]', space=smem, size = 0x4, offset = 0x4, fixed_abs, tag = 'smem constant byte address 0x4 - core index']
  #allocation1 [shape = 'u32[144,128]{1,0:T(1,128)}', space=vmem, size = 0x12000, scoped, tag = 'internal scratch']
  #allocation2 [shape = 'f32[32,128]{1,0:T(8,128)}', space=vmem, size = 0x4000, scoped, tag = 'scratch operand']
  %s0 = inlined_call_operand.vmem [shape: bf16[32,512], index: 0, kind: input, shape index: {}]
  %s1 = inlined_call_operand.vmem [shape: bf16[512,128], index: 1, kind: input, shape index: {}]
  %s2 = inlined_call_operand.vmem [shape: f32[32,128], index: 2, kind: output, shape index: {}]
  %s3 = sld [smem:[#allocation0]]
  $region26: #{generator_forward.29} parent=0
    _
  %s5 = ssub.s32 1, %s3
  %s6 = scalar_select 0, %s5, %s3
  // Predicated region
  $region2: #{generator_forward.29} parent=0 // pred_check
    _
  $region3: #{generator_forward.29} parent=0 // pred_check_branch
    %8 = sbr.rel (0) target = $region5
  $region4: #{generator_forward.29} parent=0 // pred_region
    _
  $region5: #{generator_forward.29} parent=0 // pred_fallthru
    _
  // Predicated region
  $region6: #{generator_forward.29} parent=0 // pred_check
    _
  $region7: #{generator_forward.29} parent=0 // pred_check_branch
    %10 = sbr.rel (0) target = $region9
  $region8: #{generator_forward.29} parent=0 // pred_region
    _
  $region9: #{generator_forward.29} parent=0 // pred_fallthru
    _
  %p12 = scmp.eq.s32.totalorder 0, 0
  // Predicated region
  $region10: #{generator_forward.29} parent=0 // pred_check
    %p13 = pneg %p12
  $region11: #{generator_forward.29} parent=0 // pred_check_branch
    %15 = sbr.rel (%p13) target = $region13
  $region12: #{generator_forward.29} parent=0 // pred_region
    %16 = vst [vmem:[#allocation2] sm:$0xff] 0.0
    %17 = vst [vmem:[#allocation2 + $0x8] sm:$0xff] 0.0
    %18 = vst [vmem:[#allocation2 + $0x10] sm:$0xff] 0.0
    %19 = vst [vmem:[#allocation2 + $0x18] sm:$0xff] 0.0
  $region13: #{generator_forward.29} parent=0 // pred_fallthru
    _
  %v20 = vld [vmem:[#allocation2] sm:$0xff]
  %v21 = vld [vmem:[#allocation2 + $0x8] sm:$0xff]
  %v22 = vld [vmem:[#allocation2 + $0x10] sm:$0xff]
  %v23 = vld [vmem:[#allocation2 + $0x18] sm:$0xff]
  %v24 = vld [vmem:[%s0] sm:$0xff]
  %v25 = vld [vmem:[%s0 + $0x8] sm:$0xff]
  %v26 = vld [vmem:[%s0 + $0x10] sm:$0xff]
  %v27 = vld [vmem:[%s0 + $0x18] sm:$0xff]
  %v28 = vld [vmem:[%s0 + $0x20] sm:$0xff]
  %v29 = vld [vmem:[%s0 + $0x28] sm:$0xff]
  %v30 = vld [vmem:[%s0 + $0x30] sm:$0xff]
  %v31 = vld [vmem:[%s0 + $0x38] sm:$0xff]
  %v32 = vld [vmem:[%s1] sm:$0xf]
  %v33 = vld [vmem:[%s1 + $0x4] sm:$0xf]
  %v34 = vld [vmem:[%s1 + $0x8] sm:$0xf]
  %v35 = vld [vmem:[%s1 + $0xc] sm:$0xf]
  %v36 = vld [vmem:[%s1 + $0x10] sm:$0xf]
  %v37 = vld [vmem:[%s1 + $0x14] sm:$0xf]
  %v38 = vld [vmem:[%s1 + $0x18] sm:$0xf]
  %v39 = vld [vmem:[%s1 + $0x1c] sm:$0xf]
  %v40 = vld [vmem:[%s1 + $0x20] sm:$0xf]
  %v41 = vld [vmem:[%s1 + $0x24] sm:$0xf]
  %v42 = vld [vmem:[%s1 + $0x28] sm:$0xf]
  %v43 = vld [vmem:[%s1 + $0x2c] sm:$0xf]
  %v44 = vld [vmem:[%s1 + $0x30] sm:$0xf]
  %v45 = vld [vmem:[%s1 + $0x34] sm:$0xf]
  %v46 = vld [vmem:[%s1 + $0x38] sm:$0xf]
  %v47 = vld [vmem:[%s1 + $0x3c] sm:$0xf]
  %v48 = vld [vmem:[%s1 + $0x40] sm:$0xf]
  %v49 = vld [vmem:[%s1 + $0x44] sm:$0xf]
  %v50 = vld [vmem:[%s1 + $0x48] sm:$0xf]
  %v51 = vld [vmem:[%s1 + $0x4c] sm:$0xf]
  %v52 = vld [vmem:[%s1 + $0x50] sm:$0xf]
  %v53 = vld [vmem:[%s1 + $0x54] sm:$0xf]
  %v54 = vld [vmem:[%s1 + $0x58] sm:$0xf]
  %v55 = vld [vmem:[%s1 + $0x5c] sm:$0xf]
  %v56 = vld [vmem:[%s1 + $0x60] sm:$0xf]
  %v57 = vld [vmem:[%s1 + $0x64] sm:$0xf]
  %v58 = vld [vmem:[%s1 + $0x68] sm:$0xf]
  %v59 = vld [vmem:[%s1 + $0x6c] sm:$0xf]
  %v60 = vld [vmem:[%s1 + $0x70] sm:$0xf]
  %v61 = vld [vmem:[%s1 + $0x74] sm:$0xf]
  %v62 = vld [vmem:[%s1 + $0x78] sm:$0xf]
  %v63 = vld [vmem:[%s1 + $0x7c] sm:$0xf]
  %v64 = vld [vmem:[%s1 + $0x80] sm:$0xf]
  %v65 = vld [vmem:[%s1 + $0x84] sm:$0xf]
  %v66 = vld [vmem:[%s1 + $0x88] sm:$0xf]
  %v67 = vld [vmem:[%s1 + $0x8c] sm:$0xf]
  %v68 = vld [vmem:[%s1 + $0x90] sm:$0xf]
  %v69 = vld [vmem:[%s1 + $0x94] sm:$0xf]
  %v70 = vld [vmem:[%s1 + $0x98] sm:$0xf]
  %v71 = vld [vmem:[%s1 + $0x9c] sm:$0xf]
  %v72 = vld [vmem:[%s1 + $0xa0] sm:$0xf]
  %v73 = vld [vmem:[%s1 + $0xa4] sm:$0xf]
  %v74 = vld [vmem:[%s1 + $0xa8] sm:$0xf]
  %v75 = vld [vmem:[%s1 + $0xac] sm:$0xf]
  %v76 = vld [vmem:[%s1 + $0xb0] sm:$0xf]
  %v77 = vld [vmem:[%s1 + $0xb4] sm:$0xf]
  %v78 = vld [vmem:[%s1 + $0xb8] sm:$0xf]
  %v79 = vld [vmem:[%s1 + $0xbc] sm:$0xf]
  %v80 = vld [vmem:[%s1 + $0xc0] sm:$0xf]
  %v81 = vld [vmem:[%s1 + $0xc4] sm:$0xf]
  %v82 = vld [vmem:[%s1 + $0xc8] sm:$0xf]
  %v83 = vld [vmem:[%s1 + $0xcc] sm:$0xf]
  %v84 = vld [vmem:[%s1 + $0xd0] sm:$0xf]
  %v85 = vld [vmem:[%s1 + $0xd4] sm:$0xf]
  %v86 = vld [vmem:[%s1 + $0xd8] sm:$0xf]
  %v87 = vld [vmem:[%s1 + $0xdc] sm:$0xf]
  %v88 = vld [vmem:[%s1 + $0xe0] sm:$0xf]
  %v89 = vld [vmem:[%s1 + $0xe4] sm:$0xf]
  %v90 = vld [vmem:[%s1 + $0xe8] sm:$0xf]
  %v91 = vld [vmem:[%s1 + $0xec] sm:$0xf]
  %v92 = vld [vmem:[%s1 + $0xf0] sm:$0xf]
  %v93 = vld [vmem:[%s1 + $0xf4] sm:$0xf]
  %v94 = vld [vmem:[%s1 + $0xf8] sm:$0xf]
  %v95 = vld [vmem:[%s1 + $0xfc] sm:$0xf]
  %v104 = vunpack.c.l.b16 %v24
  %v105 = vunpack.c.h.b16 %v24
  %v106 = vunpack.c.l.b16 %v25
  %v107 = vunpack.c.h.b16 %v25
  %v108 = vunpack.c.l.b16 %v26
  %v109 = vunpack.c.h.b16 %v26
  %v110 = vunpack.c.l.b16 %v27
  %v111 = vunpack.c.h.b16 %v27
  %v112 = vunpack.c.l.b16 %v28
  %v113 = vunpack.c.h.b16 %v28
  %v114 = vunpack.c.l.b16 %v29
  %v115 = vunpack.c.h.b16 %v29
  %v116 = vunpack.c.l.b16 %v30
  %v117 = vunpack.c.h.b16 %v30
  %v118 = vunpack.c.l.b16 %v31
  %v119 = vunpack.c.h.b16 %v31
  %v120 = vpack.c.b16 %v108, %v104
  %v121 = vpack.c.b16 %v109, %v105
  %v122 = vpack.c.b16 %v110, %v106
  %v123 = vpack.c.b16 %v111, %v107
  %v124 = vpack.c.b16 %v116, %v112
  %v125 = vpack.c.b16 %v117, %v113
  %v126 = vpack.c.b16 %v118, %v114
  %v127 = vpack.c.b16 %v119, %v115
  %v200 = vunpack.c.l.b16 %v32
  %v201 = vunpack.c.l.b16 %v33
  %v202 = vunpack.c.l.b16 %v34
  %v203 = vunpack.c.l.b16 %v35
  %v204 = vunpack.c.l.b16 %v36
  %v205 = vunpack.c.l.b16 %v37
  %v206 = vunpack.c.l.b16 %v38
  %v207 = vunpack.c.l.b16 %v39
  %v208 = vunpack.c.l.b16 %v40
  %v209 = vunpack.c.l.b16 %v41
  %v210 = vunpack.c.l.b16 %v42
  %v211 = vunpack.c.l.b16 %v43
  %v212 = vunpack.c.l.b16 %v44
  %v213 = vunpack.c.l.b16 %v45
  %v214 = vunpack.c.l.b16 %v46
  %v215 = vunpack.c.l.b16 %v47
  %v216 = vunpack.c.l.b16 %v48
  %v217 = vunpack.c.l.b16 %v49
  %v218 = vunpack.c.l.b16 %v50
  %v219 = vunpack.c.l.b16 %v51
  %v220 = vunpack.c.l.b16 %v52
  %v221 = vunpack.c.l.b16 %v53
  %v222 = vunpack.c.l.b16 %v54
  %v223 = vunpack.c.l.b16 %v55
  %v224 = vunpack.c.l.b16 %v56
  %v225 = vunpack.c.l.b16 %v57
  %v226 = vunpack.c.l.b16 %v58
  %v227 = vunpack.c.l.b16 %v59
  %v228 = vunpack.c.l.b16 %v60
  %v229 = vunpack.c.l.b16 %v61
  %v230 = vunpack.c.l.b16 %v62
  %v231 = vunpack.c.l.b16 %v63
  %v232 = vunpack.c.l.b16 %v64
  %v233 = vunpack.c.l.b16 %v65
  %v234 = vunpack.c.l.b16 %v66
  %v235 = vunpack.c.l.b16 %v67
  %v236 = vunpack.c.l.b16 %v68
  %v237 = vunpack.c.l.b16 %v69
  %v238 = vunpack.c.l.b16 %v70
  %v239 = vunpack.c.l.b16 %v71
  %v240 = vunpack.c.l.b16 %v72
  %v241 = vunpack.c.l.b16 %v73
  %v242 = vunpack.c.l.b16 %v74
  %v243 = vunpack.c.l.b16 %v75
  %v244 = vunpack.c.l.b16 %v76
  %v245 = vunpack.c.l.b16 %v77
  %v246 = vunpack.c.l.b16 %v78
  %v247 = vunpack.c.l.b16 %v79
  %v248 = vunpack.c.l.b16 %v80
  %v249 = vunpack.c.l.b16 %v81
  %v250 = vunpack.c.l.b16 %v82
  %v251 = vunpack.c.l.b16 %v83
  %v252 = vunpack.c.l.b16 %v84
  %v253 = vunpack.c.l.b16 %v85
  %v254 = vunpack.c.l.b16 %v86
  %v255 = vunpack.c.l.b16 %v87
  %v256 = vunpack.c.l.b16 %v88
  %v257 = vunpack.c.l.b16 %v89
  %v258 = vunpack.c.l.b16 %v90
  %v259 = vunpack.c.l.b16 %v91
  %v260 = vunpack.c.l.b16 %v92
  %v261 = vunpack.c.l.b16 %v93
  %v262 = vunpack.c.l.b16 %v94
  %v263 = vunpack.c.l.b16 %v95
  %v264 = vpack.c.b16 %v201, %v200
  %v265 = vpack.c.b16 %v203, %v202
  %v266 = vpack.c.b16 %v205, %v204
  %v267 = vpack.c.b16 %v207, %v206
  %v268 = vpack.c.b16 %v209, %v208
  %v269 = vpack.c.b16 %v211, %v210
  %v270 = vpack.c.b16 %v213, %v212
  %v271 = vpack.c.b16 %v215, %v214
  %v272 = vpack.c.b16 %v217, %v216
  %v273 = vpack.c.b16 %v219, %v218
  %v274 = vpack.c.b16 %v221, %v220
  %v275 = vpack.c.b16 %v223, %v222
  %v276 = vpack.c.b16 %v225, %v224
  %v277 = vpack.c.b16 %v227, %v226
  %v278 = vpack.c.b16 %v229, %v228
  %v279 = vpack.c.b16 %v231, %v230
  %v280 = vpack.c.b16 %v233, %v232
  %v281 = vpack.c.b16 %v235, %v234
  %v282 = vpack.c.b16 %v237, %v236
  %v283 = vpack.c.b16 %v239, %v238
  %v284 = vpack.c.b16 %v241, %v240
  %v285 = vpack.c.b16 %v243, %v242
  %v286 = vpack.c.b16 %v245, %v244
  %v287 = vpack.c.b16 %v247, %v246
  %v288 = vpack.c.b16 %v249, %v248
  %v289 = vpack.c.b16 %v251, %v250
  %v290 = vpack.c.b16 %v253, %v252
  %v291 = vpack.c.b16 %v255, %v254
  %v292 = vpack.c.b16 %v257, %v256
  %v293 = vpack.c.b16 %v259, %v258
  %v294 = vpack.c.b16 %v261, %v260
  %v295 = vpack.c.b16 %v263, %v262
  %328 = vmatprep.subr.bf16.mxu0 0
  %329 = vmatpush1.bf16.msra.mxu0 %v271
  %330 = vmatprep.subr.bf16.mxu0 0
  %331 = vmatpush1.bf16.msra.mxu0 %v270
  %332 = vmatprep.subr.bf16.mxu0 0
  %333 = vmatpush1.bf16.msra.mxu0 %v269
  %334 = vmatprep.subr.bf16.mxu0 0
  %335 = vmatpush1.bf16.msra.mxu0 %v268
  %336 = vmatprep.subr.bf16.mxu0 0
  %337 = vmatpush1.bf16.msra.mxu0 %v267
  %338 = vmatprep.subr.bf16.mxu0 0
  %339 = vmatpush1.bf16.msra.mxu0 %v266
  %340 = vmatprep.subr.bf16.mxu0 0
  %341 = vmatpush1.bf16.msra.mxu0 %v265
  %342 = vmatprep.subr.bf16.mxu0 0
  %343 = vmatpush1.bf16.msra.mxu0 %v264
  %344 = vmatprep.subr.bf16.mxu0 0
  %345 = vmatpush2.bf16.msra.mxu0 %v279
  %346 = vmatprep.subr.bf16.mxu0 0
  %347 = vmatpush2.bf16.msra.mxu0 %v278
  %348 = vmatprep.subr.bf16.mxu0 0
  %349 = vmatpush2.bf16.msra.mxu0 %v277
  %350 = vmatprep.subr.bf16.mxu0 0
  %351 = vmatpush2.bf16.msra.mxu0 %v276
  %352 = vmatprep.subr.bf16.mxu0 0
  %353 = vmatpush2.bf16.msra.mxu0 %v275
  %354 = vmatprep.subr.bf16.mxu0 0
  %355 = vmatpush2.bf16.msra.mxu0 %v274
  %356 = vmatprep.subr.bf16.mxu0 0
  %357 = vmatpush2.bf16.msra.mxu0 %v273
  %358 = vmatprep.subr.bf16.mxu0 0
  %359 = vmatpush2.bf16.msra.mxu0 %v272
  %360 = vmatprep.mubr.bf16.mxu0 %v121
  %361 = vmatmul.mubr.bf16.gmra.mxu0 %v120
  %v362 = vpop.f32.mrf.mxu0
  %v363 = vadd.f32 0.0, %v362
  %v364 = vpop.f32.mrf.mxu0
  %v365 = vpop.f32.mrf.mxu0
  %v366 = vadd.f32 0.0, %v365
  %v367 = vpop.f32.mrf.mxu0
  %368 = vmatprep.mubr.bf16.mxu0 %v125
  %369 = vmatmul.mubr.bf16.gmra.mxu0 %v124
  %v370 = vpop.f32.mrf.mxu0
  %v371 = vadd.f32 0.0, %v370
  %v372 = vpop.f32.mrf.mxu0
  %v373 = vpop.f32.mrf.mxu0
  %v374 = vadd.f32 0.0, %v373
  %v375 = vpop.f32.mrf.mxu0
  %376 = vdwg.mxu0
  %377 = vmatprep.subr.bf16.mxu0 0
  %378 = vmatpush1.bf16.msra.mxu0 %v287
  %379 = vmatprep.subr.bf16.mxu0 0
  %380 = vmatpush1.bf16.msra.mxu0 %v286
  %381 = vmatprep.subr.bf16.mxu0 0
  %382 = vmatpush1.bf16.msra.mxu0 %v285
  %383 = vmatprep.subr.bf16.mxu0 0
  %384 = vmatpush1.bf16.msra.mxu0 %v284
  %385 = vmatprep.subr.bf16.mxu0 0
  %386 = vmatpush1.bf16.msra.mxu0 %v283
  %387 = vmatprep.subr.bf16.mxu0 0
  %388 = vmatpush1.bf16.msra.mxu0 %v282
  %389 = vmatprep.subr.bf16.mxu0 0
  %390 = vmatpush1.bf16.msra.mxu0 %v281
  %391 = vmatprep.subr.bf16.mxu0 0
  %392 = vmatpush1.bf16.msra.mxu0 %v280
  %393 = vmatprep.subr.bf16.mxu0 0
  %394 = vmatpush2.bf16.msra.mxu0 %v295
  %395 = vmatprep.subr.bf16.mxu0 0
  %396 = vmatpush2.bf16.msra.mxu0 %v294
  %397 = vmatprep.subr.bf16.mxu0 0
  %398 = vmatpush2.bf16.msra.mxu0 %v293
  %399 = vmatprep.subr.bf16.mxu0 0
  %400 = vmatpush2.bf16.msra.mxu0 %v292
  %401 = vmatprep.subr.bf16.mxu0 0
  %402 = vmatpush2.bf16.msra.mxu0 %v291
  %403 = vmatprep.subr.bf16.mxu0 0
  %404 = vmatpush2.bf16.msra.mxu0 %v290
  %405 = vmatprep.subr.bf16.mxu0 0
  %406 = vmatpush2.bf16.msra.mxu0 %v289
  %407 = vmatprep.subr.bf16.mxu0 0
  %408 = vmatpush2.bf16.msra.mxu0 %v288
  %409 = vmatprep.mubr.bf16.mxu0 %v123
  %410 = vmatmul.mubr.bf16.gmra.mxu0 %v122
  %v411 = vpop.f32.mrf.mxu0
  %v412 = vadd.f32 %v363, %v411
  %v413 = vpop.f32.mrf.mxu0
  %v414 = vpop.f32.mrf.mxu0
  %v415 = vadd.f32 %v366, %v414
  %v416 = vpop.f32.mrf.mxu0
  %417 = vmatprep.mubr.bf16.mxu0 %v127
  %418 = vmatmul.mubr.bf16.gmra.mxu0 %v126
  %v419 = vpop.f32.mrf.mxu0
  %v420 = vadd.f32 %v371, %v419
  %v421 = vpop.f32.mrf.mxu0
  %v422 = vpop.f32.mrf.mxu0
  %v423 = vadd.f32 %v374, %v422
  %v424 = vpop.f32.mrf.mxu0
  %425 = vdwg.mxu0
  %v426 = vadd.f32 %v20, %v412
  %v427 = vadd.f32 %v21, %v415
  %v428 = vadd.f32 %v22, %v420
  %v429 = vadd.f32 %v23, %v423
  %430 = vst [vmem:[#allocation2] sm:$0xff] %v426
  %431 = vst [vmem:[#allocation2 + $0x8] sm:$0xff] %v427
  %432 = vst [vmem:[#allocation2 + $0x10] sm:$0xff] %v428
  %433 = vst [vmem:[#allocation2 + $0x18] sm:$0xff] %v429
  // Predicated region
  $region14: #{generator_forward.29} parent=0 // pred_check
    %p434 = pneg %p12
  $region15: #{generator_forward.29} parent=0 // pred_check_branch
    %436 = sbr.rel (%p434) target = $region17
  $region16: #{generator_forward.29} parent=0 // pred_region
    %v437 = vld [vmem:[#allocation2] sm:$0xff]
    %v438 = vld [vmem:[#allocation2 + $0x8] sm:$0xff]
    %v439 = vld [vmem:[#allocation2 + $0x10] sm:$0xff]
    %v440 = vld [vmem:[#allocation2 + $0x18] sm:$0xff]
    %441 = vst [vmem:[%s2] sm:$0xff] %v437
    %442 = vst [vmem:[%s2 + $0x8] sm:$0xff] %v438
    %443 = vst [vmem:[%s2 + $0x10] sm:$0xff] %v439
    %444 = vst [vmem:[%s2 + $0x18] sm:$0xff] %v440
  $region17: #{generator_forward.29} parent=0 // pred_fallthru
    _
  // Predicated region
  $region18: #{generator_forward.29} parent=0 // pred_check
    _
  $region19: #{generator_forward.29} parent=0 // pred_check_branch
    %446 = sbr.rel (0) target = $region21
  $region20: #{generator_forward.29} parent=0 // pred_region
    _
  $region21: #{generator_forward.29} parent=0 // pred_fallthru
    _
  // Predicated region
  $region22: #{generator_forward.29} parent=0 // pred_check
    _
  $region23: #{generator_forward.29} parent=0 // pred_check_branch
    %448 = sbr.rel (0) target = $region25
  $region24: #{generator_forward.29} parent=0 // pred_region
    _
  $region25: #{generator_forward.29} parent=0 // pred_fallthru
    _

// kernel: generator_forward.34
$region0: #{generator_forward.34}
  #allocation0 [shape = 'u32[]', space=smem, size = 0x4, offset = 0x4, fixed_abs, tag = 'smem constant byte address 0x4 - core index']
  #allocation1 [shape = 'u32[144,128]{1,0:T(1,128)}', space=vmem, size = 0x12000, scoped, tag = 'internal scratch']
  %s0 = inlined_call_operand.vmem [shape: f32[2,16,64], index: 0, kind: input, shape index: {}]
  %s1 = inlined_call_operand.vmem [shape: f32[1,1,64], index: 1, kind: input, shape index: {}]
  %s2 = inlined_call_operand.vmem [shape: f32[1,1,64], index: 2, kind: input, shape index: {}]
  %s3 = inlined_call_operand.vmem [shape: f32[2,16,64], index: 3, kind: input, shape index: {}]
  %s4 = inlined_call_operand.vmem [shape: f32[2,16,64], index: 4, kind: output, shape index: {}]
  %s5 = sld [smem:[#allocation0]]
  $region49: #{generator_forward.34} parent=0
    _
  %s7 = ssub.s32 1, %s5
  %s8 = scalar_select 0, %s7, %s5
  loop: start=0, step=1, limit=4
  $region2: #{generator_forward.34} parent=0 // loop_pre_header
    _
  $region3: #{generator_forward.34} parent=0 // loop_header
    %s10 = sphi 0, %s14
    %p11 = scmp.ge.s32.totalorder %s10, 4
    %s20 = sphi 0, %s22
    %s23 = sphi 0, %s20
    %s24 = sphi 0, %s23
    %s40 = sphi 0, %s24
    %s44 = sphi 0, %s44
    %s46 = sphi 0, %s44
    %s47 = sphi 0, %s46
    %s61 = sphi 0, %s47
    %s65 = sphi 0, %s65
    %s67 = sphi 0, %s65
    %s68 = sphi 0, %s67
    %s82 = sphi 0, %s68
    %s88 = sphi 0, %s90
    %s91 = sphi 0, %s88
    %s92 = sphi 0, %s91
    %s108 = sphi 0, %s92
    %s114 = sphi 0, %s116
    %s117 = sphi 0, %s114
    %s118 = sphi 0, %s117
    %s134 = sphi 0, %s118
  $region4: #{generator_forward.34} parent=0 // loop_header_branch
    %13 = sbr.rel (%p11) target = $region8
  $region5: #{generator_forward.34} parent=0 // loop_body
    %s15 = ssub.s32 %s10, 1
    %s16 = ssub.s32 %s10, 2
    %s17 = sadd.s32 %s10, 1
    %s18 = ssub.s32 %s10, %s17
    %p19 = scmp.eq.s32.totalorder %s18, 0
    %s21 = sadd.s32 %s20, 1
    %s22 = scalar_select %p19, %s20, %s21
    %p25 = pneg %p19
    %p26 = scmp.eq.s32.totalorder %s10, 1
    %p27 = por %p25, %p26
    %p28 = scmp.ne.s32.totalorder %s20, %s23
    %p29 = scmp.eq.s32.totalorder %s10, 0
    %p30 = por %p28, %p29
    %p31 = scmp.ne.s32.totalorder %s20, %s23
    %p32 = scmp.eq.s32.totalorder %s15, 1
    %p33 = por %p31, %p32
    %p34 = scmp.ne.s32.totalorder %s23, %s24
    %p35 = scmp.eq.s32.totalorder %s15, 0
    %p36 = por %p34, %p35
    %p37 = scmp.ne.s32.totalorder %s23, %s24
    %p38 = scmp.eq.s32.totalorder %s16, 1
    %p39 = por %p37, %p38
    %p41 = scmp.ne.s32.totalorder %s24, %s40
    %p42 = scmp.eq.s32.totalorder %s16, 0
    %p43 = por %p41, %p42
    %s45 = sadd.s32 %s44, 1
    %p48 = scmp.eq.s32.totalorder %s10, 1
    %p49 = scmp.ne.s32.totalorder %s44, %s46
    %p50 = scmp.eq.s32.totalorder %s10, 0
    %p51 = por %p49, %p50
    %p52 = scmp.ne.s32.totalorder %s44, %s46
    %p53 = scmp.eq.s32.totalorder %s15, 1
    %p54 = por %p52, %p53
    %p55 = scmp.ne.s32.totalorder %s46, %s47
    %p56 = scmp.eq.s32.totalorder %s15, 0
    %p57 = por %p55, %p56
    %p58 = scmp.ne.s32.totalorder %s46, %s47
    %p59 = scmp.eq.s32.totalorder %s16, 1
    %p60 = por %p58, %p59
    %p62 = scmp.ne.s32.totalorder %s47, %s61
    %p63 = scmp.eq.s32.totalorder %s16, 0
    %p64 = por %p62, %p63
    %s66 = sadd.s32 %s65, 1
    %p69 = scmp.eq.s32.totalorder %s10, 1
    %p70 = scmp.ne.s32.totalorder %s65, %s67
    %p71 = scmp.eq.s32.totalorder %s10, 0
    %p72 = por %p70, %p71
    %p73 = scmp.ne.s32.totalorder %s65, %s67
    %p74 = scmp.eq.s32.totalorder %s15, 1
    %p75 = por %p73, %p74
    %p76 = scmp.ne.s32.totalorder %s67, %s68
    %p77 = scmp.eq.s32.totalorder %s15, 0
    %p78 = por %p76, %p77
    %p79 = scmp.ne.s32.totalorder %s67, %s68
    %p80 = scmp.eq.s32.totalorder %s16, 1
    %p81 = por %p79, %p80
    %p83 = scmp.ne.s32.totalorder %s68, %s82
    %p84 = scmp.eq.s32.totalorder %s16, 0
    %p85 = por %p83, %p84
    %s86 = ssub.s32 %s10, %s17
    %p87 = scmp.eq.s32.totalorder %s86, 0
    %s89 = sadd.s32 %s88, 1
    %s90 = scalar_select %p87, %s88, %s89
    %p93 = pneg %p87
    %p94 = scmp.eq.s32.totalorder %s10, 1
    %p95 = por %p93, %p94
    %p96 = scmp.ne.s32.totalorder %s88, %s91
    %p97 = scmp.eq.s32.totalorder %s10, 0
    %p98 = por %p96, %p97
    %p99 = scmp.ne.s32.totalorder %s88, %s91
    %p100 = scmp.eq.s32.totalorder %s15, 1
    %p101 = por %p99, %p100
    %p102 = scmp.ne.s32.totalorder %s91, %s92
    %p103 = scmp.eq.s32.totalorder %s15, 0
    %p104 = por %p102, %p103
    %p105 = scmp.ne.s32.totalorder %s91, %s92
    %p106 = scmp.eq.s32.totalorder %s16, 1
    %p107 = por %p105, %p106
    %p109 = scmp.ne.s32.totalorder %s92, %s108
    %p110 = scmp.eq.s32.totalorder %s16, 0
    %p111 = por %p109, %p110
    %s112 = ssub.s32 %s10, %s17
    %p113 = scmp.eq.s32.totalorder %s112, 0
    %s115 = sadd.s32 %s114, 1
    %s116 = scalar_select %p113, %s114, %s115
    %p119 = pneg %p113
    %p120 = scmp.eq.s32.totalorder %s10, 1
    %p121 = por %p119, %p120
    %p122 = scmp.ne.s32.totalorder %s114, %s117
    %p123 = scmp.eq.s32.totalorder %s10, 0
    %p124 = por %p122, %p123
    %p125 = scmp.ne.s32.totalorder %s114, %s117
    %p126 = scmp.eq.s32.totalorder %s15, 1
    %p127 = por %p125, %p126
    %p128 = scmp.ne.s32.totalorder %s117, %s118
    %p129 = scmp.eq.s32.totalorder %s15, 0
    %p130 = por %p128, %p129
    %p131 = scmp.ne.s32.totalorder %s117, %s118
    %p132 = scmp.eq.s32.totalorder %s16, 1
    %p133 = por %p131, %p132
    %p135 = scmp.ne.s32.totalorder %s118, %s134
    %p136 = scmp.eq.s32.totalorder %s16, 0
    %p137 = por %p135, %p136
    %p138 = scmp.le.s32.totalorder 1, %s10
    %p139 = scmp.lt.s32.totalorder %s10, 3
    %p140 = pnand %p138, %p139
    %p141 = pneg %p140
    // Predicated region
    $region9: #{generator_forward.34} parent=5 // pred_check
      _
    $region10: #{generator_forward.34} parent=5 // pred_check_branch
      %143 = sbr.rel (%p140) target = $region12
    $region11: #{generator_forward.34} parent=5 // pred_region
      %s144 = ssub.s32 %s10, 1
      // Predicated region
      $region13: #{generator_forward.34} parent=11 // pred_check
        %p145 = pneg %p57
      $region14: #{generator_forward.34} parent=11 // pred_check_branch
        %147 = sbr.rel (%p145) target = $region16
      $region15: #{generator_forward.34} parent=11 // pred_region
        _
      $region16: #{generator_forward.34} parent=11 // pred_fallthru
        _
      // Predicated region
      $region17: #{generator_forward.34} parent=11 // pred_check
        %p148 = pneg %p78
      $region18: #{generator_forward.34} parent=11 // pred_check_branch
        %150 = sbr.rel (%p148) target = $region20
      $region19: #{generator_forward.34} parent=11 // pred_region
        _
      $region20: #{generator_forward.34} parent=11 // pred_fallthru
        _
    $region12: #{generator_forward.34} parent=5 // pred_fallthru
      _
    %p151 = scmp.lt.s32.totalorder %s10, 2
    // Predicated region
    $region21: #{generator_forward.34} parent=5 // pred_check
      %p152 = pneg %p151
    $region22: #{generator_forward.34} parent=5 // pred_check_branch
      %154 = sbr.rel (%p152) target = $region24
    $region23: #{generator_forward.34} parent=5 // pred_region
      // Predicated region
      $region25: #{generator_forward.34} parent=23 // pred_check
        %p155 = pneg %p30
      $region26: #{generator_forward.34} parent=23 // pred_check_branch
        %157 = sbr.rel (%p155) target = $region28
      $region27: #{generator_forward.34} parent=23 // pred_region
        %p158 = scmp.lt.s32.totalorder %s10, 1
        %s159 = scalar_select %p158, %s10, 1
        %s160 = smul.addr %s159, 2
        %s161 = smul.addr %s160, 8
        %s162 = scalar_lea.vmem %s0, %s161
      $region28: #{generator_forward.34} parent=23 // pred_fallthru
        _
      // Predicated region
      $region29: #{generator_forward.34} parent=23 // pred_check
        %p163 = pneg %p98
      $region30: #{generator_forward.34} parent=23 // pred_check_branch
        %165 = sbr.rel (%p163) target = $region32
      $region31: #{generator_forward.34} parent=23 // pred_region
        %p166 = scmp.lt.s32.totalorder %s10, 1
        %s167 = scalar_select %p166, %s10, 1
        %s168 = smul.addr %s167, 2
        %s169 = smul.addr %s168, 8
        %s170 = scalar_lea.vmem %s3, %s169
      $region32: #{generator_forward.34} parent=23 // pred_fallthru
        _
    $region24: #{generator_forward.34} parent=5 // pred_fallthru
      _
    %p171 = scmp.le.s32.totalorder 1, %s10
    %p172 = scmp.lt.s32.totalorder %s10, 3
    %p173 = pnand %p171, %p172
    %p174 = pneg %p173
    // Predicated region
    $region33: #{generator_forward.34} parent=5 // pred_check
      _
    $region34: #{generator_forward.34} parent=5 // pred_check_branch
      %176 = sbr.rel (%p173) target = $region36
    $region35: #{generator_forward.34} parent=5 // pred_region
      %s177 = ssub.s32 %s10, 1
      %p178 = scmp.lt.s32.totalorder %s15, 1
      %s179 = scalar_select %p178, %s15, 1
      %s180 = smul.addr %s179, 2
      %s181 = smul.addr %s180, 8
      %s182 = scalar_lea.vmem %s0, %s181
      %p183 = pneg %p36
      %p184 = pneg %p33
      %p185 = pneg %p57
      %p186 = pneg %p54
      %p187 = pneg %p78
      %p188 = pneg %p75
      %p189 = scmp.lt.s32.totalorder %s15, 1
      %s190 = scalar_select %p189, %s15, 1
      %s191 = smul.addr %s190, 2
      %s192 = smul.addr %s191, 8
      %s193 = scalar_lea.vmem %s3, %s192
      %p194 = pneg %p104
      %p195 = pneg %p101
      %p196 = pneg %p130
      %p197 = pneg %p127
      %p198 = scmp.lt.s32.totalorder %s15, 1
      %s199 = scalar_select %p198, %s15, 1
      %s200 = smul.addr %s199, 2
      %s201 = smul.addr %s200, 8
      %s202 = scalar_lea.vmem %s4, %s201
      %p203 = scmp.lt.s32.totalorder %s15, 1
      %s204 = scalar_select %p203, %s15, 1
      %s205 = smul.addr %s204, 2
      %s206 = smul.addr %s205, 8
      %s207 = scalar_lea.vmem %s0, %s206
      %p208 = scmp.lt.s32.totalorder %s15, 1
      %s209 = scalar_select %p208, %s15, 1
      %s210 = smul.addr %s209, 2
      %s211 = smul.addr %s210, 8
      %s212 = scalar_lea.vmem %s3, %s211
      %p213 = scmp.lt.s32.totalorder %s15, 1
      %s214 = scalar_select %p213, %s15, 1
      %s215 = smul.addr %s214, 2
      %s216 = smul.addr %s215, 8
      %s217 = scalar_lea.vmem %s4, %s216
      %v218 = vld [vmem:[%s207] sm:$0xff]
      %v219 = vld [vmem:[%s207 + $0x8] sm:$0xff]
      %vm220 = vcmask 523264
      %v221 = vsel %vm220, %v218, 0.0
      %v222 = vsel %vm220, %v219, 0.0
      %v223 = vadd.f32 %v221, %v222
      %v224 = vrot.slane %v223, 4
      %v225 = vadd.f32 %v223, %v224
      %v226 = vrot.slane %v225, 2
      %v227 = vadd.f32 %v225, %v226
      %v228 = vrot.slane %v227, 1
      %v229 = vadd.f32 %v227, %v228
      %v230 = vrcp.pop 16.0
      %v231 = vmul.f32 %v229, %v230
      %v232 = vsub.f32 %v218, %v231
      %v233 = vsub.f32 %v219, %v231
      %v234 = vmul.f32 %v232, %v232
      %v235 = vmul.f32 %v233, %v233
      %v236 = vsel %vm220, %v234, 0.0
      %v237 = vsel %vm220, %v235, 0.0
      %v238 = vadd.f32 %v236, %v237
      %v239 = vrot.slane %v238, 4
      %v240 = vadd.f32 %v238, %v239
      %v241 = vrot.slane %v240, 2
      %v242 = vadd.f32 %v240, %v241
      %v243 = vrot.slane %v242, 1
      %v244 = vadd.f32 %v242, %v243
      %v245 = vmul.f32 %v244, %v230
      %v246 = vadd.f32 %v245, 1e-05
      %v247 = vrsqrt.pop %v246
      %v248 = vmul.f32 %v232, %v247
      %v249 = vmul.f32 %v233, %v247
      %v250 = vld [vmem:[%s1] sm:$0x1]
      %v252 = vlaneseq
      %v253 = vshrl.u32 %v252, 7
      %v254 = vsub.s32 0, %v253
      %v255 = vrot.slane %v250, %v254
      %v257 = vmul.f32 %v248, %v255
      %v258 = vmul.f32 %v249, %v255
      %v259 = vld [vmem:[%s2] sm:$0x1]
      %v261 = vlaneseq
      %v262 = vshrl.u32 %v261, 7
      %v263 = vsub.s32 0, %v262
      %v264 = vrot.slane %v259, %v263
      %v266 = vadd.f32 %v257, %v264
      %v267 = vadd.f32 %v258, %v264
      %v268 = vld [vmem:[%s212] sm:$0xff]
      %v269 = vld [vmem:[%s212 + $0x8] sm:$0xff]
      %v270 = vadd.f32 %v266, %v268
      %v271 = vadd.f32 %v267, %v269
      %272 = vst.msk [vmem:[%s217] sm:$0xff] %vm220, %v270
      %273 = vst.msk [vmem:[%s217 + $0x8] sm:$0xff] %vm220, %v271
      %p274 = scmp.lt.s32.totalorder %s15, 1
      %s275 = scalar_select %p274, %s15, 1
      %s276 = smul.addr %s275, 2
      %s277 = smul.addr %s276, 8
      %s278 = scalar_lea.vmem %s4, %s277
      // Predicated region
      $region37: #{generator_forward.34} parent=35 // pred_check
        %p279 = pneg %p127
      $region38: #{generator_forward.34} parent=35 // pred_check_branch
        %281 = sbr.rel (%p279) target = $region40
      $region39: #{generator_forward.34} parent=35 // pred_region
        _
      $region40: #{generator_forward.34} parent=35 // pred_fallthru
        _
    $region36: #{generator_forward.34} parent=5 // pred_fallthru
      _
    %p282 = scmp.le.s32.totalorder 2, %s10
    // Predicated region
    $region41: #{generator_forward.34} parent=5 // pred_check
      %p283 = pneg %p282
    $region42: #{generator_forward.34} parent=5 // pred_check_branch
      %285 = sbr.rel (%p283) target = $region44
    $region43: #{generator_forward.34} parent=5 // pred_region
      %s286 = ssub.s32 %s10, 2
      // Predicated region
      $region45: #{generator_forward.34} parent=43 // pred_check
        %p287 = pneg %p133
      $region46: #{generator_forward.34} parent=43 // pred_check_branch
        %289 = sbr.rel (%p287) target = $region48
      $region47: #{generator_forward.34} parent=43 // pred_region
        %p290 = scmp.lt.s32.totalorder %s16, 1
        %s291 = scalar_select %p290, %s16, 1
        %s292 = smul.addr %s291, 2
        %s293 = smul.addr %s292, 8
        %s294 = scalar_lea.vmem %s4, %s293
      $region48: #{generator_forward.34} parent=43 // pred_fallthru
        _
    $region44: #{generator_forward.34} parent=5 // pred_fallthru
      _
  $region6: #{generator_forward.34} parent=0 // loop_footer
    %s14 = sadd.s32 1, %s10
  $region7: #{generator_forward.34} parent=0 // loop_footer_branch
    %9 = sbr.rel target = $region3
  $region8: #{generator_forward.34} parent=0 // loop_exit
    _

// kernel: generator_forward.31
$region0: #{generator_forward.31}
  #allocation0 [shape = 'u32[]', space=smem, size = 0x4, offset = 0x4, fixed_abs, tag = 'smem constant byte address 0x4 - core index']
  #allocation1 [shape = 'u32[144,128]{1,0:T(1,128)}', space=vmem, size = 0x12000, scoped, tag = 'internal scratch']
  #allocation2 [shape = 'f32[32,128]{1,0:T(8,128)}', space=vmem, size = 0x4000, scoped, tag = 'scratch operand']
  %s0 = inlined_call_operand.vmem [shape: bf16[32,640], index: 0, kind: input, shape index: {}]
  %s1 = inlined_call_operand.vmem [shape: bf16[640,128], index: 1, kind: input, shape index: {}]
  %s2 = inlined_call_operand.vmem [shape: f32[32,128], index: 2, kind: output, shape index: {}]
  %s3 = sld [smem:[#allocation0]]
  $region26: #{generator_forward.31} parent=0
    _
  %s5 = ssub.s32 1, %s3
  %s6 = scalar_select 0, %s5, %s3
  // Predicated region
  $region2: #{generator_forward.31} parent=0 // pred_check
    _
  $region3: #{generator_forward.31} parent=0 // pred_check_branch
    %8 = sbr.rel (0) target = $region5
  $region4: #{generator_forward.31} parent=0 // pred_region
    _
  $region5: #{generator_forward.31} parent=0 // pred_fallthru
    _
  // Predicated region
  $region6: #{generator_forward.31} parent=0 // pred_check
    _
  $region7: #{generator_forward.31} parent=0 // pred_check_branch
    %10 = sbr.rel (0) target = $region9
  $region8: #{generator_forward.31} parent=0 // pred_region
    _
  $region9: #{generator_forward.31} parent=0 // pred_fallthru
    _
  %p12 = scmp.eq.s32.totalorder 0, 0
  // Predicated region
  $region10: #{generator_forward.31} parent=0 // pred_check
    %p13 = pneg %p12
  $region11: #{generator_forward.31} parent=0 // pred_check_branch
    %15 = sbr.rel (%p13) target = $region13
  $region12: #{generator_forward.31} parent=0 // pred_region
    %16 = vst [vmem:[#allocation2] sm:$0xff] 0.0
    %17 = vst [vmem:[#allocation2 + $0x8] sm:$0xff] 0.0
    %18 = vst [vmem:[#allocation2 + $0x10] sm:$0xff] 0.0
    %19 = vst [vmem:[#allocation2 + $0x18] sm:$0xff] 0.0
  $region13: #{generator_forward.31} parent=0 // pred_fallthru
    _
  %v20 = vld [vmem:[#allocation2] sm:$0xff]
  %v21 = vld [vmem:[#allocation2 + $0x8] sm:$0xff]
  %v22 = vld [vmem:[#allocation2 + $0x10] sm:$0xff]
  %v23 = vld [vmem:[#allocation2 + $0x18] sm:$0xff]
  %v24 = vld [vmem:[%s0] sm:$0xff]
  %v25 = vld [vmem:[%s0 + $0x8] sm:$0xff]
  %v26 = vld [vmem:[%s0 + $0x10] sm:$0xf]
  %v27 = vld [vmem:[%s0 + $0x14] sm:$0xff]
  %v28 = vld [vmem:[%s0 + $0x1c] sm:$0xff]
  %v29 = vld [vmem:[%s0 + $0x24] sm:$0xf]
  %v30 = vld [vmem:[%s0 + $0x28] sm:$0xff]
  %v31 = vld [vmem:[%s0 + $0x30] sm:$0xff]
  %v32 = vld [vmem:[%s0 + $0x38] sm:$0xf]
  %v33 = vld [vmem:[%s0 + $0x3c] sm:$0xff]
  %v34 = vld [vmem:[%s0 + $0x44] sm:$0xff]
  %v35 = vld [vmem:[%s0 + $0x4c] sm:$0xf]
  %v36 = vld [vmem:[%s1] sm:$0xf]
  %v37 = vld [vmem:[%s1 + $0x4] sm:$0xf]
  %v38 = vld [vmem:[%s1 + $0x8] sm:$0xf]
  %v39 = vld [vmem:[%s1 + $0xc] sm:$0xf]
  %v40 = vld [vmem:[%s1 + $0x10] sm:$0xf]
  %v41 = vld [vmem:[%s1 + $0x14] sm:$0xf]
  %v42 = vld [vmem:[%s1 + $0x18] sm:$0xf]
  %v43 = vld [vmem:[%s1 + $0x1c] sm:$0xf]
  %v44 = vld [vmem:[%s1 + $0x20] sm:$0xf]
  %v45 = vld [vmem:[%s1 + $0x24] sm:$0xf]
  %v46 = vld [vmem:[%s1 + $0x28] sm:$0xf]
  %v47 = vld [vmem:[%s1 + $0x2c] sm:$0xf]
  %v48 = vld [vmem:[%s1 + $0x30] sm:$0xf]
  %v49 = vld [vmem:[%s1 + $0x34] sm:$0xf]
  %v50 = vld [vmem:[%s1 + $0x38] sm:$0xf]
  %v51 = vld [vmem:[%s1 + $0x3c] sm:$0xf]
  %v52 = vld [vmem:[%s1 + $0x40] sm:$0xf]
  %v53 = vld [vmem:[%s1 + $0x44] sm:$0xf]
  %v54 = vld [vmem:[%s1 + $0x48] sm:$0xf]
  %v55 = vld [vmem:[%s1 + $0x4c] sm:$0xf]
  %v56 = vld [vmem:[%s1 + $0x50] sm:$0xf]
  %v57 = vld [vmem:[%s1 + $0x54] sm:$0xf]
  %v58 = vld [vmem:[%s1 + $0x58] sm:$0xf]
  %v59 = vld [vmem:[%s1 + $0x5c] sm:$0xf]
  %v60 = vld [vmem:[%s1 + $0x60] sm:$0xf]
  %v61 = vld [vmem:[%s1 + $0x64] sm:$0xf]
  %v62 = vld [vmem:[%s1 + $0x68] sm:$0xf]
  %v63 = vld [vmem:[%s1 + $0x6c] sm:$0xf]
  %v64 = vld [vmem:[%s1 + $0x70] sm:$0xf]
  %v65 = vld [vmem:[%s1 + $0x74] sm:$0xf]
  %v66 = vld [vmem:[%s1 + $0x78] sm:$0xf]
  %v67 = vld [vmem:[%s1 + $0x7c] sm:$0xf]
  %v68 = vld [vmem:[%s1 + $0x80] sm:$0xf]
  %v69 = vld [vmem:[%s1 + $0x84] sm:$0xf]
  %v70 = vld [vmem:[%s1 + $0x88] sm:$0xf]
  %v71 = vld [vmem:[%s1 + $0x8c] sm:$0xf]
  %v72 = vld [vmem:[%s1 + $0x90] sm:$0xf]
  %v73 = vld [vmem:[%s1 + $0x94] sm:$0xf]
  %v74 = vld [vmem:[%s1 + $0x98] sm:$0xf]
  %v75 = vld [vmem:[%s1 + $0x9c] sm:$0xf]
  %v76 = vld [vmem:[%s1 + $0xa0] sm:$0xf]
  %v77 = vld [vmem:[%s1 + $0xa4] sm:$0xf]
  %v78 = vld [vmem:[%s1 + $0xa8] sm:$0xf]
  %v79 = vld [vmem:[%s1 + $0xac] sm:$0xf]
  %v80 = vld [vmem:[%s1 + $0xb0] sm:$0xf]
  %v81 = vld [vmem:[%s1 + $0xb4] sm:$0xf]
  %v82 = vld [vmem:[%s1 + $0xb8] sm:$0xf]
  %v83 = vld [vmem:[%s1 + $0xbc] sm:$0xf]
  %v84 = vld [vmem:[%s1 + $0xc0] sm:$0xf]
  %v85 = vld [vmem:[%s1 + $0xc4] sm:$0xf]
  %v86 = vld [vmem:[%s1 + $0xc8] sm:$0xf]
  %v87 = vld [vmem:[%s1 + $0xcc] sm:$0xf]
  %v88 = vld [vmem:[%s1 + $0xd0] sm:$0xf]
  %v89 = vld [vmem:[%s1 + $0xd4] sm:$0xf]
  %v90 = vld [vmem:[%s1 + $0xd8] sm:$0xf]
  %v91 = vld [vmem:[%s1 + $0xdc] sm:$0xf]
  %v92 = vld [vmem:[%s1 + $0xe0] sm:$0xf]
  %v93 = vld [vmem:[%s1 + $0xe4] sm:$0xf]
  %v94 = vld [vmem:[%s1 + $0xe8] sm:$0xf]
  %v95 = vld [vmem:[%s1 + $0xec] sm:$0xf]
  %v96 = vld [vmem:[%s1 + $0xf0] sm:$0xf]
  %v97 = vld [vmem:[%s1 + $0xf4] sm:$0xf]
  %v98 = vld [vmem:[%s1 + $0xf8] sm:$0xf]
  %v99 = vld [vmem:[%s1 + $0xfc] sm:$0xf]
  %v100 = vld [vmem:[%s1 + $0x100] sm:$0xf]
  %v101 = vld [vmem:[%s1 + $0x104] sm:$0xf]
  %v102 = vld [vmem:[%s1 + $0x108] sm:$0xf]
  %v103 = vld [vmem:[%s1 + $0x10c] sm:$0xf]
  %v104 = vld [vmem:[%s1 + $0x110] sm:$0xf]
  %v105 = vld [vmem:[%s1 + $0x114] sm:$0xf]
  %v106 = vld [vmem:[%s1 + $0x118] sm:$0xf]
  %v107 = vld [vmem:[%s1 + $0x11c] sm:$0xf]
  %v108 = vld [vmem:[%s1 + $0x120] sm:$0xf]
  %v109 = vld [vmem:[%s1 + $0x124] sm:$0xf]
  %v110 = vld [vmem:[%s1 + $0x128] sm:$0xf]
  %v111 = vld [vmem:[%s1 + $0x12c] sm:$0xf]
  %v112 = vld [vmem:[%s1 + $0x130] sm:$0xf]
  %v113 = vld [vmem:[%s1 + $0x134] sm:$0xf]
  %v114 = vld [vmem:[%s1 + $0x138] sm:$0xf]
  %v115 = vld [vmem:[%s1 + $0x13c] sm:$0xf]
  %v128 = vunpack.c.l.b16 %v24
  %v129 = vunpack.c.h.b16 %v24
  %v130 = vunpack.c.l.b16 %v25
  %v131 = vunpack.c.h.b16 %v25
  %v132 = vunpack.c.l.b16 %v26
  %v133 = vunpack.c.l.b16 %v27
  %v134 = vunpack.c.h.b16 %v27
  %v135 = vunpack.c.l.b16 %v28
  %v136 = vunpack.c.h.b16 %v28
  %v137 = vunpack.c.l.b16 %v29
  %v138 = vunpack.c.l.b16 %v30
  %v139 = vunpack.c.h.b16 %v30
  %v140 = vunpack.c.l.b16 %v31
  %v141 = vunpack.c.h.b16 %v31
  %v142 = vunpack.c.l.b16 %v32
  %v143 = vunpack.c.l.b16 %v33
  %v144 = vunpack.c.h.b16 %v33
  %v145 = vunpack.c.l.b16 %v34
  %v146 = vunpack.c.h.b16 %v34
  %v147 = vunpack.c.l.b16 %v35
  %v148 = vpack.c.b16 %v133, %v128
  %v149 = vpack.c.b16 %v134, %v129
  %v150 = vpack.c.b16 %v135, %v130
  %v151 = vpack.c.b16 %v136, %v131
  %v152 = vpack.c.b16 %v137, %v132
  %v153 = vpack.c.b16 %v143, %v138
  %v154 = vpack.c.b16 %v144, %v139
  %v155 = vpack.c.b16 %v145, %v140
  %v156 = vpack.c.b16 %v146, %v141
  %v157 = vpack.c.b16 %v147, %v142
  %v248 = vunpack.c.l.b16 %v36
  %v249 = vunpack.c.l.b16 %v37
  %v250 = vunpack.c.l.b16 %v38
  %v251 = vunpack.c.l.b16 %v39
  %v252 = vunpack.c.l.b16 %v40
  %v253 = vunpack.c.l.b16 %v41
  %v254 = vunpack.c.l.b16 %v42
  %v255 = vunpack.c.l.b16 %v43
  %v256 = vunpack.c.l.b16 %v44
  %v257 = vunpack.c.l.b16 %v45
  %v258 = vunpack.c.l.b16 %v46
  %v259 = vunpack.c.l.b16 %v47
  %v260 = vunpack.c.l.b16 %v48
  %v261 = vunpack.c.l.b16 %v49
  %v262 = vunpack.c.l.b16 %v50
  %v263 = vunpack.c.l.b16 %v51
  %v264 = vunpack.c.l.b16 %v52
  %v265 = vunpack.c.l.b16 %v53
  %v266 = vunpack.c.l.b16 %v54
  %v267 = vunpack.c.l.b16 %v55
  %v268 = vunpack.c.l.b16 %v56
  %v269 = vunpack.c.l.b16 %v57
  %v270 = vunpack.c.l.b16 %v58
  %v271 = vunpack.c.l.b16 %v59
  %v272 = vunpack.c.l.b16 %v60
  %v273 = vunpack.c.l.b16 %v61
  %v274 = vunpack.c.l.b16 %v62
  %v275 = vunpack.c.l.b16 %v63
  %v276 = vunpack.c.l.b16 %v64
  %v277 = vunpack.c.l.b16 %v65
  %v278 = vunpack.c.l.b16 %v66
  %v279 = vunpack.c.l.b16 %v67
  %v280 = vunpack.c.l.b16 %v68
  %v281 = vunpack.c.l.b16 %v69
  %v282 = vunpack.c.l.b16 %v70
  %v283 = vunpack.c.l.b16 %v71
  %v284 = vunpack.c.l.b16 %v72
  %v285 = vunpack.c.l.b16 %v73
  %v286 = vunpack.c.l.b16 %v74
  %v287 = vunpack.c.l.b16 %v75
  %v288 = vunpack.c.l.b16 %v76
  %v289 = vunpack.c.l.b16 %v77
  %v290 = vunpack.c.l.b16 %v78
  %v291 = vunpack.c.l.b16 %v79
  %v292 = vunpack.c.l.b16 %v80
  %v293 = vunpack.c.l.b16 %v81
  %v294 = vunpack.c.l.b16 %v82
  %v295 = vunpack.c.l.b16 %v83
  %v296 = vunpack.c.l.b16 %v84
  %v297 = vunpack.c.l.b16 %v85
  %v298 = vunpack.c.l.b16 %v86
  %v299 = vunpack.c.l.b16 %v87
  %v300 = vunpack.c.l.b16 %v88
  %v301 = vunpack.c.l.b16 %v89
  %v302 = vunpack.c.l.b16 %v90
  %v303 = vunpack.c.l.b16 %v91
  %v304 = vunpack.c.l.b16 %v92
  %v305 = vunpack.c.l.b16 %v93
  %v306 = vunpack.c.l.b16 %v94
  %v307 = vunpack.c.l.b16 %v95
  %v308 = vunpack.c.l.b16 %v96
  %v309 = vunpack.c.l.b16 %v97
  %v310 = vunpack.c.l.b16 %v98
  %v311 = vunpack.c.l.b16 %v99
  %v312 = vunpack.c.l.b16 %v100
  %v313 = vunpack.c.l.b16 %v101
  %v314 = vunpack.c.l.b16 %v102
  %v315 = vunpack.c.l.b16 %v103
  %v316 = vunpack.c.l.b16 %v104
  %v317 = vunpack.c.l.b16 %v105
  %v318 = vunpack.c.l.b16 %v106
  %v319 = vunpack.c.l.b16 %v107
  %v320 = vunpack.c.l.b16 %v108
  %v321 = vunpack.c.l.b16 %v109
  %v322 = vunpack.c.l.b16 %v110
  %v323 = vunpack.c.l.b16 %v111
  %v324 = vunpack.c.l.b16 %v112
  %v325 = vunpack.c.l.b16 %v113
  %v326 = vunpack.c.l.b16 %v114
  %v327 = vunpack.c.l.b16 %v115
  %v328 = vpack.c.b16 %v249, %v248
  %v329 = vpack.c.b16 %v251, %v250
  %v330 = vpack.c.b16 %v253, %v252
  %v331 = vpack.c.b16 %v255, %v254
  %v332 = vpack.c.b16 %v257, %v256
  %v333 = vpack.c.b16 %v259, %v258
  %v334 = vpack.c.b16 %v261, %v260
  %v335 = vpack.c.b16 %v263, %v262
  %v336 = vpack.c.b16 %v265, %v264
  %v337 = vpack.c.b16 %v267, %v266
  %v338 = vpack.c.b16 %v269, %v268
  %v339 = vpack.c.b16 %v271, %v270
  %v340 = vpack.c.b16 %v273, %v272
  %v341 = vpack.c.b16 %v275, %v274
  %v342 = vpack.c.b16 %v277, %v276
  %v343 = vpack.c.b16 %v279, %v278
  %v344 = vpack.c.b16 %v281, %v280
  %v345 = vpack.c.b16 %v283, %v282
  %v346 = vpack.c.b16 %v285, %v284
  %v347 = vpack.c.b16 %v287, %v286
  %v348 = vpack.c.b16 %v289, %v288
  %v349 = vpack.c.b16 %v291, %v290
  %v350 = vpack.c.b16 %v293, %v292
  %v351 = vpack.c.b16 %v295, %v294
  %v352 = vpack.c.b16 %v297, %v296
  %v353 = vpack.c.b16 %v299, %v298
  %v354 = vpack.c.b16 %v301, %v300
  %v355 = vpack.c.b16 %v303, %v302
  %v356 = vpack.c.b16 %v305, %v304
  %v357 = vpack.c.b16 %v307, %v306
  %v358 = vpack.c.b16 %v309, %v308
  %v359 = vpack.c.b16 %v311, %v310
  %v360 = vpack.c.b16 %v313, %v312
  %v361 = vpack.c.b16 %v315, %v314
  %v362 = vpack.c.b16 %v317, %v316
  %v363 = vpack.c.b16 %v319, %v318
  %v364 = vpack.c.b16 %v321, %v320
  %v365 = vpack.c.b16 %v323, %v322
  %v366 = vpack.c.b16 %v325, %v324
  %v367 = vpack.c.b16 %v327, %v326
  %408 = vmatprep.subr.bf16.mxu0 0
  %409 = vmatpush1.bf16.msra.mxu0 %v335
  %410 = vmatprep.subr.bf16.mxu0 0
  %411 = vmatpush1.bf16.msra.mxu0 %v334
  %412 = vmatprep.subr.bf16.mxu0 0
  %413 = vmatpush1.bf16.msra.mxu0 %v333
  %414 = vmatprep.subr.bf16.mxu0 0
  %415 = vmatpush1.bf16.msra.mxu0 %v332
  %416 = vmatprep.subr.bf16.mxu0 0
  %417 = vmatpush1.bf16.msra.mxu0 %v331
  %418 = vmatprep.subr.bf16.mxu0 0
  %419 = vmatpush1.bf16.msra.mxu0 %v330
  %420 = vmatprep.subr.bf16.mxu0 0
  %421 = vmatpush1.bf16.msra.mxu0 %v329
  %422 = vmatprep.subr.bf16.mxu0 0
  %423 = vmatpush1.bf16.msra.mxu0 %v328
  %424 = vmatprep.subr.bf16.mxu0 0
  %425 = vmatpush2.bf16.msra.mxu0 %v343
  %426 = vmatprep.subr.bf16.mxu0 0
  %427 = vmatpush2.bf16.msra.mxu0 %v342
  %428 = vmatprep.subr.bf16.mxu0 0
  %429 = vmatpush2.bf16.msra.mxu0 %v341
  %430 = vmatprep.subr.bf16.mxu0 0
  %431 = vmatpush2.bf16.msra.mxu0 %v340
  %432 = vmatprep.subr.bf16.mxu0 0
  %433 = vmatpush2.bf16.msra.mxu0 %v339
  %434 = vmatprep.subr.bf16.mxu0 0
  %435 = vmatpush2.bf16.msra.mxu0 %v338
  %436 = vmatprep.subr.bf16.mxu0 0
  %437 = vmatpush2.bf16.msra.mxu0 %v337
  %438 = vmatprep.subr.bf16.mxu0 0
  %439 = vmatpush2.bf16.msra.mxu0 %v336
  %440 = vmatprep.mubr.bf16.mxu0 %v149
  %441 = vmatmul.mubr.bf16.gmra.mxu0 %v148
  %v442 = vpop.f32.mrf.mxu0
  %v443 = vadd.f32 0.0, %v442
  %v444 = vpop.f32.mrf.mxu0
  %v445 = vpop.f32.mrf.mxu0
  %v446 = vadd.f32 0.0, %v445
  %v447 = vpop.f32.mrf.mxu0
  %448 = vmatprep.mubr.bf16.mxu0 %v154
  %449 = vmatmul.mubr.bf16.gmra.mxu0 %v153
  %v450 = vpop.f32.mrf.mxu0
  %v451 = vadd.f32 0.0, %v450
  %v452 = vpop.f32.mrf.mxu0
  %v453 = vpop.f32.mrf.mxu0
  %v454 = vadd.f32 0.0, %v453
  %v455 = vpop.f32.mrf.mxu0
  %456 = vdwg.mxu0
  %457 = vmatprep.subr.bf16.mxu0 0
  %458 = vmatpush1.bf16.msra.mxu0 %v351
  %459 = vmatprep.subr.bf16.mxu0 0
  %460 = vmatpush1.bf16.msra.mxu0 %v350
  %461 = vmatprep.subr.bf16.mxu0 0
  %462 = vmatpush1.bf16.msra.mxu0 %v349
  %463 = vmatprep.subr.bf16.mxu0 0
  %464 = vmatpush1.bf16.msra.mxu0 %v348
  %465 = vmatprep.subr.bf16.mxu0 0
  %466 = vmatpush1.bf16.msra.mxu0 %v347
  %467 = vmatprep.subr.bf16.mxu0 0
  %468 = vmatpush1.bf16.msra.mxu0 %v346
  %469 = vmatprep.subr.bf16.mxu0 0
  %470 = vmatpush1.bf16.msra.mxu0 %v345
  %471 = vmatprep.subr.bf16.mxu0 0
  %472 = vmatpush1.bf16.msra.mxu0 %v344
  %473 = vmatprep.subr.bf16.mxu0 0
  %474 = vmatpush2.bf16.msra.mxu0 %v359
  %475 = vmatprep.subr.bf16.mxu0 0
  %476 = vmatpush2.bf16.msra.mxu0 %v358
  %477 = vmatprep.subr.bf16.mxu0 0
  %478 = vmatpush2.bf16.msra.mxu0 %v357
  %479 = vmatprep.subr.bf16.mxu0 0
  %480 = vmatpush2.bf16.msra.mxu0 %v356
  %481 = vmatprep.subr.bf16.mxu0 0
  %482 = vmatpush2.bf16.msra.mxu0 %v355
  %483 = vmatprep.subr.bf16.mxu0 0
  %484 = vmatpush2.bf16.msra.mxu0 %v354
  %485 = vmatprep.subr.bf16.mxu0 0
  %486 = vmatpush2.bf16.msra.mxu0 %v353
  %487 = vmatprep.subr.bf16.mxu0 0
  %488 = vmatpush2.bf16.msra.mxu0 %v352
  %489 = vmatprep.mubr.bf16.mxu0 %v151
  %490 = vmatmul.mubr.bf16.gmra.mxu0 %v150
  %v491 = vpop.f32.mrf.mxu0
  %v492 = vadd.f32 %v443, %v491
  %v493 = vpop.f32.mrf.mxu0
  %v494 = vpop.f32.mrf.mxu0
  %v495 = vadd.f32 %v446, %v494
  %v496 = vpop.f32.mrf.mxu0
  %497 = vmatprep.mubr.bf16.mxu0 %v156
  %498 = vmatmul.mubr.bf16.gmra.mxu0 %v155
  %v499 = vpop.f32.mrf.mxu0
  %v500 = vadd.f32 %v451, %v499
  %v501 = vpop.f32.mrf.mxu0
  %v502 = vpop.f32.mrf.mxu0
  %v503 = vadd.f32 %v454, %v502
  %v504 = vpop.f32.mrf.mxu0
  %505 = vdwg.mxu0
  %506 = vmatprep.subr.bf16.mxu0 0
  %507 = vmatpush1.bf16.msra.mxu0 %v367
  %508 = vmatprep.subr.bf16.mxu0 0
  %509 = vmatpush1.bf16.msra.mxu0 %v366
  %510 = vmatprep.subr.bf16.mxu0 0
  %511 = vmatpush1.bf16.msra.mxu0 %v365
  %512 = vmatprep.subr.bf16.mxu0 0
  %513 = vmatpush1.bf16.msra.mxu0 %v364
  %514 = vmatprep.subr.bf16.mxu0 0
  %515 = vmatpush1.bf16.msra.mxu0 %v363
  %516 = vmatprep.subr.bf16.mxu0 0
  %517 = vmatpush1.bf16.msra.mxu0 %v362
  %518 = vmatprep.subr.bf16.mxu0 0
  %519 = vmatpush1.bf16.msra.mxu0 %v361
  %520 = vmatprep.subr.bf16.mxu0 0
  %521 = vmatpush1.bf16.msra.mxu0 %v360
  %522 = vmatprep.subr.bf16.mxu0 0
  %523 = vmatpush2.bf16.msra.mxu0 0
  %524 = vmatprep.subr.bf16.mxu0 0
  %525 = vmatpush2.bf16.msra.mxu0 0
  %526 = vmatprep.subr.bf16.mxu0 0
  %527 = vmatpush2.bf16.msra.mxu0 0
  %528 = vmatprep.subr.bf16.mxu0 0
  %529 = vmatpush2.bf16.msra.mxu0 0
  %530 = vmatprep.subr.bf16.mxu0 0
  %531 = vmatpush2.bf16.msra.mxu0 0
  %532 = vmatprep.subr.bf16.mxu0 0
  %533 = vmatpush2.bf16.msra.mxu0 0
  %534 = vmatprep.subr.bf16.mxu0 0
  %535 = vmatpush2.bf16.msra.mxu0 0
  %536 = vmatprep.subr.bf16.mxu0 0
  %537 = vmatpush2.bf16.msra.mxu0 0
  %538 = vmatprep.mubr.bf16.mxu0 0
  %539 = vmatmul.mubr.bf16.gmra.mxu0 %v152
  %v540 = vpop.f32.mrf.mxu0
  %v541 = vadd.f32 %v492, %v540
  %v542 = vpop.f32.mrf.mxu0
  %v543 = vpop.f32.mrf.mxu0
  %v544 = vadd.f32 %v495, %v543
  %v545 = vpop.f32.mrf.mxu0
  %546 = vmatprep.mubr.bf16.mxu0 0
  %547 = vmatmul.mubr.bf16.gmra.mxu0 %v157
  %v548 = vpop.f32.mrf.mxu0
  %v549 = vadd.f32 %v500, %v548
  %v550 = vpop.f32.mrf.mxu0
  %v551 = vpop.f32.mrf.mxu0
  %v552 = vadd.f32 %v503, %v551
  %v553 = vpop.f32.mrf.mxu0
  %554 = vdwg.mxu0
  %v555 = vadd.f32 %v20, %v541
  %v556 = vadd.f32 %v21, %v544
  %v557 = vadd.f32 %v22, %v549
  %v558 = vadd.f32 %v23, %v552
  %559 = vst [vmem:[#allocation2] sm:$0xff] %v555
  %560 = vst [vmem:[#allocation2 + $0x8] sm:$0xff] %v556
  %561 = vst [vmem:[#allocation2 + $0x10] sm:$0xff] %v557
  %562 = vst [vmem:[#allocation2 + $0x18] sm:$0xff] %v558
  // Predicated region
  $region14: #{generator_forward.31} parent=0 // pred_check
    %p563 = pneg %p12
  $region15: #{generator_forward.31} parent=0 // pred_check_branch
    %565 = sbr.rel (%p563) target = $region17
  $region16: #{generator_forward.31} parent=0 // pred_region
    %v566 = vld [vmem:[#allocation2] sm:$0xff]
    %v567 = vld [vmem:[#allocation2 + $0x8] sm:$0xff]
    %v568 = vld [vmem:[#allocation2 + $0x10] sm:$0xff]
    %v569 = vld [vmem:[#allocation2 + $0x18] sm:$0xff]
    %570 = vst [vmem:[%s2] sm:$0xff] %v566
    %571 = vst [vmem:[%s2 + $0x8] sm:$0xff] %v567
    %572 = vst [vmem:[%s2 + $0x10] sm:$0xff] %v568
    %573 = vst [vmem:[%s2 + $0x18] sm:$0xff] %v569
  $region17: #{generator_forward.31} parent=0 // pred_fallthru
    _
  // Predicated region
  $region18: #{generator_forward.31} parent=0 // pred_check
    _
  $region19: #{generator_forward.31} parent=0 // pred_check_branch
    %575 = sbr.rel (0) target = $region21
  $region20: #{generator_forward.31} parent=0 // pred_region
    _
  $region21: #{generator_forward.31} parent=0 // pred_fallthru
    _
  // Predicated region
  $region22: #{generator_forward.31} parent=0 // pred_check
    _
  $region23: #{generator_forward.31} parent=0 // pred_check_branch
    %577 = sbr.rel (0) target = $region25
  $region24: #{generator_forward.31} parent=0 // pred_region
    _
  $region25: #{generator_forward.31} parent=0 // pred_fallthru
    _

// kernel: generator_forward.39
$region0: #{generator_forward.39}
  #allocation0 [shape = 'u32[]', space=smem, size = 0x4, offset = 0x4, fixed_abs, tag = 'smem constant byte address 0x4 - core index']
  #allocation1 [shape = 'u32[144,128]{1,0:T(1,128)}', space=vmem, size = 0x12000, scoped, tag = 'internal scratch']
  #allocation2 [shape = 'f32[32,128]{1,0:T(8,128)}', space=vmem, size = 0x4000, scoped, tag = 'scratch operand']
  %s0 = inlined_call_operand.vmem [shape: bf16[32,256], index: 0, kind: input, shape index: {}]
  %s1 = inlined_call_operand.vmem [shape: bf16[256,128], index: 1, kind: input, shape index: {}]
  %s2 = inlined_call_operand.vmem [shape: f32[32,128], index: 2, kind: output, shape index: {}]
  %s3 = sld [smem:[#allocation0]]
  $region26: #{generator_forward.39} parent=0
    _
  %s5 = ssub.s32 1, %s3
  %s6 = scalar_select 0, %s5, %s3
  // Predicated region
  $region2: #{generator_forward.39} parent=0 // pred_check
    _
  $region3: #{generator_forward.39} parent=0 // pred_check_branch
    %8 = sbr.rel (0) target = $region5
  $region4: #{generator_forward.39} parent=0 // pred_region
    _
  $region5: #{generator_forward.39} parent=0 // pred_fallthru
    _
  // Predicated region
  $region6: #{generator_forward.39} parent=0 // pred_check
    _
  $region7: #{generator_forward.39} parent=0 // pred_check_branch
    %10 = sbr.rel (0) target = $region9
  $region8: #{generator_forward.39} parent=0 // pred_region
    _
  $region9: #{generator_forward.39} parent=0 // pred_fallthru
    _
  %p12 = scmp.eq.s32.totalorder 0, 0
  // Predicated region
  $region10: #{generator_forward.39} parent=0 // pred_check
    %p13 = pneg %p12
  $region11: #{generator_forward.39} parent=0 // pred_check_branch
    %15 = sbr.rel (%p13) target = $region13
  $region12: #{generator_forward.39} parent=0 // pred_region
    %16 = vst [vmem:[#allocation2] sm:$0xff] 0.0
    %17 = vst [vmem:[#allocation2 + $0x8] sm:$0xff] 0.0
    %18 = vst [vmem:[#allocation2 + $0x10] sm:$0xff] 0.0
    %19 = vst [vmem:[#allocation2 + $0x18] sm:$0xff] 0.0
  $region13: #{generator_forward.39} parent=0 // pred_fallthru
    _
  %v20 = vld [vmem:[#allocation2] sm:$0xff]
  %v21 = vld [vmem:[#allocation2 + $0x8] sm:$0xff]
  %v22 = vld [vmem:[#allocation2 + $0x10] sm:$0xff]
  %v23 = vld [vmem:[#allocation2 + $0x18] sm:$0xff]
  %v24 = vld [vmem:[%s0] sm:$0xff]
  %v25 = vld [vmem:[%s0 + $0x8] sm:$0xff]
  %v26 = vld [vmem:[%s0 + $0x10] sm:$0xff]
  %v27 = vld [vmem:[%s0 + $0x18] sm:$0xff]
  %v28 = vld [vmem:[%s1] sm:$0xf]
  %v29 = vld [vmem:[%s1 + $0x4] sm:$0xf]
  %v30 = vld [vmem:[%s1 + $0x8] sm:$0xf]
  %v31 = vld [vmem:[%s1 + $0xc] sm:$0xf]
  %v32 = vld [vmem:[%s1 + $0x10] sm:$0xf]
  %v33 = vld [vmem:[%s1 + $0x14] sm:$0xf]
  %v34 = vld [vmem:[%s1 + $0x18] sm:$0xf]
  %v35 = vld [vmem:[%s1 + $0x1c] sm:$0xf]
  %v36 = vld [vmem:[%s1 + $0x20] sm:$0xf]
  %v37 = vld [vmem:[%s1 + $0x24] sm:$0xf]
  %v38 = vld [vmem:[%s1 + $0x28] sm:$0xf]
  %v39 = vld [vmem:[%s1 + $0x2c] sm:$0xf]
  %v40 = vld [vmem:[%s1 + $0x30] sm:$0xf]
  %v41 = vld [vmem:[%s1 + $0x34] sm:$0xf]
  %v42 = vld [vmem:[%s1 + $0x38] sm:$0xf]
  %v43 = vld [vmem:[%s1 + $0x3c] sm:$0xf]
  %v44 = vld [vmem:[%s1 + $0x40] sm:$0xf]
  %v45 = vld [vmem:[%s1 + $0x44] sm:$0xf]
  %v46 = vld [vmem:[%s1 + $0x48] sm:$0xf]
  %v47 = vld [vmem:[%s1 + $0x4c] sm:$0xf]
  %v48 = vld [vmem:[%s1 + $0x50] sm:$0xf]
  %v49 = vld [vmem:[%s1 + $0x54] sm:$0xf]
  %v50 = vld [vmem:[%s1 + $0x58] sm:$0xf]
  %v51 = vld [vmem:[%s1 + $0x5c] sm:$0xf]
  %v52 = vld [vmem:[%s1 + $0x60] sm:$0xf]
  %v53 = vld [vmem:[%s1 + $0x64] sm:$0xf]
  %v54 = vld [vmem:[%s1 + $0x68] sm:$0xf]
  %v55 = vld [vmem:[%s1 + $0x6c] sm:$0xf]
  %v56 = vld [vmem:[%s1 + $0x70] sm:$0xf]
  %v57 = vld [vmem:[%s1 + $0x74] sm:$0xf]
  %v58 = vld [vmem:[%s1 + $0x78] sm:$0xf]
  %v59 = vld [vmem:[%s1 + $0x7c] sm:$0xf]
  %v64 = vunpack.c.l.b16 %v24
  %v65 = vunpack.c.h.b16 %v24
  %v66 = vunpack.c.l.b16 %v25
  %v67 = vunpack.c.h.b16 %v25
  %v68 = vunpack.c.l.b16 %v26
  %v69 = vunpack.c.h.b16 %v26
  %v70 = vunpack.c.l.b16 %v27
  %v71 = vunpack.c.h.b16 %v27
  %v72 = vpack.c.b16 %v66, %v64
  %v73 = vpack.c.b16 %v67, %v65
  %v74 = vpack.c.b16 %v70, %v68
  %v75 = vpack.c.b16 %v71, %v69
  %v112 = vunpack.c.l.b16 %v28
  %v113 = vunpack.c.l.b16 %v29
  %v114 = vunpack.c.l.b16 %v30
  %v115 = vunpack.c.l.b16 %v31
  %v116 = vunpack.c.l.b16 %v32
  %v117 = vunpack.c.l.b16 %v33
  %v118 = vunpack.c.l.b16 %v34
  %v119 = vunpack.c.l.b16 %v35
  %v120 = vunpack.c.l.b16 %v36
  %v121 = vunpack.c.l.b16 %v37
  %v122 = vunpack.c.l.b16 %v38
  %v123 = vunpack.c.l.b16 %v39
  %v124 = vunpack.c.l.b16 %v40
  %v125 = vunpack.c.l.b16 %v41
  %v126 = vunpack.c.l.b16 %v42
  %v127 = vunpack.c.l.b16 %v43
  %v128 = vunpack.c.l.b16 %v44
  %v129 = vunpack.c.l.b16 %v45
  %v130 = vunpack.c.l.b16 %v46
  %v131 = vunpack.c.l.b16 %v47
  %v132 = vunpack.c.l.b16 %v48
  %v133 = vunpack.c.l.b16 %v49
  %v134 = vunpack.c.l.b16 %v50
  %v135 = vunpack.c.l.b16 %v51
  %v136 = vunpack.c.l.b16 %v52
  %v137 = vunpack.c.l.b16 %v53
  %v138 = vunpack.c.l.b16 %v54
  %v139 = vunpack.c.l.b16 %v55
  %v140 = vunpack.c.l.b16 %v56
  %v141 = vunpack.c.l.b16 %v57
  %v142 = vunpack.c.l.b16 %v58
  %v143 = vunpack.c.l.b16 %v59
  %v144 = vpack.c.b16 %v113, %v112
  %v145 = vpack.c.b16 %v115, %v114
  %v146 = vpack.c.b16 %v117, %v116
  %v147 = vpack.c.b16 %v119, %v118
  %v148 = vpack.c.b16 %v121, %v120
  %v149 = vpack.c.b16 %v123, %v122
  %v150 = vpack.c.b16 %v125, %v124
  %v151 = vpack.c.b16 %v127, %v126
  %v152 = vpack.c.b16 %v129, %v128
  %v153 = vpack.c.b16 %v131, %v130
  %v154 = vpack.c.b16 %v133, %v132
  %v155 = vpack.c.b16 %v135, %v134
  %v156 = vpack.c.b16 %v137, %v136
  %v157 = vpack.c.b16 %v139, %v138
  %v158 = vpack.c.b16 %v141, %v140
  %v159 = vpack.c.b16 %v143, %v142
  %176 = vmatprep.subr.bf16.mxu0 0
  %177 = vmatpush1.bf16.msra.mxu0 %v151
  %178 = vmatprep.subr.bf16.mxu0 0
  %179 = vmatpush1.bf16.msra.mxu0 %v150
  %180 = vmatprep.subr.bf16.mxu0 0
  %181 = vmatpush1.bf16.msra.mxu0 %v149
  %182 = vmatprep.subr.bf16.mxu0 0
  %183 = vmatpush1.bf16.msra.mxu0 %v148
  %184 = vmatprep.subr.bf16.mxu0 0
  %185 = vmatpush1.bf16.msra.mxu0 %v147
  %186 = vmatprep.subr.bf16.mxu0 0
  %187 = vmatpush1.bf16.msra.mxu0 %v146
  %188 = vmatprep.subr.bf16.mxu0 0
  %189 = vmatpush1.bf16.msra.mxu0 %v145
  %190 = vmatprep.subr.bf16.mxu0 0
  %191 = vmatpush1.bf16.msra.mxu0 %v144
  %192 = vmatprep.subr.bf16.mxu0 0
  %193 = vmatpush2.bf16.msra.mxu0 %v159
  %194 = vmatprep.subr.bf16.mxu0 0
  %195 = vmatpush2.bf16.msra.mxu0 %v158
  %196 = vmatprep.subr.bf16.mxu0 0
  %197 = vmatpush2.bf16.msra.mxu0 %v157
  %198 = vmatprep.subr.bf16.mxu0 0
  %199 = vmatpush2.bf16.msra.mxu0 %v156
  %200 = vmatprep.subr.bf16.mxu0 0
  %201 = vmatpush2.bf16.msra.mxu0 %v155
  %202 = vmatprep.subr.bf16.mxu0 0
  %203 = vmatpush2.bf16.msra.mxu0 %v154
  %204 = vmatprep.subr.bf16.mxu0 0
  %205 = vmatpush2.bf16.msra.mxu0 %v153
  %206 = vmatprep.subr.bf16.mxu0 0
  %207 = vmatpush2.bf16.msra.mxu0 %v152
  %208 = vmatprep.mubr.bf16.mxu0 %v73
  %209 = vmatmul.mubr.bf16.gmra.mxu0 %v72
  %v210 = vpop.f32.mrf.mxu0
  %v211 = vadd.f32 0.0, %v210
  %v212 = vpop.f32.mrf.mxu0
  %v213 = vpop.f32.mrf.mxu0
  %v214 = vadd.f32 0.0, %v213
  %v215 = vpop.f32.mrf.mxu0
  %216 = vmatprep.mubr.bf16.mxu0 %v75
  %217 = vmatmul.mubr.bf16.gmra.mxu0 %v74
  %v218 = vpop.f32.mrf.mxu0
  %v219 = vadd.f32 0.0, %v218
  %v220 = vpop.f32.mrf.mxu0
  %v221 = vpop.f32.mrf.mxu0
  %v222 = vadd.f32 0.0, %v221
  %v223 = vpop.f32.mrf.mxu0
  %224 = vdwg.mxu0
  %v225 = vadd.f32 %v20, %v211
  %v226 = vadd.f32 %v21, %v214
  %v227 = vadd.f32 %v22, %v219
  %v228 = vadd.f32 %v23, %v222
  %229 = vst [vmem:[#allocation2] sm:$0xff] %v225
  %230 = vst [vmem:[#allocation2 + $0x8] sm:$0xff] %v226
  %231 = vst [vmem:[#allocation2 + $0x10] sm:$0xff] %v227
  %232 = vst [vmem:[#allocation2 + $0x18] sm:$0xff] %v228
  // Predicated region
  $region14: #{generator_forward.39} parent=0 // pred_check
    %p233 = pneg %p12
  $region15: #{generator_forward.39} parent=0 // pred_check_branch
    %235 = sbr.rel (%p233) target = $region17
  $region16: #{generator_forward.39} parent=0 // pred_region
    %v236 = vld [vmem:[#allocation2] sm:$0xff]
    %v237 = vld [vmem:[#allocation2 + $0x8] sm:$0xff]
    %v238 = vld [vmem:[#allocation2 + $0x10] sm:$0xff]
    %v239 = vld [vmem:[#allocation2 + $0x18] sm:$0xff]
    %240 = vst [vmem:[%s2] sm:$0xff] %v236
    %241 = vst [vmem:[%s2 + $0x8] sm:$0xff] %v237
    %242 = vst [vmem:[%s2 + $0x10] sm:$0xff] %v238
    %243 = vst [vmem:[%s2 + $0x18] sm:$0xff] %v239
  $region17: #{generator_forward.39} parent=0 // pred_fallthru
    _
  // Predicated region
  $region18: #{generator_forward.39} parent=0 // pred_check
    _
  $region19: #{generator_forward.39} parent=0 // pred_check_branch
    %245 = sbr.rel (0) target = $region21
  $region20: #{generator_forward.39} parent=0 // pred_region
    _
  $region21: #{generator_forward.39} parent=0 // pred_fallthru
    _
  // Predicated region
  $region22: #{generator_forward.39} parent=0 // pred_check
    _
  $region23: #{generator_forward.39} parent=0 // pred_check_branch
    %247 = sbr.rel (0) target = $region25
  $region24: #{generator_forward.39} parent=0 // pred_region
    _
  $region25: #{generator_forward.39} parent=0 // pred_fallthru
    _

// kernel: generator_forward.44
$region0: #{generator_forward.44}
  #allocation0 [shape = 'u32[]', space=smem, size = 0x4, offset = 0x4, fixed_abs, tag = 'smem constant byte address 0x4 - core index']
  #allocation1 [shape = 'u32[144,128]{1,0:T(1,128)}', space=vmem, size = 0x12000, scoped, tag = 'internal scratch']
  #allocation2 [shape = 'f32[128,128]{1,0:T(8,128)}', space=vmem, size = 0x10000, scoped, tag = 'scratch operand']
  %s0 = inlined_call_operand.vmem [shape: bf16[128,128], index: 0, kind: input, shape index: {}]
  %s1 = inlined_call_operand.vmem [shape: bf16[128,128], index: 1, kind: input, shape index: {}]
  %s2 = inlined_call_operand.vmem [shape: f32[128,128], index: 2, kind: output, shape index: {}]
  %s3 = sld [smem:[#allocation0]]
  $region26: #{generator_forward.44} parent=0
    _
  %s5 = ssub.s32 1, %s3
  %s6 = scalar_select 0, %s5, %s3
  // Predicated region
  $region2: #{generator_forward.44} parent=0 // pred_check
    _
  $region3: #{generator_forward.44} parent=0 // pred_check_branch
    %8 = sbr.rel (0) target = $region5
  $region4: #{generator_forward.44} parent=0 // pred_region
    _
  $region5: #{generator_forward.44} parent=0 // pred_fallthru
    _
  // Predicated region
  $region6: #{generator_forward.44} parent=0 // pred_check
    _
  $region7: #{generator_forward.44} parent=0 // pred_check_branch
    %10 = sbr.rel (0) target = $region9
  $region8: #{generator_forward.44} parent=0 // pred_region
    _
  $region9: #{generator_forward.44} parent=0 // pred_fallthru
    _
  %p12 = scmp.eq.s32.totalorder 0, 0
  // Predicated region
  $region10: #{generator_forward.44} parent=0 // pred_check
    %p13 = pneg %p12
  $region11: #{generator_forward.44} parent=0 // pred_check_branch
    %15 = sbr.rel (%p13) target = $region13
  $region12: #{generator_forward.44} parent=0 // pred_region
    %16 = vst [vmem:[#allocation2] sm:$0xff] 0.0
    %17 = vst [vmem:[#allocation2 + $0x8] sm:$0xff] 0.0
    %18 = vst [vmem:[#allocation2 + $0x10] sm:$0xff] 0.0
    %19 = vst [vmem:[#allocation2 + $0x18] sm:$0xff] 0.0
    %20 = vst [vmem:[#allocation2 + $0x20] sm:$0xff] 0.0
    %21 = vst [vmem:[#allocation2 + $0x28] sm:$0xff] 0.0
    %22 = vst [vmem:[#allocation2 + $0x30] sm:$0xff] 0.0
    %23 = vst [vmem:[#allocation2 + $0x38] sm:$0xff] 0.0
    %24 = vst [vmem:[#allocation2 + $0x40] sm:$0xff] 0.0
    %25 = vst [vmem:[#allocation2 + $0x48] sm:$0xff] 0.0
    %26 = vst [vmem:[#allocation2 + $0x50] sm:$0xff] 0.0
    %27 = vst [vmem:[#allocation2 + $0x58] sm:$0xff] 0.0
    %28 = vst [vmem:[#allocation2 + $0x60] sm:$0xff] 0.0
    %29 = vst [vmem:[#allocation2 + $0x68] sm:$0xff] 0.0
    %30 = vst [vmem:[#allocation2 + $0x70] sm:$0xff] 0.0
    %31 = vst [vmem:[#allocation2 + $0x78] sm:$0xff] 0.0
  $region13: #{generator_forward.44} parent=0 // pred_fallthru
    _
  %v32 = vld [vmem:[#allocation2] sm:$0xff]
  %v33 = vld [vmem:[#allocation2 + $0x8] sm:$0xff]
  %v34 = vld [vmem:[#allocation2 + $0x10] sm:$0xff]
  %v35 = vld [vmem:[#allocation2 + $0x18] sm:$0xff]
  %v36 = vld [vmem:[#allocation2 + $0x20] sm:$0xff]
  %v37 = vld [vmem:[#allocation2 + $0x28] sm:$0xff]
  %v38 = vld [vmem:[#allocation2 + $0x30] sm:$0xff]
  %v39 = vld [vmem:[#allocation2 + $0x38] sm:$0xff]
  %v40 = vld [vmem:[#allocation2 + $0x40] sm:$0xff]
  %v41 = vld [vmem:[#allocation2 + $0x48] sm:$0xff]
  %v42 = vld [vmem:[#allocation2 + $0x50] sm:$0xff]
  %v43 = vld [vmem:[#allocation2 + $0x58] sm:$0xff]
  %v44 = vld [vmem:[#allocation2 + $0x60] sm:$0xff]
  %v45 = vld [vmem:[#allocation2 + $0x68] sm:$0xff]
  %v46 = vld [vmem:[#allocation2 + $0x70] sm:$0xff]
  %v47 = vld [vmem:[#allocation2 + $0x78] sm:$0xff]
  %v48 = vld [vmem:[%s0] sm:$0xf]
  %v49 = vld [vmem:[%s0 + $0x4] sm:$0xf]
  %v50 = vld [vmem:[%s0 + $0x8] sm:$0xf]
  %v51 = vld [vmem:[%s0 + $0xc] sm:$0xf]
  %v52 = vld [vmem:[%s0 + $0x10] sm:$0xf]
  %v53 = vld [vmem:[%s0 + $0x14] sm:$0xf]
  %v54 = vld [vmem:[%s0 + $0x18] sm:$0xf]
  %v55 = vld [vmem:[%s0 + $0x1c] sm:$0xf]
  %v56 = vld [vmem:[%s0 + $0x20] sm:$0xf]
  %v57 = vld [vmem:[%s0 + $0x24] sm:$0xf]
  %v58 = vld [vmem:[%s0 + $0x28] sm:$0xf]
  %v59 = vld [vmem:[%s0 + $0x2c] sm:$0xf]
  %v60 = vld [vmem:[%s0 + $0x30] sm:$0xf]
  %v61 = vld [vmem:[%s0 + $0x34] sm:$0xf]
  %v62 = vld [vmem:[%s0 + $0x38] sm:$0xf]
  %v63 = vld [vmem:[%s0 + $0x3c] sm:$0xf]
  %v64 = vld [vmem:[%s1] sm:$0xf]
  %v65 = vld [vmem:[%s1 + $0x4] sm:$0xf]
  %v66 = vld [vmem:[%s1 + $0x8] sm:$0xf]
  %v67 = vld [vmem:[%s1 + $0xc] sm:$0xf]
  %v68 = vld [vmem:[%s1 + $0x10] sm:$0xf]
  %v69 = vld [vmem:[%s1 + $0x14] sm:$0xf]
  %v70 = vld [vmem:[%s1 + $0x18] sm:$0xf]
  %v71 = vld [vmem:[%s1 + $0x1c] sm:$0xf]
  %v72 = vld [vmem:[%s1 + $0x20] sm:$0xf]
  %v73 = vld [vmem:[%s1 + $0x24] sm:$0xf]
  %v74 = vld [vmem:[%s1 + $0x28] sm:$0xf]
  %v75 = vld [vmem:[%s1 + $0x2c] sm:$0xf]
  %v76 = vld [vmem:[%s1 + $0x30] sm:$0xf]
  %v77 = vld [vmem:[%s1 + $0x34] sm:$0xf]
  %v78 = vld [vmem:[%s1 + $0x38] sm:$0xf]
  %v79 = vld [vmem:[%s1 + $0x3c] sm:$0xf]
  %v96 = vunpack.c.l.b16 %v48
  %v97 = vunpack.c.l.b16 %v49
  %v98 = vunpack.c.l.b16 %v50
  %v99 = vunpack.c.l.b16 %v51
  %v100 = vunpack.c.l.b16 %v52
  %v101 = vunpack.c.l.b16 %v53
  %v102 = vunpack.c.l.b16 %v54
  %v103 = vunpack.c.l.b16 %v55
  %v104 = vunpack.c.l.b16 %v56
  %v105 = vunpack.c.l.b16 %v57
  %v106 = vunpack.c.l.b16 %v58
  %v107 = vunpack.c.l.b16 %v59
  %v108 = vunpack.c.l.b16 %v60
  %v109 = vunpack.c.l.b16 %v61
  %v110 = vunpack.c.l.b16 %v62
  %v111 = vunpack.c.l.b16 %v63
  %v112 = vpack.c.b16 %v97, %v96
  %v113 = vpack.c.b16 %v99, %v98
  %v114 = vpack.c.b16 %v101, %v100
  %v115 = vpack.c.b16 %v103, %v102
  %v116 = vpack.c.b16 %v105, %v104
  %v117 = vpack.c.b16 %v107, %v106
  %v118 = vpack.c.b16 %v109, %v108
  %v119 = vpack.c.b16 %v111, %v110
  %v144 = vunpack.c.l.b16 %v64
  %v145 = vunpack.c.l.b16 %v65
  %v146 = vunpack.c.l.b16 %v66
  %v147 = vunpack.c.l.b16 %v67
  %v148 = vunpack.c.l.b16 %v68
  %v149 = vunpack.c.l.b16 %v69
  %v150 = vunpack.c.l.b16 %v70
  %v151 = vunpack.c.l.b16 %v71
  %v152 = vunpack.c.l.b16 %v72
  %v153 = vunpack.c.l.b16 %v73
  %v154 = vunpack.c.l.b16 %v74
  %v155 = vunpack.c.l.b16 %v75
  %v156 = vunpack.c.l.b16 %v76
  %v157 = vunpack.c.l.b16 %v77
  %v158 = vunpack.c.l.b16 %v78
  %v159 = vunpack.c.l.b16 %v79
  %v160 = vpack.c.b16 %v145, %v144
  %v161 = vpack.c.b16 %v147, %v146
  %v162 = vpack.c.b16 %v149, %v148
  %v163 = vpack.c.b16 %v151, %v150
  %v164 = vpack.c.b16 %v153, %v152
  %v165 = vpack.c.b16 %v155, %v154
  %v166 = vpack.c.b16 %v157, %v156
  %v167 = vpack.c.b16 %v159, %v158
  %176 = vmatprep.subr.bf16.mxu0 0
  %177 = vmatpush1.bf16.msra.mxu0 %v167
  %178 = vmatprep.subr.bf16.mxu0 0
  %179 = vmatpush1.bf16.msra.mxu0 %v166
  %180 = vmatprep.subr.bf16.mxu0 0
  %181 = vmatpush1.bf16.msra.mxu0 %v165
  %182 = vmatprep.subr.bf16.mxu0 0
  %183 = vmatpush1.bf16.msra.mxu0 %v164
  %184 = vmatprep.subr.bf16.mxu0 0
  %185 = vmatpush1.bf16.msra.mxu0 %v163
  %186 = vmatprep.subr.bf16.mxu0 0
  %187 = vmatpush1.bf16.msra.mxu0 %v162
  %188 = vmatprep.subr.bf16.mxu0 0
  %189 = vmatpush1.bf16.msra.mxu0 %v161
  %190 = vmatprep.subr.bf16.mxu0 0
  %191 = vmatpush1.bf16.msra.mxu0 %v160
  %192 = vmatprep.subr.bf16.mxu0 0
  %193 = vmatpush2.bf16.msra.mxu0 0
  %194 = vmatprep.subr.bf16.mxu0 0
  %195 = vmatpush2.bf16.msra.mxu0 0
  %196 = vmatprep.subr.bf16.mxu0 0
  %197 = vmatpush2.bf16.msra.mxu0 0
  %198 = vmatprep.subr.bf16.mxu0 0
  %199 = vmatpush2.bf16.msra.mxu0 0
  %200 = vmatprep.subr.bf16.mxu0 0
  %201 = vmatpush2.bf16.msra.mxu0 0
  %202 = vmatprep.subr.bf16.mxu0 0
  %203 = vmatpush2.bf16.msra.mxu0 0
  %204 = vmatprep.subr.bf16.mxu0 0
  %205 = vmatpush2.bf16.msra.mxu0 0
  %206 = vmatprep.subr.bf16.mxu0 0
  %207 = vmatpush2.bf16.msra.mxu0 0
  %208 = vmatprep.mubr.bf16.mxu0 0
  %209 = vmatmul.mubr.bf16.gmra.mxu0 %v112
  %v210 = vpop.f32.mrf.mxu0
  %v211 = vadd.f32 0.0, %v210
  %v212 = vpop.f32.mrf.mxu0
  %v213 = vpop.f32.mrf.mxu0
  %v214 = vadd.f32 0.0, %v213
  %v215 = vpop.f32.mrf.mxu0
  %216 = vmatprep.mubr.bf16.mxu0 0
  %217 = vmatmul.mubr.bf16.gmra.mxu0 %v113
  %v218 = vpop.f32.mrf.mxu0
  %v219 = vadd.f32 0.0, %v218
  %v220 = vpop.f32.mrf.mxu0
  %v221 = vpop.f32.mrf.mxu0
  %v222 = vadd.f32 0.0, %v221
  %v223 = vpop.f32.mrf.mxu0
  %224 = vmatprep.mubr.bf16.mxu0 0
  %225 = vmatmul.mubr.bf16.gmra.mxu0 %v114
  %v226 = vpop.f32.mrf.mxu0
  %v227 = vadd.f32 0.0, %v226
  %v228 = vpop.f32.mrf.mxu0
  %v229 = vpop.f32.mrf.mxu0
  %v230 = vadd.f32 0.0, %v229
  %v231 = vpop.f32.mrf.mxu0
  %232 = vmatprep.mubr.bf16.mxu0 0
  %233 = vmatmul.mubr.bf16.gmra.mxu0 %v115
  %v234 = vpop.f32.mrf.mxu0
  %v235 = vadd.f32 0.0, %v234
  %v236 = vpop.f32.mrf.mxu0
  %v237 = vpop.f32.mrf.mxu0
  %v238 = vadd.f32 0.0, %v237
  %v239 = vpop.f32.mrf.mxu0
  %240 = vmatprep.mubr.bf16.mxu0 0
  %241 = vmatmul.mubr.bf16.gmra.mxu0 %v116
  %v242 = vpop.f32.mrf.mxu0
  %v243 = vadd.f32 0.0, %v242
  %v244 = vpop.f32.mrf.mxu0
  %v245 = vpop.f32.mrf.mxu0
  %v246 = vadd.f32 0.0, %v245
  %v247 = vpop.f32.mrf.mxu0
  %248 = vmatprep.mubr.bf16.mxu0 0
  %249 = vmatmul.mubr.bf16.gmra.mxu0 %v117
  %v250 = vpop.f32.mrf.mxu0
  %v251 = vadd.f32 0.0, %v250
  %v252 = vpop.f32.mrf.mxu0
  %v253 = vpop.f32.mrf.mxu0
  %v254 = vadd.f32 0.0, %v253
  %v255 = vpop.f32.mrf.mxu0
  %256 = vmatprep.mubr.bf16.mxu0 0
  %257 = vmatmul.mubr.bf16.gmra.mxu0 %v118
  %v258 = vpop.f32.mrf.mxu0
  %v259 = vadd.f32 0.0, %v258
  %v260 = vpop.f32.mrf.mxu0
  %v261 = vpop.f32.mrf.mxu0
  %v262 = vadd.f32 0.0, %v261
  %v263 = vpop.f32.mrf.mxu0
  %264 = vmatprep.mubr.bf16.mxu0 0
  %265 = vmatmul.mubr.bf16.gmra.mxu0 %v119
  %v266 = vpop.f32.mrf.mxu0
  %v267 = vadd.f32 0.0, %v266
  %v268 = vpop.f32.mrf.mxu0
  %v269 = vpop.f32.mrf.mxu0
  %v270 = vadd.f32 0.0, %v269
  %v271 = vpop.f32.mrf.mxu0
  %272 = vdwg.mxu0
  %v273 = vadd.f32 %v32, %v211
  %v274 = vadd.f32 %v33, %v214
  %v275 = vadd.f32 %v34, %v219
  %v276 = vadd.f32 %v35, %v222
  %v277 = vadd.f32 %v36, %v227
  %v278 = vadd.f32 %v37, %v230
  %v279 = vadd.f32 %v38, %v235
  %v280 = vadd.f32 %v39, %v238
  %v281 = vadd.f32 %v40, %v243
  %v282 = vadd.f32 %v41, %v246
  %v283 = vadd.f32 %v42, %v251
  %v284 = vadd.f32 %v43, %v254
  %v285 = vadd.f32 %v44, %v259
  %v286 = vadd.f32 %v45, %v262
  %v287 = vadd.f32 %v46, %v267
  %v288 = vadd.f32 %v47, %v270
  %289 = vst [vmem:[#allocation2] sm:$0xff] %v273
  %290 = vst [vmem:[#allocation2 + $0x8] sm:$0xff] %v274
  %291 = vst [vmem:[#allocation2 + $0x10] sm:$0xff] %v275
  %292 = vst [vmem:[#allocation2 + $0x18] sm:$0xff] %v276
  %293 = vst [vmem:[#allocation2 + $0x20] sm:$0xff] %v277
  %294 = vst [vmem:[#allocation2 + $0x28] sm:$0xff] %v278
  %295 = vst [vmem:[#allocation2 + $0x30] sm:$0xff] %v279
  %296 = vst [vmem:[#allocation2 + $0x38] sm:$0xff] %v280
  %297 = vst [vmem:[#allocation2 + $0x40] sm:$0xff] %v281
  %298 = vst [vmem:[#allocation2 + $0x48] sm:$0xff] %v282
  %299 = vst [vmem:[#allocation2 + $0x50] sm:$0xff] %v283
  %300 = vst [vmem:[#allocation2 + $0x58] sm:$0xff] %v284
  %301 = vst [vmem:[#allocation2 + $0x60] sm:$0xff] %v285
  %302 = vst [vmem:[#allocation2 + $0x68] sm:$0xff] %v286
  %303 = vst [vmem:[#allocation2 + $0x70] sm:$0xff] %v287
  %304 = vst [vmem:[#allocation2 + $0x78] sm:$0xff] %v288
  // Predicated region
  $region14: #{generator_forward.44} parent=0 // pred_check
    %p305 = pneg %p12
  $region15: #{generator_forward.44} parent=0 // pred_check_branch
    %307 = sbr.rel (%p305) target = $region17
  $region16: #{generator_forward.44} parent=0 // pred_region
    %v308 = vld [vmem:[#allocation2] sm:$0xff]
    %v309 = vld [vmem:[#allocation2 + $0x8] sm:$0xff]
    %v310 = vld [vmem:[#allocation2 + $0x10] sm:$0xff]
    %v311 = vld [vmem:[#allocation2 + $0x18] sm:$0xff]
    %v312 = vld [vmem:[#allocation2 + $0x20] sm:$0xff]
    %v313 = vld [vmem:[#allocation2 + $0x28] sm:$0xff]
    %v314 = vld [vmem:[#allocation2 + $0x30] sm:$0xff]
    %v315 = vld [vmem:[#allocation2 + $0x38] sm:$0xff]
    %v316 = vld [vmem:[#allocation2 + $0x40] sm:$0xff]
    %v317 = vld [vmem:[#allocation2 + $0x48] sm:$0xff]
    %v318 = vld [vmem:[#allocation2 + $0x50] sm:$0xff]
    %v319 = vld [vmem:[#allocation2 + $0x58] sm:$0xff]
    %v320 = vld [vmem:[#allocation2 + $0x60] sm:$0xff]
    %v321 = vld [vmem:[#allocation2 + $0x68] sm:$0xff]
    %v322 = vld [vmem:[#allocation2 + $0x70] sm:$0xff]
    %v323 = vld [vmem:[#allocation2 + $0x78] sm:$0xff]
    %324 = vst [vmem:[%s2] sm:$0xff] %v308
    %325 = vst [vmem:[%s2 + $0x8] sm:$0xff] %v309
    %326 = vst [vmem:[%s2 + $0x10] sm:$0xff] %v310
    %327 = vst [vmem:[%s2 + $0x18] sm:$0xff] %v311
    %328 = vst [vmem:[%s2 + $0x20] sm:$0xff] %v312
    %329 = vst [vmem:[%s2 + $0x28] sm:$0xff] %v313
    %330 = vst [vmem:[%s2 + $0x30] sm:$0xff] %v314
    %331 = vst [vmem:[%s2 + $0x38] sm:$0xff] %v315
    %332 = vst [vmem:[%s2 + $0x40] sm:$0xff] %v316
    %333 = vst [vmem:[%s2 + $0x48] sm:$0xff] %v317
    %334 = vst [vmem:[%s2 + $0x50] sm:$0xff] %v318
    %335 = vst [vmem:[%s2 + $0x58] sm:$0xff] %v319
    %336 = vst [vmem:[%s2 + $0x60] sm:$0xff] %v320
    %337 = vst [vmem:[%s2 + $0x68] sm:$0xff] %v321
    %338 = vst [vmem:[%s2 + $0x70] sm:$0xff] %v322
    %339 = vst [vmem:[%s2 + $0x78] sm:$0xff] %v323
  $region17: #{generator_forward.44} parent=0 // pred_fallthru
    _
  // Predicated region
  $region18: #{generator_forward.44} parent=0 // pred_check
    _
  $region19: #{generator_forward.44} parent=0 // pred_check_branch
    %341 = sbr.rel (0) target = $region21
  $region20: #{generator_forward.44} parent=0 // pred_region
    _
  $region21: #{generator_forward.44} parent=0 // pred_fallthru
    _
  // Predicated region
  $region22: #{generator_forward.44} parent=0 // pred_check
    _
  $region23: #{generator_forward.44} parent=0 // pred_check_branch
    %343 = sbr.rel (0) target = $region25
  $region24: #{generator_forward.44} parent=0 // pred_region
    _
  $region25: #{generator_forward.44} parent=0 // pred_fallthru
    _

// kernel: generator_forward.49
$region0: #{generator_forward.49}
  #allocation0 [shape = 'u32[]', space=smem, size = 0x4, offset = 0x4, fixed_abs, tag = 'smem constant byte address 0x4 - core index']
  #allocation1 [shape = 'u32[144,128]{1,0:T(1,128)}', space=vmem, size = 0x12000, scoped, tag = 'internal scratch']
  #allocation2 [shape = 'f32[256,128]{1,0:T(8,128)}', space=vmem, size = 0x20000, scoped, tag = 'scratch operand']
  %s0 = inlined_call_operand.vmem [shape: bf16[512,896], index: 0, kind: input, shape index: {}]
  %s1 = inlined_call_operand.vmem [shape: bf16[896,128], index: 1, kind: input, shape index: {}]
  %s2 = inlined_call_operand.vmem [shape: f32[512,128], index: 2, kind: output, shape index: {}]
  %s3 = sld [smem:[#allocation0]]
  $region49: #{generator_forward.49} parent=0
    _
  %s5 = ssub.s32 1, %s3
  %s6 = scalar_select 0, %s5, %s3
  loop: start=0, step=1, limit=4
  $region2: #{generator_forward.49} parent=0 // loop_pre_header
    _
  $region3: #{generator_forward.49} parent=0 // loop_header
    %s8 = sphi 0, %s12
    %p9 = scmp.ge.s32.totalorder %s8, 4
    %s15 = sphi 0, %s34
    %s16 = sphi 0, %s30
    %s17 = sphi 0, %s26
    %s18 = sphi 0, %s15
    %s19 = sphi 0, %s16
    %s20 = sphi 0, %s17
    %s21 = sphi 0, %s18
    %s22 = sphi 0, %s19
    %s23 = sphi 0, %s20
    %s39 = sphi 0, %s41
    %s42 = sphi 0, %s39
    %s43 = sphi 0, %s42
    %s59 = sphi 0, %s43
    %s67 = sphi 0, %s69
    %s70 = sphi 0, %s67
    %s71 = sphi 0, %s70
    %s87 = sphi 0, %s71
    %s95 = sphi 0, %s97
    %s98 = sphi 0, %s95
    %s99 = sphi 0, %s98
    %s115 = sphi 0, %s99
  $region4: #{generator_forward.49} parent=0 // loop_header_branch
    %11 = sbr.rel (%p9) target = $region8
  $region5: #{generator_forward.49} parent=0 // loop_body
    %s13 = ssub.s32 %s8, 1
    %s14 = ssub.s32 %s8, 2
    %s24 = sadd.s32 1, %s17
    %p25 = scmp.ge.s32.totalorder %s24, 1
    %s26 = scalar_select %p25, 0, %s24
    %s27 = sadd.s32 1, %s16
    %s28 = scalar_select %p25, %s27, %s16
    %p29 = scmp.ge.s32.totalorder %s28, 1
    %s30 = scalar_select %p29, 0, %s28
    %s31 = sadd.s32 1, %s15
    %s32 = scalar_select %p29, %s31, %s15
    %p33 = scmp.ge.s32.totalorder %s32, 2
    %s34 = scalar_select %p33, 0, %s32
    %s35 = ssub.s32 %s15, %s34
    %s36 = ssub.s32 %s17, %s26
    %s37 = sor.u32 %s35, %s36
    %p38 = scmp.eq.s32.totalorder %s37, 0
    %s40 = sadd.s32 %s39, 1
    %s41 = scalar_select %p38, %s39, %s40
    %p44 = pneg %p38
    %p45 = scmp.eq.s32.totalorder %s8, 1
    %p46 = por %p44, %p45
    %p47 = scmp.ne.s32.totalorder %s39, %s42
    %p48 = scmp.eq.s32.totalorder %s8, 0
    %p49 = por %p47, %p48
    %p50 = scmp.ne.s32.totalorder %s39, %s42
    %p51 = scmp.eq.s32.totalorder %s13, 1
    %p52 = por %p50, %p51
    %p53 = scmp.ne.s32.totalorder %s42, %s43
    %p54 = scmp.eq.s32.totalorder %s13, 0
    %p55 = por %p53, %p54
    %p56 = scmp.ne.s32.totalorder %s42, %s43
    %p57 = scmp.eq.s32.totalorder %s14, 1
    %p58 = por %p56, %p57
    %p60 = scmp.ne.s32.totalorder %s43, %s59
    %p61 = scmp.eq.s32.totalorder %s14, 0
    %p62 = por %p60, %p61
    %s63 = ssub.s32 %s17, %s26
    %s64 = ssub.s32 %s16, %s30
    %s65 = sor.u32 %s63, %s64
    %p66 = scmp.eq.s32.totalorder %s65, 0
    %s68 = sadd.s32 %s67, 1
    %s69 = scalar_select %p66, %s67, %s68
    %p72 = pneg %p66
    %p73 = scmp.eq.s32.totalorder %s8, 1
    %p74 = por %p72, %p73
    %p75 = scmp.ne.s32.totalorder %s67, %s70
    %p76 = scmp.eq.s32.totalorder %s8, 0
    %p77 = por %p75, %p76
    %p78 = scmp.ne.s32.totalorder %s67, %s70
    %p79 = scmp.eq.s32.totalorder %s13, 1
    %p80 = por %p78, %p79
    %p81 = scmp.ne.s32.totalorder %s70, %s71
    %p82 = scmp.eq.s32.totalorder %s13, 0
    %p83 = por %p81, %p82
    %p84 = scmp.ne.s32.totalorder %s70, %s71
    %p85 = scmp.eq.s32.totalorder %s14, 1
    %p86 = por %p84, %p85
    %p88 = scmp.ne.s32.totalorder %s71, %s87
    %p89 = scmp.eq.s32.totalorder %s14, 0
    %p90 = por %p88, %p89
    %s91 = ssub.s32 %s15, %s34
    %s92 = ssub.s32 %s16, %s30
    %s93 = sor.u32 %s91, %s92
    %p94 = scmp.eq.s32.totalorder %s93, 0
    %s96 = sadd.s32 %s95, 1
    %s97 = scalar_select %p94, %s95, %s96
    %p100 = pneg %p94
    %p101 = scmp.eq.s32.totalorder %s8, 1
    %p102 = por %p100, %p101
    %p103 = scmp.ne.s32.totalorder %s95, %s98
    %p104 = scmp.eq.s32.totalorder %s8, 0
    %p105 = por %p103, %p104
    %p106 = scmp.ne.s32.totalorder %s95, %s98
    %p107 = scmp.eq.s32.totalorder %s13, 1
    %p108 = por %p106, %p107
    %p109 = scmp.ne.s32.totalorder %s98, %s99
    %p110 = scmp.eq.s32.totalorder %s13, 0
    %p111 = por %p109, %p110
    %p112 = scmp.ne.s32.totalorder %s98, %s99
    %p113 = scmp.eq.s32.totalorder %s14, 1
    %p114 = por %p112, %p113
    %p116 = scmp.ne.s32.totalorder %s99, %s115
    %p117 = scmp.eq.s32.totalorder %s14, 0
    %p118 = por %p116, %p117
    %p119 = scmp.le.s32.totalorder 1, %s8
    %p120 = scmp.lt.s32.totalorder %s8, 3
    %p121 = pnand %p119, %p120
    %p122 = pneg %p121
    // Predicated region
    $region9: #{generator_forward.49} parent=5 // pred_check
      _
    $region10: #{generator_forward.49} parent=5 // pred_check_branch
      %124 = sbr.rel (%p121) target = $region12
    $region11: #{generator_forward.49} parent=5 // pred_region
      %s125 = ssub.s32 %s8, 1
      // Predicated region
      $region13: #{generator_forward.49} parent=11 // pred_check
        %p126 = pneg %p83
      $region14: #{generator_forward.49} parent=11 // pred_check_branch
        %128 = sbr.rel (%p126) target = $region16
      $region15: #{generator_forward.49} parent=11 // pred_region
        %s129 = smul.u32 112, %s20
        %p130 = scmp.lt.s32.totalorder %s129, 111
        %s131 = scalar_select %p130, %s129, 111
        %p132 = scmp.lt.s32.totalorder %s19, 0
        %s133 = scalar_select %p132, %s19, 0
        %s134 = sadd.s32 %s133, %s131
        %s135 = smul.addr %s134, 4
        %s136 = scalar_lea.vmem %s1, %s135
        %s137 = smul.u32 112, %s20
      $region16: #{generator_forward.49} parent=11 // pred_fallthru
        _
    $region12: #{generator_forward.49} parent=5 // pred_fallthru
      _
    %p138 = scmp.lt.s32.totalorder %s8, 2
    // Predicated region
    $region17: #{generator_forward.49} parent=5 // pred_check
      %p139 = pneg %p138
    $region18: #{generator_forward.49} parent=5 // pred_check_branch
      %141 = sbr.rel (%p139) target = $region20
    $region19: #{generator_forward.49} parent=5 // pred_region
      // Predicated region
      $region21: #{generator_forward.49} parent=19 // pred_check
        %p142 = pneg %p49
      $region22: #{generator_forward.49} parent=19 // pred_check_branch
        %144 = sbr.rel (%p142) target = $region24
      $region23: #{generator_forward.49} parent=19 // pred_region
        %s145 = smul.u32 32, %s15
        %s146 = smul.u32 7, %s17
        %p147 = scmp.lt.s32.totalorder %s145, 63
        %s148 = scalar_select %p147, %s145, 63
        %p149 = scmp.lt.s32.totalorder %s146, 6
        %s150 = scalar_select %p149, %s146, 6
        %s151 = smul.addr %s148, 7
        %s152 = sadd.s32 %s150, %s151
        %s153 = smul.addr %s152, 4
        %s154 = scalar_lea.vmem %s0, %s153
        %s155 = smul.u32 32, %s15
        %s156 = smul.u32 7, %s17
      $region24: #{generator_forward.49} parent=19 // pred_fallthru
        _
    $region20: #{generator_forward.49} parent=5 // pred_fallthru
      _
    %p157 = scmp.le.s32.totalorder 1, %s8
    %p158 = scmp.lt.s32.totalorder %s8, 3
    %p159 = pnand %p157, %p158
    %p160 = pneg %p159
    // Predicated region
    $region25: #{generator_forward.49} parent=5 // pred_check
      _
    $region26: #{generator_forward.49} parent=5 // pred_check_branch
      %162 = sbr.rel (%p159) target = $region28
    $region27: #{generator_forward.49} parent=5 // pred_region
      %s163 = ssub.s32 %s8, 1
      %s164 = smul.u32 32, %s18
      %s165 = smul.u32 7, %s20
      %p166 = scmp.lt.s32.totalorder %s164, 63
      %s167 = scalar_select %p166, %s164, 63
      %p168 = scmp.lt.s32.totalorder %s165, 6
      %s169 = scalar_select %p168, %s165, 6
      %s170 = smul.addr %s167, 7
      %s171 = sadd.s32 %s169, %s170
      %s172 = smul.addr %s171, 4
      %s173 = scalar_lea.vmem %s0, %s172
      %p174 = pneg %p55
      %p175 = pneg %p52
      %s176 = smul.u32 112, %s20
      %p177 = scmp.lt.s32.totalorder %s176, 111
      %s178 = scalar_select %p177, %s176, 111
      %p179 = scmp.lt.s32.totalorder %s19, 0
      %s180 = scalar_select %p179, %s19, 0
      %s181 = sadd.s32 %s180, %s178
      %s182 = smul.addr %s181, 4
      %s183 = scalar_lea.vmem %s1, %s182
      %p184 = pneg %p83
      %p185 = pneg %p80
      %p186 = pneg %p111
      %p187 = pneg %p108
      %s188 = smul.u32 32, %s18
      %p189 = scmp.lt.s32.totalorder %s188, 63
      %s190 = scalar_select %p189, %s188, 63
      %p191 = scmp.lt.s32.totalorder %s19, 0
      %s192 = scalar_select %p191, %s19, 0
      %s193 = sadd.s32 %s192, %s190
      %s194 = smul.addr %s193, 8
      %s195 = scalar_lea.vmem %s2, %s194
      %s196 = smul.u32 32, %s18
      %s197 = smul.u32 7, %s20
      %p198 = scmp.lt.s32.totalorder %s196, 63
      %s199 = scalar_select %p198, %s196, 63
      %p200 = scmp.lt.s32.totalorder %s197, 6
      %s201 = scalar_select %p200, %s197, 6
      %s202 = smul.addr %s199, 7
      %s203 = sadd.s32 %s201, %s202
      %s204 = smul.addr %s203, 4
      %s205 = scalar_lea.vmem %s0, %s204
      %s206 = smul.u32 32, %s18
      %s207 = smul.u32 7, %s20
      %s208 = smul.u32 112, %s20
      %p209 = scmp.lt.s32.totalorder %s208, 111
      %s210 = scalar_select %p209, %s208, 111
      %p211 = scmp.lt.s32.totalorder %s19, 0
      %s212 = scalar_select %p211, %s19, 0
      %s213 = sadd.s32 %s212, %s210
      %s214 = smul.addr %s213, 4
      %s215 = scalar_lea.vmem %s1, %s214
      %s216 = smul.u32 112, %s20
      %s217 = smul.u32 32, %s18
      %p218 = scmp.lt.s32.totalorder %s217, 63
      %s219 = scalar_select %p218, %s217, 63
      %p220 = scmp.lt.s32.totalorder %s19, 0
      %s221 = scalar_select %p220, %s19, 0
      %s222 = sadd.s32 %s221, %s219
      %s223 = smul.addr %s222, 8
      %s224 = scalar_lea.vmem %s2, %s223
      %s225 = smul.u32 32, %s18
      %p227 = scmp.eq.s32.totalorder %s20, 0
      // Predicated region
      $region29: #{generator_forward.49} parent=27 // pred_check
        %p228 = pneg %p227
      $region30: #{generator_forward.49} parent=27 // pred_check_branch
        %230 = sbr.rel (%p228) target = $region32
      $region31: #{generator_forward.49} parent=27 // pred_region
        %231 = vst [vmem:[#allocation2] sm:$0xff] 0.0
        %232 = vst [vmem:[#allocation2 + $0x8] sm:$0xff] 0.0
        %233 = vst [vmem:[#allocation2 + $0x10] sm:$0xff] 0.0
        %234 = vst [vmem:[#allocation2 + $0x18] sm:$0xff] 0.0
        %235 = vst [vmem:[#allocation2 + $0x20] sm:$0xff] 0.0
        %236 = vst [vmem:[#allocation2 + $0x28] sm:$0xff] 0.0
        %237 = vst [vmem:[#allocation2 + $0x30] sm:$0xff] 0.0
        %238 = vst [vmem:[#allocation2 + $0x38] sm:$0xff] 0.0
        %239 = vst [vmem:[#allocation2 + $0x40] sm:$0xff] 0.0
        %240 = vst [vmem:[#allocation2 + $0x48] sm:$0xff] 0.0
        %241 = vst [vmem:[#allocation2 + $0x50] sm:$0xff] 0.0
        %242 = vst [vmem:[#allocation2 + $0x58] sm:$0xff] 0.0
        %243 = vst [vmem:[#allocation2 + $0x60] sm:$0xff] 0.0
        %244 = vst [vmem:[#allocation2 + $0x68] sm:$0xff] 0.0
        %245 = vst [vmem:[#allocation2 + $0x70] sm:$0xff] 0.0
        %246 = vst [vmem:[#allocation2 + $0x78] sm:$0xff] 0.0
        %247 = vst [vmem:[#allocation2 + $0x80] sm:$0xff] 0.0
        %248 = vst [vmem:[#allocation2 + $0x88] sm:$0xff] 0.0
        %249 = vst [vmem:[#allocation2 + $0x90] sm:$0xff] 0.0
        %250 = vst [vmem:[#allocation2 + $0x98] sm:$0xff] 0.0
        %251 = vst [vmem:[#allocation2 + $0xa0] sm:$0xff] 0.0
        %252 = vst [vmem:[#allocation2 + $0xa8] sm:$0xff] 0.0
        %253 = vst [vmem:[#allocation2 + $0xb0] sm:$0xff] 0.0
        %254 = vst [vmem:[#allocation2 + $0xb8] sm:$0xff] 0.0
        %255 = vst [vmem:[#allocation2 + $0xc0] sm:$0xff] 0.0
        %256 = vst [vmem:[#allocation2 + $0xc8] sm:$0xff] 0.0
        %257 = vst [vmem:[#allocation2 + $0xd0] sm:$0xff] 0.0
        %258 = vst [vmem:[#allocation2 + $0xd8] sm:$0xff] 0.0
        %259 = vst [vmem:[#allocation2 + $0xe0] sm:$0xff] 0.0
        %260 = vst [vmem:[#allocation2 + $0xe8] sm:$0xff] 0.0
        %261 = vst [vmem:[#allocation2 + $0xf0] sm:$0xff] 0.0
        %262 = vst [vmem:[#allocation2 + $0xf8] sm:$0xff] 0.0
      $region32: #{generator_forward.49} parent=27 // pred_fallthru
        _
      %v263 = vld [vmem:[#allocation2] sm:$0xff]
      %v264 = vld [vmem:[#allocation2 + $0x8] sm:$0xff]
      %v265 = vld [vmem:[#allocation2 + $0x10] sm:$0xff]
      %v266 = vld [vmem:[#allocation2 + $0x18] sm:$0xff]
      %v267 = vld [vmem:[#allocation2 + $0x20] sm:$0xff]
      %v268 = vld [vmem:[#allocation2 + $0x28] sm:$0xff]
      %v269 = vld [vmem:[#allocation2 + $0x30] sm:$0xff]
      %v270 = vld [vmem:[#allocation2 + $0x38] sm:$0xff]
      %v271 = vld [vmem:[#allocation2 + $0x40] sm:$0xff]
      %v272 = vld [vmem:[#allocation2 + $0x48] sm:$0xff]
      %v273 = vld [vmem:[#allocation2 + $0x50] sm:$0xff]
      %v274 = vld [vmem:[#allocation2 + $0x58] sm:$0xff]
      %v275 = vld [vmem:[#allocation2 + $0x60] sm:$0xff]
      %v276 = vld [vmem:[#allocation2 + $0x68] sm:$0xff]
      %v277 = vld [vmem:[#allocation2 + $0x70] sm:$0xff]
      %v278 = vld [vmem:[#allocation2 + $0x78] sm:$0xff]
      %v279 = vld [vmem:[#allocation2 + $0x80] sm:$0xff]
      %v280 = vld [vmem:[#allocation2 + $0x88] sm:$0xff]
      %v281 = vld [vmem:[#allocation2 + $0x90] sm:$0xff]
      %v282 = vld [vmem:[#allocation2 + $0x98] sm:$0xff]
      %v283 = vld [vmem:[#allocation2 + $0xa0] sm:$0xff]
      %v284 = vld [vmem:[#allocation2 + $0xa8] sm:$0xff]
      %v285 = vld [vmem:[#allocation2 + $0xb0] sm:$0xff]
      %v286 = vld [vmem:[#allocation2 + $0xb8] sm:$0xff]
      %v287 = vld [vmem:[#allocation2 + $0xc0] sm:$0xff]
      %v288 = vld [vmem:[#allocation2 + $0xc8] sm:$0xff]
      %v289 = vld [vmem:[#allocation2 + $0xd0] sm:$0xff]
      %v290 = vld [vmem:[#allocation2 + $0xd8] sm:$0xff]
      %v291 = vld [vmem:[#allocation2 + $0xe0] sm:$0xff]
      %v292 = vld [vmem:[#allocation2 + $0xe8] sm:$0xff]
      %v293 = vld [vmem:[#allocation2 + $0xf0] sm:$0xff]
      %v294 = vld [vmem:[#allocation2 + $0xf8] sm:$0xff]
      %v295 = vld [vmem:[%s205] sm:$0xff]
      %v296 = vld [vmem:[%s205 + $0x8] sm:$0xff]
      %v297 = vld [vmem:[%s205 + $0x10] sm:$0xff]
      %v298 = vld [vmem:[%s205 + $0x18] sm:$0xf]
      %v299 = vld [vmem:[%s205 + $0x1c] sm:$0xff]
      %v300 = vld [vmem:[%s205 + $0x24] sm:$0xff]
      %v301 = vld [vmem:[%s205 + $0x2c] sm:$0xff]
      %v302 = vld [vmem:[%s205 + $0x34] sm:$0xf]
      %v303 = vld [vmem:[%s205 + $0x38] sm:$0xff]
      %v304 = vld [vmem:[%s205 + $0x40] sm:$0xff]
      %v305 = vld [vmem:[%s205 + $0x48] sm:$0xff]
      %v306 = vld [vmem:[%s205 + $0x50] sm:$0xf]
      %v307 = vld [vmem:[%s205 + $0x54] sm:$0xff]
      %v308 = vld [vmem:[%s205 + $0x5c] sm:$0xff]
      %v309 = vld [vmem:[%s205 + $0x64] sm:$0xff]
      %v310 = vld [vmem:[%s205 + $0x6c] sm:$0xf]
      %v311 = vld [vmem:[%s205 + $0x70] sm:$0xff]
      %v312 = vld [vmem:[%s205 + $0x78] sm:$0xff]
      %v313 = vld [vmem:[%s205 + $0x80] sm:$0xff]
      %v314 = vld [vmem:[%s205 + $0x88] sm:$0xf]
      %v315 = vld [vmem:[%s205 + $0x8c] sm:$0xff]
      %v316 = vld [vmem:[%s205 + $0x94] sm:$0xff]
      %v317 = vld [vmem:[%s205 + $0x9c] sm:$0xff]
      %v318 = vld [vmem:[%s205 + $0xa4] sm:$0xf]
      %v319 = vld [vmem:[%s205 + $0xa8] sm:$0xff]
      %v320 = vld [vmem:[%s205 + $0xb0] sm:$0xff]
      %v321 = vld [vmem:[%s205 + $0xb8] sm:$0xff]
      %v322 = vld [vmem:[%s205 + $0xc0] sm:$0xf]
      %v323 = vld [vmem:[%s205 + $0xc4] sm:$0xff]
      %v324 = vld [vmem:[%s205 + $0xcc] sm:$0xff]
      %v325 = vld [vmem:[%s205 + $0xd4] sm:$0xff]
      %v326 = vld [vmem:[%s205 + $0xdc] sm:$0xf]
      %v327 = vld [vmem:[%s205 + $0xe0] sm:$0xff]
      %v328 = vld [vmem:[%s205 + $0xe8] sm:$0xff]
      %v329 = vld [vmem:[%s205 + $0xf0] sm:$0xff]
      %v330 = vld [vmem:[%s205 + $0xf8] sm:$0xf]
      %v331 = vld [vmem:[%s205 + $0xfc] sm:$0xff]
      %v332 = vld [vmem:[%s205 + $0x104] sm:$0xff]
      %v333 = vld [vmem:[%s205 + $0x10c] sm:$0xff]
      %v334 = vld [vmem:[%s205 + $0x114] sm:$0xf]
      %v335 = vld [vmem:[%s205 + $0x118] sm:$0xff]
      %v336 = vld [vmem:[%s205 + $0x120] sm:$0xff]
      %v337 = vld [vmem:[%s205 + $0x128] sm:$0xff]
      %v338 = vld [vmem:[%s205 + $0x130] sm:$0xf]
      %v339 = vld [vmem:[%s205 + $0x134] sm:$0xff]
      %v340 = vld [vmem:[%s205 + $0x13c] sm:$0xff]
      %v341 = vld [vmem:[%s205 + $0x144] sm:$0xff]
      %v342 = vld [vmem:[%s205 + $0x14c] sm:$0xf]
      %v343 = vld [vmem:[%s205 + $0x150] sm:$0xff]
      %v344 = vld [vmem:[%s205 + $0x158] sm:$0xff]
      %v345 = vld [vmem:[%s205 + $0x160] sm:$0xff]
      %v346 = vld [vmem:[%s205 + $0x168] sm:$0xf]
      %v347 = vld [vmem:[%s205 + $0x16c] sm:$0xff]
      %v348 = vld [vmem:[%s205 + $0x174] sm:$0xff]
      %v349 = vld [vmem:[%s205 + $0x17c] sm:$0xff]
      %v350 = vld [vmem:[%s205 + $0x184] sm:$0xf]
      %v351 = vld [vmem:[%s205 + $0x188] sm:$0xff]
      %v352 = vld [vmem:[%s205 + $0x190] sm:$0xff]
      %v353 = vld [vmem:[%s205 + $0x198] sm:$0xff]
      %v354 = vld [vmem:[%s205 + $0x1a0] sm:$0xf]
      %v355 = vld [vmem:[%s205 + $0x1a4] sm:$0xff]
      %v356 = vld [vmem:[%s205 + $0x1ac] sm:$0xff]
      %v357 = vld [vmem:[%s205 + $0x1b4] sm:$0xff]
      %v358 = vld [vmem:[%s205 + $0x1bc] sm:$0xf]
      %v359 = vld [vmem:[%s205 + $0x1c0] sm:$0xff]
      %v360 = vld [vmem:[%s205 + $0x1c8] sm:$0xff]
      %v361 = vld [vmem:[%s205 + $0x1d0] sm:$0xff]
      %v362 = vld [vmem:[%s205 + $0x1d8] sm:$0xf]
      %v363 = vld [vmem:[%s205 + $0x1dc] sm:$0xff]
      %v364 = vld [vmem:[%s205 + $0x1e4] sm:$0xff]
      %v365 = vld [vmem:[%s205 + $0x1ec] sm:$0xff]
      %v366 = vld [vmem:[%s205 + $0x1f4] sm:$0xf]
      %v367 = vld [vmem:[%s205 + $0x1f8] sm:$0xff]
      %v368 = vld [vmem:[%s205 + $0x200] sm:$0xff]
      %v369 = vld [vmem:[%s205 + $0x208] sm:$0xff]
      %v370 = vld [vmem:[%s205 + $0x210] sm:$0xf]
      %v371 = vld [vmem:[%s205 + $0x214] sm:$0xff]
      %v372 = vld [vmem:[%s205 + $0x21c] sm:$0xff]
      %v373 = vld [vmem:[%s205 + $0x224] sm:$0xff]
      %v374 = vld [vmem:[%s205 + $0x22c] sm:$0xf]
      %v375 = vld [vmem:[%s205 + $0x230] sm:$0xff]
      %v376 = vld [vmem:[%s205 + $0x238] sm:$0xff]
      %v377 = vld [vmem:[%s205 + $0x240] sm:$0xff]
      %v378 = vld [vmem:[%s205 + $0x248] sm:$0xf]
      %v379 = vld [vmem:[%s205 + $0x24c] sm:$0xff]
      %v380 = vld [vmem:[%s205 + $0x254] sm:$0xff]
      %v381 = vld [vmem:[%s205 + $0x25c] sm:$0xff]
      %v382 = vld [vmem:[%s205 + $0x264] sm:$0xf]
      %v383 = vld [vmem:[%s205 + $0x268] sm:$0xff]
      %v384 = vld [vmem:[%s205 + $0x270] sm:$0xff]
      %v385 = vld [vmem:[%s205 + $0x278] sm:$0xff]
      %v386 = vld [vmem:[%s205 + $0x280] sm:$0xf]
      %v387 = vld [vmem:[%s205 + $0x284] sm:$0xff]
      %v388 = vld [vmem:[%s205 + $0x28c] sm:$0xff]
      %v389 = vld [vmem:[%s205 + $0x294] sm:$0xff]
      %v390 = vld [vmem:[%s205 + $0x29c] sm:$0xf]
      %v391 = vld [vmem:[%s205 + $0x2a0] sm:$0xff]
      %v392 = vld [vmem:[%s205 + $0x2a8] sm:$0xff]
      %v393 = vld [vmem:[%s205 + $0x2b0] sm:$0xff]
      %v394 = vld [vmem:[%s205 + $0x2b8] sm:$0xf]
      %v395 = vld [vmem:[%s205 + $0x2bc] sm:$0xff]
      %v396 = vld [vmem:[%s205 + $0x2c4] sm:$0xff]
      %v397 = vld [vmem:[%s205 + $0x2cc] sm:$0xff]
      %v398 = vld [vmem:[%s205 + $0x2d4] sm:$0xf]
      %v399 = vld [vmem:[%s205 + $0x2d8] sm:$0xff]
      %v400 = vld [vmem:[%s205 + $0x2e0] sm:$0xff]
      %v401 = vld [vmem:[%s205 + $0x2e8] sm:$0xff]
      %v402 = vld [vmem:[%s205 + $0x2f0] sm:$0xf]
      %v403 = vld [vmem:[%s205 + $0x2f4] sm:$0xff]
      %v404 = vld [vmem:[%s205 + $0x2fc] sm:$0xff]
      %v405 = vld [vmem:[%s205 + $0x304] sm:$0xff]
      %v406 = vld [vmem:[%s205 + $0x30c] sm:$0xf]
      %v407 = vld [vmem:[%s205 + $0x310] sm:$0xff]
      %v408 = vld [vmem:[%s205 + $0x318] sm:$0xff]
      %v409 = vld [vmem:[%s205 + $0x320] sm:$0xff]
      %v410 = vld [vmem:[%s205 + $0x328] sm:$0xf]
      %v411 = vld [vmem:[%s205 + $0x32c] sm:$0xff]
      %v412 = vld [vmem:[%s205 + $0x334] sm:$0xff]
      %v413 = vld [vmem:[%s205 + $0x33c] sm:$0xff]
      %v414 = vld [vmem:[%s205 + $0x344] sm:$0xf]
      %v415 = vld [vmem:[%s205 + $0x348] sm:$0xff]
      %v416 = vld [vmem:[%s205 + $0x350] sm:$0xff]
      %v417 = vld [vmem:[%s205 + $0x358] sm:$0xff]
      %v418 = vld [vmem:[%s205 + $0x360] sm:$0xf]
      %v419 = vld [vmem:[%s205 + $0x364] sm:$0xff]
      %v420 = vld [vmem:[%s205 + $0x36c] sm:$0xff]
      %v421 = vld [vmem:[%s205 + $0x374] sm:$0xff]
      %v422 = vld [vmem:[%s205 + $0x37c] sm:$0xf]
      %v423 = vld [vmem:[%s215] sm:$0xf]
      %v424 = vld [vmem:[%s215 + $0x4] sm:$0xf]
      %v425 = vld [vmem:[%s215 + $0x8] sm:$0xf]
      %v426 = vld [vmem:[%s215 + $0xc] sm:$0xf]
      %v427 = vld [vmem:[%s215 + $0x10] sm:$0xf]
      %v428 = vld [vmem:[%s215 + $0x14] sm:$0xf]
      %v429 = vld [vmem:[%s215 + $0x18] sm:$0xf]
      %v430 = vld [vmem:[%s215 + $0x1c] sm:$0xf]
      %v431 = vld [vmem:[%s215 + $0x20] sm:$0xf]
      %v432 = vld [vmem:[%s215 + $0x24] sm:$0xf]
      %v433 = vld [vmem:[%s215 + $0x28] sm:$0xf]
      %v434 = vld [vmem:[%s215 + $0x2c] sm:$0xf]
      %v435 = vld [vmem:[%s215 + $0x30] sm:$0xf]
      %v436 = vld [vmem:[%s215 + $0x34] sm:$0xf]
      %v437 = vld [vmem:[%s215 + $0x38] sm:$0xf]
      %v438 = vld [vmem:[%s215 + $0x3c] sm:$0xf]
      %v439 = vld [vmem:[%s215 + $0x40] sm:$0xf]
      %v440 = vld [vmem:[%s215 + $0x44] sm:$0xf]
      %v441 = vld [vmem:[%s215 + $0x48] sm:$0xf]
      %v442 = vld [vmem:[%s215 + $0x4c] sm:$0xf]
      %v443 = vld [vmem:[%s215 + $0x50] sm:$0xf]
      %v444 = vld [vmem:[%s215 + $0x54] sm:$0xf]
      %v445 = vld [vmem:[%s215 + $0x58] sm:$0xf]
      %v446 = vld [vmem:[%s215 + $0x5c] sm:$0xf]
      %v447 = vld [vmem:[%s215 + $0x60] sm:$0xf]
      %v448 = vld [vmem:[%s215 + $0x64] sm:$0xf]
      %v449 = vld [vmem:[%s215 + $0x68] sm:$0xf]
      %v450 = vld [vmem:[%s215 + $0x6c] sm:$0xf]
      %v451 = vld [vmem:[%s215 + $0x70] sm:$0xf]
      %v452 = vld [vmem:[%s215 + $0x74] sm:$0xf]
      %v453 = vld [vmem:[%s215 + $0x78] sm:$0xf]
      %v454 = vld [vmem:[%s215 + $0x7c] sm:$0xf]
      %v455 = vld [vmem:[%s215 + $0x80] sm:$0xf]
      %v456 = vld [vmem:[%s215 + $0x84] sm:$0xf]
      %v457 = vld [vmem:[%s215 + $0x88] sm:$0xf]
      %v458 = vld [vmem:[%s215 + $0x8c] sm:$0xf]
      %v459 = vld [vmem:[%s215 + $0x90] sm:$0xf]
      %v460 = vld [vmem:[%s215 + $0x94] sm:$0xf]
      %v461 = vld [vmem:[%s215 + $0x98] sm:$0xf]
      %v462 = vld [vmem:[%s215 + $0x9c] sm:$0xf]
      %v463 = vld [vmem:[%s215 + $0xa0] sm:$0xf]
      %v464 = vld [vmem:[%s215 + $0xa4] sm:$0xf]
      %v465 = vld [vmem:[%s215 + $0xa8] sm:$0xf]
      %v466 = vld [vmem:[%s215 + $0xac] sm:$0xf]
      %v467 = vld [vmem:[%s215 + $0xb0] sm:$0xf]
      %v468 = vld [vmem:[%s215 + $0xb4] sm:$0xf]
      %v469 = vld [vmem:[%s215 + $0xb8] sm:$0xf]
      %v470 = vld [vmem:[%s215 + $0xbc] sm:$0xf]
      %v471 = vld [vmem:[%s215 + $0xc0] sm:$0xf]
      %v472 = vld [vmem:[%s215 + $0xc4] sm:$0xf]
      %v473 = vld [vmem:[%s215 + $0xc8] sm:$0xf]
      %v474 = vld [vmem:[%s215 + $0xcc] sm:$0xf]
      %v475 = vld [vmem:[%s215 + $0xd0] sm:$0xf]
      %v476 = vld [vmem:[%s215 + $0xd4] sm:$0xf]
      %v477 = vld [vmem:[%s215 + $0xd8] sm:$0xf]
      %v478 = vld [vmem:[%s215 + $0xdc] sm:$0xf]
      %v479 = vld [vmem:[%s215 + $0xe0] sm:$0xf]
      %v480 = vld [vmem:[%s215 + $0xe4] sm:$0xf]
      %v481 = vld [vmem:[%s215 + $0xe8] sm:$0xf]
      %v482 = vld [vmem:[%s215 + $0xec] sm:$0xf]
      %v483 = vld [vmem:[%s215 + $0xf0] sm:$0xf]
      %v484 = vld [vmem:[%s215 + $0xf4] sm:$0xf]
      %v485 = vld [vmem:[%s215 + $0xf8] sm:$0xf]
      %v486 = vld [vmem:[%s215 + $0xfc] sm:$0xf]
      %v487 = vld [vmem:[%s215 + $0x100] sm:$0xf]
      %v488 = vld [vmem:[%s215 + $0x104] sm:$0xf]
      %v489 = vld [vmem:[%s215 + $0x108] sm:$0xf]
      %v490 = vld [vmem:[%s215 + $0x10c] sm:$0xf]
      %v491 = vld [vmem:[%s215 + $0x110] sm:$0xf]
      %v492 = vld [vmem:[%s215 + $0x114] sm:$0xf]
      %v493 = vld [vmem:[%s215 + $0x118] sm:$0xf]
      %v494 = vld [vmem:[%s215 + $0x11c] sm:$0xf]
      %v495 = vld [vmem:[%s215 + $0x120] sm:$0xf]
      %v496 = vld [vmem:[%s215 + $0x124] sm:$0xf]
      %v497 = vld [vmem:[%s215 + $0x128] sm:$0xf]
      %v498 = vld [vmem:[%s215 + $0x12c] sm:$0xf]
      %v499 = vld [vmem:[%s215 + $0x130] sm:$0xf]
      %v500 = vld [vmem:[%s215 + $0x134] sm:$0xf]
      %v501 = vld [vmem:[%s215 + $0x138] sm:$0xf]
      %v502 = vld [vmem:[%s215 + $0x13c] sm:$0xf]
      %v503 = vld [vmem:[%s215 + $0x140] sm:$0xf]
      %v504 = vld [vmem:[%s215 + $0x144] sm:$0xf]
      %v505 = vld [vmem:[%s215 + $0x148] sm:$0xf]
      %v506 = vld [vmem:[%s215 + $0x14c] sm:$0xf]
      %v507 = vld [vmem:[%s215 + $0x150] sm:$0xf]
      %v508 = vld [vmem:[%s215 + $0x154] sm:$0xf]
      %v509 = vld [vmem:[%s215 + $0x158] sm:$0xf]
      %v510 = vld [vmem:[%s215 + $0x15c] sm:$0xf]
      %v511 = vld [vmem:[%s215 + $0x160] sm:$0xf]
      %v512 = vld [vmem:[%s215 + $0x164] sm:$0xf]
      %v513 = vld [vmem:[%s215 + $0x168] sm:$0xf]
      %v514 = vld [vmem:[%s215 + $0x16c] sm:$0xf]
      %v515 = vld [vmem:[%s215 + $0x170] sm:$0xf]
      %v516 = vld [vmem:[%s215 + $0x174] sm:$0xf]
      %v517 = vld [vmem:[%s215 + $0x178] sm:$0xf]
      %v518 = vld [vmem:[%s215 + $0x17c] sm:$0xf]
      %v519 = vld [vmem:[%s215 + $0x180] sm:$0xf]
      %v520 = vld [vmem:[%s215 + $0x184] sm:$0xf]
      %v521 = vld [vmem:[%s215 + $0x188] sm:$0xf]
      %v522 = vld [vmem:[%s215 + $0x18c] sm:$0xf]
      %v523 = vld [vmem:[%s215 + $0x190] sm:$0xf]
      %v524 = vld [vmem:[%s215 + $0x194] sm:$0xf]
      %v525 = vld [vmem:[%s215 + $0x198] sm:$0xf]
      %v526 = vld [vmem:[%s215 + $0x19c] sm:$0xf]
      %v527 = vld [vmem:[%s215 + $0x1a0] sm:$0xf]
      %v528 = vld [vmem:[%s215 + $0x1a4] sm:$0xf]
      %v529 = vld [vmem:[%s215 + $0x1a8] sm:$0xf]
      %v530 = vld [vmem:[%s215 + $0x1ac] sm:$0xf]
      %v531 = vld [vmem:[%s215 + $0x1b0] sm:$0xf]
      %v532 = vld [vmem:[%s215 + $0x1b4] sm:$0xf]
      %v533 = vld [vmem:[%s215 + $0x1b8] sm:$0xf]
      %v534 = vld [vmem:[%s215 + $0x1bc] sm:$0xf]
      %v663 = vunpack.c.l.b16 %v295
      %v664 = vunpack.c.h.b16 %v295
      %v665 = vunpack.c.l.b16 %v296
      %v666 = vunpack.c.h.b16 %v296
      %v667 = vunpack.c.l.b16 %v297
      %v668 = vunpack.c.h.b16 %v297
      %v669 = vunpack.c.l.b16 %v298
      %v670 = vunpack.c.l.b16 %v299
      %v671 = vunpack.c.h.b16 %v299
      %v672 = vunpack.c.l.b16 %v300
      %v673 = vunpack.c.h.b16 %v300
      %v674 = vunpack.c.l.b16 %v301
      %v675 = vunpack.c.h.b16 %v301
      %v676 = vunpack.c.l.b16 %v302
      %v677 = vunpack.c.l.b16 %v303
      %v678 = vunpack.c.h.b16 %v303
      %v679 = vunpack.c.l.b16 %v304
      %v680 = vunpack.c.h.b16 %v304
      %v681 = vunpack.c.l.b16 %v305
      %v682 = vunpack.c.h.b16 %v305
      %v683 = vunpack.c.l.b16 %v306
      %v684 = vunpack.c.l.b16 %v307
      %v685 = vunpack.c.h.b16 %v307
      %v686 = vunpack.c.l.b16 %v308
      %v687 = vunpack.c.h.b16 %v308
      %v688 = vunpack.c.l.b16 %v309
      %v689 = vunpack.c.h.b16 %v309
      %v690 = vunpack.c.l.b16 %v310
      %v691 = vunpack.c.l.b16 %v311
      %v692 = vunpack.c.h.b16 %v311
      %v693 = vunpack.c.l.b16 %v312
      %v694 = vunpack.c.h.b16 %v312
      %v695 = vunpack.c.l.b16 %v313
      %v696 = vunpack.c.h.b16 %v313
      %v697 = vunpack.c.l.b16 %v314
      %v698 = vunpack.c.l.b16 %v315
      %v699 = vunpack.c.h.b16 %v315
      %v700 = vunpack.c.l.b16 %v316
      %v701 = vunpack.c.h.b16 %v316
      %v702 = vunpack.c.l.b16 %v317
      %v703 = vunpack.c.h.b16 %v317
      %v704 = vunpack.c.l.b16 %v318
      %v705 = vunpack.c.l.b16 %v319
      %v706 = vunpack.c.h.b16 %v319
      %v707 = vunpack.c.l.b16 %v320
      %v708 = vunpack.c.h.b16 %v320
      %v709 = vunpack.c.l.b16 %v321
      %v710 = vunpack.c.h.b16 %v321
      %v711 = vunpack.c.l.b16 %v322
      %v712 = vunpack.c.l.b16 %v323
      %v713 = vunpack.c.h.b16 %v323
      %v714 = vunpack.c.l.b16 %v324
      %v715 = vunpack.c.h.b16 %v324
      %v716 = vunpack.c.l.b16 %v325
      %v717 = vunpack.c.h.b16 %v325
      %v718 = vunpack.c.l.b16 %v326
      %v719 = vunpack.c.l.b16 %v327
      %v720 = vunpack.c.h.b16 %v327
      %v721 = vunpack.c.l.b16 %v328
      %v722 = vunpack.c.h.b16 %v328
      %v723 = vunpack.c.l.b16 %v329
      %v724 = vunpack.c.h.b16 %v329
      %v725 = vunpack.c.l.b16 %v330
      %v726 = vunpack.c.l.b16 %v331
      %v727 = vunpack.c.h.b16 %v331
      %v728 = vunpack.c.l.b16 %v332
      %v729 = vunpack.c.h.b16 %v332
      %v730 = vunpack.c.l.b16 %v333
      %v731 = vunpack.c.h.b16 %v333
      %v732 = vunpack.c.l.b16 %v334
      %v733 = vunpack.c.l.b16 %v335
      %v734 = vunpack.c.h.b16 %v335
      %v735 = vunpack.c.l.b16 %v336
      %v736 = vunpack.c.h.b16 %v336
      %v737 = vunpack.c.l.b16 %v337
      %v738 = vunpack.c.h.b16 %v337
      %v739 = vunpack.c.l.b16 %v338
      %v740 = vunpack.c.l.b16 %v339
      %v741 = vunpack.c.h.b16 %v339
      %v742 = vunpack.c.l.b16 %v340
      %v743 = vunpack.c.h.b16 %v340
      %v744 = vunpack.c.l.b16 %v341
      %v745 = vunpack.c.h.b16 %v341
      %v746 = vunpack.c.l.b16 %v342
      %v747 = vunpack.c.l.b16 %v343
      %v748 = vunpack.c.h.b16 %v343
      %v749 = vunpack.c.l.b16 %v344
      %v750 = vunpack.c.h.b16 %v344
      %v751 = vunpack.c.l.b16 %v345
      %v752 = vunpack.c.h.b16 %v345
      %v753 = vunpack.c.l.b16 %v346
      %v754 = vunpack.c.l.b16 %v347
      %v755 = vunpack.c.h.b16 %v347
      %v756 = vunpack.c.l.b16 %v348
      %v757 = vunpack.c.h.b16 %v348
      %v758 = vunpack.c.l.b16 %v349
      %v759 = vunpack.c.h.b16 %v349
      %v760 = vunpack.c.l.b16 %v350
      %v761 = vunpack.c.l.b16 %v351
      %v762 = vunpack.c.h.b16 %v351
      %v763 = vunpack.c.l.b16 %v352
      %v764 = vunpack.c.h.b16 %v352
      %v765 = vunpack.c.l.b16 %v353
      %v766 = vunpack.c.h.b16 %v353
      %v767 = vunpack.c.l.b16 %v354
      %v768 = vunpack.c.l.b16 %v355
      %v769 = vunpack.c.h.b16 %v355
      %v770 = vunpack.c.l.b16 %v356
      %v771 = vunpack.c.h.b16 %v356
      %v772 = vunpack.c.l.b16 %v357
      %v773 = vunpack.c.h.b16 %v357
      %v774 = vunpack.c.l.b16 %v358
      %v775 = vunpack.c.l.b16 %v359
      %v776 = vunpack.c.h.b16 %v359
      %v777 = vunpack.c.l.b16 %v360
      %v778 = vunpack.c.h.b16 %v360
      %v779 = vunpack.c.l.b16 %v361
      %v780 = vunpack.c.h.b16 %v361
      %v781 = vunpack.c.l.b16 %v362
      %v782 = vunpack.c.l.b16 %v363
      %v783 = vunpack.c.h.b16 %v363
      %v784 = vunpack.c.l.b16 %v364
      %v785 = vunpack.c.h.b16 %v364
      %v786 = vunpack.c.l.b16 %v365
      %v787 = vunpack.c.h.b16 %v365
      %v788 = vunpack.c.l.b16 %v366
      %v789 = vunpack.c.l.b16 %v367
      %v790 = vunpack.c.h.b16 %v367
      %v791 = vunpack.c.l.b16 %v368
      %v792 = vunpack.c.h.b16 %v368
      %v793 = vunpack.c.l.b16 %v369
      %v794 = vunpack.c.h.b16 %v369
      %v795 = vunpack.c.l.b16 %v370
      %v796 = vunpack.c.l.b16 %v371
      %v797 = vunpack.c.h.b16 %v371
      %v798 = vunpack.c.l.b16 %v372
      %v799 = vunpack.c.h.b16 %v372
      %v800 = vunpack.c.l.b16 %v373
      %v801 = vunpack.c.h.b16 %v373
      %v802 = vunpack.c.l.b16 %v374
      %v803 = vunpack.c.l.b16 %v375
      %v804 = vunpack.c.h.b16 %v375
      %v805 = vunpack.c.l.b16 %v376
      %v806 = vunpack.c.h.b16 %v376
      %v807 = vunpack.c.l.b16 %v377
      %v808 = vunpack.c.h.b16 %v377
      %v809 = vunpack.c.l.b16 %v378
      %v810 = vunpack.c.l.b16 %v379
      %v811 = vunpack.c.h.b16 %v379
      %v812 = vunpack.c.l.b16 %v380
      %v813 = vunpack.c.h.b16 %v380
      %v814 = vunpack.c.l.b16 %v381
      %v815 = vunpack.c.h.b16 %v381
      %v816 = vunpack.c.l.b16 %v382
      %v817 = vunpack.c.l.b16 %v383
      %v818 = vunpack.c.h.b16 %v383
      %v819 = vunpack.c.l.b16 %v384
      %v820 = vunpack.c.h.b16 %v384
      %v821 = vunpack.c.l.b16 %v385
      %v822 = vunpack.c.h.b16 %v385
      %v823 = vunpack.c.l.b16 %v386
      %v824 = vunpack.c.l.b16 %v387
      %v825 = vunpack.c.h.b16 %v387
      %v826 = vunpack.c.l.b16 %v388
      %v827 = vunpack.c.h.b16 %v388
      %v828 = vunpack.c.l.b16 %v389
      %v829 = vunpack.c.h.b16 %v389
      %v830 = vunpack.c.l.b16 %v390
      %v831 = vunpack.c.l.b16 %v391
      %v832 = vunpack.c.h.b16 %v391
      %v833 = vunpack.c.l.b16 %v392
      %v834 = vunpack.c.h.b16 %v392
      %v835 = vunpack.c.l.b16 %v393
      %v836 = vunpack.c.h.b16 %v393
      %v837 = vunpack.c.l.b16 %v394
      %v838 = vunpack.c.l.b16 %v395
      %v839 = vunpack.c.h.b16 %v395
      %v840 = vunpack.c.l.b16 %v396
      %v841 = vunpack.c.h.b16 %v396
      %v842 = vunpack.c.l.b16 %v397
      %v843 = vunpack.c.h.b16 %v397
      %v844 = vunpack.c.l.b16 %v398
      %v845 = vunpack.c.l.b16 %v399
      %v846 = vunpack.c.h.b16 %v399
      %v847 = vunpack.c.l.b16 %v400
      %v848 = vunpack.c.h.b16 %v400
      %v849 = vunpack.c.l.b16 %v401
      %v850 = vunpack.c.h.b16 %v401
      %v851 = vunpack.c.l.b16 %v402
      %v852 = vunpack.c.l.b16 %v403
      %v853 = vunpack.c.h.b16 %v403
      %v854 = vunpack.c.l.b16 %v404
      %v855 = vunpack.c.h.b16 %v404
      %v856 = vunpack.c.l.b16 %v405
      %v857 = vunpack.c.h.b16 %v405
      %v858 = vunpack.c.l.b16 %v406
      %v859 = vunpack.c.l.b16 %v407
      %v860 = vunpack.c.h.b16 %v407
      %v861 = vunpack.c.l.b16 %v408
      %v862 = vunpack.c.h.b16 %v408
      %v863 = vunpack.c.l.b16 %v409
      %v864 = vunpack.c.h.b16 %v409
      %v865 = vunpack.c.l.b16 %v410
      %v866 = vunpack.c.l.b16 %v411
      %v867 = vunpack.c.h.b16 %v411
      %v868 = vunpack.c.l.b16 %v412
      %v869 = vunpack.c.h.b16 %v412
      %v870 = vunpack.c.l.b16 %v413
      %v871 = vunpack.c.h.b16 %v413
      %v872 = vunpack.c.l.b16 %v414
      %v873 = vunpack.c.l.b16 %v415
      %v874 = vunpack.c.h.b16 %v415
      %v875 = vunpack.c.l.b16 %v416
      %v876 = vunpack.c.h.b16 %v416
      %v877 = vunpack.c.l.b16 %v417
      %v878 = vunpack.c.h.b16 %v417
      %v879 = vunpack.c.l.b16 %v418
      %v880 = vunpack.c.l.b16 %v419
      %v881 = vunpack.c.h.b16 %v419
      %v882 = vunpack.c.l.b16 %v420
      %v883 = vunpack.c.h.b16 %v420
      %v884 = vunpack.c.l.b16 %v421
      %v885 = vunpack.c.h.b16 %v421
      %v886 = vunpack.c.l.b16 %v422
      %v887 = vpack.c.b16 %v670, %v663
      %v888 = vpack.c.b16 %v671, %v664
      %v889 = vpack.c.b16 %v672, %v665
      %v890 = vpack.c.b16 %v673, %v666
      %v891 = vpack.c.b16 %v674, %v667
      %v892 = vpack.c.b16 %v675, %v668
      %v893 = vpack.c.b16 %v676, %v669
      %v894 = vpack.c.b16 %v684, %v677
      %v895 = vpack.c.b16 %v685, %v678
      %v896 = vpack.c.b16 %v686, %v679
      %v897 = vpack.c.b16 %v687, %v680
      %v898 = vpack.c.b16 %v688, %v681
      %v899 = vpack.c.b16 %v689, %v682
      %v900 = vpack.c.b16 %v690, %v683
      %v901 = vpack.c.b16 %v698, %v691
      %v902 = vpack.c.b16 %v699, %v692
      %v903 = vpack.c.b16 %v700, %v693
      %v904 = vpack.c.b16 %v701, %v694
      %v905 = vpack.c.b16 %v702, %v695
      %v906 = vpack.c.b16 %v703, %v696
      %v907 = vpack.c.b16 %v704, %v697
      %v908 = vpack.c.b16 %v712, %v705
      %v909 = vpack.c.b16 %v713, %v706
      %v910 = vpack.c.b16 %v714, %v707
      %v911 = vpack.c.b16 %v715, %v708
      %v912 = vpack.c.b16 %v716, %v709
      %v913 = vpack.c.b16 %v717, %v710
      %v914 = vpack.c.b16 %v718, %v711
      %v915 = vpack.c.b16 %v726, %v719
      %v916 = vpack.c.b16 %v727, %v720
      %v917 = vpack.c.b16 %v728, %v721
      %v918 = vpack.c.b16 %v729, %v722
      %v919 = vpack.c.b16 %v730, %v723
      %v920 = vpack.c.b16 %v731, %v724
      %v921 = vpack.c.b16 %v732, %v725
      %v922 = vpack.c.b16 %v740, %v733
      %v923 = vpack.c.b16 %v741, %v734
      %v924 = vpack.c.b16 %v742, %v735
      %v925 = vpack.c.b16 %v743, %v736
      %v926 = vpack.c.b16 %v744, %v737
      %v927 = vpack.c.b16 %v745, %v738
      %v928 = vpack.c.b16 %v746, %v739
      %v929 = vpack.c.b16 %v754, %v747
      %v930 = vpack.c.b16 %v755, %v748
      %v931 = vpack.c.b16 %v756, %v749
      %v932 = vpack.c.b16 %v757, %v750
      %v933 = vpack.c.b16 %v758, %v751
      %v934 = vpack.c.b16 %v759, %v752
      %v935 = vpack.c.b16 %v760, %v753
      %v936 = vpack.c.b16 %v768, %v761
      %v937 = vpack.c.b16 %v769, %v762
      %v938 = vpack.c.b16 %v770, %v763
      %v939 = vpack.c.b16 %v771, %v764
      %v940 = vpack.c.b16 %v772, %v765
      %v941 = vpack.c.b16 %v773, %v766
      %v942 = vpack.c.b16 %v774, %v767
      %v943 = vpack.c.b16 %v782, %v775
      %v944 = vpack.c.b16 %v783, %v776
      %v945 = vpack.c.b16 %v784, %v777
      %v946 = vpack.c.b16 %v785, %v778
      %v947 = vpack.c.b16 %v786, %v779
      %v948 = vpack.c.b16 %v787, %v780
      %v949 = vpack.c.b16 %v788, %v781
      %v950 = vpack.c.b16 %v796, %v789
      %v951 = vpack.c.b16 %v797, %v790
      %v952 = vpack.c.b16 %v798, %v791
      %v953 = vpack.c.b16 %v799, %v792
      %v954 = vpack.c.b16 %v800, %v793
      %v955 = vpack.c.b16 %v801, %v794
      %v956 = vpack.c.b16 %v802, %v795
      %v957 = vpack.c.b16 %v810, %v803
      %v958 = vpack.c.b16 %v811, %v804
      %v959 = vpack.c.b16 %v812, %v805
      %v960 = vpack.c.b16 %v813, %v806
      %v961 = vpack.c.b16 %v814, %v807
      %v962 = vpack.c.b16 %v815, %v808
      %v963 = vpack.c.b16 %v816, %v809
      %v964 = vpack.c.b16 %v824, %v817
      %v965 = vpack.c.b16 %v825, %v818
      %v966 = vpack.c.b16 %v826, %v819
      %v967 = vpack.c.b16 %v827, %v820
      %v968 = vpack.c.b16 %v828, %v821
      %v969 = vpack.c.b16 %v829, %v822
      %v970 = vpack.c.b16 %v830, %v823
      %v971 = vpack.c.b16 %v838, %v831
      %v972 = vpack.c.b16 %v839, %v832
      %v973 = vpack.c.b16 %v840, %v833
      %v974 = vpack.c.b16 %v841, %v834
      %v975 = vpack.c.b16 %v842, %v835
      %v976 = vpack.c.b16 %v843, %v836
      %v977 = vpack.c.b16 %v844, %v837
      %v978 = vpack.c.b16 %v852, %v845
      %v979 = vpack.c.b16 %v853, %v846
      %v980 = vpack.c.b16 %v854, %v847
      %v981 = vpack.c.b16 %v855, %v848
      %v982 = vpack.c.b16 %v856, %v849
      %v983 = vpack.c.b16 %v857, %v850
      %v984 = vpack.c.b16 %v858, %v851
      %v985 = vpack.c.b16 %v866, %v859
      %v986 = vpack.c.b16 %v867, %v860
      %v987 = vpack.c.b16 %v868, %v861
      %v988 = vpack.c.b16 %v869, %v862
      %v989 = vpack.c.b16 %v870, %v863
      %v990 = vpack.c.b16 %v871, %v864
      %v991 = vpack.c.b16 %v872, %v865
      %v992 = vpack.c.b16 %v880, %v873
      %v993 = vpack.c.b16 %v881, %v874
      %v994 = vpack.c.b16 %v882, %v875
      %v995 = vpack.c.b16 %v883, %v876
      %v996 = vpack.c.b16 %v884, %v877
      %v997 = vpack.c.b16 %v885, %v878
      %v998 = vpack.c.b16 %v886, %v879
      %v1223 = vunpack.c.l.b16 %v423
      %v1224 = vunpack.c.l.b16 %v424
      %v1225 = vunpack.c.l.b16 %v425
      %v1226 = vunpack.c.l.b16 %v426
      %v1227 = vunpack.c.l.b16 %v427
      %v1228 = vunpack.c.l.b16 %v428
      %v1229 = vunpack.c.l.b16 %v429
      %v1230 = vunpack.c.l.b16 %v430
      %v1231 = vunpack.c.l.b16 %v431
      %v1232 = vunpack.c.l.b16 %v432
      %v1233 = vunpack.c.l.b16 %v433
      %v1234 = vunpack.c.l.b16 %v434
      %v1235 = vunpack.c.l.b16 %v435
      %v1236 = vunpack.c.l.b16 %v436
      %v1237 = vunpack.c.l.b16 %v437
      %v1238 = vunpack.c.l.b16 %v438
      %v1239 = vunpack.c.l.b16 %v439
      %v1240 = vunpack.c.l.b16 %v440
      %v1241 = vunpack.c.l.b16 %v441
      %v1242 = vunpack.c.l.b16 %v442
      %v1243 = vunpack.c.l.b16 %v443
      %v1244 = vunpack.c.l.b16 %v444
      %v1245 = vunpack.c.l.b16 %v445
      %v1246 = vunpack.c.l.b16 %v446
      %v1247 = vunpack.c.l.b16 %v447
      %v1248 = vunpack.c.l.b16 %v448
      %v1249 = vunpack.c.l.b16 %v449
      %v1250 = vunpack.c.l.b16 %v450
      %v1251 = vunpack.c.l.b16 %v451
      %v1252 = vunpack.c.l.b16 %v452
      %v1253 = vunpack.c.l.b16 %v453
      %v1254 = vunpack.c.l.b16 %v454
      %v1255 = vunpack.c.l.b16 %v455
      %v1256 = vunpack.c.l.b16 %v456
      %v1257 = vunpack.c.l.b16 %v457
      %v1258 = vunpack.c.l.b16 %v458
      %v1259 = vunpack.c.l.b16 %v459
      %v1260 = vunpack.c.l.b16 %v460
      %v1261 = vunpack.c.l.b16 %v461
      %v1262 = vunpack.c.l.b16 %v462
      %v1263 = vunpack.c.l.b16 %v463
      %v1264 = vunpack.c.l.b16 %v464
      %v1265 = vunpack.c.l.b16 %v465
      %v1266 = vunpack.c.l.b16 %v466
      %v1267 = vunpack.c.l.b16 %v467
      %v1268 = vunpack.c.l.b16 %v468
      %v1269 = vunpack.c.l.b16 %v469
      %v1270 = vunpack.c.l.b16 %v470
      %v1271 = vunpack.c.l.b16 %v471
      %v1272 = vunpack.c.l.b16 %v472
      %v1273 = vunpack.c.l.b16 %v473
      %v1274 = vunpack.c.l.b16 %v474
      %v1275 = vunpack.c.l.b16 %v475
      %v1276 = vunpack.c.l.b16 %v476
      %v1277 = vunpack.c.l.b16 %v477
      %v1278 = vunpack.c.l.b16 %v478
      %v1279 = vunpack.c.l.b16 %v479
      %v1280 = vunpack.c.l.b16 %v480
      %v1281 = vunpack.c.l.b16 %v481
      %v1282 = vunpack.c.l.b16 %v482
      %v1283 = vunpack.c.l.b16 %v483
      %v1284 = vunpack.c.l.b16 %v484
      %v1285 = vunpack.c.l.b16 %v485
      %v1286 = vunpack.c.l.b16 %v486
      %v1287 = vunpack.c.l.b16 %v487
      %v1288 = vunpack.c.l.b16 %v488
      %v1289 = vunpack.c.l.b16 %v489
      %v1290 = vunpack.c.l.b16 %v490
      %v1291 = vunpack.c.l.b16 %v491
      %v1292 = vunpack.c.l.b16 %v492
      %v1293 = vunpack.c.l.b16 %v493
      %v1294 = vunpack.c.l.b16 %v494
      %v1295 = vunpack.c.l.b16 %v495
      %v1296 = vunpack.c.l.b16 %v496
      %v1297 = vunpack.c.l.b16 %v497
      %v1298 = vunpack.c.l.b16 %v498
      %v1299 = vunpack.c.l.b16 %v499
      %v1300 = vunpack.c.l.b16 %v500
      %v1301 = vunpack.c.l.b16 %v501
      %v1302 = vunpack.c.l.b16 %v502
      %v1303 = vunpack.c.l.b16 %v503
      %v1304 = vunpack.c.l.b16 %v504
      %v1305 = vunpack.c.l.b16 %v505
      %v1306 = vunpack.c.l.b16 %v506
      %v1307 = vunpack.c.l.b16 %v507
      %v1308 = vunpack.c.l.b16 %v508
      %v1309 = vunpack.c.l.b16 %v509
      %v1310 = vunpack.c.l.b16 %v510
      %v1311 = vunpack.c.l.b16 %v511
      %v1312 = vunpack.c.l.b16 %v512
      %v1313 = vunpack.c.l.b16 %v513
      %v1314 = vunpack.c.l.b16 %v514
      %v1315 = vunpack.c.l.b16 %v515
      %v1316 = vunpack.c.l.b16 %v516
      %v1317 = vunpack.c.l.b16 %v517
      %v1318 = vunpack.c.l.b16 %v518
      %v1319 = vunpack.c.l.b16 %v519
      %v1320 = vunpack.c.l.b16 %v520
      %v1321 = vunpack.c.l.b16 %v521
      %v1322 = vunpack.c.l.b16 %v522
      %v1323 = vunpack.c.l.b16 %v523
      %v1324 = vunpack.c.l.b16 %v524
      %v1325 = vunpack.c.l.b16 %v525
      %v1326 = vunpack.c.l.b16 %v526
      %v1327 = vunpack.c.l.b16 %v527
      %v1328 = vunpack.c.l.b16 %v528
      %v1329 = vunpack.c.l.b16 %v529
      %v1330 = vunpack.c.l.b16 %v530
      %v1331 = vunpack.c.l.b16 %v531
      %v1332 = vunpack.c.l.b16 %v532
      %v1333 = vunpack.c.l.b16 %v533
      %v1334 = vunpack.c.l.b16 %v534
      %v1335 = vpack.c.b16 %v1224, %v1223
      %v1336 = vpack.c.b16 %v1226, %v1225
      %v1337 = vpack.c.b16 %v1228, %v1227
      %v1338 = vpack.c.b16 %v1230, %v1229
      %v1339 = vpack.c.b16 %v1232, %v1231
      %v1340 = vpack.c.b16 %v1234, %v1233
      %v1341 = vpack.c.b16 %v1236, %v1235
      %v1342 = vpack.c.b16 %v1238, %v1237
      %v1343 = vpack.c.b16 %v1240, %v1239
      %v1344 = vpack.c.b16 %v1242, %v1241
      %v1345 = vpack.c.b16 %v1244, %v1243
      %v1346 = vpack.c.b16 %v1246, %v1245
      %v1347 = vpack.c.b16 %v1248, %v1247
      %v1348 = vpack.c.b16 %v1250, %v1249
      %v1349 = vpack.c.b16 %v1252, %v1251
      %v1350 = vpack.c.b16 %v1254, %v1253
      %v1351 = vpack.c.b16 %v1256, %v1255
      %v1352 = vpack.c.b16 %v1258, %v1257
      %v1353 = vpack.c.b16 %v1260, %v1259
      %v1354 = vpack.c.b16 %v1262, %v1261
      %v1355 = vpack.c.b16 %v1264, %v1263
      %v1356 = vpack.c.b16 %v1266, %v1265
      %v1357 = vpack.c.b16 %v1268, %v1267
      %v1358 = vpack.c.b16 %v1270, %v1269
      %v1359 = vpack.c.b16 %v1272, %v1271
      %v1360 = vpack.c.b16 %v1274, %v1273
      %v1361 = vpack.c.b16 %v1276, %v1275
      %v1362 = vpack.c.b16 %v1278, %v1277
      %v1363 = vpack.c.b16 %v1280, %v1279
      %v1364 = vpack.c.b16 %v1282, %v1281
      %v1365 = vpack.c.b16 %v1284, %v1283
      %v1366 = vpack.c.b16 %v1286, %v1285
      %v1367 = vpack.c.b16 %v1288, %v1287
      %v1368 = vpack.c.b16 %v1290, %v1289
      %v1369 = vpack.c.b16 %v1292, %v1291
      %v1370 = vpack.c.b16 %v1294, %v1293
      %v1371 = vpack.c.b16 %v1296, %v1295
      %v1372 = vpack.c.b16 %v1298, %v1297
      %v1373 = vpack.c.b16 %v1300, %v1299
      %v1374 = vpack.c.b16 %v1302, %v1301
      %v1375 = vpack.c.b16 %v1304, %v1303
      %v1376 = vpack.c.b16 %v1306, %v1305
      %v1377 = vpack.c.b16 %v1308, %v1307
      %v1378 = vpack.c.b16 %v1310, %v1309
      %v1379 = vpack.c.b16 %v1312, %v1311
      %v1380 = vpack.c.b16 %v1314, %v1313
      %v1381 = vpack.c.b16 %v1316, %v1315
      %v1382 = vpack.c.b16 %v1318, %v1317
      %v1383 = vpack.c.b16 %v1320, %v1319
      %v1384 = vpack.c.b16 %v1322, %v1321
      %v1385 = vpack.c.b16 %v1324, %v1323
      %v1386 = vpack.c.b16 %v1326, %v1325
      %v1387 = vpack.c.b16 %v1328, %v1327
      %v1388 = vpack.c.b16 %v1330, %v1329
      %v1389 = vpack.c.b16 %v1332, %v1331
      %v1390 = vpack.c.b16 %v1334, %v1333
      %1447 = vmatprep.subr.bf16.mxu0 0
      %1448 = vmatpush1.bf16.msra.mxu0 %v1342
      %1449 = vmatprep.subr.bf16.mxu0 0
      %1450 = vmatpush1.bf16.msra.mxu0 %v1341
      %1451 = vmatprep.subr.bf16.mxu0 0
      %1452 = vmatpush1.bf16.msra.mxu0 %v1340
      %1453 = vmatprep.subr.bf16.mxu0 0
      %1454 = vmatpush1.bf16.msra.mxu0 %v1339
      %1455 = vmatprep.subr.bf16.mxu0 0
      %1456 = vmatpush1.bf16.msra.mxu0 %v1338
      %1457 = vmatprep.subr.bf16.mxu0 0
      %1458 = vmatpush1.bf16.msra.mxu0 %v1337
      %1459 = vmatprep.subr.bf16.mxu0 0
      %1460 = vmatpush1.bf16.msra.mxu0 %v1336
      %1461 = vmatprep.subr.bf16.mxu0 0
      %1462 = vmatpush1.bf16.msra.mxu0 %v1335
      %1463 = vmatprep.subr.bf16.mxu0 0
      %1464 = vmatpush2.bf16.msra.mxu0 %v1350
      %1465 = vmatprep.subr.bf16.mxu0 0
      %1466 = vmatpush2.bf16.msra.mxu0 %v1349
      %1467 = vmatprep.subr.bf16.mxu0 0
      %1468 = vmatpush2.bf16.msra.mxu0 %v1348
      %1469 = vmatprep.subr.bf16.mxu0 0
      %1470 = vmatpush2.bf16.msra.mxu0 %v1347
      %1471 = vmatprep.subr.bf16.mxu0 0
      %1472 = vmatpush2.bf16.msra.mxu0 %v1346
      %1473 = vmatprep.subr.bf16.mxu0 0
      %1474 = vmatpush2.bf16.msra.mxu0 %v1345
      %1475 = vmatprep.subr.bf16.mxu0 0
      %1476 = vmatpush2.bf16.msra.mxu0 %v1344
      %1477 = vmatprep.subr.bf16.mxu0 0
      %1478 = vmatpush2.bf16.msra.mxu0 %v1343
      %1479 = vmatprep.mubr.bf16.mxu0 %v888
      %1480 = vmatmul.mubr.bf16.gmra.mxu0 %v887
      %v1481 = vpop.f32.mrf.mxu0
      %v1482 = vadd.f32 0.0, %v1481
      %v1483 = vpop.f32.mrf.mxu0
      %v1484 = vpop.f32.mrf.mxu0
      %v1485 = vadd.f32 0.0, %v1484
      %v1486 = vpop.f32.mrf.mxu0
      %1487 = vmatprep.mubr.bf16.mxu0 %v895
      %1488 = vmatmul.mubr.bf16.gmra.mxu0 %v894
      %v1489 = vpop.f32.mrf.mxu0
      %v1490 = vadd.f32 0.0, %v1489
      %v1491 = vpop.f32.mrf.mxu0
      %v1492 = vpop.f32.mrf.mxu0
      %v1493 = vadd.f32 0.0, %v1492
      %v1494 = vpop.f32.mrf.mxu0
      %1495 = vmatprep.mubr.bf16.mxu0 %v902
      %1496 = vmatmul.mubr.bf16.gmra.mxu0 %v901
      %v1497 = vpop.f32.mrf.mxu0
      %v1498 = vadd.f32 0.0, %v1497
      %v1499 = vpop.f32.mrf.mxu0
      %v1500 = vpop.f32.mrf.mxu0
      %v1501 = vadd.f32 0.0, %v1500
      %v1502 = vpop.f32.mrf.mxu0
      %1503 = vmatprep.mubr.bf16.mxu0 %v909
      %1504 = vmatmul.mubr.bf16.gmra.mxu0 %v908
      %v1505 = vpop.f32.mrf.mxu0
      %v1506 = vadd.f32 0.0, %v1505
      %v1507 = vpop.f32.mrf.mxu0
      %v1508 = vpop.f32.mrf.mxu0
      %v1509 = vadd.f32 0.0, %v1508
      %v1510 = vpop.f32.mrf.mxu0
      %1511 = vmatprep.mubr.bf16.mxu0 %v916
      %1512 = vmatmul.mubr.bf16.gmra.mxu0 %v915
      %v1513 = vpop.f32.mrf.mxu0
      %v1514 = vadd.f32 0.0, %v1513
      %v1515 = vpop.f32.mrf.mxu0
      %v1516 = vpop.f32.mrf.mxu0
      %v1517 = vadd.f32 0.0, %v1516
      %v1518 = vpop.f32.mrf.mxu0
      %1519 = vmatprep.mubr.bf16.mxu0 %v923
      %1520 = vmatmul.mubr.bf16.gmra.mxu0 %v922
      %v1521 = vpop.f32.mrf.mxu0
      %v1522 = vadd.f32 0.0, %v1521
      %v1523 = vpop.f32.mrf.mxu0
      %v1524 = vpop.f32.mrf.mxu0
      %v1525 = vadd.f32 0.0, %v1524
      %v1526 = vpop.f32.mrf.mxu0
      %1527 = vmatprep.mubr.bf16.mxu0 %v930
      %1528 = vmatmul.mubr.bf16.gmra.mxu0 %v929
      %v1529 = vpop.f32.mrf.mxu0
      %v1530 = vadd.f32 0.0, %v1529
      %v1531 = vpop.f32.mrf.mxu0
      %v1532 = vpop.f32.mrf.mxu0
      %v1533 = vadd.f32 0.0, %v1532
      %v1534 = vpop.f32.mrf.mxu0
      %1535 = vmatprep.mubr.bf16.mxu0 %v937
      %1536 = vmatmul.mubr.bf16.gmra.mxu0 %v936
      %v1537 = vpop.f32.mrf.mxu0
      %v1538 = vadd.f32 0.0, %v1537
      %v1539 = vpop.f32.mrf.mxu0
      %v1540 = vpop.f32.mrf.mxu0
      %v1541 = vadd.f32 0.0, %v1540
      %v1542 = vpop.f32.mrf.mxu0
      %1543 = vmatprep.mubr.bf16.mxu0 %v944
      %1544 = vmatmul.mubr.bf16.gmra.mxu0 %v943
      %v1545 = vpop.f32.mrf.mxu0
      %v1546 = vadd.f32 0.0, %v1545
      %v1547 = vpop.f32.mrf.mxu0
      %v1548 = vpop.f32.mrf.mxu0
      %v1549 = vadd.f32 0.0, %v1548
      %v1550 = vpop.f32.mrf.mxu0
      %1551 = vmatprep.mubr.bf16.mxu0 %v951
      %1552 = vmatmul.mubr.bf16.gmra.mxu0 %v950
      %v1553 = vpop.f32.mrf.mxu0
      %v1554 = vadd.f32 0.0, %v1553
      %v1555 = vpop.f32.mrf.mxu0
      %v1556 = vpop.f32.mrf.mxu0
      %v1557 = vadd.f32 0.0, %v1556
      %v1558 = vpop.f32.mrf.mxu0
      %1559 = vmatprep.mubr.bf16.mxu0 %v958
      %1560 = vmatmul.mubr.bf16.gmra.mxu0 %v957
      %v1561 = vpop.f32.mrf.mxu0
      %v1562 = vadd.f32 0.0, %v1561
      %v1563 = vpop.f32.mrf.mxu0
      %v1564 = vpop.f32.mrf.mxu0
      %v1565 = vadd.f32 0.0, %v1564
      %v1566 = vpop.f32.mrf.mxu0
      %1567 = vmatprep.mubr.bf16.mxu0 %v965
      %1568 = vmatmul.mubr.bf16.gmra.mxu0 %v964
      %v1569 = vpop.f32.mrf.mxu0
      %v1570 = vadd.f32 0.0, %v1569
      %v1571 = vpop.f32.mrf.mxu0
      %v1572 = vpop.f32.mrf.mxu0
      %v1573 = vadd.f32 0.0, %v1572
      %v1574 = vpop.f32.mrf.mxu0
      %1575 = vmatprep.mubr.bf16.mxu0 %v972
      %1576 = vmatmul.mubr.bf16.gmra.mxu0 %v971
      %v1577 = vpop.f32.mrf.mxu0
      %v1578 = vadd.f32 0.0, %v1577
      %v1579 = vpop.f32.mrf.mxu0
      %v1580 = vpop.f32.mrf.mxu0
      %v1581 = vadd.f32 0.0, %v1580
      %v1582 = vpop.f32.mrf.mxu0
      %1583 = vmatprep.mubr.bf16.mxu0 %v979
      %1584 = vmatmul.mubr.bf16.gmra.mxu0 %v978
      %v1585 = vpop.f32.mrf.mxu0
      %v1586 = vadd.f32 0.0, %v1585
      %v1587 = vpop.f32.mrf.mxu0
      %v1588 = vpop.f32.mrf.mxu0
      %v1589 = vadd.f32 0.0, %v1588
      %v1590 = vpop.f32.mrf.mxu0
      %1591 = vmatprep.mubr.bf16.mxu0 %v986
      %1592 = vmatmul.mubr.bf16.gmra.mxu0 %v985
      %v1593 = vpop.f32.mrf.mxu0
      %v1594 = vadd.f32 0.0, %v1593
      %v1595 = vpop.f32.mrf.mxu0
      %v1596 = vpop.f32.mrf.mxu0
      %v1597 = vadd.f32 0.0, %v1596
      %v1598 = vpop.f32.mrf.mxu0
      %1599 = vmatprep.mubr.bf16.mxu0 %v993
      %1600 = vmatmul.mubr.bf16.gmra.mxu0 %v992
      %v1601 = vpop.f32.mrf.mxu0
      %v1602 = vadd.f32 0.0, %v1601
      %v1603 = vpop.f32.mrf.mxu0
      %v1604 = vpop.f32.mrf.mxu0
      %v1605 = vadd.f32 0.0, %v1604
      %v1606 = vpop.f32.mrf.mxu0
      %1607 = vdwg.mxu0
      %1608 = vmatprep.subr.bf16.mxu0 0
      %1609 = vmatpush1.bf16.msra.mxu0 %v1358
      %1610 = vmatprep.subr.bf16.mxu0 0
      %1611 = vmatpush1.bf16.msra.mxu0 %v1357
      %1612 = vmatprep.subr.bf16.mxu0 0
      %1613 = vmatpush1.bf16.msra.mxu0 %v1356
      %1614 = vmatprep.subr.bf16.mxu0 0
      %1615 = vmatpush1.bf16.msra.mxu0 %v1355
      %1616 = vmatprep.subr.bf16.mxu0 0
      %1617 = vmatpush1.bf16.msra.mxu0 %v1354
      %1618 = vmatprep.subr.bf16.mxu0 0
      %1619 = vmatpush1.bf16.msra.mxu0 %v1353
      %1620 = vmatprep.subr.bf16.mxu0 0
      %1621 = vmatpush1.bf16.msra.mxu0 %v1352
      %1622 = vmatprep.subr.bf16.mxu0 0
      %1623 = vmatpush1.bf16.msra.mxu0 %v1351
      %1624 = vmatprep.subr.bf16.mxu0 0
      %1625 = vmatpush2.bf16.msra.mxu0 %v1366
      %1626 = vmatprep.subr.bf16.mxu0 0
      %1627 = vmatpush2.bf16.msra.mxu0 %v1365
      %1628 = vmatprep.subr.bf16.mxu0 0
      %1629 = vmatpush2.bf16.msra.mxu0 %v1364
      %1630 = vmatprep.subr.bf16.mxu0 0
      %1631 = vmatpush2.bf16.msra.mxu0 %v1363
      %1632 = vmatprep.subr.bf16.mxu0 0
      %1633 = vmatpush2.bf16.msra.mxu0 %v1362
      %1634 = vmatprep.subr.bf16.mxu0 0
      %1635 = vmatpush2.bf16.msra.mxu0 %v1361
      %1636 = vmatprep.subr.bf16.mxu0 0
      %1637 = vmatpush2.bf16.msra.mxu0 %v1360
      %1638 = vmatprep.subr.bf16.mxu0 0
      %1639 = vmatpush2.bf16.msra.mxu0 %v1359
      %1640 = vmatprep.mubr.bf16.mxu0 %v890
      %1641 = vmatmul.mubr.bf16.gmra.mxu0 %v889
      %v1642 = vpop.f32.mrf.mxu0
      %v1643 = vadd.f32 %v1482, %v1642
      %v1644 = vpop.f32.mrf.mxu0
      %v1645 = vpop.f32.mrf.mxu0
      %v1646 = vadd.f32 %v1485, %v1645
      %v1647 = vpop.f32.mrf.mxu0
      %1648 = vmatprep.mubr.bf16.mxu0 %v897
      %1649 = vmatmul.mubr.bf16.gmra.mxu0 %v896
      %v1650 = vpop.f32.mrf.mxu0
      %v1651 = vadd.f32 %v1490, %v1650
      %v1652 = vpop.f32.mrf.mxu0
      %v1653 = vpop.f32.mrf.mxu0
      %v1654 = vadd.f32 %v1493, %v1653
      %v1655 = vpop.f32.mrf.mxu0
      %1656 = vmatprep.mubr.bf16.mxu0 %v904
      %1657 = vmatmul.mubr.bf16.gmra.mxu0 %v903
      %v1658 = vpop.f32.mrf.mxu0
      %v1659 = vadd.f32 %v1498, %v1658
      %v1660 = vpop.f32.mrf.mxu0
      %v1661 = vpop.f32.mrf.mxu0
      %v1662 = vadd.f32 %v1501, %v1661
      %v1663 = vpop.f32.mrf.mxu0
      %1664 = vmatprep.mubr.bf16.mxu0 %v911
      %1665 = vmatmul.mubr.bf16.gmra.mxu0 %v910
      %v1666 = vpop.f32.mrf.mxu0
      %v1667 = vadd.f32 %v1506, %v1666
      %v1668 = vpop.f32.mrf.mxu0
      %v1669 = vpop.f32.mrf.mxu0
      %v1670 = vadd.f32 %v1509, %v1669
      %v1671 = vpop.f32.mrf.mxu0
      %1672 = vmatprep.mubr.bf16.mxu0 %v918
      %1673 = vmatmul.mubr.bf16.gmra.mxu0 %v917
      %v1674 = vpop.f32.mrf.mxu0
      %v1675 = vadd.f32 %v1514, %v1674
      %v1676 = vpop.f32.mrf.mxu0
      %v1677 = vpop.f32.mrf.mxu0
      %v1678 = vadd.f32 %v1517, %v1677
      %v1679 = vpop.f32.mrf.mxu0
      %1680 = vmatprep.mubr.bf16.mxu0 %v925
      %1681 = vmatmul.mubr.bf16.gmra.mxu0 %v924
      %v1682 = vpop.f32.mrf.mxu0
      %v1683 = vadd.f32 %v1522, %v1682
      %v1684 = vpop.f32.mrf.mxu0
      %v1685 = vpop.f32.mrf.mxu0
      %v1686 = vadd.f32 %v1525, %v1685
      %v1687 = vpop.f32.mrf.mxu0
      %1688 = vmatprep.mubr.bf16.mxu0 %v932
      %1689 = vmatmul.mubr.bf16.gmra.mxu0 %v931
      %v1690 = vpop.f32.mrf.mxu0
      %v1691 = vadd.f32 %v1530, %v1690
      %v1692 = vpop.f32.mrf.mxu0
      %v1693 = vpop.f32.mrf.mxu0
      %v1694 = vadd.f32 %v1533, %v1693
      %v1695 = vpop.f32.mrf.mxu0
      %1696 = vmatprep.mubr.bf16.mxu0 %v939
      %1697 = vmatmul.mubr.bf16.gmra.mxu0 %v938
      %v1698 = vpop.f32.mrf.mxu0
      %v1699 = vadd.f32 %v1538, %v1698
      %v1700 = vpop.f32.mrf.mxu0
      %v1701 = vpop.f32.mrf.mxu0
      %v1702 = vadd.f32 %v1541, %v1701
      %v1703 = vpop.f32.mrf.mxu0
      %1704 = vmatprep.mubr.bf16.mxu0 %v946
      %1705 = vmatmul.mubr.bf16.gmra.mxu0 %v945
      %v1706 = vpop.f32.mrf.mxu0
      %v1707 = vadd.f32 %v1546, %v1706
      %v1708 = vpop.f32.mrf.mxu0
      %v1709 = vpop.f32.mrf.mxu0
      %v1710 = vadd.f32 %v1549, %v1709
      %v1711 = vpop.f32.mrf.mxu0
      %1712 = vmatprep.mubr.bf16.mxu0 %v953
      %1713 = vmatmul.mubr.bf16.gmra.mxu0 %v952
      %v1714 = vpop.f32.mrf.mxu0
      %v1715 = vadd.f32 %v1554, %v1714
      %v1716 = vpop.f32.mrf.mxu0
      %v1717 = vpop.f32.mrf.mxu0
      %v1718 = vadd.f32 %v1557, %v1717
      %v1719 = vpop.f32.mrf.mxu0
      %1720 = vmatprep.mubr.bf16.mxu0 %v960
      %1721 = vmatmul.mubr.bf16.gmra.mxu0 %v959
      %v1722 = vpop.f32.mrf.mxu0
      %v1723 = vadd.f32 %v1562, %v1722
      %v1724 = vpop.f32.mrf.mxu0
      %v1725 = vpop.f32.mrf.mxu0
      %v1726 = vadd.f32 %v1565, %v1725
      %v1727 = vpop.f32.mrf.mxu0
      %1728 = vmatprep.mubr.bf16.mxu0 %v967
      %1729 = vmatmul.mubr.bf16.gmra.mxu0 %v966
      %v1730 = vpop.f32.mrf.mxu0
      %v1731 = vadd.f32 %v1570, %v1730
      %v1732 = vpop.f32.mrf.mxu0
      %v1733 = vpop.f32.mrf.mxu0
      %v1734 = vadd.f32 %v1573, %v1733
      %v1735 = vpop.f32.mrf.mxu0
      %1736 = vmatprep.mubr.bf16.mxu0 %v974
      %1737 = vmatmul.mubr.bf16.gmra.mxu0 %v973
      %v1738 = vpop.f32.mrf.mxu0
      %v1739 = vadd.f32 %v1578, %v1738
      %v1740 = vpop.f32.mrf.mxu0
      %v1741 = vpop.f32.mrf.mxu0
      %v1742 = vadd.f32 %v1581, %v1741
      %v1743 = vpop.f32.mrf.mxu0
      %1744 = vmatprep.mubr.bf16.mxu0 %v981
      %1745 = vmatmul.mubr.bf16.gmra.mxu0 %v980
      %v1746 = vpop.f32.mrf.mxu0
      %v1747 = vadd.f32 %v1586, %v1746
      %v1748 = vpop.f32.mrf.mxu0
      %v1749 = vpop.f32.mrf.mxu0
      %v1750 = vadd.f32 %v1589, %v1749
      %v1751 = vpop.f32.mrf.mxu0
      %1752 = vmatprep.mubr.bf16.mxu0 %v988
      %1753 = vmatmul.mubr.bf16.gmra.mxu0 %v987
      %v1754 = vpop.f32.mrf.mxu0
      %v1755 = vadd.f32 %v1594, %v1754
      %v1756 = vpop.f32.mrf.mxu0
      %v1757 = vpop.f32.mrf.mxu0
      %v1758 = vadd.f32 %v1597, %v1757
      %v1759 = vpop.f32.mrf.mxu0
      %1760 = vmatprep.mubr.bf16.mxu0 %v995
      %1761 = vmatmul.mubr.bf16.gmra.mxu0 %v994
      %v1762 = vpop.f32.mrf.mxu0
      %v1763 = vadd.f32 %v1602, %v1762
      %v1764 = vpop.f32.mrf.mxu0
      %v1765 = vpop.f32.mrf.mxu0
      %v1766 = vadd.f32 %v1605, %v1765
      %v1767 = vpop.f32.mrf.mxu0
      %1768 = vdwg.mxu0
      %1769 = vmatprep.subr.bf16.mxu0 0
      %1770 = vmatpush1.bf16.msra.mxu0 %v1374
      %1771 = vmatprep.subr.bf16.mxu0 0
      %1772 = vmatpush1.bf16.msra.mxu0 %v1373
      %1773 = vmatprep.subr.bf16.mxu0 0
      %1774 = vmatpush1.bf16.msra.mxu0 %v1372
      %1775 = vmatprep.subr.bf16.mxu0 0
      %1776 = vmatpush1.bf16.msra.mxu0 %v1371
      %1777 = vmatprep.subr.bf16.mxu0 0
      %1778 = vmatpush1.bf16.msra.mxu0 %v1370
      %1779 = vmatprep.subr.bf16.mxu0 0
      %1780 = vmatpush1.bf16.msra.mxu0 %v1369
      %1781 = vmatprep.subr.bf16.mxu0 0
      %1782 = vmatpush1.bf16.msra.mxu0 %v1368
      %1783 = vmatprep.subr.bf16.mxu0 0
      %1784 = vmatpush1.bf16.msra.mxu0 %v1367
      %1785 = vmatprep.subr.bf16.mxu0 0
      %1786 = vmatpush2.bf16.msra.mxu0 %v1382
      %1787 = vmatprep.subr.bf16.mxu0 0
      %1788 = vmatpush2.bf16.msra.mxu0 %v1381
      %1789 = vmatprep.subr.bf16.mxu0 0
      %1790 = vmatpush2.bf16.msra.mxu0 %v1380
      %1791 = vmatprep.subr.bf16.mxu0 0
      %1792 = vmatpush2.bf16.msra.mxu0 %v1379
      %1793 = vmatprep.subr.bf16.mxu0 0
      %1794 = vmatpush2.bf16.msra.mxu0 %v1378
      %1795 = vmatprep.subr.bf16.mxu0 0
      %1796 = vmatpush2.bf16.msra.mxu0 %v1377
      %1797 = vmatprep.subr.bf16.mxu0 0
      %1798 = vmatpush2.bf16.msra.mxu0 %v1376
      %1799 = vmatprep.subr.bf16.mxu0 0
      %1800 = vmatpush2.bf16.msra.mxu0 %v1375
      %1801 = vmatprep.mubr.bf16.mxu0 %v892
      %1802 = vmatmul.mubr.bf16.gmra.mxu0 %v891
      %v1803 = vpop.f32.mrf.mxu0
      %v1804 = vadd.f32 %v1643, %v1803
      %v1805 = vpop.f32.mrf.mxu0
      %v1806 = vpop.f32.mrf.mxu0
      %v1807 = vadd.f32 %v1646, %v1806
      %v1808 = vpop.f32.mrf.mxu0
      %1809 = vmatprep.mubr.bf16.mxu0 %v899
      %1810 = vmatmul.mubr.bf16.gmra.mxu0 %v898
      %v1811 = vpop.f32.mrf.mxu0
      %v1812 = vadd.f32 %v1651, %v1811
      %v1813 = vpop.f32.mrf.mxu0
      %v1814 = vpop.f32.mrf.mxu0
      %v1815 = vadd.f32 %v1654, %v1814
      %v1816 = vpop.f32.mrf.mxu0
      %1817 = vmatprep.mubr.bf16.mxu0 %v906
      %1818 = vmatmul.mubr.bf16.gmra.mxu0 %v905
      %v1819 = vpop.f32.mrf.mxu0
      %v1820 = vadd.f32 %v1659, %v1819
      %v1821 = vpop.f32.mrf.mxu0
      %v1822 = vpop.f32.mrf.mxu0
      %v1823 = vadd.f32 %v1662, %v1822
      %v1824 = vpop.f32.mrf.mxu0
      %1825 = vmatprep.mubr.bf16.mxu0 %v913
      %1826 = vmatmul.mubr.bf16.gmra.mxu0 %v912
      %v1827 = vpop.f32.mrf.mxu0
      %v1828 = vadd.f32 %v1667, %v1827
      %v1829 = vpop.f32.mrf.mxu0
      %v1830 = vpop.f32.mrf.mxu0
      %v1831 = vadd.f32 %v1670, %v1830
      %v1832 = vpop.f32.mrf.mxu0
      %1833 = vmatprep.mubr.bf16.mxu0 %v920
      %1834 = vmatmul.mubr.bf16.gmra.mxu0 %v919
      %v1835 = vpop.f32.mrf.mxu0
      %v1836 = vadd.f32 %v1675, %v1835
      %v1837 = vpop.f32.mrf.mxu0
      %v1838 = vpop.f32.mrf.mxu0
      %v1839 = vadd.f32 %v1678, %v1838
      %v1840 = vpop.f32.mrf.mxu0
      %1841 = vmatprep.mubr.bf16.mxu0 %v927
      %1842 = vmatmul.mubr.bf16.gmra.mxu0 %v926
      %v1843 = vpop.f32.mrf.mxu0
      %v1844 = vadd.f32 %v1683, %v1843
      %v1845 = vpop.f32.mrf.mxu0
      %v1846 = vpop.f32.mrf.mxu0
      %v1847 = vadd.f32 %v1686, %v1846
      %v1848 = vpop.f32.mrf.mxu0
      %1849 = vmatprep.mubr.bf16.mxu0 %v934
      %1850 = vmatmul.mubr.bf16.gmra.mxu0 %v933
      %v1851 = vpop.f32.mrf.mxu0
      %v1852 = vadd.f32 %v1691, %v1851
      %v1853 = vpop.f32.mrf.mxu0
      %v1854 = vpop.f32.mrf.mxu0
      %v1855 = vadd.f32 %v1694, %v1854
      %v1856 = vpop.f32.mrf.mxu0
      %1857 = vmatprep.mubr.bf16.mxu0 %v941
      %1858 = vmatmul.mubr.bf16.gmra.mxu0 %v940
      %v1859 = vpop.f32.mrf.mxu0
      %v1860 = vadd.f32 %v1699, %v1859
      %v1861 = vpop.f32.mrf.mxu0
      %v1862 = vpop.f32.mrf.mxu0
      %v1863 = vadd.f32 %v1702, %v1862
      %v1864 = vpop.f32.mrf.mxu0
      %1865 = vmatprep.mubr.bf16.mxu0 %v948
      %1866 = vmatmul.mubr.bf16.gmra.mxu0 %v947
      %v1867 = vpop.f32.mrf.mxu0
      %v1868 = vadd.f32 %v1707, %v1867
      %v1869 = vpop.f32.mrf.mxu0
      %v1870 = vpop.f32.mrf.mxu0
      %v1871 = vadd.f32 %v1710, %v1870
      %v1872 = vpop.f32.mrf.mxu0
      %1873 = vmatprep.mubr.bf16.mxu0 %v955
      %1874 = vmatmul.mubr.bf16.gmra.mxu0 %v954
      %v1875 = vpop.f32.mrf.mxu0
      %v1876 = vadd.f32 %v1715, %v1875
      %v1877 = vpop.f32.mrf.mxu0
      %v1878 = vpop.f32.mrf.mxu0
      %v1879 = vadd.f32 %v1718, %v1878
      %v1880 = vpop.f32.mrf.mxu0
      %1881 = vmatprep.mubr.bf16.mxu0 %v962
      %1882 = vmatmul.mubr.bf16.gmra.mxu0 %v961
      %v1883 = vpop.f32.mrf.mxu0
      %v1884 = vadd.f32 %v1723, %v1883
      %v1885 = vpop.f32.mrf.mxu0
      %v1886 = vpop.f32.mrf.mxu0
      %v1887 = vadd.f32 %v1726, %v1886
      %v1888 = vpop.f32.mrf.mxu0
      %1889 = vmatprep.mubr.bf16.mxu0 %v969
      %1890 = vmatmul.mubr.bf16.gmra.mxu0 %v968
      %v1891 = vpop.f32.mrf.mxu0
      %v1892 = vadd.f32 %v1731, %v1891
      %v1893 = vpop.f32.mrf.mxu0
      %v1894 = vpop.f32.mrf.mxu0
      %v1895 = vadd.f32 %v1734, %v1894
      %v1896 = vpop.f32.mrf.mxu0
      %1897 = vmatprep.mubr.bf16.mxu0 %v976
      %1898 = vmatmul.mubr.bf16.gmra.mxu0 %v975
      %v1899 = vpop.f32.mrf.mxu0
      %v1900 = vadd.f32 %v1739, %v1899
      %v1901 = vpop.f32.mrf.mxu0
      %v1902 = vpop.f32.mrf.mxu0
      %v1903 = vadd.f32 %v1742, %v1902
      %v1904 = vpop.f32.mrf.mxu0
      %1905 = vmatprep.mubr.bf16.mxu0 %v983
      %1906 = vmatmul.mubr.bf16.gmra.mxu0 %v982
      %v1907 = vpop.f32.mrf.mxu0
      %v1908 = vadd.f32 %v1747, %v1907
      %v1909 = vpop.f32.mrf.mxu0
      %v1910 = vpop.f32.mrf.mxu0
      %v1911 = vadd.f32 %v1750, %v1910
      %v1912 = vpop.f32.mrf.mxu0
      %1913 = vmatprep.mubr.bf16.mxu0 %v990
      %1914 = vmatmul.mubr.bf16.gmra.mxu0 %v989
      %v1915 = vpop.f32.mrf.mxu0
      %v1916 = vadd.f32 %v1755, %v1915
      %v1917 = vpop.f32.mrf.mxu0
      %v1918 = vpop.f32.mrf.mxu0
      %v1919 = vadd.f32 %v1758, %v1918
      %v1920 = vpop.f32.mrf.mxu0
      %1921 = vmatprep.mubr.bf16.mxu0 %v997
      %1922 = vmatmul.mubr.bf16.gmra.mxu0 %v996
      %v1923 = vpop.f32.mrf.mxu0
      %v1924 = vadd.f32 %v1763, %v1923
      %v1925 = vpop.f32.mrf.mxu0
      %v1926 = vpop.f32.mrf.mxu0
      %v1927 = vadd.f32 %v1766, %v1926
      %v1928 = vpop.f32.mrf.mxu0
      %1929 = vdwg.mxu0
      %1930 = vmatprep.subr.bf16.mxu0 0
      %1931 = vmatpush1.bf16.msra.mxu0 %v1390
      %1932 = vmatprep.subr.bf16.mxu0 0
      %1933 = vmatpush1.bf16.msra.mxu0 %v1389
      %1934 = vmatprep.subr.bf16.mxu0 0
      %1935 = vmatpush1.bf16.msra.mxu0 %v1388
      %1936 = vmatprep.subr.bf16.mxu0 0
      %1937 = vmatpush1.bf16.msra.mxu0 %v1387
      %1938 = vmatprep.subr.bf16.mxu0 0
      %1939 = vmatpush1.bf16.msra.mxu0 %v1386
      %1940 = vmatprep.subr.bf16.mxu0 0
      %1941 = vmatpush1.bf16.msra.mxu0 %v1385
      %1942 = vmatprep.subr.bf16.mxu0 0
      %1943 = vmatpush1.bf16.msra.mxu0 %v1384
      %1944 = vmatprep.subr.bf16.mxu0 0
      %1945 = vmatpush1.bf16.msra.mxu0 %v1383
      %1946 = vmatprep.subr.bf16.mxu0 0
      %1947 = vmatpush2.bf16.msra.mxu0 0
      %1948 = vmatprep.subr.bf16.mxu0 0
      %1949 = vmatpush2.bf16.msra.mxu0 0
      %1950 = vmatprep.subr.bf16.mxu0 0
      %1951 = vmatpush2.bf16.msra.mxu0 0
      %1952 = vmatprep.subr.bf16.mxu0 0
      %1953 = vmatpush2.bf16.msra.mxu0 0
      %1954 = vmatprep.subr.bf16.mxu0 0
      %1955 = vmatpush2.bf16.msra.mxu0 0
      %1956 = vmatprep.subr.bf16.mxu0 0
      %1957 = vmatpush2.bf16.msra.mxu0 0
      %1958 = vmatprep.subr.bf16.mxu0 0
      %1959 = vmatpush2.bf16.msra.mxu0 0
      %1960 = vmatprep.subr.bf16.mxu0 0
      %1961 = vmatpush2.bf16.msra.mxu0 0
      %1962 = vmatprep.mubr.bf16.mxu0 0
      %1963 = vmatmul.mubr.bf16.gmra.mxu0 %v893
      %v1964 = vpop.f32.mrf.mxu0
      %v1965 = vadd.f32 %v1804, %v1964
      %v1966 = vpop.f32.mrf.mxu0
      %v1967 = vpop.f32.mrf.mxu0
      %v1968 = vadd.f32 %v1807, %v1967
      %v1969 = vpop.f32.mrf.mxu0
      %1970 = vmatprep.mubr.bf16.mxu0 0
      %1971 = vmatmul.mubr.bf16.gmra.mxu0 %v900
      %v1972 = vpop.f32.mrf.mxu0
      %v1973 = vadd.f32 %v1812, %v1972
      %v1974 = vpop.f32.mrf.mxu0
      %v1975 = vpop.f32.mrf.mxu0
      %v1976 = vadd.f32 %v1815, %v1975
      %v1977 = vpop.f32.mrf.mxu0
      %1978 = vmatprep.mubr.bf16.mxu0 0
      %1979 = vmatmul.mubr.bf16.gmra.mxu0 %v907
      %v1980 = vpop.f32.mrf.mxu0
      %v1981 = vadd.f32 %v1820, %v1980
      %v1982 = vpop.f32.mrf.mxu0
      %v1983 = vpop.f32.mrf.mxu0
      %v1984 = vadd.f32 %v1823, %v1983
      %v1985 = vpop.f32.mrf.mxu0
      %1986 = vmatprep.mubr.bf16.mxu0 0
      %1987 = vmatmul.mubr.bf16.gmra.mxu0 %v914
      %v1988 = vpop.f32.mrf.mxu0
      %v1989 = vadd.f32 %v1828, %v1988
      %v1990 = vpop.f32.mrf.mxu0
      %v1991 = vpop.f32.mrf.mxu0
      %v1992 = vadd.f32 %v1831, %v1991
      %v1993 = vpop.f32.mrf.mxu0
      %1994 = vmatprep.mubr.bf16.mxu0 0
      %1995 = vmatmul.mubr.bf16.gmra.mxu0 %v921
      %v1996 = vpop.f32.mrf.mxu0
      %v1997 = vadd.f32 %v1836, %v1996
      %v1998 = vpop.f32.mrf.mxu0
      %v1999 = vpop.f32.mrf.mxu0
      %v2000 = vadd.f32 %v1839, %v1999
      %v2001 = vpop.f32.mrf.mxu0
      %2002 = vmatprep.mubr.bf16.mxu0 0
      %2003 = vmatmul.mubr.bf16.gmra.mxu0 %v928
      %v2004 = vpop.f32.mrf.mxu0
      %v2005 = vadd.f32 %v1844, %v2004
      %v2006 = vpop.f32.mrf.mxu0
      %v2007 = vpop.f32.mrf.mxu0
      %v2008 = vadd.f32 %v1847, %v2007
      %v2009 = vpop.f32.mrf.mxu0
      %2010 = vmatprep.mubr.bf16.mxu0 0
      %2011 = vmatmul.mubr.bf16.gmra.mxu0 %v935
      %v2012 = vpop.f32.mrf.mxu0
      %v2013 = vadd.f32 %v1852, %v2012
      %v2014 = vpop.f32.mrf.mxu0
      %v2015 = vpop.f32.mrf.mxu0
      %v2016 = vadd.f32 %v1855, %v2015
      %v2017 = vpop.f32.mrf.mxu0
      %2018 = vmatprep.mubr.bf16.mxu0 0
      %2019 = vmatmul.mubr.bf16.gmra.mxu0 %v942
      %v2020 = vpop.f32.mrf.mxu0
      %v2021 = vadd.f32 %v1860, %v2020
      %v2022 = vpop.f32.mrf.mxu0
      %v2023 = vpop.f32.mrf.mxu0
      %v2024 = vadd.f32 %v1863, %v2023
      %v2025 = vpop.f32.mrf.mxu0
      %2026 = vmatprep.mubr.bf16.mxu0 0
      %2027 = vmatmul.mubr.bf16.gmra.mxu0 %v949
      %v2028 = vpop.f32.mrf.mxu0
      %v2029 = vadd.f32 %v1868, %v2028
      %v2030 = vpop.f32.mrf.mxu0
      %v2031 = vpop.f32.mrf.mxu0
      %v2032 = vadd.f32 %v1871, %v2031
      %v2033 = vpop.f32.mrf.mxu0
      %2034 = vmatprep.mubr.bf16.mxu0 0
      %2035 = vmatmul.mubr.bf16.gmra.mxu0 %v956
      %v2036 = vpop.f32.mrf.mxu0
      %v2037 = vadd.f32 %v1876, %v2036
      %v2038 = vpop.f32.mrf.mxu0
      %v2039 = vpop.f32.mrf.mxu0
      %v2040 = vadd.f32 %v1879, %v2039
      %v2041 = vpop.f32.mrf.mxu0
      %2042 = vmatprep.mubr.bf16.mxu0 0
      %2043 = vmatmul.mubr.bf16.gmra.mxu0 %v963
      %v2044 = vpop.f32.mrf.mxu0
      %v2045 = vadd.f32 %v1884, %v2044
      %v2046 = vpop.f32.mrf.mxu0
      %v2047 = vpop.f32.mrf.mxu0
      %v2048 = vadd.f32 %v1887, %v2047
      %v2049 = vpop.f32.mrf.mxu0
      %2050 = vmatprep.mubr.bf16.mxu0 0
      %2051 = vmatmul.mubr.bf16.gmra.mxu0 %v970
      %v2052 = vpop.f32.mrf.mxu0
      %v2053 = vadd.f32 %v1892, %v2052
      %v2054 = vpop.f32.mrf.mxu0
      %v2055 = vpop.f32.mrf.mxu0
      %v2056 = vadd.f32 %v1895, %v2055
      %v2057 = vpop.f32.mrf.mxu0
      %2058 = vmatprep.mubr.bf16.mxu0 0
      %2059 = vmatmul.mubr.bf16.gmra.mxu0 %v977
      %v2060 = vpop.f32.mrf.mxu0
      %v2061 = vadd.f32 %v1900, %v2060
      %v2062 = vpop.f32.mrf.mxu0
      %v2063 = vpop.f32.mrf.mxu0
      %v2064 = vadd.f32 %v1903, %v2063
      %v2065 = vpop.f32.mrf.mxu0
      %2066 = vmatprep.mubr.bf16.mxu0 0
      %2067 = vmatmul.mubr.bf16.gmra.mxu0 %v984
      %v2068 = vpop.f32.mrf.mxu0
      %v2069 = vadd.f32 %v1908, %v2068
      %v2070 = vpop.f32.mrf.mxu0
      %v2071 = vpop.f32.mrf.mxu0
      %v2072 = vadd.f32 %v1911, %v2071
      %v2073 = vpop.f32.mrf.mxu0
      %2074 = vmatprep.mubr.bf16.mxu0 0
      %2075 = vmatmul.mubr.bf16.gmra.mxu0 %v991
      %v2076 = vpop.f32.mrf.mxu0
      %v2077 = vadd.f32 %v1916, %v2076
      %v2078 = vpop.f32.mrf.mxu0
      %v2079 = vpop.f32.mrf.mxu0
      %v2080 = vadd.f32 %v1919, %v2079
      %v2081 = vpop.f32.mrf.mxu0
      %2082 = vmatprep.mubr.bf16.mxu0 0
      %2083 = vmatmul.mubr.bf16.gmra.mxu0 %v998
      %v2084 = vpop.f32.mrf.mxu0
      %v2085 = vadd.f32 %v1924, %v2084
      %v2086 = vpop.f32.mrf.mxu0
      %v2087 = vpop.f32.mrf.mxu0
      %v2088 = vadd.f32 %v1927, %v2087
      %v2089 = vpop.f32.mrf.mxu0
      %2090 = vdwg.mxu0
      %v2091 = vadd.f32 %v263, %v1965
      %v2092 = vadd.f32 %v264, %v1968
      %v2093 = vadd.f32 %v265, %v1973
      %v2094 = vadd.f32 %v266, %v1976
      %v2095 = vadd.f32 %v267, %v1981
      %v2096 = vadd.f32 %v268, %v1984
      %v2097 = vadd.f32 %v269, %v1989
      %v2098 = vadd.f32 %v270, %v1992
      %v2099 = vadd.f32 %v271, %v1997
      %v2100 = vadd.f32 %v272, %v2000
      %v2101 = vadd.f32 %v273, %v2005
      %v2102 = vadd.f32 %v274, %v2008
      %v2103 = vadd.f32 %v275, %v2013
      %v2104 = vadd.f32 %v276, %v2016
      %v2105 = vadd.f32 %v277, %v2021
      %v2106 = vadd.f32 %v278, %v2024
      %v2107 = vadd.f32 %v279, %v2029
      %v2108 = vadd.f32 %v280, %v2032
      %v2109 = vadd.f32 %v281, %v2037
      %v2110 = vadd.f32 %v282, %v2040
      %v2111 = vadd.f32 %v283, %v2045
      %v2112 = vadd.f32 %v284, %v2048
      %v2113 = vadd.f32 %v285, %v2053
      %v2114 = vadd.f32 %v286, %v2056
      %v2115 = vadd.f32 %v287, %v2061
      %v2116 = vadd.f32 %v288, %v2064
      %v2117 = vadd.f32 %v289, %v2069
      %v2118 = vadd.f32 %v290, %v2072
      %v2119 = vadd.f32 %v291, %v2077
      %v2120 = vadd.f32 %v292, %v2080
      %v2121 = vadd.f32 %v293, %v2085
      %v2122 = vadd.f32 %v294, %v2088
      %2123 = vst [vmem:[#allocation2] sm:$0xff] %v2091
      %2124 = vst [vmem:[#allocation2 + $0x8] sm:$0xff] %v2092
      %2125 = vst [vmem:[#allocation2 + $0x10] sm:$0xff] %v2093
      %2126 = vst [vmem:[#allocation2 + $0x18] sm:$0xff] %v2094
      %2127 = vst [vmem:[#allocation2 + $0x20] sm:$0xff] %v2095
      %2128 = vst [vmem:[#allocation2 + $0x28] sm:$0xff] %v2096
      %2129 = vst [vmem:[#allocation2 + $0x30] sm:$0xff] %v2097
      %2130 = vst [vmem:[#allocation2 + $0x38] sm:$0xff] %v2098
      %2131 = vst [vmem:[#allocation2 + $0x40] sm:$0xff] %v2099
      %2132 = vst [vmem:[#allocation2 + $0x48] sm:$0xff] %v2100
      %2133 = vst [vmem:[#allocation2 + $0x50] sm:$0xff] %v2101
      %2134 = vst [vmem:[#allocation2 + $0x58] sm:$0xff] %v2102
      %2135 = vst [vmem:[#allocation2 + $0x60] sm:$0xff] %v2103
      %2136 = vst [vmem:[#allocation2 + $0x68] sm:$0xff] %v2104
      %2137 = vst [vmem:[#allocation2 + $0x70] sm:$0xff] %v2105
      %2138 = vst [vmem:[#allocation2 + $0x78] sm:$0xff] %v2106
      %2139 = vst [vmem:[#allocation2 + $0x80] sm:$0xff] %v2107
      %2140 = vst [vmem:[#allocation2 + $0x88] sm:$0xff] %v2108
      %2141 = vst [vmem:[#allocation2 + $0x90] sm:$0xff] %v2109
      %2142 = vst [vmem:[#allocation2 + $0x98] sm:$0xff] %v2110
      %2143 = vst [vmem:[#allocation2 + $0xa0] sm:$0xff] %v2111
      %2144 = vst [vmem:[#allocation2 + $0xa8] sm:$0xff] %v2112
      %2145 = vst [vmem:[#allocation2 + $0xb0] sm:$0xff] %v2113
      %2146 = vst [vmem:[#allocation2 + $0xb8] sm:$0xff] %v2114
      %2147 = vst [vmem:[#allocation2 + $0xc0] sm:$0xff] %v2115
      %2148 = vst [vmem:[#allocation2 + $0xc8] sm:$0xff] %v2116
      %2149 = vst [vmem:[#allocation2 + $0xd0] sm:$0xff] %v2117
      %2150 = vst [vmem:[#allocation2 + $0xd8] sm:$0xff] %v2118
      %2151 = vst [vmem:[#allocation2 + $0xe0] sm:$0xff] %v2119
      %2152 = vst [vmem:[#allocation2 + $0xe8] sm:$0xff] %v2120
      %2153 = vst [vmem:[#allocation2 + $0xf0] sm:$0xff] %v2121
      %2154 = vst [vmem:[#allocation2 + $0xf8] sm:$0xff] %v2122
      // Predicated region
      $region33: #{generator_forward.49} parent=27 // pred_check
        %p2155 = pneg %p227
      $region34: #{generator_forward.49} parent=27 // pred_check_branch
        %2157 = sbr.rel (%p2155) target = $region36
      $region35: #{generator_forward.49} parent=27 // pred_region
        %v2158 = vld [vmem:[#allocation2] sm:$0xff]
        %v2159 = vld [vmem:[#allocation2 + $0x8] sm:$0xff]
        %v2160 = vld [vmem:[#allocation2 + $0x10] sm:$0xff]
        %v2161 = vld [vmem:[#allocation2 + $0x18] sm:$0xff]
        %v2162 = vld [vmem:[#allocation2 + $0x20] sm:$0xff]
        %v2163 = vld [vmem:[#allocation2 + $0x28] sm:$0xff]
        %v2164 = vld [vmem:[#allocation2 + $0x30] sm:$0xff]
        %v2165 = vld [vmem:[#allocation2 + $0x38] sm:$0xff]
        %v2166 = vld [vmem:[#allocation2 + $0x40] sm:$0xff]
        %v2167 = vld [vmem:[#allocation2 + $0x48] sm:$0xff]
        %v2168 = vld [vmem:[#allocation2 + $0x50] sm:$0xff]
        %v2169 = vld [vmem:[#allocation2 + $0x58] sm:$0xff]
        %v2170 = vld [vmem:[#allocation2 + $0x60] sm:$0xff]
        %v2171 = vld [vmem:[#allocation2 + $0x68] sm:$0xff]
        %v2172 = vld [vmem:[#allocation2 + $0x70] sm:$0xff]
        %v2173 = vld [vmem:[#allocation2 + $0x78] sm:$0xff]
        %v2174 = vld [vmem:[#allocation2 + $0x80] sm:$0xff]
        %v2175 = vld [vmem:[#allocation2 + $0x88] sm:$0xff]
        %v2176 = vld [vmem:[#allocation2 + $0x90] sm:$0xff]
        %v2177 = vld [vmem:[#allocation2 + $0x98] sm:$0xff]
        %v2178 = vld [vmem:[#allocation2 + $0xa0] sm:$0xff]
        %v2179 = vld [vmem:[#allocation2 + $0xa8] sm:$0xff]
        %v2180 = vld [vmem:[#allocation2 + $0xb0] sm:$0xff]
        %v2181 = vld [vmem:[#allocation2 + $0xb8] sm:$0xff]
        %v2182 = vld [vmem:[#allocation2 + $0xc0] sm:$0xff]
        %v2183 = vld [vmem:[#allocation2 + $0xc8] sm:$0xff]
        %v2184 = vld [vmem:[#allocation2 + $0xd0] sm:$0xff]
        %v2185 = vld [vmem:[#allocation2 + $0xd8] sm:$0xff]
        %v2186 = vld [vmem:[#allocation2 + $0xe0] sm:$0xff]
        %v2187 = vld [vmem:[#allocation2 + $0xe8] sm:$0xff]
        %v2188 = vld [vmem:[#allocation2 + $0xf0] sm:$0xff]
        %v2189 = vld [vmem:[#allocation2 + $0xf8] sm:$0xff]
        %v2190 = vtanh.pop %v2158
        %v2191 = vtanh.pop %v2159
        %v2192 = vtanh.pop %v2160
        %v2193 = vtanh.pop %v2161
        %v2194 = vtanh.pop %v2162
        %v2195 = vtanh.pop %v2163
        %v2196 = vtanh.pop %v2164
        %v2197 = vtanh.pop %v2165
        %v2198 = vtanh.pop %v2166
        %v2199 = vtanh.pop %v2167
        %v2200 = vtanh.pop %v2168
        %v2201 = vtanh.pop %v2169
        %v2202 = vtanh.pop %v2170
        %v2203 = vtanh.pop %v2171
        %v2204 = vtanh.pop %v2172
        %v2205 = vtanh.pop %v2173
        %v2206 = vtanh.pop %v2174
        %v2207 = vtanh.pop %v2175
        %v2208 = vtanh.pop %v2176
        %v2209 = vtanh.pop %v2177
        %v2210 = vtanh.pop %v2178
        %v2211 = vtanh.pop %v2179
        %v2212 = vtanh.pop %v2180
        %v2213 = vtanh.pop %v2181
        %v2214 = vtanh.pop %v2182
        %v2215 = vtanh.pop %v2183
        %v2216 = vtanh.pop %v2184
        %v2217 = vtanh.pop %v2185
        %v2218 = vtanh.pop %v2186
        %v2219 = vtanh.pop %v2187
        %v2220 = vtanh.pop %v2188
        %v2221 = vtanh.pop %v2189
        %2222 = vst [vmem:[%s224] sm:$0xff] %v2190
        %2223 = vst [vmem:[%s224 + $0x8] sm:$0xff] %v2191
        %2224 = vst [vmem:[%s224 + $0x10] sm:$0xff] %v2192
        %2225 = vst [vmem:[%s224 + $0x18] sm:$0xff] %v2193
        %2226 = vst [vmem:[%s224 + $0x20] sm:$0xff] %v2194
        %2227 = vst [vmem:[%s224 + $0x28] sm:$0xff] %v2195
        %2228 = vst [vmem:[%s224 + $0x30] sm:$0xff] %v2196
        %2229 = vst [vmem:[%s224 + $0x38] sm:$0xff] %v2197
        %2230 = vst [vmem:[%s224 + $0x40] sm:$0xff] %v2198
        %2231 = vst [vmem:[%s224 + $0x48] sm:$0xff] %v2199
        %2232 = vst [vmem:[%s224 + $0x50] sm:$0xff] %v2200
        %2233 = vst [vmem:[%s224 + $0x58] sm:$0xff] %v2201
        %2234 = vst [vmem:[%s224 + $0x60] sm:$0xff] %v2202
        %2235 = vst [vmem:[%s224 + $0x68] sm:$0xff] %v2203
        %2236 = vst [vmem:[%s224 + $0x70] sm:$0xff] %v2204
        %2237 = vst [vmem:[%s224 + $0x78] sm:$0xff] %v2205
        %2238 = vst [vmem:[%s224 + $0x80] sm:$0xff] %v2206
        %2239 = vst [vmem:[%s224 + $0x88] sm:$0xff] %v2207
        %2240 = vst [vmem:[%s224 + $0x90] sm:$0xff] %v2208
        %2241 = vst [vmem:[%s224 + $0x98] sm:$0xff] %v2209
        %2242 = vst [vmem:[%s224 + $0xa0] sm:$0xff] %v2210
        %2243 = vst [vmem:[%s224 + $0xa8] sm:$0xff] %v2211
        %2244 = vst [vmem:[%s224 + $0xb0] sm:$0xff] %v2212
        %2245 = vst [vmem:[%s224 + $0xb8] sm:$0xff] %v2213
        %2246 = vst [vmem:[%s224 + $0xc0] sm:$0xff] %v2214
        %2247 = vst [vmem:[%s224 + $0xc8] sm:$0xff] %v2215
        %2248 = vst [vmem:[%s224 + $0xd0] sm:$0xff] %v2216
        %2249 = vst [vmem:[%s224 + $0xd8] sm:$0xff] %v2217
        %2250 = vst [vmem:[%s224 + $0xe0] sm:$0xff] %v2218
        %2251 = vst [vmem:[%s224 + $0xe8] sm:$0xff] %v2219
        %2252 = vst [vmem:[%s224 + $0xf0] sm:$0xff] %v2220
        %2253 = vst [vmem:[%s224 + $0xf8] sm:$0xff] %v2221
      $region36: #{generator_forward.49} parent=27 // pred_fallthru
        _
      %s2254 = smul.u32 32, %s18
      %p2255 = scmp.lt.s32.totalorder %s2254, 63
      %s2256 = scalar_select %p2255, %s2254, 63
      %p2257 = scmp.lt.s32.totalorder %s19, 0
      %s2258 = scalar_select %p2257, %s19, 0
      %s2259 = sadd.s32 %s2258, %s2256
      %s2260 = smul.addr %s2259, 8
      %s2261 = scalar_lea.vmem %s2, %s2260
      // Predicated region
      $region37: #{generator_forward.49} parent=27 // pred_check
        %p2262 = pneg %p108
      $region38: #{generator_forward.49} parent=27 // pred_check_branch
        %2264 = sbr.rel (%p2262) target = $region40
      $region39: #{generator_forward.49} parent=27 // pred_region
        %s2265 = smul.u32 32, %s18
      $region40: #{generator_forward.49} parent=27 // pred_fallthru
        _
    $region28: #{generator_forward.49} parent=5 // pred_fallthru
      _
    %p2266 = scmp.le.s32.totalorder 2, %s8
    // Predicated region
    $region41: #{generator_forward.49} parent=5 // pred_check
      %p2267 = pneg %p2266
    $region42: #{generator_forward.49} parent=5 // pred_check_branch
      %2269 = sbr.rel (%p2267) target = $region44
    $region43: #{generator_forward.49} parent=5 // pred_region
      %s2270 = ssub.s32 %s8, 2
      // Predicated region
      $region45: #{generator_forward.49} parent=43 // pred_check
        %p2271 = pneg %p114
      $region46: #{generator_forward.49} parent=43 // pred_check_branch
        %2273 = sbr.rel (%p2271) target = $region48
      $region47: #{generator_forward.49} parent=43 // pred_region
        %s2274 = smul.u32 32, %s21
        %p2275 = scmp.lt.s32.totalorder %s2274, 63
        %s2276 = scalar_select %p2275, %s2274, 63
        %p2277 = scmp.lt.s32.totalorder %s22, 0
        %s2278 = scalar_select %p2277, %s22, 0
        %s2279 = sadd.s32 %s2278, %s2276
        %s2280 = smul.addr %s2279, 8
        %s2281 = scalar_lea.vmem %s2, %s2280
      $region48: #{generator_forward.49} parent=43 // pred_fallthru
        _
    $region44: #{generator_forward.49} parent=5 // pred_fallthru
      _
  $region6: #{generator_forward.49} parent=0 // loop_footer
    %s12 = sadd.s32 1, %s8
  $region7: #{generator_forward.49} parent=0 // loop_footer_branch
    %7 = sbr.rel target = $region3
  $region8: #{generator_forward.49} parent=0 // loop_exit
    _

</llo_original>
